<compile_context>
chip_gen: v6e
topology: v6e:2x2x1
jax: 0.10.0
libtpu: 0.0.40
codegen_flags: <defaults>
</compile_context>

<pallas_src>
import functools

import jax
import jax.numpy as jnp
from jax import lax
from jax.experimental import pallas as pl
from jax.experimental.pallas import tpu as pltpu


def _round_up(x, m):
    return (x + m - 1) // m * m


def _conv_block_kernel(x_ref, w1_ref, w2_ref, out_ref, yhalo_ref, *,
                       bb, k, stride, ho, wo, cin, cout, cpad, norm, eps,
                       neg_slope, pack):
    hw = ho * wo
    m_rows = bb * hw

    # ---- conv_1: k*k shifted/strided taps of the padded bf16 block, fused into ONE
    # ---- (bb*hw, k*k*cin) @ (k*k*cin, cpad) MXU GEMM with f32 accumulation.
    xp = x_ref[...]                                        # (bb, hp, wp, cin) bf16
    taps = []
    for kh in range(k):
        for kw in range(k):
            taps.append(lax.slice(
                xp, (0, kh, kw, 0),
                (bb, kh + (ho - 1) * stride + 1, kw + (wo - 1) * stride + 1, cin),
                (1, stride, stride, 1)))                   # (bb, ho, wo, cin) bf16
    patches = jnp.concatenate(taps, axis=-1).reshape(m_rows, k * k * cin)
    y = jnp.dot(patches, w1_ref[...],                      # bf16 x bf16 -> f32 acc
                preferred_element_type=jnp.float32)        # (m_rows, cpad)

    # ---- InstanceNorm2d (per sample & channel over H*W, biased var, eps in rsqrt,
    # ---- affine-free).  Two-pass mean / centered variance for numerical robustness.
    if norm == "IN":
        yb = y.reshape(bb, hw, cpad)
        mean = jnp.mean(yb, axis=1, keepdims=True)
        cen = yb - mean
        var = jnp.mean(cen * cen, axis=1, keepdims=True)
        y = (cen * lax.rsqrt(var + eps)).reshape(m_rows, cpad)

    # ---- LeakyReLU(0.1) ----
    y = jnp.where(y >= 0, y, neg_slope * y)

    # ---- conv_2 (3x3 / stride 1 / pad 1) via a bf16 zero-halo scratch.  Only the four
    # ---- 1-pixel border strips are zeroed (cheap; keeps grid steps independent); the
    # ---- interior is fully overwritten right after.
    yhalo_ref[:, 0:1, :, :] = jnp.zeros((bb, 1, wo + 2, cout), jnp.bfloat16)
    yhalo_ref[:, ho + 1:ho + 2, :, :] = jnp.zeros((bb, 1, wo + 2, cout), jnp.bfloat16)
    yhalo_ref[:, 1:ho + 1, 0:1, :] = jnp.zeros((bb, ho, 1, cout), jnp.bfloat16)
    yhalo_ref[:, 1:ho + 1, wo + 1:wo + 2, :] = jnp.zeros((bb, ho, 1, cout), jnp.bfloat16)
    yhalo_ref[:, 1:ho + 1, 1:wo + 1, :] = (
        y[:, :cout].astype(jnp.bfloat16).reshape(bb, ho, wo, cout))

    if cout >= 128:
        # K = cout already fills the MXU contraction dim: accumulate 9 per-tap GEMMs and
        # skip materializing the hw x 9*cout concat (largest intermediate at real sizes).
        out = jnp.zeros((m_rows, cpad), jnp.float32)
        t = 0
        for dh in range(3):
            for dw in range(3):
                tap = yhalo_ref[:, dh:dh + ho, dw:dw + wo, :].reshape(m_rows, cout)
                out = out + jnp.dot(tap, w2_ref[t * cout:(t + 1) * cout, :],
                                    preferred_element_type=jnp.float32)
                t += 1
    else:
        taps2 = [yhalo_ref[:, dh:dh + ho, dw:dw + wo, :]
                 for dh in range(3) for dw in range(3)]
        p2 = jnp.concatenate(taps2, axis=-1).reshape(m_rows, 9 * cout)    # bf16
        out = jnp.dot(p2, w2_ref[...], preferred_element_type=jnp.float32)

    # ---- store: lane-dense, no zero-padded channels in the HBM writeback ----
    if pack > 1:
        # Re-pack (m_rows, cout) -> (m_rows/pack, pack*cout = 128) with contiguous
        # sublane slices + one lane concatenate; undone by cheap reshapes in the
        # wrapper.  Keeps unmasked 128-lane stores while writing only real channels.
        rows_out = m_rows // pack
        out_small = out[:, :cout]
        pieces = [out_small[g * rows_out:(g + 1) * rows_out, :] for g in range(pack)]
        out_ref[...] = jnp.concatenate(pieces, axis=-1).astype(out_ref.dtype)
    else:
        out_ref[...] = out.astype(out_ref.dtype)


def conv_block_forward(x_nchw, w1, w2, *, stride, padding, norm=None,
                       eps=1e-5, neg_slope=0.1):
    """Pallas implementation of ConvBlock.forward (bias-free convs, optional IN)."""
    if norm not in (None, "IN"):
        raise NotImplementedError("only norm=None or norm='IN' supported")
    n, cin, h, w = x_nchw.shape
    cout, _, k, _ = w1.shape
    ho = (h + 2 * padding - k) // stride + 1
    wo = (w + 2 * padding - k) // stride + 1
    hw = ho * wo
    hp, wp = h + 2 * padding, w + 2 * padding
    cpad = _round_up(cout, 128)                            # GEMM N kept lane-dense

    # Rough per-step VMEM footprint (bytes); drives batch-block choice and the
    # explicit scoped-VMEM limit (defaults are only 16/32 MiB).
    def footprint(bb):
        hw_b = bb * hw
        in_blk = 2 * bb * hp * wp * cin * 2            # bf16 input block, double buffered
        wts = (k * k * cin + 9 * cout) * cpad * 2      # bf16 weights, single buffered
        patches = hw_b * k * k * cin * 2               # bf16 im2col for conv_1
        y_f32 = 2 * hw_b * cpad * 4                    # conv_1 out + activation copy
        halo = bb * (ho + 2) * (wo + 2) * cout * 2     # bf16 halo scratch
        p2 = hw_b * 9 * cout * 2                       # bf16 im2col for conv_2
        out_b = hw_b * cpad * 4 + 2 * hw_b * cout * 4  # pre-pack + output block x2
        return 2 * (in_blk + wts + patches + y_f32 + halo + p2 + out_b)   # 2x slack

    budget = 24 * 1024 * 1024
    bb = 1
    for cand in range(n, 0, -1):
        if n % cand == 0 and footprint(cand) <= budget:
            bb = cand
            break
    num_steps = n // bb
    m_rows = bb * hw

    # Lane-dense output packing factor (pack*cout == 128); fall back to zero-padded
    # channels only when the shapes do not allow a clean re-pack.
    pack = 128 // cout if (cout < 128 and 128 % cout == 0) else 1
    if pack > 1 and m_rows % pack != 0:
        pack = 1

    # NCHW -> NHWC, spatial zero pad, bf16 cast: a single 1x pass over the input in HBM.
    x_nhwc = jnp.transpose(x_nchw, (0, 2, 3, 1)).astype(jnp.bfloat16)
    x_pad = jnp.pad(x_nhwc, ((0, 0), (padding, padding), (padding, padding), (0, 0)))

    # Weights -> GEMM layouts matching the in-kernel tap ordering ((kh,kw) major, input
    # channel minor); Cout padded to 128 lanes; bf16 operands, f32 accumulation.
    w1_mat = jnp.transpose(w1, (2, 3, 1, 0)).reshape(k * k * cin, cout)
    w1_mat = jnp.pad(w1_mat, ((0, 0), (0, cpad - cout))).astype(jnp.bfloat16)
    w2_mat = jnp.transpose(w2, (2, 3, 1, 0)).reshape(9 * cout, cout)
    w2_mat = jnp.pad(w2_mat, ((0, 0), (0, cpad - cout))).astype(jnp.bfloat16)

    if pack > 1:
        rows_out = m_rows // pack
        out_shape = jax.ShapeDtypeStruct((num_steps, rows_out, 128), jnp.float32)
        out_spec = pl.BlockSpec((None, rows_out, 128), lambda i: (i, 0, 0))
    else:
        out_shape = jax.ShapeDtypeStruct((num_steps, m_rows, cpad), jnp.float32)
        out_spec = pl.BlockSpec((None, m_rows, cpad), lambda i: (i, 0, 0))

    vmem_limit = int(min(64 * 1024 * 1024, max(footprint(bb), 32 * 1024 * 1024)))

    kernel = functools.partial(
        _conv_block_kernel, bb=bb, k=k, stride=stride, ho=ho, wo=wo, cin=cin,
        cout=cout, cpad=cpad, norm=norm, eps=eps, neg_slope=neg_slope, pack=pack)

    out_raw = pl.pallas_call(
        kernel,
        out_shape=out_shape,
        grid=(num_steps,),
        in_specs=[
            pl.BlockSpec((bb, hp, wp, cin), lambda i: (i, 0, 0, 0)),       # bf16 samples
            pl.BlockSpec((k * k * cin, cpad), lambda i: (0, 0),
                         pipeline_mode=pl.Buffered(1)),                    # resident w1
            pl.BlockSpec((9 * cout, cpad), lambda i: (0, 0),
                         pipeline_mode=pl.Buffered(1)),                    # resident w2
        ],
        out_specs=out_spec,
        scratch_shapes=[pltpu.VMEM((bb, ho + 2, wo + 2, cout), jnp.bfloat16)],
        compiler_params=pltpu.CompilerParams(
            dimension_semantics=("parallel",),
            vmem_limit_bytes=vmem_limit),
    )(x_pad, w1_mat, w2_mat)

    if pack > 1:
        rows_out = m_rows // pack
        out = out_raw.reshape(num_steps, rows_out, pack, cout)
        out = jnp.transpose(out, (0, 2, 1, 3)).reshape(n, ho, wo, cout)   # undo packing
    else:
        out = out_raw[:, :, :cout].reshape(n, ho, wo, cout)               # drop lane pad
    return jnp.transpose(out, (0, 3, 1, 2))                               # back to NCHW


def _reference(x, w1, w2, *, stride, padding, norm, eps=1e-5, neg_slope=0.1):
    dn = ("NCHW", "OIHW", "NCHW")
    y = lax.conv_general_dilated(x, w1, (stride, stride),
                                 [(padding, padding), (padding, padding)],
                                 dimension_numbers=dn, precision=lax.Precision.HIGHEST)
    if norm == "IN":
        mean = jnp.mean(y, axis=(2, 3), keepdims=True)
        var = jnp.mean((y - mean) ** 2, axis=(2, 3), keepdims=True)
        y = (y - mean) / jnp.sqrt(var + eps)
    y = jnp.where(y >= 0, y, neg_slope * y)
    y = lax.conv_general_dilated(y, w2, (1, 1), [(1, 1), (1, 1)],
                                 dimension_numbers=dn, precision=lax.Precision.HIGHEST)
    return y


if __name__ == "__main__":
    key = jax.random.PRNGKey(0)
    kx, k1, k2 = jax.random.split(key, 3)
    # small shapes consistent with the module: batch=2, in=4, out=8, spatial=16
    N, CIN, COUT, H, W = 2, 4, 8, 16, 16
    K, STRIDE, PAD = 3, 1, 1
    NORM = "IN"

    x = jax.random.normal(kx, (N, CIN, H, W), jnp.float32)
    w1 = jax.random.normal(k1, (COUT, CIN, K, K), jnp.float32) * 0.1   # conv_1.weight
    w2 = jax.random.normal(k2, (COUT, COUT, 3, 3), jnp.float32) * 0.1  # conv_2.weight

    out = conv_block_forward(x, w1, w2, stride=STRIDE, padding=PAD, norm=NORM)
    out = jax.block_until_ready(out)

    ref = _reference(x, w1, w2, stride=STRIDE, padding=PAD, norm=NORM)
    assert out.shape == ref.shape == (N, COUT, H, W)
    err = float(jnp.max(jnp.abs(out - ref)))
    # bf16 MXU operands vs f32-HIGHEST reference: allow ~1e-2 error.
    assert err < 5e-2, f"max abs err {err}"
    print("KERNEL_OK")
</pallas_src>

<mosaic_0001>
module attributes {stable_mosaic.version = 11 : i64} {
  func.func @_conv_block_kernel(%arg0: i32, %arg1: memref<2x18x18x4xbf16, #tpu.memory_space<vmem>>, %arg2: memref<36x128xbf16, #tpu.memory_space<vmem>>, %arg3: memref<72x128xbf16, #tpu.memory_space<vmem>>, %arg4: memref<1x32x128xf32, #tpu.memory_space<vmem>>, %arg5: memref<2x18x18x8xbf16, #tpu.memory_space<vmem>>) attributes {dimension_semantics = [#tpu.dimension_semantics<parallel>], iteration_bounds = array<i64: 1>, scalar_prefetch = 0 : i64, scratch_operands = 1 : i64, tpu.core_type = #tpu.core_type<tc>, window_params = [{transform_indices = @transform_0, window_bounds = array<i64: 2, 18, 18, 4>}, {pipeline_mode = #tpu.pipeline_mode<synchronous>, transform_indices = @transform_1, window_bounds = array<i64: 36, 128>}, {pipeline_mode = #tpu.pipeline_mode<synchronous>, transform_indices = @transform_2, window_bounds = array<i64: 72, 128>}, {transform_indices = @transform_3, window_bounds = array<i64: 1, 32, 128>}]} {
    %c0 = arith.constant 0 : index
    %c0_0 = arith.constant 0 : index
    %c0_1 = arith.constant 0 : index
    %c0_2 = arith.constant 0 : index
    %0 = vector.load %arg1[%c0, %c0_0, %c0_1, %c0_2] : memref<2x18x18x4xbf16, #tpu.memory_space<vmem>>, vector<2x18x18x4xbf16>
    %1 = vector.extract_strided_slice %0 {offsets = [0, 0, 0, 0], sizes = [2, 16, 16, 4], strides = [1, 1, 1, 1]} : vector<2x18x18x4xbf16> to vector<2x16x16x4xbf16>
    %2 = vector.extract_strided_slice %0 {offsets = [0, 0, 1, 0], sizes = [2, 16, 16, 4], strides = [1, 1, 1, 1]} : vector<2x18x18x4xbf16> to vector<2x16x16x4xbf16>
    %3 = vector.extract_strided_slice %0 {offsets = [0, 0, 2, 0], sizes = [2, 16, 16, 4], strides = [1, 1, 1, 1]} : vector<2x18x18x4xbf16> to vector<2x16x16x4xbf16>
    %4 = vector.extract_strided_slice %0 {offsets = [0, 1, 0, 0], sizes = [2, 16, 16, 4], strides = [1, 1, 1, 1]} : vector<2x18x18x4xbf16> to vector<2x16x16x4xbf16>
    %5 = vector.extract_strided_slice %0 {offsets = [0, 1, 1, 0], sizes = [2, 16, 16, 4], strides = [1, 1, 1, 1]} : vector<2x18x18x4xbf16> to vector<2x16x16x4xbf16>
    %6 = vector.extract_strided_slice %0 {offsets = [0, 1, 2, 0], sizes = [2, 16, 16, 4], strides = [1, 1, 1, 1]} : vector<2x18x18x4xbf16> to vector<2x16x16x4xbf16>
    %7 = vector.extract_strided_slice %0 {offsets = [0, 2, 0, 0], sizes = [2, 16, 16, 4], strides = [1, 1, 1, 1]} : vector<2x18x18x4xbf16> to vector<2x16x16x4xbf16>
    %8 = vector.extract_strided_slice %0 {offsets = [0, 2, 1, 0], sizes = [2, 16, 16, 4], strides = [1, 1, 1, 1]} : vector<2x18x18x4xbf16> to vector<2x16x16x4xbf16>
    %9 = vector.extract_strided_slice %0 {offsets = [0, 2, 2, 0], sizes = [2, 16, 16, 4], strides = [1, 1, 1, 1]} : vector<2x18x18x4xbf16> to vector<2x16x16x4xbf16>
    %10 = tpu.concatenate %1, %2, %3, %4, %5, %6, %7, %8, %9 in 3 : vector<2x16x16x4xbf16>, vector<2x16x16x4xbf16>, vector<2x16x16x4xbf16>, vector<2x16x16x4xbf16>, vector<2x16x16x4xbf16>, vector<2x16x16x4xbf16>, vector<2x16x16x4xbf16>, vector<2x16x16x4xbf16>, vector<2x16x16x4xbf16> -> vector<2x16x16x36xbf16>
    %11 = vector.shape_cast %10 : vector<2x16x16x36xbf16> to vector<512x36xbf16>
    %c0_3 = arith.constant 0 : index
    %c0_4 = arith.constant 0 : index
    %12 = vector.load %arg2[%c0_3, %c0_4] : memref<36x128xbf16, #tpu.memory_space<vmem>>, vector<36x128xbf16>
    %cst = arith.constant dense<0.000000e+00> : vector<512x128xf32>
    %13 = tpu.matmul %11, %12, %cst {dimension_numbers = #tpu.dot_dimension_numbers<[1], [0], [0], [1], [0, 0, 1, 1], [], []>} : vector<512x36xbf16>, vector<36x128xbf16>, vector<512x128xf32> -> vector<512x128xf32>
    %14 = vector.shape_cast %13 : vector<512x128xf32> to vector<2x256x128xf32>
    %cst_5 = arith.constant dense<0.000000e+00> : vector<2x128xf32>
    %15 = vector.multi_reduction <add>, %14, %cst_5 [1] : vector<2x256x128xf32> to vector<2x128xf32>
    %16 = vector.shape_cast %15 : vector<2x128xf32> to vector<2x1x128xf32>
    %cst_6 = arith.constant 2.560000e+02 : f32
    %17 = vector.broadcast %cst_6 : f32 to vector<2x1x128xf32>
    %18 = arith.divf %16, %17 : vector<2x1x128xf32>
    %19 = vector.broadcast %18 : vector<2x1x128xf32> to vector<2x256x128xf32>
    %20 = arith.subf %14, %19 : vector<2x256x128xf32>
    %21 = arith.mulf %20, %20 : vector<2x256x128xf32>
    %cst_7 = arith.constant dense<0.000000e+00> : vector<2x128xf32>
    %22 = vector.multi_reduction <add>, %21, %cst_7 [1] : vector<2x256x128xf32> to vector<2x128xf32>
    %23 = vector.shape_cast %22 : vector<2x128xf32> to vector<2x1x128xf32>
    %cst_8 = arith.constant 2.560000e+02 : f32
    %24 = vector.broadcast %cst_8 : f32 to vector<2x1x128xf32>
    %25 = arith.divf %23, %24 : vector<2x1x128xf32>
    %cst_9 = arith.constant 9.99999974E-6 : f32
    %26 = vector.broadcast %cst_9 : f32 to vector<2x1x128xf32>
    %27 = arith.addf %25, %26 : vector<2x1x128xf32>
    %28 = math.rsqrt %27 : vector<2x1x128xf32>
    %29 = vector.broadcast %28 : vector<2x1x128xf32> to vector<2x256x128xf32>
    %30 = arith.mulf %20, %29 : vector<2x256x128xf32>
    %31 = vector.shape_cast %30 : vector<2x256x128xf32> to vector<512x128xf32>
    %cst_10 = arith.constant 0.000000e+00 : f32
    %32 = vector.broadcast %cst_10 : f32 to vector<512x128xf32>
    %33 = arith.cmpf oge, %31, %32 : vector<512x128xf32>
    %cst_11 = arith.constant 1.000000e-01 : f32
    %34 = vector.broadcast %cst_11 : f32 to vector<512x128xf32>
    %35 = arith.mulf %34, %31 : vector<512x128xf32>
    %36 = arith.select %33, %31, %35 : vector<512x128xi1>, vector<512x128xf32>
    %cst_12 = arith.constant 0.000000e+00 : bf16
    %37 = vector.broadcast %cst_12 : bf16 to vector<2x1x18x8xbf16>
    %c0_13 = arith.constant 0 : index
    %c0_14 = arith.constant 0 : index
    %c0_15 = arith.constant 0 : index
    %c0_16 = arith.constant 0 : index
    %38 = vector.load %arg5[%c0_13, %c0_14, %c0_15, %c0_16] : memref<2x18x18x8xbf16, #tpu.memory_space<vmem>>, vector<2x1x18x8xbf16>
    tpu.vector_store %arg5[%c0_13, %c0_14, %c0_15, %c0_16], %37 {strides = array<i32>} : memref<2x18x18x8xbf16, #tpu.memory_space<vmem>>, vector<2x1x18x8xbf16>,
    %cst_17 = arith.constant 0.000000e+00 : bf16
    %39 = vector.broadcast %cst_17 : bf16 to vector<2x1x18x8xbf16>
    %c0_18 = arith.constant 0 : index
    %c17 = arith.constant 17 : index
    %c0_19 = arith.constant 0 : index
    %c0_20 = arith.constant 0 : index
    %40 = vector.load %arg5[%c0_18, %c17, %c0_19, %c0_20] : memref<2x18x18x8xbf16, #tpu.memory_space<vmem>>, vector<2x1x18x8xbf16>
    tpu.vector_store %arg5[%c0_18, %c17, %c0_19, %c0_20], %39 {strides = array<i32>} : memref<2x18x18x8xbf16, #tpu.memory_space<vmem>>, vector<2x1x18x8xbf16>,
    %cst_21 = arith.constant 0.000000e+00 : bf16
    %41 = vector.broadcast %cst_21 : bf16 to vector<2x16x1x8xbf16>
    %c0_22 = arith.constant 0 : index
    %c1 = arith.constant 1 : index
    %c0_23 = arith.constant 0 : index
    %c0_24 = arith.constant 0 : index
    %42 = vector.load %arg5[%c0_22, %c1, %c0_23, %c0_24] : memref<2x18x18x8xbf16, #tpu.memory_space<vmem>>, vector<2x16x1x8xbf16>
    tpu.vector_store %arg5[%c0_22, %c1, %c0_23, %c0_24], %41 {strides = array<i32>} : memref<2x18x18x8xbf16, #tpu.memory_space<vmem>>, vector<2x16x1x8xbf16>,
    %cst_25 = arith.constant 0.000000e+00 : bf16
    %43 = vector.broadcast %cst_25 : bf16 to vector<2x16x1x8xbf16>
    %c0_26 = arith.constant 0 : index
    %c1_27 = arith.constant 1 : index
    %c17_28 = arith.constant 17 : index
    %c0_29 = arith.constant 0 : index
    %44 = vector.load %arg5[%c0_26, %c1_27, %c17_28, %c0_29] : memref<2x18x18x8xbf16, #tpu.memory_space<vmem>>, vector<2x16x1x8xbf16>
    tpu.vector_store %arg5[%c0_26, %c1_27, %c17_28, %c0_29], %43 {strides = array<i32>} : memref<2x18x18x8xbf16, #tpu.memory_space<vmem>>, vector<2x16x1x8xbf16>,
    %45 = vector.extract_strided_slice %36 {offsets = [0, 0], sizes = [512, 8], strides = [1, 1]} : vector<512x128xf32> to vector<512x8xf32>
    %46 = arith.truncf %45 : vector<512x8xf32> to vector<512x8xbf16>
    %47 = vector.shape_cast %46 : vector<512x8xbf16> to vector<2x16x16x8xbf16>
    %c0_30 = arith.constant 0 : index
    %c1_31 = arith.constant 1 : index
    %c1_32 = arith.constant 1 : index
    %c0_33 = arith.constant 0 : index
    %48 = vector.load %arg5[%c0_30, %c1_31, %c1_32, %c0_33] : memref<2x18x18x8xbf16, #tpu.memory_space<vmem>>, vector<2x16x16x8xbf16>
    tpu.vector_store %arg5[%c0_30, %c1_31, %c1_32, %c0_33], %47 {strides = array<i32>} : memref<2x18x18x8xbf16, #tpu.memory_space<vmem>>, vector<2x16x16x8xbf16>,
    %c0_34 = arith.constant 0 : index
    %c0_35 = arith.constant 0 : index
    %c0_36 = arith.constant 0 : index
    %c0_37 = arith.constant 0 : index
    %49 = vector.load %arg5[%c0_34, %c0_35, %c0_36, %c0_37] : memref<2x18x18x8xbf16, #tpu.memory_space<vmem>>, vector<2x16x16x8xbf16>
    %c0_38 = arith.constant 0 : index
    %c0_39 = arith.constant 0 : index
    %c1_40 = arith.constant 1 : index
    %c0_41 = arith.constant 0 : index
    %50 = vector.load %arg5[%c0_38, %c0_39, %c1_40, %c0_41] : memref<2x18x18x8xbf16, #tpu.memory_space<vmem>>, vector<2x16x16x8xbf16>
    %c0_42 = arith.constant 0 : index
    %c0_43 = arith.constant 0 : index
    %c2 = arith.constant 2 : index
    %c0_44 = arith.constant 0 : index
    %51 = vector.load %arg5[%c0_42, %c0_43, %c2, %c0_44] : memref<2x18x18x8xbf16, #tpu.memory_space<vmem>>, vector<2x16x16x8xbf16>
    %c0_45 = arith.constant 0 : index
    %c1_46 = arith.constant 1 : index
    %c0_47 = arith.constant 0 : index
    %c0_48 = arith.constant 0 : index
    %52 = vector.load %arg5[%c0_45, %c1_46, %c0_47, %c0_48] : memref<2x18x18x8xbf16, #tpu.memory_space<vmem>>, vector<2x16x16x8xbf16>
    %c0_49 = arith.constant 0 : index
    %c1_50 = arith.constant 1 : index
    %c1_51 = arith.constant 1 : index
    %c0_52 = arith.constant 0 : index
    %53 = vector.load %arg5[%c0_49, %c1_50, %c1_51, %c0_52] : memref<2x18x18x8xbf16, #tpu.memory_space<vmem>>, vector<2x16x16x8xbf16>
    %c0_53 = arith.constant 0 : index
    %c1_54 = arith.constant 1 : index
    %c2_55 = arith.constant 2 : index
    %c0_56 = arith.constant 0 : index
    %54 = vector.load %arg5[%c0_53, %c1_54, %c2_55, %c0_56] : memref<2x18x18x8xbf16, #tpu.memory_space<vmem>>, vector<2x16x16x8xbf16>
    %c0_57 = arith.constant 0 : index
    %c2_58 = arith.constant 2 : index
    %c0_59 = arith.constant 0 : index
    %c0_60 = arith.constant 0 : index
    %55 = vector.load %arg5[%c0_57, %c2_58, %c0_59, %c0_60] : memref<2x18x18x8xbf16, #tpu.memory_space<vmem>>, vector<2x16x16x8xbf16>
    %c0_61 = arith.constant 0 : index
    %c2_62 = arith.constant 2 : index
    %c1_63 = arith.constant 1 : index
    %c0_64 = arith.constant 0 : index
    %56 = vector.load %arg5[%c0_61, %c2_62, %c1_63, %c0_64] : memref<2x18x18x8xbf16, #tpu.memory_space<vmem>>, vector<2x16x16x8xbf16>
    %c0_65 = arith.constant 0 : index
    %c2_66 = arith.constant 2 : index
    %c2_67 = arith.constant 2 : index
    %c0_68 = arith.constant 0 : index
    %57 = vector.load %arg5[%c0_65, %c2_66, %c2_67, %c0_68] : memref<2x18x18x8xbf16, #tpu.memory_space<vmem>>, vector<2x16x16x8xbf16>
    %58 = tpu.concatenate %49, %50, %51, %52, %53, %54, %55, %56, %57 in 3 : vector<2x16x16x8xbf16>, vector<2x16x16x8xbf16>, vector<2x16x16x8xbf16>, vector<2x16x16x8xbf16>, vector<2x16x16x8xbf16>, vector<2x16x16x8xbf16>, vector<2x16x16x8xbf16>, vector<2x16x16x8xbf16>, vector<2x16x16x8xbf16> -> vector<2x16x16x72xbf16>
    %59 = vector.shape_cast %58 : vector<2x16x16x72xbf16> to vector<512x72xbf16>
    %c0_69 = arith.constant 0 : index
    %c0_70 = arith.constant 0 : index
    %60 = vector.load %arg3[%c0_69, %c0_70] : memref<72x128xbf16, #tpu.memory_space<vmem>>, vector<72x128xbf16>
    %cst_71 = arith.constant dense<0.000000e+00> : vector<512x128xf32>
    %61 = tpu.matmul %59, %60, %cst_71 {dimension_numbers = #tpu.dot_dimension_numbers<[1], [0], [0], [1], [0, 0, 1, 1], [], []>} : vector<512x72xbf16>, vector<72x128xbf16>, vector<512x128xf32> -> vector<512x128xf32>
    %62 = vector.extract_strided_slice %61 {offsets = [0, 0], sizes = [512, 8], strides = [1, 1]} : vector<512x128xf32> to vector<512x8xf32>
    %63 = vector.extract_strided_slice %62 {offsets = [0, 0], sizes = [32, 8], strides = [1, 1]} : vector<512x8xf32> to vector<32x8xf32>
    %64 = vector.extract_strided_slice %62 {offsets = [32, 0], sizes = [32, 8], strides = [1, 1]} : vector<512x8xf32> to vector<32x8xf32>
    %65 = vector.extract_strided_slice %62 {offsets = [64, 0], sizes = [32, 8], strides = [1, 1]} : vector<512x8xf32> to vector<32x8xf32>
    %66 = vector.extract_strided_slice %62 {offsets = [96, 0], sizes = [32, 8], strides = [1, 1]} : vector<512x8xf32> to vector<32x8xf32>
    %67 = vector.extract_strided_slice %62 {offsets = [128, 0], sizes = [32, 8], strides = [1, 1]} : vector<512x8xf32> to vector<32x8xf32>
    %68 = vector.extract_strided_slice %62 {offsets = [160, 0], sizes = [32, 8], strides = [1, 1]} : vector<512x8xf32> to vector<32x8xf32>
    %69 = vector.extract_strided_slice %62 {offsets = [192, 0], sizes = [32, 8], strides = [1, 1]} : vector<512x8xf32> to vector<32x8xf32>
    %70 = vector.extract_strided_slice %62 {offsets = [224, 0], sizes = [32, 8], strides = [1, 1]} : vector<512x8xf32> to vector<32x8xf32>
    %71 = vector.extract_strided_slice %62 {offsets = [256, 0], sizes = [32, 8], strides = [1, 1]} : vector<512x8xf32> to vector<32x8xf32>
    %72 = vector.extract_strided_slice %62 {offsets = [288, 0], sizes = [32, 8], strides = [1, 1]} : vector<512x8xf32> to vector<32x8xf32>
    %73 = vector.extract_strided_slice %62 {offsets = [320, 0], sizes = [32, 8], strides = [1, 1]} : vector<512x8xf32> to vector<32x8xf32>
    %74 = vector.extract_strided_slice %62 {offsets = [352, 0], sizes = [32, 8], strides = [1, 1]} : vector<512x8xf32> to vector<32x8xf32>
    %75 = vector.extract_strided_slice %62 {offsets = [384, 0], sizes = [32, 8], strides = [1, 1]} : vector<512x8xf32> to vector<32x8xf32>
    %76 = vector.extract_strided_slice %62 {offsets = [416, 0], sizes = [32, 8], strides = [1, 1]} : vector<512x8xf32> to vector<32x8xf32>
    %77 = vector.extract_strided_slice %62 {offsets = [448, 0], sizes = [32, 8], strides = [1, 1]} : vector<512x8xf32> to vector<32x8xf32>
    %78 = vector.extract_strided_slice %62 {offsets = [480, 0], sizes = [32, 8], strides = [1, 1]} : vector<512x8xf32> to vector<32x8xf32>
    %79 = tpu.concatenate %63, %64, %65, %66, %67, %68, %69, %70, %71, %72, %73, %74, %75, %76, %77, %78 in 1 : vector<32x8xf32>, vector<32x8xf32>, vector<32x8xf32>, vector<32x8xf32>, vector<32x8xf32>, vector<32x8xf32>, vector<32x8xf32>, vector<32x8xf32>, vector<32x8xf32>, vector<32x8xf32>, vector<32x8xf32>, vector<32x8xf32>, vector<32x8xf32>, vector<32x8xf32>, vector<32x8xf32>, vector<32x8xf32> -> vector<32x128xf32>
    %c0_72 = arith.constant 0 : index
    %c0_73 = arith.constant 0 : index
    %c0_74 = arith.constant 0 : index
    %80 = vector.load %arg4[%c0_72, %c0_73, %c0_74] : memref<1x32x128xf32, #tpu.memory_space<vmem>>, vector<1x32x128xf32>
    %81 = vector.shape_cast %80 : vector<1x32x128xf32> to vector<32x128xf32>
    %82 = vector.shape_cast %79 : vector<32x128xf32> to vector<1x32x128xf32>
    tpu.vector_store %arg4[%c0_72, %c0_73, %c0_74], %82 {strides = array<i32>} : memref<1x32x128xf32, #tpu.memory_space<vmem>>, vector<1x32x128xf32>,
    return
  }
  func.func @transform_0(%arg0: i32) -> (i32, i32, i32, i32) {
    %c0_i32 = arith.constant 0 : i32
    %c0_i32_0 = arith.constant 0 : i32
    %c0_i32_1 = arith.constant 0 : i32
    %c0_i32_2 = arith.constant 0 : i32
    return %arg0, %c0_i32, %c0_i32_0, %c0_i32_1 : i32, i32, i32, i32
  }
  func.func @transform_1(%arg0: i32) -> (i32, i32) {
    %c0_i32 = arith.constant 0 : i32
    %c0_i32_0 = arith.constant 0 : i32
    %c0_i32_1 = arith.constant 0 : i32
    return %c0_i32, %c0_i32_0 : i32, i32
  }
  func.func @transform_2(%arg0: i32) -> (i32, i32) {
    %c0_i32 = arith.constant 0 : i32
    %c0_i32_0 = arith.constant 0 : i32
    %c0_i32_1 = arith.constant 0 : i32
    return %c0_i32, %c0_i32_0 : i32, i32
  }
  func.func @transform_3(%arg0: i32) -> (i32, i32, i32) {
    %c0_i32 = arith.constant 0 : i32
    %c0_i32_0 = arith.constant 0 : i32
    %c0_i32_1 = arith.constant 0 : i32
    return %arg0, %c0_i32, %c0_i32_0 : i32, i32, i32
  }
}

</mosaic_0001>

<llo_original>
// kernel: tpu_custom_call.1
$region0: #{tpu_custom_call.1}
  #allocation0 [shape = 'u32[]', space=smem, size = 0x4, offset = 0x4, fixed_abs, tag = 'smem constant byte address 0x4 - core index']
  #allocation1 [shape = 'u32[144,128]{1,0:T(1,128)}', space=vmem, size = 0x12000, scoped, tag = 'internal scratch']
  #allocation2 [shape = 'bf16[2,18,18,8]{3,2,1,0:T(8,128)(2,1)}', space=vmem, size = 0x36000, scoped, tag = 'scratch operand']
  %s0 = inlined_call_operand.vmem [shape: bf16[2,18,18,4], index: 0, kind: input, shape index: {}]
  %s1 = inlined_call_operand.vmem [shape: bf16[36,128], index: 1, kind: input, shape index: {}]
  %s2 = inlined_call_operand.vmem [shape: bf16[72,128], index: 2, kind: input, shape index: {}]
  %s3 = inlined_call_operand.hbm [shape: f32[1,32,128], index: 3, kind: output, shape index: {}]
  %s4 = sld [smem:[#allocation0]]
  $region22: #{tpu_custom_call.1} parent=0
    _
  %s6 = ssub.s32 1, %s4
  %s7 = scalar_select 0, %s6, %s4
  $region1: #{tpu_custom_call.1} parent=0
    #allocation3 [shape = 'u8[16384]{0}', space=vmem, size = 0x4000, scoped, tag = 'output window, operand 0, single buffered']
    #allocation4 [shape = 's32[1]{0}', space=sflag, size = 0x4, scoped, tag = 'scoped memory for tpu_custom_call.1']
    %8 = vsyncpa [#allocation4], 0
    // Predicated region
    $region2: #{tpu_custom_call.1} parent=1 // pred_check
      _
    $region3: #{tpu_custom_call.1} parent=1 // pred_check_branch
      %10 = sbr.rel (0) target = $region5
    $region4: #{tpu_custom_call.1} parent=1 // pred_region
      _
    $region5: #{tpu_custom_call.1} parent=1 // pred_fallthru
      _
    // Predicated region
    $region6: #{tpu_custom_call.1} parent=1 // pred_check
      _
    $region7: #{tpu_custom_call.1} parent=1 // pred_check_branch
      %12 = sbr.rel (0) target = $region9
    $region8: #{tpu_custom_call.1} parent=1 // pred_region
      _
    $region9: #{tpu_custom_call.1} parent=1 // pred_fallthru
      _
    // Predicated region
    $region10: #{tpu_custom_call.1} parent=1 // pred_check
      _
    $region11: #{tpu_custom_call.1} parent=1 // pred_check_branch
      %14 = sbr.rel (0) target = $region13
    $region12: #{tpu_custom_call.1} parent=1 // pred_region
      _
    $region13: #{tpu_custom_call.1} parent=1 // pred_fallthru
      _
    %v16 = vld [vmem:[%s0] sm:$0xf]
    %v17 = vld [vmem:[%s0 + $0x4] sm:$0xf]
    %v18 = vld [vmem:[%s0 + $0x8] sm:$0x1]
    %v19 = vld [vmem:[%s0 + $0xc] sm:$0xf]
    %v20 = vld [vmem:[%s0 + $0x10] sm:$0xf]
    %v21 = vld [vmem:[%s0 + $0x14] sm:$0x1]
    %v22 = vld [vmem:[%s0 + $0x18] sm:$0xf]
    %v23 = vld [vmem:[%s0 + $0x1c] sm:$0xf]
    %v24 = vld [vmem:[%s0 + $0x20] sm:$0x1]
    %v25 = vld [vmem:[%s0 + $0x24] sm:$0xf]
    %v26 = vld [vmem:[%s0 + $0x28] sm:$0xf]
    %v27 = vld [vmem:[%s0 + $0x2c] sm:$0x1]
    %v28 = vld [vmem:[%s0 + $0x30] sm:$0xf]
    %v29 = vld [vmem:[%s0 + $0x34] sm:$0xf]
    %v30 = vld [vmem:[%s0 + $0x38] sm:$0x1]
    %v31 = vld [vmem:[%s0 + $0x3c] sm:$0xf]
    %v32 = vld [vmem:[%s0 + $0x40] sm:$0xf]
    %v33 = vld [vmem:[%s0 + $0x44] sm:$0x1]
    %v34 = vld [vmem:[%s0 + $0x48] sm:$0xf]
    %v35 = vld [vmem:[%s0 + $0x4c] sm:$0xf]
    %v36 = vld [vmem:[%s0 + $0x50] sm:$0x1]
    %v37 = vld [vmem:[%s0 + $0x54] sm:$0xf]
    %v38 = vld [vmem:[%s0 + $0x58] sm:$0xf]
    %v39 = vld [vmem:[%s0 + $0x5c] sm:$0x1]
    %v40 = vld [vmem:[%s0 + $0x60] sm:$0xf]
    %v41 = vld [vmem:[%s0 + $0x64] sm:$0xf]
    %v42 = vld [vmem:[%s0 + $0x68] sm:$0x1]
    %v43 = vld [vmem:[%s0 + $0x6c] sm:$0xf]
    %v44 = vld [vmem:[%s0 + $0x70] sm:$0xf]
    %v45 = vld [vmem:[%s0 + $0x74] sm:$0x1]
    %v46 = vld [vmem:[%s0 + $0x78] sm:$0xf]
    %v47 = vld [vmem:[%s0 + $0x7c] sm:$0xf]
    %v48 = vld [vmem:[%s0 + $0x80] sm:$0x1]
    %v49 = vld [vmem:[%s0 + $0x84] sm:$0xf]
    %v50 = vld [vmem:[%s0 + $0x88] sm:$0xf]
    %v51 = vld [vmem:[%s0 + $0x8c] sm:$0x1]
    %v52 = vld [vmem:[%s0 + $0x90] sm:$0xf]
    %v53 = vld [vmem:[%s0 + $0x94] sm:$0xf]
    %v54 = vld [vmem:[%s0 + $0x98] sm:$0x1]
    %v55 = vld [vmem:[%s0 + $0x9c] sm:$0xf]
    %v56 = vld [vmem:[%s0 + $0xa0] sm:$0xf]
    %v57 = vld [vmem:[%s0 + $0xa4] sm:$0x1]
    %v58 = vld [vmem:[%s0 + $0xa8] sm:$0xf]
    %v59 = vld [vmem:[%s0 + $0xac] sm:$0xf]
    %v60 = vld [vmem:[%s0 + $0xb0] sm:$0x1]
    %v61 = vld [vmem:[%s0 + $0xb4] sm:$0xf]
    %v62 = vld [vmem:[%s0 + $0xb8] sm:$0xf]
    %v63 = vld [vmem:[%s0 + $0xbc] sm:$0x1]
    %v64 = vld [vmem:[%s0 + $0xc0] sm:$0xf]
    %v65 = vld [vmem:[%s0 + $0xc4] sm:$0xf]
    %v66 = vld [vmem:[%s0 + $0xc8] sm:$0x1]
    %v67 = vld [vmem:[%s0 + $0xcc] sm:$0xf]
    %v68 = vld [vmem:[%s0 + $0xd0] sm:$0xf]
    %v69 = vld [vmem:[%s0 + $0xd4] sm:$0x1]
    %v70 = vld [vmem:[%s0 + $0xd8] sm:$0xf]
    %v71 = vld [vmem:[%s0 + $0xdc] sm:$0xf]
    %v72 = vld [vmem:[%s0 + $0xe0] sm:$0x1]
    %v73 = vld [vmem:[%s0 + $0xe4] sm:$0xf]
    %v74 = vld [vmem:[%s0 + $0xe8] sm:$0xf]
    %v75 = vld [vmem:[%s0 + $0xec] sm:$0x1]
    %v76 = vld [vmem:[%s0 + $0xf0] sm:$0xf]
    %v77 = vld [vmem:[%s0 + $0xf4] sm:$0xf]
    %v78 = vld [vmem:[%s0 + $0xf8] sm:$0x1]
    %v79 = vld [vmem:[%s0 + $0xfc] sm:$0xf]
    %v80 = vld [vmem:[%s0 + $0x100] sm:$0xf]
    %v81 = vld [vmem:[%s0 + $0x104] sm:$0x1]
    %v82 = vld [vmem:[%s0 + $0x108] sm:$0xf]
    %v83 = vld [vmem:[%s0 + $0x10c] sm:$0xf]
    %v84 = vld [vmem:[%s0 + $0x110] sm:$0x1]
    %v85 = vld [vmem:[%s0 + $0x114] sm:$0xf]
    %v86 = vld [vmem:[%s0 + $0x118] sm:$0xf]
    %v87 = vld [vmem:[%s0 + $0x11c] sm:$0x1]
    %v88 = vld [vmem:[%s0 + $0x120] sm:$0xf]
    %v89 = vld [vmem:[%s0 + $0x124] sm:$0xf]
    %v90 = vld [vmem:[%s0 + $0x128] sm:$0x1]
    %v91 = vld [vmem:[%s0 + $0x12c] sm:$0xf]
    %v92 = vld [vmem:[%s0 + $0x130] sm:$0xf]
    %v93 = vld [vmem:[%s0 + $0x134] sm:$0x1]
    %v94 = vld [vmem:[%s0 + $0x138] sm:$0xf]
    %v95 = vld [vmem:[%s0 + $0x13c] sm:$0xf]
    %v96 = vld [vmem:[%s0 + $0x140] sm:$0x1]
    %v97 = vld [vmem:[%s0 + $0x144] sm:$0xf]
    %v98 = vld [vmem:[%s0 + $0x148] sm:$0xf]
    %v99 = vld [vmem:[%s0 + $0x14c] sm:$0x1]
    %v100 = vld [vmem:[%s0 + $0x150] sm:$0xf]
    %v101 = vld [vmem:[%s0 + $0x154] sm:$0xf]
    %v102 = vld [vmem:[%s0 + $0x158] sm:$0x1]
    %v103 = vld [vmem:[%s0 + $0x15c] sm:$0xf]
    %v104 = vld [vmem:[%s0 + $0x160] sm:$0xf]
    %v105 = vld [vmem:[%s0 + $0x164] sm:$0x1]
    %v106 = vld [vmem:[%s0 + $0x168] sm:$0xf]
    %v107 = vld [vmem:[%s0 + $0x16c] sm:$0xf]
    %v108 = vld [vmem:[%s0 + $0x170] sm:$0x1]
    %v109 = vld [vmem:[%s0 + $0x174] sm:$0xf]
    %v110 = vld [vmem:[%s0 + $0x178] sm:$0xf]
    %v111 = vld [vmem:[%s0 + $0x17c] sm:$0x1]
    %v112 = vld [vmem:[%s0 + $0x180] sm:$0xf]
    %v113 = vld [vmem:[%s0 + $0x184] sm:$0xf]
    %v114 = vld [vmem:[%s0 + $0x188] sm:$0x1]
    %v115 = vld [vmem:[%s0 + $0x18c] sm:$0xf]
    %v116 = vld [vmem:[%s0 + $0x190] sm:$0xf]
    %v117 = vld [vmem:[%s0 + $0x194] sm:$0x1]
    %v118 = vld [vmem:[%s0 + $0x198] sm:$0xf]
    %v119 = vld [vmem:[%s0 + $0x19c] sm:$0xf]
    %v120 = vld [vmem:[%s0 + $0x1a0] sm:$0x1]
    %v121 = vld [vmem:[%s0 + $0x1a4] sm:$0xf]
    %v122 = vld [vmem:[%s0 + $0x1a8] sm:$0xf]
    %v123 = vld [vmem:[%s0 + $0x1ac] sm:$0x1]
    %v188 = vunpack.c.l.b16 %v16
    %v189 = vunpack.c.l.b16 %v17
    %v190 = vunpack.c.l.b16 %v19
    %v191 = vunpack.c.l.b16 %v20
    %v192 = vunpack.c.l.b16 %v22
    %v193 = vunpack.c.l.b16 %v23
    %v194 = vunpack.c.l.b16 %v25
    %v195 = vunpack.c.l.b16 %v26
    %v196 = vunpack.c.l.b16 %v28
    %v197 = vunpack.c.l.b16 %v29
    %v198 = vunpack.c.l.b16 %v31
    %v199 = vunpack.c.l.b16 %v32
    %v200 = vunpack.c.l.b16 %v34
    %v201 = vunpack.c.l.b16 %v35
    %v202 = vunpack.c.l.b16 %v37
    %v203 = vunpack.c.l.b16 %v38
    %v204 = vunpack.c.l.b16 %v40
    %v205 = vunpack.c.l.b16 %v41
    %v206 = vunpack.c.l.b16 %v43
    %v207 = vunpack.c.l.b16 %v44
    %v208 = vunpack.c.l.b16 %v46
    %v209 = vunpack.c.l.b16 %v47
    %v210 = vunpack.c.l.b16 %v49
    %v211 = vunpack.c.l.b16 %v50
    %v212 = vunpack.c.l.b16 %v52
    %v213 = vunpack.c.l.b16 %v53
    %v214 = vunpack.c.l.b16 %v55
    %v215 = vunpack.c.l.b16 %v56
    %v216 = vunpack.c.l.b16 %v58
    %v217 = vunpack.c.l.b16 %v59
    %v218 = vunpack.c.l.b16 %v61
    %v219 = vunpack.c.l.b16 %v62
    %v220 = vunpack.c.l.b16 %v70
    %v221 = vunpack.c.l.b16 %v71
    %v222 = vunpack.c.l.b16 %v73
    %v223 = vunpack.c.l.b16 %v74
    %v224 = vunpack.c.l.b16 %v76
    %v225 = vunpack.c.l.b16 %v77
    %v226 = vunpack.c.l.b16 %v79
    %v227 = vunpack.c.l.b16 %v80
    %v228 = vunpack.c.l.b16 %v82
    %v229 = vunpack.c.l.b16 %v83
    %v230 = vunpack.c.l.b16 %v85
    %v231 = vunpack.c.l.b16 %v86
    %v232 = vunpack.c.l.b16 %v88
    %v233 = vunpack.c.l.b16 %v89
    %v234 = vunpack.c.l.b16 %v91
    %v235 = vunpack.c.l.b16 %v92
    %v236 = vunpack.c.l.b16 %v94
    %v237 = vunpack.c.l.b16 %v95
    %v238 = vunpack.c.l.b16 %v97
    %v239 = vunpack.c.l.b16 %v98
    %v240 = vunpack.c.l.b16 %v100
    %v241 = vunpack.c.l.b16 %v101
    %v242 = vunpack.c.l.b16 %v103
    %v243 = vunpack.c.l.b16 %v104
    %v244 = vunpack.c.l.b16 %v106
    %v245 = vunpack.c.l.b16 %v107
    %v246 = vunpack.c.l.b16 %v109
    %v247 = vunpack.c.l.b16 %v110
    %v248 = vunpack.c.l.b16 %v112
    %v249 = vunpack.c.l.b16 %v113
    %v250 = vunpack.c.l.b16 %v115
    %v251 = vunpack.c.l.b16 %v116
    %v252 = vpack.c.b16 %v189, %v188
    %v253 = vpack.c.b16 %v191, %v190
    %v254 = vpack.c.b16 %v193, %v192
    %v255 = vpack.c.b16 %v195, %v194
    %v256 = vpack.c.b16 %v197, %v196
    %v257 = vpack.c.b16 %v199, %v198
    %v258 = vpack.c.b16 %v201, %v200
    %v259 = vpack.c.b16 %v203, %v202
    %v260 = vpack.c.b16 %v205, %v204
    %v261 = vpack.c.b16 %v207, %v206
    %v262 = vpack.c.b16 %v209, %v208
    %v263 = vpack.c.b16 %v211, %v210
    %v264 = vpack.c.b16 %v213, %v212
    %v265 = vpack.c.b16 %v215, %v214
    %v266 = vpack.c.b16 %v217, %v216
    %v267 = vpack.c.b16 %v219, %v218
    %v268 = vpack.c.b16 %v221, %v220
    %v269 = vpack.c.b16 %v223, %v222
    %v270 = vpack.c.b16 %v225, %v224
    %v271 = vpack.c.b16 %v227, %v226
    %v272 = vpack.c.b16 %v229, %v228
    %v273 = vpack.c.b16 %v231, %v230
    %v274 = vpack.c.b16 %v233, %v232
    %v275 = vpack.c.b16 %v235, %v234
    %v276 = vpack.c.b16 %v237, %v236
    %v277 = vpack.c.b16 %v239, %v238
    %v278 = vpack.c.b16 %v241, %v240
    %v279 = vpack.c.b16 %v243, %v242
    %v280 = vpack.c.b16 %v245, %v244
    %v281 = vpack.c.b16 %v247, %v246
    %v282 = vpack.c.b16 %v249, %v248
    %v283 = vpack.c.b16 %v251, %v250
    %v316 = vunpack.c.l.b16 %v18
    %v317 = vunpack.c.l.b16 %v21
    %v318 = vunpack.c.l.b16 %v24
    %v319 = vunpack.c.l.b16 %v27
    %v320 = vunpack.c.l.b16 %v30
    %v321 = vunpack.c.l.b16 %v33
    %v322 = vunpack.c.l.b16 %v36
    %v323 = vunpack.c.l.b16 %v39
    %v324 = vunpack.c.l.b16 %v42
    %v325 = vunpack.c.l.b16 %v45
    %v326 = vunpack.c.l.b16 %v48
    %v327 = vunpack.c.l.b16 %v51
    %v328 = vunpack.c.l.b16 %v54
    %v329 = vunpack.c.l.b16 %v57
    %v330 = vunpack.c.l.b16 %v60
    %v331 = vunpack.c.l.b16 %v63
    %v332 = vunpack.c.l.b16 %v72
    %v333 = vunpack.c.l.b16 %v75
    %v334 = vunpack.c.l.b16 %v78
    %v335 = vunpack.c.l.b16 %v81
    %v336 = vunpack.c.l.b16 %v84
    %v337 = vunpack.c.l.b16 %v87
    %v338 = vunpack.c.l.b16 %v90
    %v339 = vunpack.c.l.b16 %v93
    %v340 = vunpack.c.l.b16 %v96
    %v341 = vunpack.c.l.b16 %v99
    %v342 = vunpack.c.l.b16 %v102
    %v343 = vunpack.c.l.b16 %v105
    %v344 = vunpack.c.l.b16 %v108
    %v345 = vunpack.c.l.b16 %v111
    %v346 = vunpack.c.l.b16 %v114
    %v347 = vunpack.c.l.b16 %v117
    %v348 = vpack.c.b16 %v316, %v316
    %v349 = vpack.c.b16 %v317, %v317
    %v350 = vpack.c.b16 %v318, %v318
    %v351 = vpack.c.b16 %v319, %v319
    %v352 = vpack.c.b16 %v320, %v320
    %v353 = vpack.c.b16 %v321, %v321
    %v354 = vpack.c.b16 %v322, %v322
    %v355 = vpack.c.b16 %v323, %v323
    %v356 = vpack.c.b16 %v324, %v324
    %v357 = vpack.c.b16 %v325, %v325
    %v358 = vpack.c.b16 %v326, %v326
    %v359 = vpack.c.b16 %v327, %v327
    %v360 = vpack.c.b16 %v328, %v328
    %v361 = vpack.c.b16 %v329, %v329
    %v362 = vpack.c.b16 %v330, %v330
    %v363 = vpack.c.b16 %v331, %v331
    %v364 = vpack.c.b16 %v332, %v332
    %v365 = vpack.c.b16 %v333, %v333
    %v366 = vpack.c.b16 %v334, %v334
    %v367 = vpack.c.b16 %v335, %v335
    %v368 = vpack.c.b16 %v336, %v336
    %v369 = vpack.c.b16 %v337, %v337
    %v370 = vpack.c.b16 %v338, %v338
    %v371 = vpack.c.b16 %v339, %v339
    %v372 = vpack.c.b16 %v340, %v340
    %v373 = vpack.c.b16 %v341, %v341
    %v374 = vpack.c.b16 %v342, %v342
    %v375 = vpack.c.b16 %v343, %v343
    %v376 = vpack.c.b16 %v344, %v344
    %v377 = vpack.c.b16 %v345, %v345
    %v378 = vpack.c.b16 %v346, %v346
    %v379 = vpack.c.b16 %v347, %v347
    %vm380 = vsmask.f32 7424
    %v382 = vshrl.u32 %v252, 16
    %v384 = vshll.u32 %v252, 16
    %v386 = vrot.slane %v384, 1
    %v387 = vor.u32 %v382, %v386
    %v389 = vshll.u32 %v348, 16
    %v391 = vrot.slane %v389, 1
    %v392 = vsel %vm380, %v387, %v391
    %v394 = vshrl.u32 %v253, 16
    %v396 = vshll.u32 %v253, 16
    %v398 = vrot.slane %v396, 1
    %v399 = vor.u32 %v394, %v398
    %v401 = vshll.u32 %v349, 16
    %v403 = vrot.slane %v401, 1
    %v404 = vsel %vm380, %v399, %v403
    %v406 = vshrl.u32 %v254, 16
    %v408 = vshll.u32 %v254, 16
    %v410 = vrot.slane %v408, 1
    %v411 = vor.u32 %v406, %v410
    %v413 = vshll.u32 %v350, 16
    %v415 = vrot.slane %v413, 1
    %v416 = vsel %vm380, %v411, %v415
    %v418 = vshrl.u32 %v255, 16
    %v420 = vshll.u32 %v255, 16
    %v422 = vrot.slane %v420, 1
    %v423 = vor.u32 %v418, %v422
    %v425 = vshll.u32 %v351, 16
    %v427 = vrot.slane %v425, 1
    %v428 = vsel %vm380, %v423, %v427
    %v430 = vshrl.u32 %v256, 16
    %v432 = vshll.u32 %v256, 16
    %v434 = vrot.slane %v432, 1
    %v435 = vor.u32 %v430, %v434
    %v437 = vshll.u32 %v352, 16
    %v439 = vrot.slane %v437, 1
    %v440 = vsel %vm380, %v435, %v439
    %v442 = vshrl.u32 %v257, 16
    %v444 = vshll.u32 %v257, 16
    %v446 = vrot.slane %v444, 1
    %v447 = vor.u32 %v442, %v446
    %v449 = vshll.u32 %v353, 16
    %v451 = vrot.slane %v449, 1
    %v452 = vsel %vm380, %v447, %v451
    %v454 = vshrl.u32 %v258, 16
    %v456 = vshll.u32 %v258, 16
    %v458 = vrot.slane %v456, 1
    %v459 = vor.u32 %v454, %v458
    %v461 = vshll.u32 %v354, 16
    %v463 = vrot.slane %v461, 1
    %v464 = vsel %vm380, %v459, %v463
    %v466 = vshrl.u32 %v259, 16
    %v468 = vshll.u32 %v259, 16
    %v470 = vrot.slane %v468, 1
    %v471 = vor.u32 %v466, %v470
    %v473 = vshll.u32 %v355, 16
    %v475 = vrot.slane %v473, 1
    %v476 = vsel %vm380, %v471, %v475
    %v478 = vshrl.u32 %v260, 16
    %v480 = vshll.u32 %v260, 16
    %v482 = vrot.slane %v480, 1
    %v483 = vor.u32 %v478, %v482
    %v485 = vshll.u32 %v356, 16
    %v487 = vrot.slane %v485, 1
    %v488 = vsel %vm380, %v483, %v487
    %v490 = vshrl.u32 %v261, 16
    %v492 = vshll.u32 %v261, 16
    %v494 = vrot.slane %v492, 1
    %v495 = vor.u32 %v490, %v494
    %v497 = vshll.u32 %v357, 16
    %v499 = vrot.slane %v497, 1
    %v500 = vsel %vm380, %v495, %v499
    %v502 = vshrl.u32 %v262, 16
    %v504 = vshll.u32 %v262, 16
    %v506 = vrot.slane %v504, 1
    %v507 = vor.u32 %v502, %v506
    %v509 = vshll.u32 %v358, 16
    %v511 = vrot.slane %v509, 1
    %v512 = vsel %vm380, %v507, %v511
    %v514 = vshrl.u32 %v263, 16
    %v516 = vshll.u32 %v263, 16
    %v518 = vrot.slane %v516, 1
    %v519 = vor.u32 %v514, %v518
    %v521 = vshll.u32 %v359, 16
    %v523 = vrot.slane %v521, 1
    %v524 = vsel %vm380, %v519, %v523
    %v526 = vshrl.u32 %v264, 16
    %v528 = vshll.u32 %v264, 16
    %v530 = vrot.slane %v528, 1
    %v531 = vor.u32 %v526, %v530
    %v533 = vshll.u32 %v360, 16
    %v535 = vrot.slane %v533, 1
    %v536 = vsel %vm380, %v531, %v535
    %v538 = vshrl.u32 %v265, 16
    %v540 = vshll.u32 %v265, 16
    %v542 = vrot.slane %v540, 1
    %v543 = vor.u32 %v538, %v542
    %v545 = vshll.u32 %v361, 16
    %v547 = vrot.slane %v545, 1
    %v548 = vsel %vm380, %v543, %v547
    %v550 = vshrl.u32 %v266, 16
    %v552 = vshll.u32 %v266, 16
    %v554 = vrot.slane %v552, 1
    %v555 = vor.u32 %v550, %v554
    %v557 = vshll.u32 %v362, 16
    %v559 = vrot.slane %v557, 1
    %v560 = vsel %vm380, %v555, %v559
    %v562 = vshrl.u32 %v267, 16
    %v564 = vshll.u32 %v267, 16
    %v566 = vrot.slane %v564, 1
    %v567 = vor.u32 %v562, %v566
    %v569 = vshll.u32 %v363, 16
    %v571 = vrot.slane %v569, 1
    %v572 = vsel %vm380, %v567, %v571
    %v574 = vshrl.u32 %v268, 16
    %v576 = vshll.u32 %v268, 16
    %v578 = vrot.slane %v576, 1
    %v579 = vor.u32 %v574, %v578
    %v581 = vshll.u32 %v364, 16
    %v583 = vrot.slane %v581, 1
    %v584 = vsel %vm380, %v579, %v583
    %v586 = vshrl.u32 %v269, 16
    %v588 = vshll.u32 %v269, 16
    %v590 = vrot.slane %v588, 1
    %v591 = vor.u32 %v586, %v590
    %v593 = vshll.u32 %v365, 16
    %v595 = vrot.slane %v593, 1
    %v596 = vsel %vm380, %v591, %v595
    %v598 = vshrl.u32 %v270, 16
    %v600 = vshll.u32 %v270, 16
    %v602 = vrot.slane %v600, 1
    %v603 = vor.u32 %v598, %v602
    %v605 = vshll.u32 %v366, 16
    %v607 = vrot.slane %v605, 1
    %v608 = vsel %vm380, %v603, %v607
    %v610 = vshrl.u32 %v271, 16
    %v612 = vshll.u32 %v271, 16
    %v614 = vrot.slane %v612, 1
    %v615 = vor.u32 %v610, %v614
    %v617 = vshll.u32 %v367, 16
    %v619 = vrot.slane %v617, 1
    %v620 = vsel %vm380, %v615, %v619
    %v622 = vshrl.u32 %v272, 16
    %v624 = vshll.u32 %v272, 16
    %v626 = vrot.slane %v624, 1
    %v627 = vor.u32 %v622, %v626
    %v629 = vshll.u32 %v368, 16
    %v631 = vrot.slane %v629, 1
    %v632 = vsel %vm380, %v627, %v631
    %v634 = vshrl.u32 %v273, 16
    %v636 = vshll.u32 %v273, 16
    %v638 = vrot.slane %v636, 1
    %v639 = vor.u32 %v634, %v638
    %v641 = vshll.u32 %v369, 16
    %v643 = vrot.slane %v641, 1
    %v644 = vsel %vm380, %v639, %v643
    %v646 = vshrl.u32 %v274, 16
    %v648 = vshll.u32 %v274, 16
    %v650 = vrot.slane %v648, 1
    %v651 = vor.u32 %v646, %v650
    %v653 = vshll.u32 %v370, 16
    %v655 = vrot.slane %v653, 1
    %v656 = vsel %vm380, %v651, %v655
    %v658 = vshrl.u32 %v275, 16
    %v660 = vshll.u32 %v275, 16
    %v662 = vrot.slane %v660, 1
    %v663 = vor.u32 %v658, %v662
    %v665 = vshll.u32 %v371, 16
    %v667 = vrot.slane %v665, 1
    %v668 = vsel %vm380, %v663, %v667
    %v670 = vshrl.u32 %v276, 16
    %v672 = vshll.u32 %v276, 16
    %v674 = vrot.slane %v672, 1
    %v675 = vor.u32 %v670, %v674
    %v677 = vshll.u32 %v372, 16
    %v679 = vrot.slane %v677, 1
    %v680 = vsel %vm380, %v675, %v679
    %v682 = vshrl.u32 %v277, 16
    %v684 = vshll.u32 %v277, 16
    %v686 = vrot.slane %v684, 1
    %v687 = vor.u32 %v682, %v686
    %v689 = vshll.u32 %v373, 16
    %v691 = vrot.slane %v689, 1
    %v692 = vsel %vm380, %v687, %v691
    %v694 = vshrl.u32 %v278, 16
    %v696 = vshll.u32 %v278, 16
    %v698 = vrot.slane %v696, 1
    %v699 = vor.u32 %v694, %v698
    %v701 = vshll.u32 %v374, 16
    %v703 = vrot.slane %v701, 1
    %v704 = vsel %vm380, %v699, %v703
    %v706 = vshrl.u32 %v279, 16
    %v708 = vshll.u32 %v279, 16
    %v710 = vrot.slane %v708, 1
    %v711 = vor.u32 %v706, %v710
    %v713 = vshll.u32 %v375, 16
    %v715 = vrot.slane %v713, 1
    %v716 = vsel %vm380, %v711, %v715
    %v718 = vshrl.u32 %v280, 16
    %v720 = vshll.u32 %v280, 16
    %v722 = vrot.slane %v720, 1
    %v723 = vor.u32 %v718, %v722
    %v725 = vshll.u32 %v376, 16
    %v727 = vrot.slane %v725, 1
    %v728 = vsel %vm380, %v723, %v727
    %v730 = vshrl.u32 %v281, 16
    %v732 = vshll.u32 %v281, 16
    %v734 = vrot.slane %v732, 1
    %v735 = vor.u32 %v730, %v734
    %v737 = vshll.u32 %v377, 16
    %v739 = vrot.slane %v737, 1
    %v740 = vsel %vm380, %v735, %v739
    %v742 = vshrl.u32 %v282, 16
    %v744 = vshll.u32 %v282, 16
    %v746 = vrot.slane %v744, 1
    %v747 = vor.u32 %v742, %v746
    %v749 = vshll.u32 %v378, 16
    %v751 = vrot.slane %v749, 1
    %v752 = vsel %vm380, %v747, %v751
    %v754 = vshrl.u32 %v283, 16
    %v756 = vshll.u32 %v283, 16
    %v758 = vrot.slane %v756, 1
    %v759 = vor.u32 %v754, %v758
    %v761 = vshll.u32 %v379, 16
    %v763 = vrot.slane %v761, 1
    %v764 = vsel %vm380, %v759, %v763
    %765 = vrot.lane.b32.xlu0 %v392, 4
    %v766 = vpop.permute.xlu0 %765
    %767 = vrot.lane.b32.xlu0 %v404, 4
    %v768 = vpop.permute.xlu0 %767
    %769 = vrot.lane.b32.xlu0 %v416, 4
    %v770 = vpop.permute.xlu0 %769
    %771 = vrot.lane.b32.xlu0 %v428, 4
    %v772 = vpop.permute.xlu0 %771
    %773 = vrot.lane.b32.xlu0 %v440, 4
    %v774 = vpop.permute.xlu0 %773
    %775 = vrot.lane.b32.xlu0 %v452, 4
    %v776 = vpop.permute.xlu0 %775
    %777 = vrot.lane.b32.xlu0 %v464, 4
    %v778 = vpop.permute.xlu0 %777
    %779 = vrot.lane.b32.xlu0 %v476, 4
    %v780 = vpop.permute.xlu0 %779
    %781 = vrot.lane.b32.xlu0 %v488, 4
    %v782 = vpop.permute.xlu0 %781
    %783 = vrot.lane.b32.xlu0 %v500, 4
    %v784 = vpop.permute.xlu0 %783
    %785 = vrot.lane.b32.xlu0 %v512, 4
    %v786 = vpop.permute.xlu0 %785
    %787 = vrot.lane.b32.xlu0 %v524, 4
    %v788 = vpop.permute.xlu0 %787
    %789 = vrot.lane.b32.xlu0 %v536, 4
    %v790 = vpop.permute.xlu0 %789
    %791 = vrot.lane.b32.xlu0 %v548, 4
    %v792 = vpop.permute.xlu0 %791
    %793 = vrot.lane.b32.xlu0 %v560, 4
    %v794 = vpop.permute.xlu0 %793
    %795 = vrot.lane.b32.xlu0 %v572, 4
    %v796 = vpop.permute.xlu0 %795
    %797 = vrot.lane.b32.xlu0 %v584, 4
    %v798 = vpop.permute.xlu0 %797
    %799 = vrot.lane.b32.xlu0 %v596, 4
    %v800 = vpop.permute.xlu0 %799
    %801 = vrot.lane.b32.xlu0 %v608, 4
    %v802 = vpop.permute.xlu0 %801
    %803 = vrot.lane.b32.xlu0 %v620, 4
    %v804 = vpop.permute.xlu0 %803
    %805 = vrot.lane.b32.xlu0 %v632, 4
    %v806 = vpop.permute.xlu0 %805
    %807 = vrot.lane.b32.xlu0 %v644, 4
    %v808 = vpop.permute.xlu0 %807
    %809 = vrot.lane.b32.xlu0 %v656, 4
    %v810 = vpop.permute.xlu0 %809
    %811 = vrot.lane.b32.xlu0 %v668, 4
    %v812 = vpop.permute.xlu0 %811
    %813 = vrot.lane.b32.xlu0 %v680, 4
    %v814 = vpop.permute.xlu0 %813
    %815 = vrot.lane.b32.xlu0 %v692, 4
    %v816 = vpop.permute.xlu0 %815
    %817 = vrot.lane.b32.xlu0 %v704, 4
    %v818 = vpop.permute.xlu0 %817
    %819 = vrot.lane.b32.xlu0 %v716, 4
    %v820 = vpop.permute.xlu0 %819
    %821 = vrot.lane.b32.xlu0 %v728, 4
    %v822 = vpop.permute.xlu0 %821
    %823 = vrot.lane.b32.xlu0 %v740, 4
    %v824 = vpop.permute.xlu0 %823
    %825 = vrot.lane.b32.xlu0 %v752, 4
    %v826 = vpop.permute.xlu0 %825
    %827 = vrot.lane.b32.xlu0 %v764, 4
    %v828 = vpop.permute.xlu0 %827
    %vm829 = vcmask 1046528
    %v830 = vrot.slane %v252, 1
    %v831 = vrot.slane %v348, 1
    %v832 = vsel %vm829, %v830, %v831
    %v833 = vrot.slane %v253, 1
    %v834 = vrot.slane %v349, 1
    %v835 = vsel %vm829, %v833, %v834
    %v836 = vrot.slane %v254, 1
    %v837 = vrot.slane %v350, 1
    %v838 = vsel %vm829, %v836, %v837
    %v839 = vrot.slane %v255, 1
    %v840 = vrot.slane %v351, 1
    %v841 = vsel %vm829, %v839, %v840
    %v842 = vrot.slane %v256, 1
    %v843 = vrot.slane %v352, 1
    %v844 = vsel %vm829, %v842, %v843
    %v845 = vrot.slane %v257, 1
    %v846 = vrot.slane %v353, 1
    %v847 = vsel %vm829, %v845, %v846
    %v848 = vrot.slane %v258, 1
    %v849 = vrot.slane %v354, 1
    %v850 = vsel %vm829, %v848, %v849
    %v851 = vrot.slane %v259, 1
    %v852 = vrot.slane %v355, 1
    %v853 = vsel %vm829, %v851, %v852
    %v854 = vrot.slane %v260, 1
    %v855 = vrot.slane %v356, 1
    %v856 = vsel %vm829, %v854, %v855
    %v857 = vrot.slane %v261, 1
    %v858 = vrot.slane %v357, 1
    %v859 = vsel %vm829, %v857, %v858
    %v860 = vrot.slane %v262, 1
    %v861 = vrot.slane %v358, 1
    %v862 = vsel %vm829, %v860, %v861
    %v863 = vrot.slane %v263, 1
    %v864 = vrot.slane %v359, 1
    %v865 = vsel %vm829, %v863, %v864
    %v866 = vrot.slane %v264, 1
    %v867 = vrot.slane %v360, 1
    %v868 = vsel %vm829, %v866, %v867
    %v869 = vrot.slane %v265, 1
    %v870 = vrot.slane %v361, 1
    %v871 = vsel %vm829, %v869, %v870
    %v872 = vrot.slane %v266, 1
    %v873 = vrot.slane %v362, 1
    %v874 = vsel %vm829, %v872, %v873
    %v875 = vrot.slane %v267, 1
    %v876 = vrot.slane %v363, 1
    %v877 = vsel %vm829, %v875, %v876
    %v878 = vrot.slane %v268, 1
    %v879 = vrot.slane %v364, 1
    %v880 = vsel %vm829, %v878, %v879
    %v881 = vrot.slane %v269, 1
    %v882 = vrot.slane %v365, 1
    %v883 = vsel %vm829, %v881, %v882
    %v884 = vrot.slane %v270, 1
    %v885 = vrot.slane %v366, 1
    %v886 = vsel %vm829, %v884, %v885
    %v887 = vrot.slane %v271, 1
    %v888 = vrot.slane %v367, 1
    %v889 = vsel %vm829, %v887, %v888
    %v890 = vrot.slane %v272, 1
    %v891 = vrot.slane %v368, 1
    %v892 = vsel %vm829, %v890, %v891
    %v893 = vrot.slane %v273, 1
    %v894 = vrot.slane %v369, 1
    %v895 = vsel %vm829, %v893, %v894
    %v896 = vrot.slane %v274, 1
    %v897 = vrot.slane %v370, 1
    %v898 = vsel %vm829, %v896, %v897
    %v899 = vrot.slane %v275, 1
    %v900 = vrot.slane %v371, 1
    %v901 = vsel %vm829, %v899, %v900
    %v902 = vrot.slane %v276, 1
    %v903 = vrot.slane %v372, 1
    %v904 = vsel %vm829, %v902, %v903
    %v905 = vrot.slane %v277, 1
    %v906 = vrot.slane %v373, 1
    %v907 = vsel %vm829, %v905, %v906
    %v908 = vrot.slane %v278, 1
    %v909 = vrot.slane %v374, 1
    %v910 = vsel %vm829, %v908, %v909
    %v911 = vrot.slane %v279, 1
    %v912 = vrot.slane %v375, 1
    %v913 = vsel %vm829, %v911, %v912
    %v914 = vrot.slane %v280, 1
    %v915 = vrot.slane %v376, 1
    %v916 = vsel %vm829, %v914, %v915
    %v917 = vrot.slane %v281, 1
    %v918 = vrot.slane %v377, 1
    %v919 = vsel %vm829, %v917, %v918
    %v920 = vrot.slane %v282, 1
    %v921 = vrot.slane %v378, 1
    %v922 = vsel %vm829, %v920, %v921
    %v923 = vrot.slane %v283, 1
    %v924 = vrot.slane %v379, 1
    %v925 = vsel %vm829, %v923, %v924
    %926 = vrot.lane.b32.xlu0 %v832, 8
    %v927 = vpop.permute.xlu0 %926
    %928 = vrot.lane.b32.xlu0 %v835, 8
    %v929 = vpop.permute.xlu0 %928
    %930 = vrot.lane.b32.xlu0 %v838, 8
    %v931 = vpop.permute.xlu0 %930
    %932 = vrot.lane.b32.xlu0 %v841, 8
    %v933 = vpop.permute.xlu0 %932
    %934 = vrot.lane.b32.xlu0 %v844, 8
    %v935 = vpop.permute.xlu0 %934
    %936 = vrot.lane.b32.xlu0 %v847, 8
    %v937 = vpop.permute.xlu0 %936
    %938 = vrot.lane.b32.xlu0 %v850, 8
    %v939 = vpop.permute.xlu0 %938
    %940 = vrot.lane.b32.xlu0 %v853, 8
    %v941 = vpop.permute.xlu0 %940
    %942 = vrot.lane.b32.xlu0 %v856, 8
    %v943 = vpop.permute.xlu0 %942
    %944 = vrot.lane.b32.xlu0 %v859, 8
    %v945 = vpop.permute.xlu0 %944
    %946 = vrot.lane.b32.xlu0 %v862, 8
    %v947 = vpop.permute.xlu0 %946
    %948 = vrot.lane.b32.xlu0 %v865, 8
    %v949 = vpop.permute.xlu0 %948
    %950 = vrot.lane.b32.xlu0 %v868, 8
    %v951 = vpop.permute.xlu0 %950
    %952 = vrot.lane.b32.xlu0 %v871, 8
    %v953 = vpop.permute.xlu0 %952
    %954 = vrot.lane.b32.xlu0 %v874, 8
    %v955 = vpop.permute.xlu0 %954
    %956 = vrot.lane.b32.xlu0 %v877, 8
    %v957 = vpop.permute.xlu0 %956
    %958 = vrot.lane.b32.xlu0 %v880, 8
    %v959 = vpop.permute.xlu0 %958
    %960 = vrot.lane.b32.xlu0 %v883, 8
    %v961 = vpop.permute.xlu0 %960
    %962 = vrot.lane.b32.xlu0 %v886, 8
    %v963 = vpop.permute.xlu0 %962
    %964 = vrot.lane.b32.xlu0 %v889, 8
    %v965 = vpop.permute.xlu0 %964
    %966 = vrot.lane.b32.xlu0 %v892, 8
    %v967 = vpop.permute.xlu0 %966
    %968 = vrot.lane.b32.xlu0 %v895, 8
    %v969 = vpop.permute.xlu0 %968
    %970 = vrot.lane.b32.xlu0 %v898, 8
    %v971 = vpop.permute.xlu0 %970
    %972 = vrot.lane.b32.xlu0 %v901, 8
    %v973 = vpop.permute.xlu0 %972
    %974 = vrot.lane.b32.xlu0 %v904, 8
    %v975 = vpop.permute.xlu0 %974
    %976 = vrot.lane.b32.xlu0 %v907, 8
    %v977 = vpop.permute.xlu0 %976
    %978 = vrot.lane.b32.xlu0 %v910, 8
    %v979 = vpop.permute.xlu0 %978
    %980 = vrot.lane.b32.xlu0 %v913, 8
    %v981 = vpop.permute.xlu0 %980
    %982 = vrot.lane.b32.xlu0 %v916, 8
    %v983 = vpop.permute.xlu0 %982
    %984 = vrot.lane.b32.xlu0 %v919, 8
    %v985 = vpop.permute.xlu0 %984
    %986 = vrot.lane.b32.xlu0 %v922, 8
    %v987 = vpop.permute.xlu0 %986
    %988 = vrot.lane.b32.xlu0 %v925, 8
    %v989 = vpop.permute.xlu0 %988
    %v994 = vunpack.c.l.b16 %v64
    %v995 = vunpack.c.l.b16 %v65
    %v996 = vunpack.c.l.b16 %v118
    %v997 = vunpack.c.l.b16 %v119
    %v998 = vpack.c.b16 %v995, %v994
    %v999 = vpack.c.b16 %v997, %v996
    %1000 = vrot.lane.b32.xlu0 %v253, 12
    %v1001 = vpop.permute.xlu0 %1000
    %1002 = vrot.lane.b32.xlu0 %v254, 12
    %v1003 = vpop.permute.xlu0 %1002
    %1004 = vrot.lane.b32.xlu0 %v255, 12
    %v1005 = vpop.permute.xlu0 %1004
    %1006 = vrot.lane.b32.xlu0 %v256, 12
    %v1007 = vpop.permute.xlu0 %1006
    %1008 = vrot.lane.b32.xlu0 %v257, 12
    %v1009 = vpop.permute.xlu0 %1008
    %1010 = vrot.lane.b32.xlu0 %v258, 12
    %v1011 = vpop.permute.xlu0 %1010
    %1012 = vrot.lane.b32.xlu0 %v259, 12
    %v1013 = vpop.permute.xlu0 %1012
    %1014 = vrot.lane.b32.xlu0 %v260, 12
    %v1015 = vpop.permute.xlu0 %1014
    %1016 = vrot.lane.b32.xlu0 %v261, 12
    %v1017 = vpop.permute.xlu0 %1016
    %1018 = vrot.lane.b32.xlu0 %v262, 12
    %v1019 = vpop.permute.xlu0 %1018
    %1020 = vrot.lane.b32.xlu0 %v263, 12
    %v1021 = vpop.permute.xlu0 %1020
    %1022 = vrot.lane.b32.xlu0 %v264, 12
    %v1023 = vpop.permute.xlu0 %1022
    %1024 = vrot.lane.b32.xlu0 %v265, 12
    %v1025 = vpop.permute.xlu0 %1024
    %1026 = vrot.lane.b32.xlu0 %v266, 12
    %v1027 = vpop.permute.xlu0 %1026
    %1028 = vrot.lane.b32.xlu0 %v267, 12
    %v1029 = vpop.permute.xlu0 %1028
    %1030 = vrot.lane.b32.xlu0 %v998, 12
    %v1031 = vpop.permute.xlu0 %1030
    %1032 = vrot.lane.b32.xlu0 %v269, 12
    %v1033 = vpop.permute.xlu0 %1032
    %1034 = vrot.lane.b32.xlu0 %v270, 12
    %v1035 = vpop.permute.xlu0 %1034
    %1036 = vrot.lane.b32.xlu0 %v271, 12
    %v1037 = vpop.permute.xlu0 %1036
    %1038 = vrot.lane.b32.xlu0 %v272, 12
    %v1039 = vpop.permute.xlu0 %1038
    %1040 = vrot.lane.b32.xlu0 %v273, 12
    %v1041 = vpop.permute.xlu0 %1040
    %1042 = vrot.lane.b32.xlu0 %v274, 12
    %v1043 = vpop.permute.xlu0 %1042
    %1044 = vrot.lane.b32.xlu0 %v275, 12
    %v1045 = vpop.permute.xlu0 %1044
    %1046 = vrot.lane.b32.xlu0 %v276, 12
    %v1047 = vpop.permute.xlu0 %1046
    %1048 = vrot.lane.b32.xlu0 %v277, 12
    %v1049 = vpop.permute.xlu0 %1048
    %1050 = vrot.lane.b32.xlu0 %v278, 12
    %v1051 = vpop.permute.xlu0 %1050
    %1052 = vrot.lane.b32.xlu0 %v279, 12
    %v1053 = vpop.permute.xlu0 %1052
    %1054 = vrot.lane.b32.xlu0 %v280, 12
    %v1055 = vpop.permute.xlu0 %1054
    %1056 = vrot.lane.b32.xlu0 %v281, 12
    %v1057 = vpop.permute.xlu0 %1056
    %1058 = vrot.lane.b32.xlu0 %v282, 12
    %v1059 = vpop.permute.xlu0 %1058
    %1060 = vrot.lane.b32.xlu0 %v283, 12
    %v1061 = vpop.permute.xlu0 %1060
    %1062 = vrot.lane.b32.xlu0 %v999, 12
    %v1063 = vpop.permute.xlu0 %1062
    %v1066 = vunpack.c.l.b16 %v66
    %v1067 = vunpack.c.l.b16 %v120
    %v1068 = vpack.c.b16 %v1066, %v1066
    %v1069 = vpack.c.b16 %v1067, %v1067
    %v1071 = vshrl.u32 %v998, 16
    %v1073 = vshll.u32 %v998, 16
    %v1075 = vrot.slane %v1073, 1
    %v1076 = vor.u32 %v1071, %v1075
    %v1078 = vshll.u32 %v1068, 16
    %v1080 = vrot.slane %v1078, 1
    %v1081 = vsel %vm380, %v1076, %v1080
    %v1083 = vshrl.u32 %v999, 16
    %v1085 = vshll.u32 %v999, 16
    %v1087 = vrot.slane %v1085, 1
    %v1088 = vor.u32 %v1083, %v1087
    %v1090 = vshll.u32 %v1069, 16
    %v1092 = vrot.slane %v1090, 1
    %v1093 = vsel %vm380, %v1088, %v1092
    %1094 = vrot.lane.b32.xlu0 %v404, 16
    %v1095 = vpop.permute.xlu0 %1094
    %1096 = vrot.lane.b32.xlu0 %v416, 16
    %v1097 = vpop.permute.xlu0 %1096
    %1098 = vrot.lane.b32.xlu0 %v428, 16
    %v1099 = vpop.permute.xlu0 %1098
    %1100 = vrot.lane.b32.xlu0 %v440, 16
    %v1101 = vpop.permute.xlu0 %1100
    %1102 = vrot.lane.b32.xlu0 %v452, 16
    %v1103 = vpop.permute.xlu0 %1102
    %1104 = vrot.lane.b32.xlu0 %v464, 16
    %v1105 = vpop.permute.xlu0 %1104
    %1106 = vrot.lane.b32.xlu0 %v476, 16
    %v1107 = vpop.permute.xlu0 %1106
    %1108 = vrot.lane.b32.xlu0 %v488, 16
    %v1109 = vpop.permute.xlu0 %1108
    %1110 = vrot.lane.b32.xlu0 %v500, 16
    %v1111 = vpop.permute.xlu0 %1110
    %1112 = vrot.lane.b32.xlu0 %v512, 16
    %v1113 = vpop.permute.xlu0 %1112
    %1114 = vrot.lane.b32.xlu0 %v524, 16
    %v1115 = vpop.permute.xlu0 %1114
    %1116 = vrot.lane.b32.xlu0 %v536, 16
    %v1117 = vpop.permute.xlu0 %1116
    %1118 = vrot.lane.b32.xlu0 %v548, 16
    %v1119 = vpop.permute.xlu0 %1118
    %1120 = vrot.lane.b32.xlu0 %v560, 16
    %v1121 = vpop.permute.xlu0 %1120
    %1122 = vrot.lane.b32.xlu0 %v572, 16
    %v1123 = vpop.permute.xlu0 %1122
    %1124 = vrot.lane.b32.xlu0 %v1081, 16
    %v1125 = vpop.permute.xlu0 %1124
    %1126 = vrot.lane.b32.xlu0 %v596, 16
    %v1127 = vpop.permute.xlu0 %1126
    %1128 = vrot.lane.b32.xlu0 %v608, 16
    %v1129 = vpop.permute.xlu0 %1128
    %1130 = vrot.lane.b32.xlu0 %v620, 16
    %v1131 = vpop.permute.xlu0 %1130
    %1132 = vrot.lane.b32.xlu0 %v632, 16
    %v1133 = vpop.permute.xlu0 %1132
    %1134 = vrot.lane.b32.xlu0 %v644, 16
    %v1135 = vpop.permute.xlu0 %1134
    %1136 = vrot.lane.b32.xlu0 %v656, 16
    %v1137 = vpop.permute.xlu0 %1136
    %1138 = vrot.lane.b32.xlu0 %v668, 16
    %v1139 = vpop.permute.xlu0 %1138
    %1140 = vrot.lane.b32.xlu0 %v680, 16
    %v1141 = vpop.permute.xlu0 %1140
    %1142 = vrot.lane.b32.xlu0 %v692, 16
    %v1143 = vpop.permute.xlu0 %1142
    %1144 = vrot.lane.b32.xlu0 %v704, 16
    %v1145 = vpop.permute.xlu0 %1144
    %1146 = vrot.lane.b32.xlu0 %v716, 16
    %v1147 = vpop.permute.xlu0 %1146
    %1148 = vrot.lane.b32.xlu0 %v728, 16
    %v1149 = vpop.permute.xlu0 %1148
    %1150 = vrot.lane.b32.xlu0 %v740, 16
    %v1151 = vpop.permute.xlu0 %1150
    %1152 = vrot.lane.b32.xlu0 %v752, 16
    %v1153 = vpop.permute.xlu0 %1152
    %1154 = vrot.lane.b32.xlu0 %v764, 16
    %v1155 = vpop.permute.xlu0 %1154
    %1156 = vrot.lane.b32.xlu0 %v1093, 16
    %v1157 = vpop.permute.xlu0 %1156
    %v1158 = vrot.slane %v998, 1
    %v1159 = vrot.slane %v1068, 1
    %v1160 = vsel %vm829, %v1158, %v1159
    %v1161 = vrot.slane %v999, 1
    %v1162 = vrot.slane %v1069, 1
    %v1163 = vsel %vm829, %v1161, %v1162
    %1164 = vrot.lane.b32.xlu0 %v835, 20
    %v1165 = vpop.permute.xlu0 %1164
    %1166 = vrot.lane.b32.xlu0 %v838, 20
    %v1167 = vpop.permute.xlu0 %1166
    %1168 = vrot.lane.b32.xlu0 %v841, 20
    %v1169 = vpop.permute.xlu0 %1168
    %1170 = vrot.lane.b32.xlu0 %v844, 20
    %v1171 = vpop.permute.xlu0 %1170
    %1172 = vrot.lane.b32.xlu0 %v847, 20
    %v1173 = vpop.permute.xlu0 %1172
    %1174 = vrot.lane.b32.xlu0 %v850, 20
    %v1175 = vpop.permute.xlu0 %1174
    %1176 = vrot.lane.b32.xlu0 %v853, 20
    %v1177 = vpop.permute.xlu0 %1176
    %1178 = vrot.lane.b32.xlu0 %v856, 20
    %v1179 = vpop.permute.xlu0 %1178
    %1180 = vrot.lane.b32.xlu0 %v859, 20
    %v1181 = vpop.permute.xlu0 %1180
    %1182 = vrot.lane.b32.xlu0 %v862, 20
    %v1183 = vpop.permute.xlu0 %1182
    %1184 = vrot.lane.b32.xlu0 %v865, 20
    %v1185 = vpop.permute.xlu0 %1184
    %1186 = vrot.lane.b32.xlu0 %v868, 20
    %v1187 = vpop.permute.xlu0 %1186
    %1188 = vrot.lane.b32.xlu0 %v871, 20
    %v1189 = vpop.permute.xlu0 %1188
    %1190 = vrot.lane.b32.xlu0 %v874, 20
    %v1191 = vpop.permute.xlu0 %1190
    %1192 = vrot.lane.b32.xlu0 %v877, 20
    %v1193 = vpop.permute.xlu0 %1192
    %1194 = vrot.lane.b32.xlu0 %v1160, 20
    %v1195 = vpop.permute.xlu0 %1194
    %1196 = vrot.lane.b32.xlu0 %v883, 20
    %v1197 = vpop.permute.xlu0 %1196
    %1198 = vrot.lane.b32.xlu0 %v886, 20
    %v1199 = vpop.permute.xlu0 %1198
    %1200 = vrot.lane.b32.xlu0 %v889, 20
    %v1201 = vpop.permute.xlu0 %1200
    %1202 = vrot.lane.b32.xlu0 %v892, 20
    %v1203 = vpop.permute.xlu0 %1202
    %1204 = vrot.lane.b32.xlu0 %v895, 20
    %v1205 = vpop.permute.xlu0 %1204
    %1206 = vrot.lane.b32.xlu0 %v898, 20
    %v1207 = vpop.permute.xlu0 %1206
    %1208 = vrot.lane.b32.xlu0 %v901, 20
    %v1209 = vpop.permute.xlu0 %1208
    %1210 = vrot.lane.b32.xlu0 %v904, 20
    %v1211 = vpop.permute.xlu0 %1210
    %1212 = vrot.lane.b32.xlu0 %v907, 20
    %v1213 = vpop.permute.xlu0 %1212
    %1214 = vrot.lane.b32.xlu0 %v910, 20
    %v1215 = vpop.permute.xlu0 %1214
    %1216 = vrot.lane.b32.xlu0 %v913, 20
    %v1217 = vpop.permute.xlu0 %1216
    %1218 = vrot.lane.b32.xlu0 %v916, 20
    %v1219 = vpop.permute.xlu0 %1218
    %1220 = vrot.lane.b32.xlu0 %v919, 20
    %v1221 = vpop.permute.xlu0 %1220
    %1222 = vrot.lane.b32.xlu0 %v922, 20
    %v1223 = vpop.permute.xlu0 %1222
    %1224 = vrot.lane.b32.xlu0 %v925, 20
    %v1225 = vpop.permute.xlu0 %1224
    %1226 = vrot.lane.b32.xlu0 %v1163, 20
    %v1227 = vpop.permute.xlu0 %1226
    %v1232 = vunpack.c.l.b16 %v67
    %v1233 = vunpack.c.l.b16 %v68
    %v1234 = vunpack.c.l.b16 %v121
    %v1235 = vunpack.c.l.b16 %v122
    %v1236 = vpack.c.b16 %v1233, %v1232
    %v1237 = vpack.c.b16 %v1235, %v1234
    %1238 = vrot.lane.b32.xlu0 %v254, 24
    %v1239 = vpop.permute.xlu0 %1238
    %1240 = vrot.lane.b32.xlu0 %v255, 24
    %v1241 = vpop.permute.xlu0 %1240
    %1242 = vrot.lane.b32.xlu0 %v256, 24
    %v1243 = vpop.permute.xlu0 %1242
    %1244 = vrot.lane.b32.xlu0 %v257, 24
    %v1245 = vpop.permute.xlu0 %1244
    %1246 = vrot.lane.b32.xlu0 %v258, 24
    %v1247 = vpop.permute.xlu0 %1246
    %1248 = vrot.lane.b32.xlu0 %v259, 24
    %v1249 = vpop.permute.xlu0 %1248
    %1250 = vrot.lane.b32.xlu0 %v260, 24
    %v1251 = vpop.permute.xlu0 %1250
    %1252 = vrot.lane.b32.xlu0 %v261, 24
    %v1253 = vpop.permute.xlu0 %1252
    %1254 = vrot.lane.b32.xlu0 %v262, 24
    %v1255 = vpop.permute.xlu0 %1254
    %1256 = vrot.lane.b32.xlu0 %v263, 24
    %v1257 = vpop.permute.xlu0 %1256
    %1258 = vrot.lane.b32.xlu0 %v264, 24
    %v1259 = vpop.permute.xlu0 %1258
    %1260 = vrot.lane.b32.xlu0 %v265, 24
    %v1261 = vpop.permute.xlu0 %1260
    %1262 = vrot.lane.b32.xlu0 %v266, 24
    %v1263 = vpop.permute.xlu0 %1262
    %1264 = vrot.lane.b32.xlu0 %v267, 24
    %v1265 = vpop.permute.xlu0 %1264
    %1266 = vrot.lane.b32.xlu0 %v998, 24
    %v1267 = vpop.permute.xlu0 %1266
    %1268 = vrot.lane.b32.xlu0 %v1236, 24
    %v1269 = vpop.permute.xlu0 %1268
    %1270 = vrot.lane.b32.xlu0 %v270, 24
    %v1271 = vpop.permute.xlu0 %1270
    %1272 = vrot.lane.b32.xlu0 %v271, 24
    %v1273 = vpop.permute.xlu0 %1272
    %1274 = vrot.lane.b32.xlu0 %v272, 24
    %v1275 = vpop.permute.xlu0 %1274
    %1276 = vrot.lane.b32.xlu0 %v273, 24
    %v1277 = vpop.permute.xlu0 %1276
    %1278 = vrot.lane.b32.xlu0 %v274, 24
    %v1279 = vpop.permute.xlu0 %1278
    %1280 = vrot.lane.b32.xlu0 %v275, 24
    %v1281 = vpop.permute.xlu0 %1280
    %1282 = vrot.lane.b32.xlu0 %v276, 24
    %v1283 = vpop.permute.xlu0 %1282
    %1284 = vrot.lane.b32.xlu0 %v277, 24
    %v1285 = vpop.permute.xlu0 %1284
    %1286 = vrot.lane.b32.xlu0 %v278, 24
    %v1287 = vpop.permute.xlu0 %1286
    %1288 = vrot.lane.b32.xlu0 %v279, 24
    %v1289 = vpop.permute.xlu0 %1288
    %1290 = vrot.lane.b32.xlu0 %v280, 24
    %v1291 = vpop.permute.xlu0 %1290
    %1292 = vrot.lane.b32.xlu0 %v281, 24
    %v1293 = vpop.permute.xlu0 %1292
    %1294 = vrot.lane.b32.xlu0 %v282, 24
    %v1295 = vpop.permute.xlu0 %1294
    %1296 = vrot.lane.b32.xlu0 %v283, 24
    %v1297 = vpop.permute.xlu0 %1296
    %1298 = vrot.lane.b32.xlu0 %v999, 24
    %v1299 = vpop.permute.xlu0 %1298
    %1300 = vrot.lane.b32.xlu0 %v1237, 24
    %v1301 = vpop.permute.xlu0 %1300
    %v1304 = vunpack.c.l.b16 %v69
    %v1305 = vunpack.c.l.b16 %v123
    %v1306 = vpack.c.b16 %v1304, %v1304
    %v1307 = vpack.c.b16 %v1305, %v1305
    %v1309 = vshrl.u32 %v1236, 16
    %v1311 = vshll.u32 %v1236, 16
    %v1313 = vrot.slane %v1311, 1
    %v1314 = vor.u32 %v1309, %v1313
    %v1316 = vshll.u32 %v1306, 16
    %v1318 = vrot.slane %v1316, 1
    %v1319 = vsel %vm380, %v1314, %v1318
    %v1321 = vshrl.u32 %v1237, 16
    %v1323 = vshll.u32 %v1237, 16
    %v1325 = vrot.slane %v1323, 1
    %v1326 = vor.u32 %v1321, %v1325
    %v1328 = vshll.u32 %v1307, 16
    %v1330 = vrot.slane %v1328, 1
    %v1331 = vsel %vm380, %v1326, %v1330
    %1332 = vrot.lane.b32.xlu0 %v416, 28
    %v1333 = vpop.permute.xlu0 %1332
    %1334 = vrot.lane.b32.xlu0 %v428, 28
    %v1335 = vpop.permute.xlu0 %1334
    %1336 = vrot.lane.b32.xlu0 %v440, 28
    %v1337 = vpop.permute.xlu0 %1336
    %1338 = vrot.lane.b32.xlu0 %v452, 28
    %v1339 = vpop.permute.xlu0 %1338
    %1340 = vrot.lane.b32.xlu0 %v464, 28
    %v1341 = vpop.permute.xlu0 %1340
    %1342 = vrot.lane.b32.xlu0 %v476, 28
    %v1343 = vpop.permute.xlu0 %1342
    %1344 = vrot.lane.b32.xlu0 %v488, 28
    %v1345 = vpop.permute.xlu0 %1344
    %1346 = vrot.lane.b32.xlu0 %v500, 28
    %v1347 = vpop.permute.xlu0 %1346
    %1348 = vrot.lane.b32.xlu0 %v512, 28
    %v1349 = vpop.permute.xlu0 %1348
    %1350 = vrot.lane.b32.xlu0 %v524, 28
    %v1351 = vpop.permute.xlu0 %1350
    %1352 = vrot.lane.b32.xlu0 %v536, 28
    %v1353 = vpop.permute.xlu0 %1352
    %1354 = vrot.lane.b32.xlu0 %v548, 28
    %v1355 = vpop.permute.xlu0 %1354
    %1356 = vrot.lane.b32.xlu0 %v560, 28
    %v1357 = vpop.permute.xlu0 %1356
    %1358 = vrot.lane.b32.xlu0 %v572, 28
    %v1359 = vpop.permute.xlu0 %1358
    %1360 = vrot.lane.b32.xlu0 %v1081, 28
    %v1361 = vpop.permute.xlu0 %1360
    %1362 = vrot.lane.b32.xlu0 %v1319, 28
    %v1363 = vpop.permute.xlu0 %1362
    %1364 = vrot.lane.b32.xlu0 %v608, 28
    %v1365 = vpop.permute.xlu0 %1364
    %1366 = vrot.lane.b32.xlu0 %v620, 28
    %v1367 = vpop.permute.xlu0 %1366
    %1368 = vrot.lane.b32.xlu0 %v632, 28
    %v1369 = vpop.permute.xlu0 %1368
    %1370 = vrot.lane.b32.xlu0 %v644, 28
    %v1371 = vpop.permute.xlu0 %1370
    %1372 = vrot.lane.b32.xlu0 %v656, 28
    %v1373 = vpop.permute.xlu0 %1372
    %1374 = vrot.lane.b32.xlu0 %v668, 28
    %v1375 = vpop.permute.xlu0 %1374
    %1376 = vrot.lane.b32.xlu0 %v680, 28
    %v1377 = vpop.permute.xlu0 %1376
    %1378 = vrot.lane.b32.xlu0 %v692, 28
    %v1379 = vpop.permute.xlu0 %1378
    %1380 = vrot.lane.b32.xlu0 %v704, 28
    %v1381 = vpop.permute.xlu0 %1380
    %1382 = vrot.lane.b32.xlu0 %v716, 28
    %v1383 = vpop.permute.xlu0 %1382
    %1384 = vrot.lane.b32.xlu0 %v728, 28
    %v1385 = vpop.permute.xlu0 %1384
    %1386 = vrot.lane.b32.xlu0 %v740, 28
    %v1387 = vpop.permute.xlu0 %1386
    %1388 = vrot.lane.b32.xlu0 %v752, 28
    %v1389 = vpop.permute.xlu0 %1388
    %1390 = vrot.lane.b32.xlu0 %v764, 28
    %v1391 = vpop.permute.xlu0 %1390
    %1392 = vrot.lane.b32.xlu0 %v1093, 28
    %v1393 = vpop.permute.xlu0 %1392
    %1394 = vrot.lane.b32.xlu0 %v1331, 28
    %v1395 = vpop.permute.xlu0 %1394
    %v1396 = vrot.slane %v1236, 1
    %v1397 = vrot.slane %v1306, 1
    %v1398 = vsel %vm829, %v1396, %v1397
    %v1399 = vrot.slane %v1237, 1
    %v1400 = vrot.slane %v1307, 1
    %v1401 = vsel %vm829, %v1399, %v1400
    %1402 = vrot.lane.b32.xlu0 %v838, 32
    %v1403 = vpop.permute.xlu0 %1402
    %1404 = vrot.lane.b32.xlu0 %v841, 32
    %v1405 = vpop.permute.xlu0 %1404
    %1406 = vrot.lane.b32.xlu0 %v844, 32
    %v1407 = vpop.permute.xlu0 %1406
    %1408 = vrot.lane.b32.xlu0 %v847, 32
    %v1409 = vpop.permute.xlu0 %1408
    %1410 = vrot.lane.b32.xlu0 %v850, 32
    %v1411 = vpop.permute.xlu0 %1410
    %1412 = vrot.lane.b32.xlu0 %v853, 32
    %v1413 = vpop.permute.xlu0 %1412
    %1414 = vrot.lane.b32.xlu0 %v856, 32
    %v1415 = vpop.permute.xlu0 %1414
    %1416 = vrot.lane.b32.xlu0 %v859, 32
    %v1417 = vpop.permute.xlu0 %1416
    %1418 = vrot.lane.b32.xlu0 %v862, 32
    %v1419 = vpop.permute.xlu0 %1418
    %1420 = vrot.lane.b32.xlu0 %v865, 32
    %v1421 = vpop.permute.xlu0 %1420
    %1422 = vrot.lane.b32.xlu0 %v868, 32
    %v1423 = vpop.permute.xlu0 %1422
    %1424 = vrot.lane.b32.xlu0 %v871, 32
    %v1425 = vpop.permute.xlu0 %1424
    %1426 = vrot.lane.b32.xlu0 %v874, 32
    %v1427 = vpop.permute.xlu0 %1426
    %1428 = vrot.lane.b32.xlu0 %v877, 32
    %v1429 = vpop.permute.xlu0 %1428
    %1430 = vrot.lane.b32.xlu0 %v1160, 32
    %v1431 = vpop.permute.xlu0 %1430
    %1432 = vrot.lane.b32.xlu0 %v1398, 32
    %v1433 = vpop.permute.xlu0 %1432
    %1434 = vrot.lane.b32.xlu0 %v886, 32
    %v1435 = vpop.permute.xlu0 %1434
    %1436 = vrot.lane.b32.xlu0 %v889, 32
    %v1437 = vpop.permute.xlu0 %1436
    %1438 = vrot.lane.b32.xlu0 %v892, 32
    %v1439 = vpop.permute.xlu0 %1438
    %1440 = vrot.lane.b32.xlu0 %v895, 32
    %v1441 = vpop.permute.xlu0 %1440
    %1442 = vrot.lane.b32.xlu0 %v898, 32
    %v1443 = vpop.permute.xlu0 %1442
    %1444 = vrot.lane.b32.xlu0 %v901, 32
    %v1445 = vpop.permute.xlu0 %1444
    %1446 = vrot.lane.b32.xlu0 %v904, 32
    %v1447 = vpop.permute.xlu0 %1446
    %1448 = vrot.lane.b32.xlu0 %v907, 32
    %v1449 = vpop.permute.xlu0 %1448
    %1450 = vrot.lane.b32.xlu0 %v910, 32
    %v1451 = vpop.permute.xlu0 %1450
    %1452 = vrot.lane.b32.xlu0 %v913, 32
    %v1453 = vpop.permute.xlu0 %1452
    %1454 = vrot.lane.b32.xlu0 %v916, 32
    %v1455 = vpop.permute.xlu0 %1454
    %1456 = vrot.lane.b32.xlu0 %v919, 32
    %v1457 = vpop.permute.xlu0 %1456
    %1458 = vrot.lane.b32.xlu0 %v922, 32
    %v1459 = vpop.permute.xlu0 %1458
    %1460 = vrot.lane.b32.xlu0 %v925, 32
    %v1461 = vpop.permute.xlu0 %1460
    %1462 = vrot.lane.b32.xlu0 %v1163, 32
    %v1463 = vpop.permute.xlu0 %1462
    %1464 = vrot.lane.b32.xlu0 %v1401, 32
    %v1465 = vpop.permute.xlu0 %1464
    %vm1466 = vcmask 31744
    %v1468 = vsel %vm1466, %v252, %v766
    %v1470 = vsel %vm1466, %v253, %v768
    %v1472 = vsel %vm1466, %v254, %v770
    %v1474 = vsel %vm1466, %v255, %v772
    %v1476 = vsel %vm1466, %v256, %v774
    %v1478 = vsel %vm1466, %v257, %v776
    %v1480 = vsel %vm1466, %v258, %v778
    %v1482 = vsel %vm1466, %v259, %v780
    %v1484 = vsel %vm1466, %v260, %v782
    %v1486 = vsel %vm1466, %v261, %v784
    %v1488 = vsel %vm1466, %v262, %v786
    %v1490 = vsel %vm1466, %v263, %v788
    %v1492 = vsel %vm1466, %v264, %v790
    %v1494 = vsel %vm1466, %v265, %v792
    %v1496 = vsel %vm1466, %v266, %v794
    %v1498 = vsel %vm1466, %v267, %v796
    %v1500 = vsel %vm1466, %v268, %v798
    %v1502 = vsel %vm1466, %v269, %v800
    %v1504 = vsel %vm1466, %v270, %v802
    %v1506 = vsel %vm1466, %v271, %v804
    %v1508 = vsel %vm1466, %v272, %v806
    %v1510 = vsel %vm1466, %v273, %v808
    %v1512 = vsel %vm1466, %v274, %v810
    %v1514 = vsel %vm1466, %v275, %v812
    %v1516 = vsel %vm1466, %v276, %v814
    %v1518 = vsel %vm1466, %v277, %v816
    %v1520 = vsel %vm1466, %v278, %v818
    %v1522 = vsel %vm1466, %v279, %v820
    %v1524 = vsel %vm1466, %v280, %v822
    %v1526 = vsel %vm1466, %v281, %v824
    %v1528 = vsel %vm1466, %v282, %v826
    %v1530 = vsel %vm1466, %v283, %v828
    %vm1531 = vcmask 64512
    %v1533 = vsel %vm1531, %v1468, %v927
    %v1535 = vsel %vm1531, %v1470, %v929
    %v1537 = vsel %vm1531, %v1472, %v931
    %v1539 = vsel %vm1531, %v1474, %v933
    %v1541 = vsel %vm1531, %v1476, %v935
    %v1543 = vsel %vm1531, %v1478, %v937
    %v1545 = vsel %vm1531, %v1480, %v939
    %v1547 = vsel %vm1531, %v1482, %v941
    %v1549 = vsel %vm1531, %v1484, %v943
    %v1551 = vsel %vm1531, %v1486, %v945
    %v1553 = vsel %vm1531, %v1488, %v947
    %v1555 = vsel %vm1531, %v1490, %v949
    %v1557 = vsel %vm1531, %v1492, %v951
    %v1559 = vsel %vm1531, %v1494, %v953
    %v1561 = vsel %vm1531, %v1496, %v955
    %v1563 = vsel %vm1531, %v1498, %v957
    %v1565 = vsel %vm1531, %v1500, %v959
    %v1567 = vsel %vm1531, %v1502, %v961
    %v1569 = vsel %vm1531, %v1504, %v963
    %v1571 = vsel %vm1531, %v1506, %v965
    %v1573 = vsel %vm1531, %v1508, %v967
    %v1575 = vsel %vm1531, %v1510, %v969
    %v1577 = vsel %vm1531, %v1512, %v971
    %v1579 = vsel %vm1531, %v1514, %v973
    %v1581 = vsel %vm1531, %v1516, %v975
    %v1583 = vsel %vm1531, %v1518, %v977
    %v1585 = vsel %vm1531, %v1520, %v979
    %v1587 = vsel %vm1531, %v1522, %v981
    %v1589 = vsel %vm1531, %v1524, %v983
    %v1591 = vsel %vm1531, %v1526, %v985
    %v1593 = vsel %vm1531, %v1528, %v987
    %v1595 = vsel %vm1531, %v1530, %v989
    %vm1596 = vcmask 97280
    %v1598 = vsel %vm1596, %v1533, %v1001
    %v1600 = vsel %vm1596, %v1535, %v1003
    %v1602 = vsel %vm1596, %v1537, %v1005
    %v1604 = vsel %vm1596, %v1539, %v1007
    %v1606 = vsel %vm1596, %v1541, %v1009
    %v1608 = vsel %vm1596, %v1543, %v1011
    %v1610 = vsel %vm1596, %v1545, %v1013
    %v1612 = vsel %vm1596, %v1547, %v1015
    %v1614 = vsel %vm1596, %v1549, %v1017
    %v1616 = vsel %vm1596, %v1551, %v1019
    %v1618 = vsel %vm1596, %v1553, %v1021
    %v1620 = vsel %vm1596, %v1555, %v1023
    %v1622 = vsel %vm1596, %v1557, %v1025
    %v1624 = vsel %vm1596, %v1559, %v1027
    %v1626 = vsel %vm1596, %v1561, %v1029
    %v1628 = vsel %vm1596, %v1563, %v1031
    %v1630 = vsel %vm1596, %v1565, %v1033
    %v1632 = vsel %vm1596, %v1567, %v1035
    %v1634 = vsel %vm1596, %v1569, %v1037
    %v1636 = vsel %vm1596, %v1571, %v1039
    %v1638 = vsel %vm1596, %v1573, %v1041
    %v1640 = vsel %vm1596, %v1575, %v1043
    %v1642 = vsel %vm1596, %v1577, %v1045
    %v1644 = vsel %vm1596, %v1579, %v1047
    %v1646 = vsel %vm1596, %v1581, %v1049
    %v1648 = vsel %vm1596, %v1583, %v1051
    %v1650 = vsel %vm1596, %v1585, %v1053
    %v1652 = vsel %vm1596, %v1587, %v1055
    %v1654 = vsel %vm1596, %v1589, %v1057
    %v1656 = vsel %vm1596, %v1591, %v1059
    %v1658 = vsel %vm1596, %v1593, %v1061
    %v1660 = vsel %vm1596, %v1595, %v1063
    %vm1661 = vcmask 130048
    %v1663 = vsel %vm1661, %v1598, %v1095
    %v1665 = vsel %vm1661, %v1600, %v1097
    %v1667 = vsel %vm1661, %v1602, %v1099
    %v1669 = vsel %vm1661, %v1604, %v1101
    %v1671 = vsel %vm1661, %v1606, %v1103
    %v1673 = vsel %vm1661, %v1608, %v1105
    %v1675 = vsel %vm1661, %v1610, %v1107
    %v1677 = vsel %vm1661, %v1612, %v1109
    %v1679 = vsel %vm1661, %v1614, %v1111
    %v1681 = vsel %vm1661, %v1616, %v1113
    %v1683 = vsel %vm1661, %v1618, %v1115
    %v1685 = vsel %vm1661, %v1620, %v1117
    %v1687 = vsel %vm1661, %v1622, %v1119
    %v1689 = vsel %vm1661, %v1624, %v1121
    %v1691 = vsel %vm1661, %v1626, %v1123
    %v1693 = vsel %vm1661, %v1628, %v1125
    %v1695 = vsel %vm1661, %v1630, %v1127
    %v1697 = vsel %vm1661, %v1632, %v1129
    %v1699 = vsel %vm1661, %v1634, %v1131
    %v1701 = vsel %vm1661, %v1636, %v1133
    %v1703 = vsel %vm1661, %v1638, %v1135
    %v1705 = vsel %vm1661, %v1640, %v1137
    %v1707 = vsel %vm1661, %v1642, %v1139
    %v1709 = vsel %vm1661, %v1644, %v1141
    %v1711 = vsel %vm1661, %v1646, %v1143
    %v1713 = vsel %vm1661, %v1648, %v1145
    %v1715 = vsel %vm1661, %v1650, %v1147
    %v1717 = vsel %vm1661, %v1652, %v1149
    %v1719 = vsel %vm1661, %v1654, %v1151
    %v1721 = vsel %vm1661, %v1656, %v1153
    %v1723 = vsel %vm1661, %v1658, %v1155
    %v1725 = vsel %vm1661, %v1660, %v1157
    %vm1726 = vcmask 162816
    %v1728 = vsel %vm1726, %v1663, %v1165
    %v1730 = vsel %vm1726, %v1665, %v1167
    %v1732 = vsel %vm1726, %v1667, %v1169
    %v1734 = vsel %vm1726, %v1669, %v1171
    %v1736 = vsel %vm1726, %v1671, %v1173
    %v1738 = vsel %vm1726, %v1673, %v1175
    %v1740 = vsel %vm1726, %v1675, %v1177
    %v1742 = vsel %vm1726, %v1677, %v1179
    %v1744 = vsel %vm1726, %v1679, %v1181
    %v1746 = vsel %vm1726, %v1681, %v1183
    %v1748 = vsel %vm1726, %v1683, %v1185
    %v1750 = vsel %vm1726, %v1685, %v1187
    %v1752 = vsel %vm1726, %v1687, %v1189
    %v1754 = vsel %vm1726, %v1689, %v1191
    %v1756 = vsel %vm1726, %v1691, %v1193
    %v1758 = vsel %vm1726, %v1693, %v1195
    %v1760 = vsel %vm1726, %v1695, %v1197
    %v1762 = vsel %vm1726, %v1697, %v1199
    %v1764 = vsel %vm1726, %v1699, %v1201
    %v1766 = vsel %vm1726, %v1701, %v1203
    %v1768 = vsel %vm1726, %v1703, %v1205
    %v1770 = vsel %vm1726, %v1705, %v1207
    %v1772 = vsel %vm1726, %v1707, %v1209
    %v1774 = vsel %vm1726, %v1709, %v1211
    %v1776 = vsel %vm1726, %v1711, %v1213
    %v1778 = vsel %vm1726, %v1713, %v1215
    %v1780 = vsel %vm1726, %v1715, %v1217
    %v1782 = vsel %vm1726, %v1717, %v1219
    %v1784 = vsel %vm1726, %v1719, %v1221
    %v1786 = vsel %vm1726, %v1721, %v1223
    %v1788 = vsel %vm1726, %v1723, %v1225
    %v1790 = vsel %vm1726, %v1725, %v1227
    %vm1791 = vcmask 195584
    %v1793 = vsel %vm1791, %v1728, %v1239
    %v1795 = vsel %vm1791, %v1730, %v1241
    %v1797 = vsel %vm1791, %v1732, %v1243
    %v1799 = vsel %vm1791, %v1734, %v1245
    %v1801 = vsel %vm1791, %v1736, %v1247
    %v1803 = vsel %vm1791, %v1738, %v1249
    %v1805 = vsel %vm1791, %v1740, %v1251
    %v1807 = vsel %vm1791, %v1742, %v1253
    %v1809 = vsel %vm1791, %v1744, %v1255
    %v1811 = vsel %vm1791, %v1746, %v1257
    %v1813 = vsel %vm1791, %v1748, %v1259
    %v1815 = vsel %vm1791, %v1750, %v1261
    %v1817 = vsel %vm1791, %v1752, %v1263
    %v1819 = vsel %vm1791, %v1754, %v1265
    %v1821 = vsel %vm1791, %v1756, %v1267
    %v1823 = vsel %vm1791, %v1758, %v1269
    %v1825 = vsel %vm1791, %v1760, %v1271
    %v1827 = vsel %vm1791, %v1762, %v1273
    %v1829 = vsel %vm1791, %v1764, %v1275
    %v1831 = vsel %vm1791, %v1766, %v1277
    %v1833 = vsel %vm1791, %v1768, %v1279
    %v1835 = vsel %vm1791, %v1770, %v1281
    %v1837 = vsel %vm1791, %v1772, %v1283
    %v1839 = vsel %vm1791, %v1774, %v1285
    %v1841 = vsel %vm1791, %v1776, %v1287
    %v1843 = vsel %vm1791, %v1778, %v1289
    %v1845 = vsel %vm1791, %v1780, %v1291
    %v1847 = vsel %vm1791, %v1782, %v1293
    %v1849 = vsel %vm1791, %v1784, %v1295
    %v1851 = vsel %vm1791, %v1786, %v1297
    %v1853 = vsel %vm1791, %v1788, %v1299
    %v1855 = vsel %vm1791, %v1790, %v1301
    %vm1856 = vcmask 228352
    %v1858 = vsel %vm1856, %v1793, %v1333
    %v1860 = vsel %vm1856, %v1795, %v1335
    %v1862 = vsel %vm1856, %v1797, %v1337
    %v1864 = vsel %vm1856, %v1799, %v1339
    %v1866 = vsel %vm1856, %v1801, %v1341
    %v1868 = vsel %vm1856, %v1803, %v1343
    %v1870 = vsel %vm1856, %v1805, %v1345
    %v1872 = vsel %vm1856, %v1807, %v1347
    %v1874 = vsel %vm1856, %v1809, %v1349
    %v1876 = vsel %vm1856, %v1811, %v1351
    %v1878 = vsel %vm1856, %v1813, %v1353
    %v1880 = vsel %vm1856, %v1815, %v1355
    %v1882 = vsel %vm1856, %v1817, %v1357
    %v1884 = vsel %vm1856, %v1819, %v1359
    %v1886 = vsel %vm1856, %v1821, %v1361
    %v1888 = vsel %vm1856, %v1823, %v1363
    %v1890 = vsel %vm1856, %v1825, %v1365
    %v1892 = vsel %vm1856, %v1827, %v1367
    %v1894 = vsel %vm1856, %v1829, %v1369
    %v1896 = vsel %vm1856, %v1831, %v1371
    %v1898 = vsel %vm1856, %v1833, %v1373
    %v1900 = vsel %vm1856, %v1835, %v1375
    %v1902 = vsel %vm1856, %v1837, %v1377
    %v1904 = vsel %vm1856, %v1839, %v1379
    %v1906 = vsel %vm1856, %v1841, %v1381
    %v1908 = vsel %vm1856, %v1843, %v1383
    %v1910 = vsel %vm1856, %v1845, %v1385
    %v1912 = vsel %vm1856, %v1847, %v1387
    %v1914 = vsel %vm1856, %v1849, %v1389
    %v1916 = vsel %vm1856, %v1851, %v1391
    %v1918 = vsel %vm1856, %v1853, %v1393
    %v1920 = vsel %vm1856, %v1855, %v1395
    %vm1921 = vcmask 261120
    %v1923 = vsel %vm1921, %v1858, %v1403
    %v1925 = vsel %vm1921, %v1860, %v1405
    %v1927 = vsel %vm1921, %v1862, %v1407
    %v1929 = vsel %vm1921, %v1864, %v1409
    %v1931 = vsel %vm1921, %v1866, %v1411
    %v1933 = vsel %vm1921, %v1868, %v1413
    %v1935 = vsel %vm1921, %v1870, %v1415
    %v1937 = vsel %vm1921, %v1872, %v1417
    %v1939 = vsel %vm1921, %v1874, %v1419
    %v1941 = vsel %vm1921, %v1876, %v1421
    %v1943 = vsel %vm1921, %v1878, %v1423
    %v1945 = vsel %vm1921, %v1880, %v1425
    %v1947 = vsel %vm1921, %v1882, %v1427
    %v1949 = vsel %vm1921, %v1884, %v1429
    %v1951 = vsel %vm1921, %v1886, %v1431
    %v1953 = vsel %vm1921, %v1888, %v1433
    %v1955 = vsel %vm1921, %v1890, %v1435
    %v1957 = vsel %vm1921, %v1892, %v1437
    %v1959 = vsel %vm1921, %v1894, %v1439
    %v1961 = vsel %vm1921, %v1896, %v1441
    %v1963 = vsel %vm1921, %v1898, %v1443
    %v1965 = vsel %vm1921, %v1900, %v1445
    %v1967 = vsel %vm1921, %v1902, %v1447
    %v1969 = vsel %vm1921, %v1904, %v1449
    %v1971 = vsel %vm1921, %v1906, %v1451
    %v1973 = vsel %vm1921, %v1908, %v1453
    %v1975 = vsel %vm1921, %v1910, %v1455
    %v1977 = vsel %vm1921, %v1912, %v1457
    %v1979 = vsel %vm1921, %v1914, %v1459
    %v1981 = vsel %vm1921, %v1916, %v1461
    %v1983 = vsel %vm1921, %v1918, %v1463
    %v1985 = vsel %vm1921, %v1920, %v1465
    %v1986 = vld [vmem:[%s1] sm:$0xf]
    %v1987 = vld [vmem:[%s1 + $0x4] sm:$0xf]
    %v1988 = vld [vmem:[%s1 + $0x8] sm:$0xf]
    %v1989 = vld [vmem:[%s1 + $0xc] sm:$0xf]
    %v1990 = vld [vmem:[%s1 + $0x10] sm:$0x3]
    %v1996 = vunpack.c.l.b16 %v1986
    %v1997 = vunpack.c.l.b16 %v1987
    %v1998 = vunpack.c.l.b16 %v1988
    %v1999 = vunpack.c.l.b16 %v1989
    %v2000 = vunpack.c.l.b16 %v1990
    %v2001 = vpack.c.b16 %v1997, %v1996
    %v2002 = vpack.c.b16 %v1999, %v1998
    %v2003 = vpack.c.b16 %v2000, %v2000
    %vm2006 = vcmask 293888
    %v2007 = vsel %vm2006, %v1923, 0
    %v2009 = vsel %vm2006, %v1925, 0
    %v2011 = vsel %vm2006, %v1927, 0
    %v2013 = vsel %vm2006, %v1929, 0
    %v2015 = vsel %vm2006, %v1931, 0
    %v2017 = vsel %vm2006, %v1933, 0
    %v2019 = vsel %vm2006, %v1935, 0
    %v2021 = vsel %vm2006, %v1937, 0
    %v2023 = vsel %vm2006, %v1939, 0
    %v2025 = vsel %vm2006, %v1941, 0
    %v2027 = vsel %vm2006, %v1943, 0
    %v2029 = vsel %vm2006, %v1945, 0
    %v2031 = vsel %vm2006, %v1947, 0
    %v2033 = vsel %vm2006, %v1949, 0
    %v2035 = vsel %vm2006, %v1951, 0
    %v2037 = vsel %vm2006, %v1953, 0
    %v2039 = vsel %vm2006, %v1955, 0
    %v2041 = vsel %vm2006, %v1957, 0
    %v2043 = vsel %vm2006, %v1959, 0
    %v2045 = vsel %vm2006, %v1961, 0
    %v2047 = vsel %vm2006, %v1963, 0
    %v2049 = vsel %vm2006, %v1965, 0
    %v2051 = vsel %vm2006, %v1967, 0
    %v2053 = vsel %vm2006, %v1969, 0
    %v2055 = vsel %vm2006, %v1971, 0
    %v2057 = vsel %vm2006, %v1973, 0
    %v2059 = vsel %vm2006, %v1975, 0
    %v2061 = vsel %vm2006, %v1977, 0
    %v2063 = vsel %vm2006, %v1979, 0
    %v2065 = vsel %vm2006, %v1981, 0
    %v2067 = vsel %vm2006, %v1983, 0
    %v2069 = vsel %vm2006, %v1985, 0
    %vm2071 = vcmask 1041408
    %v2073 = vsel %vm2071, %v2003, 0
    %2075 = vmatprep.subr.bf16.mxu0 0
    %2076 = vmatpush1.bf16.msra.mxu0 0
    %2077 = vmatprep.subr.bf16.mxu0 0
    %2078 = vmatpush1.bf16.msra.mxu0 0
    %2079 = vmatprep.subr.bf16.mxu0 0
    %2080 = vmatpush1.bf16.msra.mxu0 0
    %2081 = vmatprep.subr.bf16.mxu0 0
    %2082 = vmatpush1.bf16.msra.mxu0 0
    %2083 = vmatprep.subr.bf16.mxu0 0
    %2084 = vmatpush1.bf16.msra.mxu0 0
    %2085 = vmatprep.subr.bf16.mxu0 0
    %2086 = vmatpush1.bf16.msra.mxu0 %v2073
    %2087 = vmatprep.subr.bf16.mxu0 0
    %2088 = vmatpush1.bf16.msra.mxu0 %v2002
    %2089 = vmatprep.subr.bf16.mxu0 0
    %2090 = vmatpush1.bf16.msra.mxu0 %v2001
    %2091 = vmatprep.subr.bf16.mxu0 0
    %2092 = vmatpush2.bf16.msra.mxu0 0
    %2093 = vmatprep.subr.bf16.mxu0 0
    %2094 = vmatpush2.bf16.msra.mxu0 0
    %2095 = vmatprep.subr.bf16.mxu0 0
    %2096 = vmatpush2.bf16.msra.mxu0 0
    %2097 = vmatprep.subr.bf16.mxu0 0
    %2098 = vmatpush2.bf16.msra.mxu0 0
    %2099 = vmatprep.subr.bf16.mxu0 0
    %2100 = vmatpush2.bf16.msra.mxu0 0
    %2101 = vmatprep.subr.bf16.mxu0 0
    %2102 = vmatpush2.bf16.msra.mxu0 0
    %2103 = vmatprep.subr.bf16.mxu0 0
    %2104 = vmatpush2.bf16.msra.mxu0 0
    %2105 = vmatprep.subr.bf16.mxu0 0
    %2106 = vmatpush2.bf16.msra.mxu0 0
    %2107 = vmatprep.mubr.bf16.mxu0 0
    %2108 = vmatmul.mubr.bf16.gmra.mxu0 %v2007
    %v2109 = vpop.f32.mrf.mxu0
    %v2110 = vadd.f32 0.0, %v2109
    %v2111 = vpop.f32.mrf.mxu0
    %v2112 = vpop.f32.mrf.mxu0
    %v2113 = vadd.f32 0.0, %v2112
    %v2114 = vpop.f32.mrf.mxu0
    %2115 = vmatprep.mubr.bf16.mxu0 0
    %2116 = vmatmul.mubr.bf16.gmra.mxu0 %v2009
    %v2117 = vpop.f32.mrf.mxu0
    %v2118 = vadd.f32 0.0, %v2117
    %v2119 = vpop.f32.mrf.mxu0
    %v2120 = vpop.f32.mrf.mxu0
    %v2121 = vadd.f32 0.0, %v2120
    %v2122 = vpop.f32.mrf.mxu0
    %2123 = vmatprep.mubr.bf16.mxu0 0
    %2124 = vmatmul.mubr.bf16.gmra.mxu0 %v2011
    %v2125 = vpop.f32.mrf.mxu0
    %v2126 = vadd.f32 0.0, %v2125
    %v2127 = vpop.f32.mrf.mxu0
    %v2128 = vpop.f32.mrf.mxu0
    %v2129 = vadd.f32 0.0, %v2128
    %v2130 = vpop.f32.mrf.mxu0
    %2131 = vmatprep.mubr.bf16.mxu0 0
    %2132 = vmatmul.mubr.bf16.gmra.mxu0 %v2013
    %v2133 = vpop.f32.mrf.mxu0
    %v2134 = vadd.f32 0.0, %v2133
    %v2135 = vpop.f32.mrf.mxu0
    %v2136 = vpop.f32.mrf.mxu0
    %v2137 = vadd.f32 0.0, %v2136
    %v2138 = vpop.f32.mrf.mxu0
    %2139 = vmatprep.mubr.bf16.mxu0 0
    %2140 = vmatmul.mubr.bf16.gmra.mxu0 %v2015
    %v2141 = vpop.f32.mrf.mxu0
    %v2142 = vadd.f32 0.0, %v2141
    %v2143 = vpop.f32.mrf.mxu0
    %v2144 = vpop.f32.mrf.mxu0
    %v2145 = vadd.f32 0.0, %v2144
    %v2146 = vpop.f32.mrf.mxu0
    %2147 = vmatprep.mubr.bf16.mxu0 0
    %2148 = vmatmul.mubr.bf16.gmra.mxu0 %v2017
    %v2149 = vpop.f32.mrf.mxu0
    %v2150 = vadd.f32 0.0, %v2149
    %v2151 = vpop.f32.mrf.mxu0
    %v2152 = vpop.f32.mrf.mxu0
    %v2153 = vadd.f32 0.0, %v2152
    %v2154 = vpop.f32.mrf.mxu0
    %2155 = vmatprep.mubr.bf16.mxu0 0
    %2156 = vmatmul.mubr.bf16.gmra.mxu0 %v2019
    %v2157 = vpop.f32.mrf.mxu0
    %v2158 = vadd.f32 0.0, %v2157
    %v2159 = vpop.f32.mrf.mxu0
    %v2160 = vpop.f32.mrf.mxu0
    %v2161 = vadd.f32 0.0, %v2160
    %v2162 = vpop.f32.mrf.mxu0
    %2163 = vmatprep.mubr.bf16.mxu0 0
    %2164 = vmatmul.mubr.bf16.gmra.mxu0 %v2021
    %v2165 = vpop.f32.mrf.mxu0
    %v2166 = vadd.f32 0.0, %v2165
    %v2167 = vpop.f32.mrf.mxu0
    %v2168 = vpop.f32.mrf.mxu0
    %v2169 = vadd.f32 0.0, %v2168
    %v2170 = vpop.f32.mrf.mxu0
    %2171 = vmatprep.mubr.bf16.mxu0 0
    %2172 = vmatmul.mubr.bf16.gmra.mxu0 %v2023
    %v2173 = vpop.f32.mrf.mxu0
    %v2174 = vadd.f32 0.0, %v2173
    %v2175 = vpop.f32.mrf.mxu0
    %v2176 = vpop.f32.mrf.mxu0
    %v2177 = vadd.f32 0.0, %v2176
    %v2178 = vpop.f32.mrf.mxu0
    %2179 = vmatprep.mubr.bf16.mxu0 0
    %2180 = vmatmul.mubr.bf16.gmra.mxu0 %v2025
    %v2181 = vpop.f32.mrf.mxu0
    %v2182 = vadd.f32 0.0, %v2181
    %v2183 = vpop.f32.mrf.mxu0
    %v2184 = vpop.f32.mrf.mxu0
    %v2185 = vadd.f32 0.0, %v2184
    %v2186 = vpop.f32.mrf.mxu0
    %2187 = vmatprep.mubr.bf16.mxu0 0
    %2188 = vmatmul.mubr.bf16.gmra.mxu0 %v2027
    %v2189 = vpop.f32.mrf.mxu0
    %v2190 = vadd.f32 0.0, %v2189
    %v2191 = vpop.f32.mrf.mxu0
    %v2192 = vpop.f32.mrf.mxu0
    %v2193 = vadd.f32 0.0, %v2192
    %v2194 = vpop.f32.mrf.mxu0
    %2195 = vmatprep.mubr.bf16.mxu0 0
    %2196 = vmatmul.mubr.bf16.gmra.mxu0 %v2029
    %v2197 = vpop.f32.mrf.mxu0
    %v2198 = vadd.f32 0.0, %v2197
    %v2199 = vpop.f32.mrf.mxu0
    %v2200 = vpop.f32.mrf.mxu0
    %v2201 = vadd.f32 0.0, %v2200
    %v2202 = vpop.f32.mrf.mxu0
    %2203 = vmatprep.mubr.bf16.mxu0 0
    %2204 = vmatmul.mubr.bf16.gmra.mxu0 %v2031
    %v2205 = vpop.f32.mrf.mxu0
    %v2206 = vadd.f32 0.0, %v2205
    %v2207 = vpop.f32.mrf.mxu0
    %v2208 = vpop.f32.mrf.mxu0
    %v2209 = vadd.f32 0.0, %v2208
    %v2210 = vpop.f32.mrf.mxu0
    %2211 = vmatprep.mubr.bf16.mxu0 0
    %2212 = vmatmul.mubr.bf16.gmra.mxu0 %v2033
    %v2213 = vpop.f32.mrf.mxu0
    %v2214 = vadd.f32 0.0, %v2213
    %v2215 = vpop.f32.mrf.mxu0
    %v2216 = vpop.f32.mrf.mxu0
    %v2217 = vadd.f32 0.0, %v2216
    %v2218 = vpop.f32.mrf.mxu0
    %2219 = vmatprep.mubr.bf16.mxu0 0
    %2220 = vmatmul.mubr.bf16.gmra.mxu0 %v2035
    %v2221 = vpop.f32.mrf.mxu0
    %v2222 = vadd.f32 0.0, %v2221
    %v2223 = vpop.f32.mrf.mxu0
    %v2224 = vpop.f32.mrf.mxu0
    %v2225 = vadd.f32 0.0, %v2224
    %v2226 = vpop.f32.mrf.mxu0
    %2227 = vmatprep.mubr.bf16.mxu0 0
    %2228 = vmatmul.mubr.bf16.gmra.mxu0 %v2037
    %v2229 = vpop.f32.mrf.mxu0
    %v2230 = vadd.f32 0.0, %v2229
    %v2231 = vpop.f32.mrf.mxu0
    %v2232 = vpop.f32.mrf.mxu0
    %v2233 = vadd.f32 0.0, %v2232
    %v2234 = vpop.f32.mrf.mxu0
    %2235 = vmatprep.mubr.bf16.mxu0 0
    %2236 = vmatmul.mubr.bf16.gmra.mxu0 %v2039
    %v2237 = vpop.f32.mrf.mxu0
    %v2238 = vadd.f32 0.0, %v2237
    %v2239 = vpop.f32.mrf.mxu0
    %v2240 = vpop.f32.mrf.mxu0
    %v2241 = vadd.f32 0.0, %v2240
    %v2242 = vpop.f32.mrf.mxu0
    %2243 = vmatprep.mubr.bf16.mxu0 0
    %2244 = vmatmul.mubr.bf16.gmra.mxu0 %v2041
    %v2245 = vpop.f32.mrf.mxu0
    %v2246 = vadd.f32 0.0, %v2245
    %v2247 = vpop.f32.mrf.mxu0
    %v2248 = vpop.f32.mrf.mxu0
    %v2249 = vadd.f32 0.0, %v2248
    %v2250 = vpop.f32.mrf.mxu0
    %2251 = vmatprep.mubr.bf16.mxu0 0
    %2252 = vmatmul.mubr.bf16.gmra.mxu0 %v2043
    %v2253 = vpop.f32.mrf.mxu0
    %v2254 = vadd.f32 0.0, %v2253
    %v2255 = vpop.f32.mrf.mxu0
    %v2256 = vpop.f32.mrf.mxu0
    %v2257 = vadd.f32 0.0, %v2256
    %v2258 = vpop.f32.mrf.mxu0
    %2259 = vmatprep.mubr.bf16.mxu0 0
    %2260 = vmatmul.mubr.bf16.gmra.mxu0 %v2045
    %v2261 = vpop.f32.mrf.mxu0
    %v2262 = vadd.f32 0.0, %v2261
    %v2263 = vpop.f32.mrf.mxu0
    %v2264 = vpop.f32.mrf.mxu0
    %v2265 = vadd.f32 0.0, %v2264
    %v2266 = vpop.f32.mrf.mxu0
    %2267 = vmatprep.mubr.bf16.mxu0 0
    %2268 = vmatmul.mubr.bf16.gmra.mxu0 %v2047
    %v2269 = vpop.f32.mrf.mxu0
    %v2270 = vadd.f32 0.0, %v2269
    %v2271 = vpop.f32.mrf.mxu0
    %v2272 = vpop.f32.mrf.mxu0
    %v2273 = vadd.f32 0.0, %v2272
    %v2274 = vpop.f32.mrf.mxu0
    %2275 = vmatprep.mubr.bf16.mxu0 0
    %2276 = vmatmul.mubr.bf16.gmra.mxu0 %v2049
    %v2277 = vpop.f32.mrf.mxu0
    %v2278 = vadd.f32 0.0, %v2277
    %v2279 = vpop.f32.mrf.mxu0
    %v2280 = vpop.f32.mrf.mxu0
    %v2281 = vadd.f32 0.0, %v2280
    %v2282 = vpop.f32.mrf.mxu0
    %2283 = vmatprep.mubr.bf16.mxu0 0
    %2284 = vmatmul.mubr.bf16.gmra.mxu0 %v2051
    %v2285 = vpop.f32.mrf.mxu0
    %v2286 = vadd.f32 0.0, %v2285
    %v2287 = vpop.f32.mrf.mxu0
    %v2288 = vpop.f32.mrf.mxu0
    %v2289 = vadd.f32 0.0, %v2288
    %v2290 = vpop.f32.mrf.mxu0
    %2291 = vmatprep.mubr.bf16.mxu0 0
    %2292 = vmatmul.mubr.bf16.gmra.mxu0 %v2053
    %v2293 = vpop.f32.mrf.mxu0
    %v2294 = vadd.f32 0.0, %v2293
    %v2295 = vpop.f32.mrf.mxu0
    %v2296 = vpop.f32.mrf.mxu0
    %v2297 = vadd.f32 0.0, %v2296
    %v2298 = vpop.f32.mrf.mxu0
    %2299 = vmatprep.mubr.bf16.mxu0 0
    %2300 = vmatmul.mubr.bf16.gmra.mxu0 %v2055
    %v2301 = vpop.f32.mrf.mxu0
    %v2302 = vadd.f32 0.0, %v2301
    %v2303 = vpop.f32.mrf.mxu0
    %v2304 = vpop.f32.mrf.mxu0
    %v2305 = vadd.f32 0.0, %v2304
    %v2306 = vpop.f32.mrf.mxu0
    %2307 = vmatprep.mubr.bf16.mxu0 0
    %2308 = vmatmul.mubr.bf16.gmra.mxu0 %v2057
    %v2309 = vpop.f32.mrf.mxu0
    %v2310 = vadd.f32 0.0, %v2309
    %v2311 = vpop.f32.mrf.mxu0
    %v2312 = vpop.f32.mrf.mxu0
    %v2313 = vadd.f32 0.0, %v2312
    %v2314 = vpop.f32.mrf.mxu0
    %2315 = vmatprep.mubr.bf16.mxu0 0
    %2316 = vmatmul.mubr.bf16.gmra.mxu0 %v2059
    %v2317 = vpop.f32.mrf.mxu0
    %v2318 = vadd.f32 0.0, %v2317
    %v2319 = vpop.f32.mrf.mxu0
    %v2320 = vpop.f32.mrf.mxu0
    %v2321 = vadd.f32 0.0, %v2320
    %v2322 = vpop.f32.mrf.mxu0
    %2323 = vmatprep.mubr.bf16.mxu0 0
    %2324 = vmatmul.mubr.bf16.gmra.mxu0 %v2061
    %v2325 = vpop.f32.mrf.mxu0
    %v2326 = vadd.f32 0.0, %v2325
    %v2327 = vpop.f32.mrf.mxu0
    %v2328 = vpop.f32.mrf.mxu0
    %v2329 = vadd.f32 0.0, %v2328
    %v2330 = vpop.f32.mrf.mxu0
    %2331 = vmatprep.mubr.bf16.mxu0 0
    %2332 = vmatmul.mubr.bf16.gmra.mxu0 %v2063
    %v2333 = vpop.f32.mrf.mxu0
    %v2334 = vadd.f32 0.0, %v2333
    %v2335 = vpop.f32.mrf.mxu0
    %v2336 = vpop.f32.mrf.mxu0
    %v2337 = vadd.f32 0.0, %v2336
    %v2338 = vpop.f32.mrf.mxu0
    %2339 = vmatprep.mubr.bf16.mxu0 0
    %2340 = vmatmul.mubr.bf16.gmra.mxu0 %v2065
    %v2341 = vpop.f32.mrf.mxu0
    %v2342 = vadd.f32 0.0, %v2341
    %v2343 = vpop.f32.mrf.mxu0
    %v2344 = vpop.f32.mrf.mxu0
    %v2345 = vadd.f32 0.0, %v2344
    %v2346 = vpop.f32.mrf.mxu0
    %2347 = vmatprep.mubr.bf16.mxu0 0
    %2348 = vmatmul.mubr.bf16.gmra.mxu0 %v2067
    %v2349 = vpop.f32.mrf.mxu0
    %v2350 = vadd.f32 0.0, %v2349
    %v2351 = vpop.f32.mrf.mxu0
    %v2352 = vpop.f32.mrf.mxu0
    %v2353 = vadd.f32 0.0, %v2352
    %v2354 = vpop.f32.mrf.mxu0
    %2355 = vmatprep.mubr.bf16.mxu0 0
    %2356 = vmatmul.mubr.bf16.gmra.mxu0 %v2069
    %v2357 = vpop.f32.mrf.mxu0
    %v2358 = vadd.f32 0.0, %v2357
    %v2359 = vpop.f32.mrf.mxu0
    %v2360 = vpop.f32.mrf.mxu0
    %v2361 = vadd.f32 0.0, %v2360
    %v2362 = vpop.f32.mrf.mxu0
    %2363 = vdwg.mxu0
    %v2364 = vadd.f32 %v2110, %v2113
    %v2365 = vadd.f32 %v2364, %v2118
    %v2366 = vadd.f32 %v2365, %v2121
    %v2367 = vadd.f32 %v2366, %v2126
    %v2368 = vadd.f32 %v2367, %v2129
    %v2369 = vadd.f32 %v2368, %v2134
    %v2370 = vadd.f32 %v2369, %v2137
    %v2371 = vadd.f32 %v2370, %v2142
    %v2372 = vadd.f32 %v2371, %v2145
    %v2373 = vadd.f32 %v2372, %v2150
    %v2374 = vadd.f32 %v2373, %v2153
    %v2375 = vadd.f32 %v2374, %v2158
    %v2376 = vadd.f32 %v2375, %v2161
    %v2377 = vadd.f32 %v2376, %v2166
    %v2378 = vadd.f32 %v2377, %v2169
    %v2379 = vadd.f32 %v2378, %v2174
    %v2380 = vadd.f32 %v2379, %v2177
    %v2381 = vadd.f32 %v2380, %v2182
    %v2382 = vadd.f32 %v2381, %v2185
    %v2383 = vadd.f32 %v2382, %v2190
    %v2384 = vadd.f32 %v2383, %v2193
    %v2385 = vadd.f32 %v2384, %v2198
    %v2386 = vadd.f32 %v2385, %v2201
    %v2387 = vadd.f32 %v2386, %v2206
    %v2388 = vadd.f32 %v2387, %v2209
    %v2389 = vadd.f32 %v2388, %v2214
    %v2390 = vadd.f32 %v2389, %v2217
    %v2391 = vadd.f32 %v2390, %v2222
    %v2392 = vadd.f32 %v2391, %v2225
    %v2393 = vadd.f32 %v2392, %v2230
    %v2394 = vadd.f32 %v2393, %v2233
    %v2395 = vrot.slane %v2394, 4
    %v2396 = vadd.f32 %v2394, %v2395
    %v2397 = vrot.slane %v2396, 2
    %v2398 = vadd.f32 %v2396, %v2397
    %v2399 = vrot.slane %v2398, 1
    %v2400 = vadd.f32 %v2398, %v2399
    %v2401 = vadd.f32 %v2238, %v2241
    %v2402 = vadd.f32 %v2401, %v2246
    %v2403 = vadd.f32 %v2402, %v2249
    %v2404 = vadd.f32 %v2403, %v2254
    %v2405 = vadd.f32 %v2404, %v2257
    %v2406 = vadd.f32 %v2405, %v2262
    %v2407 = vadd.f32 %v2406, %v2265
    %v2408 = vadd.f32 %v2407, %v2270
    %v2409 = vadd.f32 %v2408, %v2273
    %v2410 = vadd.f32 %v2409, %v2278
    %v2411 = vadd.f32 %v2410, %v2281
    %v2412 = vadd.f32 %v2411, %v2286
    %v2413 = vadd.f32 %v2412, %v2289
    %v2414 = vadd.f32 %v2413, %v2294
    %v2415 = vadd.f32 %v2414, %v2297
    %v2416 = vadd.f32 %v2415, %v2302
    %v2417 = vadd.f32 %v2416, %v2305
    %v2418 = vadd.f32 %v2417, %v2310
    %v2419 = vadd.f32 %v2418, %v2313
    %v2420 = vadd.f32 %v2419, %v2318
    %v2421 = vadd.f32 %v2420, %v2321
    %v2422 = vadd.f32 %v2421, %v2326
    %v2423 = vadd.f32 %v2422, %v2329
    %v2424 = vadd.f32 %v2423, %v2334
    %v2425 = vadd.f32 %v2424, %v2337
    %v2426 = vadd.f32 %v2425, %v2342
    %v2427 = vadd.f32 %v2426, %v2345
    %v2428 = vadd.f32 %v2427, %v2350
    %v2429 = vadd.f32 %v2428, %v2353
    %v2430 = vadd.f32 %v2429, %v2358
    %v2431 = vadd.f32 %v2430, %v2361
    %v2432 = vrot.slane %v2431, 4
    %v2433 = vadd.f32 %v2431, %v2432
    %v2434 = vrot.slane %v2433, 2
    %v2435 = vadd.f32 %v2433, %v2434
    %v2436 = vrot.slane %v2435, 1
    %v2437 = vadd.f32 %v2435, %v2436
    %v2438 = vrcp.pop 256.0
    %v2439 = vmul.f32 %v2400, %v2438
    %v2440 = vmul.f32 %v2437, %v2438
    %v2441 = vsub.f32 %v2110, %v2439
    %v2442 = vsub.f32 %v2113, %v2439
    %v2443 = vsub.f32 %v2118, %v2439
    %v2444 = vsub.f32 %v2121, %v2439
    %v2445 = vsub.f32 %v2126, %v2439
    %v2446 = vsub.f32 %v2129, %v2439
    %v2447 = vsub.f32 %v2134, %v2439
    %v2448 = vsub.f32 %v2137, %v2439
    %v2449 = vsub.f32 %v2142, %v2439
    %v2450 = vsub.f32 %v2145, %v2439
    %v2451 = vsub.f32 %v2150, %v2439
    %v2452 = vsub.f32 %v2153, %v2439
    %v2453 = vsub.f32 %v2158, %v2439
    %v2454 = vsub.f32 %v2161, %v2439
    %v2455 = vsub.f32 %v2166, %v2439
    %v2456 = vsub.f32 %v2169, %v2439
    %v2457 = vsub.f32 %v2174, %v2439
    %v2458 = vsub.f32 %v2177, %v2439
    %v2459 = vsub.f32 %v2182, %v2439
    %v2460 = vsub.f32 %v2185, %v2439
    %v2461 = vsub.f32 %v2190, %v2439
    %v2462 = vsub.f32 %v2193, %v2439
    %v2463 = vsub.f32 %v2198, %v2439
    %v2464 = vsub.f32 %v2201, %v2439
    %v2465 = vsub.f32 %v2206, %v2439
    %v2466 = vsub.f32 %v2209, %v2439
    %v2467 = vsub.f32 %v2214, %v2439
    %v2468 = vsub.f32 %v2217, %v2439
    %v2469 = vsub.f32 %v2222, %v2439
    %v2470 = vsub.f32 %v2225, %v2439
    %v2471 = vsub.f32 %v2230, %v2439
    %v2472 = vsub.f32 %v2233, %v2439
    %v2473 = vsub.f32 %v2238, %v2440
    %v2474 = vsub.f32 %v2241, %v2440
    %v2475 = vsub.f32 %v2246, %v2440
    %v2476 = vsub.f32 %v2249, %v2440
    %v2477 = vsub.f32 %v2254, %v2440
    %v2478 = vsub.f32 %v2257, %v2440
    %v2479 = vsub.f32 %v2262, %v2440
    %v2480 = vsub.f32 %v2265, %v2440
    %v2481 = vsub.f32 %v2270, %v2440
    %v2482 = vsub.f32 %v2273, %v2440
    %v2483 = vsub.f32 %v2278, %v2440
    %v2484 = vsub.f32 %v2281, %v2440
    %v2485 = vsub.f32 %v2286, %v2440
    %v2486 = vsub.f32 %v2289, %v2440
    %v2487 = vsub.f32 %v2294, %v2440
    %v2488 = vsub.f32 %v2297, %v2440
    %v2489 = vsub.f32 %v2302, %v2440
    %v2490 = vsub.f32 %v2305, %v2440
    %v2491 = vsub.f32 %v2310, %v2440
    %v2492 = vsub.f32 %v2313, %v2440
    %v2493 = vsub.f32 %v2318, %v2440
    %v2494 = vsub.f32 %v2321, %v2440
    %v2495 = vsub.f32 %v2326, %v2440
    %v2496 = vsub.f32 %v2329, %v2440
    %v2497 = vsub.f32 %v2334, %v2440
    %v2498 = vsub.f32 %v2337, %v2440
    %v2499 = vsub.f32 %v2342, %v2440
    %v2500 = vsub.f32 %v2345, %v2440
    %v2501 = vsub.f32 %v2350, %v2440
    %v2502 = vsub.f32 %v2353, %v2440
    %v2503 = vsub.f32 %v2358, %v2440
    %v2504 = vsub.f32 %v2361, %v2440
    %v2505 = vmul.f32 %v2441, %v2441
    %v2506 = vmul.f32 %v2442, %v2442
    %v2507 = vmul.f32 %v2443, %v2443
    %v2508 = vmul.f32 %v2444, %v2444
    %v2509 = vmul.f32 %v2445, %v2445
    %v2510 = vmul.f32 %v2446, %v2446
    %v2511 = vmul.f32 %v2447, %v2447
    %v2512 = vmul.f32 %v2448, %v2448
    %v2513 = vmul.f32 %v2449, %v2449
    %v2514 = vmul.f32 %v2450, %v2450
    %v2515 = vmul.f32 %v2451, %v2451
    %v2516 = vmul.f32 %v2452, %v2452
    %v2517 = vmul.f32 %v2453, %v2453
    %v2518 = vmul.f32 %v2454, %v2454
    %v2519 = vmul.f32 %v2455, %v2455
    %v2520 = vmul.f32 %v2456, %v2456
    %v2521 = vmul.f32 %v2457, %v2457
    %v2522 = vmul.f32 %v2458, %v2458
    %v2523 = vmul.f32 %v2459, %v2459
    %v2524 = vmul.f32 %v2460, %v2460
    %v2525 = vmul.f32 %v2461, %v2461
    %v2526 = vmul.f32 %v2462, %v2462
    %v2527 = vmul.f32 %v2463, %v2463
    %v2528 = vmul.f32 %v2464, %v2464
    %v2529 = vmul.f32 %v2465, %v2465
    %v2530 = vmul.f32 %v2466, %v2466
    %v2531 = vmul.f32 %v2467, %v2467
    %v2532 = vmul.f32 %v2468, %v2468
    %v2533 = vmul.f32 %v2469, %v2469
    %v2534 = vmul.f32 %v2470, %v2470
    %v2535 = vmul.f32 %v2471, %v2471
    %v2536 = vmul.f32 %v2472, %v2472
    %v2537 = vmul.f32 %v2473, %v2473
    %v2538 = vmul.f32 %v2474, %v2474
    %v2539 = vmul.f32 %v2475, %v2475
    %v2540 = vmul.f32 %v2476, %v2476
    %v2541 = vmul.f32 %v2477, %v2477
    %v2542 = vmul.f32 %v2478, %v2478
    %v2543 = vmul.f32 %v2479, %v2479
    %v2544 = vmul.f32 %v2480, %v2480
    %v2545 = vmul.f32 %v2481, %v2481
    %v2546 = vmul.f32 %v2482, %v2482
    %v2547 = vmul.f32 %v2483, %v2483
    %v2548 = vmul.f32 %v2484, %v2484
    %v2549 = vmul.f32 %v2485, %v2485
    %v2550 = vmul.f32 %v2486, %v2486
    %v2551 = vmul.f32 %v2487, %v2487
    %v2552 = vmul.f32 %v2488, %v2488
    %v2553 = vmul.f32 %v2489, %v2489
    %v2554 = vmul.f32 %v2490, %v2490
    %v2555 = vmul.f32 %v2491, %v2491
    %v2556 = vmul.f32 %v2492, %v2492
    %v2557 = vmul.f32 %v2493, %v2493
    %v2558 = vmul.f32 %v2494, %v2494
    %v2559 = vmul.f32 %v2495, %v2495
    %v2560 = vmul.f32 %v2496, %v2496
    %v2561 = vmul.f32 %v2497, %v2497
    %v2562 = vmul.f32 %v2498, %v2498
    %v2563 = vmul.f32 %v2499, %v2499
    %v2564 = vmul.f32 %v2500, %v2500
    %v2565 = vmul.f32 %v2501, %v2501
    %v2566 = vmul.f32 %v2502, %v2502
    %v2567 = vmul.f32 %v2503, %v2503
    %v2568 = vmul.f32 %v2504, %v2504
    %v2569 = vadd.f32 %v2505, %v2506
    %v2570 = vadd.f32 %v2569, %v2507
    %v2571 = vadd.f32 %v2570, %v2508
    %v2572 = vadd.f32 %v2571, %v2509
    %v2573 = vadd.f32 %v2572, %v2510
    %v2574 = vadd.f32 %v2573, %v2511
    %v2575 = vadd.f32 %v2574, %v2512
    %v2576 = vadd.f32 %v2575, %v2513
    %v2577 = vadd.f32 %v2576, %v2514
    %v2578 = vadd.f32 %v2577, %v2515
    %v2579 = vadd.f32 %v2578, %v2516
    %v2580 = vadd.f32 %v2579, %v2517
    %v2581 = vadd.f32 %v2580, %v2518
    %v2582 = vadd.f32 %v2581, %v2519
    %v2583 = vadd.f32 %v2582, %v2520
    %v2584 = vadd.f32 %v2583, %v2521
    %v2585 = vadd.f32 %v2584, %v2522
    %v2586 = vadd.f32 %v2585, %v2523
    %v2587 = vadd.f32 %v2586, %v2524
    %v2588 = vadd.f32 %v2587, %v2525
    %v2589 = vadd.f32 %v2588, %v2526
    %v2590 = vadd.f32 %v2589, %v2527
    %v2591 = vadd.f32 %v2590, %v2528
    %v2592 = vadd.f32 %v2591, %v2529
    %v2593 = vadd.f32 %v2592, %v2530
    %v2594 = vadd.f32 %v2593, %v2531
    %v2595 = vadd.f32 %v2594, %v2532
    %v2596 = vadd.f32 %v2595, %v2533
    %v2597 = vadd.f32 %v2596, %v2534
    %v2598 = vadd.f32 %v2597, %v2535
    %v2599 = vadd.f32 %v2598, %v2536
    %v2600 = vrot.slane %v2599, 4
    %v2601 = vadd.f32 %v2599, %v2600
    %v2602 = vrot.slane %v2601, 2
    %v2603 = vadd.f32 %v2601, %v2602
    %v2604 = vrot.slane %v2603, 1
    %v2605 = vadd.f32 %v2603, %v2604
    %v2606 = vadd.f32 %v2537, %v2538
    %v2607 = vadd.f32 %v2606, %v2539
    %v2608 = vadd.f32 %v2607, %v2540
    %v2609 = vadd.f32 %v2608, %v2541
    %v2610 = vadd.f32 %v2609, %v2542
    %v2611 = vadd.f32 %v2610, %v2543
    %v2612 = vadd.f32 %v2611, %v2544
    %v2613 = vadd.f32 %v2612, %v2545
    %v2614 = vadd.f32 %v2613, %v2546
    %v2615 = vadd.f32 %v2614, %v2547
    %v2616 = vadd.f32 %v2615, %v2548
    %v2617 = vadd.f32 %v2616, %v2549
    %v2618 = vadd.f32 %v2617, %v2550
    %v2619 = vadd.f32 %v2618, %v2551
    %v2620 = vadd.f32 %v2619, %v2552
    %v2621 = vadd.f32 %v2620, %v2553
    %v2622 = vadd.f32 %v2621, %v2554
    %v2623 = vadd.f32 %v2622, %v2555
    %v2624 = vadd.f32 %v2623, %v2556
    %v2625 = vadd.f32 %v2624, %v2557
    %v2626 = vadd.f32 %v2625, %v2558
    %v2627 = vadd.f32 %v2626, %v2559
    %v2628 = vadd.f32 %v2627, %v2560
    %v2629 = vadd.f32 %v2628, %v2561
    %v2630 = vadd.f32 %v2629, %v2562
    %v2631 = vadd.f32 %v2630, %v2563
    %v2632 = vadd.f32 %v2631, %v2564
    %v2633 = vadd.f32 %v2632, %v2565
    %v2634 = vadd.f32 %v2633, %v2566
    %v2635 = vadd.f32 %v2634, %v2567
    %v2636 = vadd.f32 %v2635, %v2568
    %v2637 = vrot.slane %v2636, 4
    %v2638 = vadd.f32 %v2636, %v2637
    %v2639 = vrot.slane %v2638, 2
    %v2640 = vadd.f32 %v2638, %v2639
    %v2641 = vrot.slane %v2640, 1
    %v2642 = vadd.f32 %v2640, %v2641
    %v2643 = vmul.f32 %v2605, %v2438
    %v2644 = vmul.f32 %v2642, %v2438
    %v2645 = vadd.f32 %v2643, 1e-05
    %v2646 = vadd.f32 %v2644, 1e-05
    %v2647 = vrsqrt.pop %v2645
    %v2648 = vrsqrt.pop %v2646
    %v2649 = vmul.f32 %v2441, %v2647
    %v2650 = vmul.f32 %v2442, %v2647
    %v2651 = vmul.f32 %v2443, %v2647
    %v2652 = vmul.f32 %v2444, %v2647
    %v2653 = vmul.f32 %v2445, %v2647
    %v2654 = vmul.f32 %v2446, %v2647
    %v2655 = vmul.f32 %v2447, %v2647
    %v2656 = vmul.f32 %v2448, %v2647
    %v2657 = vmul.f32 %v2449, %v2647
    %v2658 = vmul.f32 %v2450, %v2647
    %v2659 = vmul.f32 %v2451, %v2647
    %v2660 = vmul.f32 %v2452, %v2647
    %v2661 = vmul.f32 %v2453, %v2647
    %v2662 = vmul.f32 %v2454, %v2647
    %v2663 = vmul.f32 %v2455, %v2647
    %v2664 = vmul.f32 %v2456, %v2647
    %v2665 = vmul.f32 %v2457, %v2647
    %v2666 = vmul.f32 %v2458, %v2647
    %v2667 = vmul.f32 %v2459, %v2647
    %v2668 = vmul.f32 %v2460, %v2647
    %v2669 = vmul.f32 %v2461, %v2647
    %v2670 = vmul.f32 %v2462, %v2647
    %v2671 = vmul.f32 %v2463, %v2647
    %v2672 = vmul.f32 %v2464, %v2647
    %v2673 = vmul.f32 %v2465, %v2647
    %v2674 = vmul.f32 %v2466, %v2647
    %v2675 = vmul.f32 %v2467, %v2647
    %v2676 = vmul.f32 %v2468, %v2647
    %v2677 = vmul.f32 %v2469, %v2647
    %v2678 = vmul.f32 %v2470, %v2647
    %v2679 = vmul.f32 %v2471, %v2647
    %v2680 = vmul.f32 %v2472, %v2647
    %v2681 = vmul.f32 %v2473, %v2648
    %v2682 = vmul.f32 %v2474, %v2648
    %v2683 = vmul.f32 %v2475, %v2648
    %v2684 = vmul.f32 %v2476, %v2648
    %v2685 = vmul.f32 %v2477, %v2648
    %v2686 = vmul.f32 %v2478, %v2648
    %v2687 = vmul.f32 %v2479, %v2648
    %v2688 = vmul.f32 %v2480, %v2648
    %v2689 = vmul.f32 %v2481, %v2648
    %v2690 = vmul.f32 %v2482, %v2648
    %v2691 = vmul.f32 %v2483, %v2648
    %v2692 = vmul.f32 %v2484, %v2648
    %v2693 = vmul.f32 %v2485, %v2648
    %v2694 = vmul.f32 %v2486, %v2648
    %v2695 = vmul.f32 %v2487, %v2648
    %v2696 = vmul.f32 %v2488, %v2648
    %v2697 = vmul.f32 %v2489, %v2648
    %v2698 = vmul.f32 %v2490, %v2648
    %v2699 = vmul.f32 %v2491, %v2648
    %v2700 = vmul.f32 %v2492, %v2648
    %v2701 = vmul.f32 %v2493, %v2648
    %v2702 = vmul.f32 %v2494, %v2648
    %v2703 = vmul.f32 %v2495, %v2648
    %v2704 = vmul.f32 %v2496, %v2648
    %v2705 = vmul.f32 %v2497, %v2648
    %v2706 = vmul.f32 %v2498, %v2648
    %v2707 = vmul.f32 %v2499, %v2648
    %v2708 = vmul.f32 %v2500, %v2648
    %v2709 = vmul.f32 %v2501, %v2648
    %v2710 = vmul.f32 %v2502, %v2648
    %v2711 = vmul.f32 %v2503, %v2648
    %v2712 = vmul.f32 %v2504, %v2648
    %vm2713 = vcmp.ge.f32.partialorder %v2649, 0.0
    %vm2714 = vcmp.ge.f32.partialorder %v2650, 0.0
    %vm2715 = vcmp.ge.f32.partialorder %v2651, 0.0
    %vm2716 = vcmp.ge.f32.partialorder %v2652, 0.0
    %vm2717 = vcmp.ge.f32.partialorder %v2653, 0.0
    %vm2718 = vcmp.ge.f32.partialorder %v2654, 0.0
    %vm2719 = vcmp.ge.f32.partialorder %v2655, 0.0
    %vm2720 = vcmp.ge.f32.partialorder %v2656, 0.0
    %vm2721 = vcmp.ge.f32.partialorder %v2657, 0.0
    %vm2722 = vcmp.ge.f32.partialorder %v2658, 0.0
    %vm2723 = vcmp.ge.f32.partialorder %v2659, 0.0
    %vm2724 = vcmp.ge.f32.partialorder %v2660, 0.0
    %vm2725 = vcmp.ge.f32.partialorder %v2661, 0.0
    %vm2726 = vcmp.ge.f32.partialorder %v2662, 0.0
    %vm2727 = vcmp.ge.f32.partialorder %v2663, 0.0
    %vm2728 = vcmp.ge.f32.partialorder %v2664, 0.0
    %vm2729 = vcmp.ge.f32.partialorder %v2665, 0.0
    %vm2730 = vcmp.ge.f32.partialorder %v2666, 0.0
    %vm2731 = vcmp.ge.f32.partialorder %v2667, 0.0
    %vm2732 = vcmp.ge.f32.partialorder %v2668, 0.0
    %vm2733 = vcmp.ge.f32.partialorder %v2669, 0.0
    %vm2734 = vcmp.ge.f32.partialorder %v2670, 0.0
    %vm2735 = vcmp.ge.f32.partialorder %v2671, 0.0
    %vm2736 = vcmp.ge.f32.partialorder %v2672, 0.0
    %vm2737 = vcmp.ge.f32.partialorder %v2673, 0.0
    %vm2738 = vcmp.ge.f32.partialorder %v2674, 0.0
    %vm2739 = vcmp.ge.f32.partialorder %v2675, 0.0
    %vm2740 = vcmp.ge.f32.partialorder %v2676, 0.0
    %vm2741 = vcmp.ge.f32.partialorder %v2677, 0.0
    %vm2742 = vcmp.ge.f32.partialorder %v2678, 0.0
    %vm2743 = vcmp.ge.f32.partialorder %v2679, 0.0
    %vm2744 = vcmp.ge.f32.partialorder %v2680, 0.0
    %vm2745 = vcmp.ge.f32.partialorder %v2681, 0.0
    %vm2746 = vcmp.ge.f32.partialorder %v2682, 0.0
    %vm2747 = vcmp.ge.f32.partialorder %v2683, 0.0
    %vm2748 = vcmp.ge.f32.partialorder %v2684, 0.0
    %vm2749 = vcmp.ge.f32.partialorder %v2685, 0.0
    %vm2750 = vcmp.ge.f32.partialorder %v2686, 0.0
    %vm2751 = vcmp.ge.f32.partialorder %v2687, 0.0
    %vm2752 = vcmp.ge.f32.partialorder %v2688, 0.0
    %vm2753 = vcmp.ge.f32.partialorder %v2689, 0.0
    %vm2754 = vcmp.ge.f32.partialorder %v2690, 0.0
    %vm2755 = vcmp.ge.f32.partialorder %v2691, 0.0
    %vm2756 = vcmp.ge.f32.partialorder %v2692, 0.0
    %vm2757 = vcmp.ge.f32.partialorder %v2693, 0.0
    %vm2758 = vcmp.ge.f32.partialorder %v2694, 0.0
    %vm2759 = vcmp.ge.f32.partialorder %v2695, 0.0
    %vm2760 = vcmp.ge.f32.partialorder %v2696, 0.0
    %vm2761 = vcmp.ge.f32.partialorder %v2697, 0.0
    %vm2762 = vcmp.ge.f32.partialorder %v2698, 0.0
    %vm2763 = vcmp.ge.f32.partialorder %v2699, 0.0
    %vm2764 = vcmp.ge.f32.partialorder %v2700, 0.0
    %vm2765 = vcmp.ge.f32.partialorder %v2701, 0.0
    %vm2766 = vcmp.ge.f32.partialorder %v2702, 0.0
    %vm2767 = vcmp.ge.f32.partialorder %v2703, 0.0
    %vm2768 = vcmp.ge.f32.partialorder %v2704, 0.0
    %vm2769 = vcmp.ge.f32.partialorder %v2705, 0.0
    %vm2770 = vcmp.ge.f32.partialorder %v2706, 0.0
    %vm2771 = vcmp.ge.f32.partialorder %v2707, 0.0
    %vm2772 = vcmp.ge.f32.partialorder %v2708, 0.0
    %vm2773 = vcmp.ge.f32.partialorder %v2709, 0.0
    %vm2774 = vcmp.ge.f32.partialorder %v2710, 0.0
    %vm2775 = vcmp.ge.f32.partialorder %v2711, 0.0
    %vm2776 = vcmp.ge.f32.partialorder %v2712, 0.0
    %v2777 = vmul.f32 %v2649, 0.1
    %v2778 = vmul.f32 %v2650, 0.1
    %v2779 = vmul.f32 %v2651, 0.1
    %v2780 = vmul.f32 %v2652, 0.1
    %v2781 = vmul.f32 %v2653, 0.1
    %v2782 = vmul.f32 %v2654, 0.1
    %v2783 = vmul.f32 %v2655, 0.1
    %v2784 = vmul.f32 %v2656, 0.1
    %v2785 = vmul.f32 %v2657, 0.1
    %v2786 = vmul.f32 %v2658, 0.1
    %v2787 = vmul.f32 %v2659, 0.1
    %v2788 = vmul.f32 %v2660, 0.1
    %v2789 = vmul.f32 %v2661, 0.1
    %v2790 = vmul.f32 %v2662, 0.1
    %v2791 = vmul.f32 %v2663, 0.1
    %v2792 = vmul.f32 %v2664, 0.1
    %v2793 = vmul.f32 %v2665, 0.1
    %v2794 = vmul.f32 %v2666, 0.1
    %v2795 = vmul.f32 %v2667, 0.1
    %v2796 = vmul.f32 %v2668, 0.1
    %v2797 = vmul.f32 %v2669, 0.1
    %v2798 = vmul.f32 %v2670, 0.1
    %v2799 = vmul.f32 %v2671, 0.1
    %v2800 = vmul.f32 %v2672, 0.1
    %v2801 = vmul.f32 %v2673, 0.1
    %v2802 = vmul.f32 %v2674, 0.1
    %v2803 = vmul.f32 %v2675, 0.1
    %v2804 = vmul.f32 %v2676, 0.1
    %v2805 = vmul.f32 %v2677, 0.1
    %v2806 = vmul.f32 %v2678, 0.1
    %v2807 = vmul.f32 %v2679, 0.1
    %v2808 = vmul.f32 %v2680, 0.1
    %v2809 = vmul.f32 %v2681, 0.1
    %v2810 = vmul.f32 %v2682, 0.1
    %v2811 = vmul.f32 %v2683, 0.1
    %v2812 = vmul.f32 %v2684, 0.1
    %v2813 = vmul.f32 %v2685, 0.1
    %v2814 = vmul.f32 %v2686, 0.1
    %v2815 = vmul.f32 %v2687, 0.1
    %v2816 = vmul.f32 %v2688, 0.1
    %v2817 = vmul.f32 %v2689, 0.1
    %v2818 = vmul.f32 %v2690, 0.1
    %v2819 = vmul.f32 %v2691, 0.1
    %v2820 = vmul.f32 %v2692, 0.1
    %v2821 = vmul.f32 %v2693, 0.1
    %v2822 = vmul.f32 %v2694, 0.1
    %v2823 = vmul.f32 %v2695, 0.1
    %v2824 = vmul.f32 %v2696, 0.1
    %v2825 = vmul.f32 %v2697, 0.1
    %v2826 = vmul.f32 %v2698, 0.1
    %v2827 = vmul.f32 %v2699, 0.1
    %v2828 = vmul.f32 %v2700, 0.1
    %v2829 = vmul.f32 %v2701, 0.1
    %v2830 = vmul.f32 %v2702, 0.1
    %v2831 = vmul.f32 %v2703, 0.1
    %v2832 = vmul.f32 %v2704, 0.1
    %v2833 = vmul.f32 %v2705, 0.1
    %v2834 = vmul.f32 %v2706, 0.1
    %v2835 = vmul.f32 %v2707, 0.1
    %v2836 = vmul.f32 %v2708, 0.1
    %v2837 = vmul.f32 %v2709, 0.1
    %v2838 = vmul.f32 %v2710, 0.1
    %v2839 = vmul.f32 %v2711, 0.1
    %v2840 = vmul.f32 %v2712, 0.1
    %v2841 = vsel %vm2713, %v2649, %v2777
    %v2842 = vsel %vm2714, %v2650, %v2778
    %v2843 = vsel %vm2715, %v2651, %v2779
    %v2844 = vsel %vm2716, %v2652, %v2780
    %v2845 = vsel %vm2717, %v2653, %v2781
    %v2846 = vsel %vm2718, %v2654, %v2782
    %v2847 = vsel %vm2719, %v2655, %v2783
    %v2848 = vsel %vm2720, %v2656, %v2784
    %v2849 = vsel %vm2721, %v2657, %v2785
    %v2850 = vsel %vm2722, %v2658, %v2786
    %v2851 = vsel %vm2723, %v2659, %v2787
    %v2852 = vsel %vm2724, %v2660, %v2788
    %v2853 = vsel %vm2725, %v2661, %v2789
    %v2854 = vsel %vm2726, %v2662, %v2790
    %v2855 = vsel %vm2727, %v2663, %v2791
    %v2856 = vsel %vm2728, %v2664, %v2792
    %v2857 = vsel %vm2729, %v2665, %v2793
    %v2858 = vsel %vm2730, %v2666, %v2794
    %v2859 = vsel %vm2731, %v2667, %v2795
    %v2860 = vsel %vm2732, %v2668, %v2796
    %v2861 = vsel %vm2733, %v2669, %v2797
    %v2862 = vsel %vm2734, %v2670, %v2798
    %v2863 = vsel %vm2735, %v2671, %v2799
    %v2864 = vsel %vm2736, %v2672, %v2800
    %v2865 = vsel %vm2737, %v2673, %v2801
    %v2866 = vsel %vm2738, %v2674, %v2802
    %v2867 = vsel %vm2739, %v2675, %v2803
    %v2868 = vsel %vm2740, %v2676, %v2804
    %v2869 = vsel %vm2741, %v2677, %v2805
    %v2870 = vsel %vm2742, %v2678, %v2806
    %v2871 = vsel %vm2743, %v2679, %v2807
    %v2872 = vsel %vm2744, %v2680, %v2808
    %v2873 = vsel %vm2745, %v2681, %v2809
    %v2874 = vsel %vm2746, %v2682, %v2810
    %v2875 = vsel %vm2747, %v2683, %v2811
    %v2876 = vsel %vm2748, %v2684, %v2812
    %v2877 = vsel %vm2749, %v2685, %v2813
    %v2878 = vsel %vm2750, %v2686, %v2814
    %v2879 = vsel %vm2751, %v2687, %v2815
    %v2880 = vsel %vm2752, %v2688, %v2816
    %v2881 = vsel %vm2753, %v2689, %v2817
    %v2882 = vsel %vm2754, %v2690, %v2818
    %v2883 = vsel %vm2755, %v2691, %v2819
    %v2884 = vsel %vm2756, %v2692, %v2820
    %v2885 = vsel %vm2757, %v2693, %v2821
    %v2886 = vsel %vm2758, %v2694, %v2822
    %v2887 = vsel %vm2759, %v2695, %v2823
    %v2888 = vsel %vm2760, %v2696, %v2824
    %v2889 = vsel %vm2761, %v2697, %v2825
    %v2890 = vsel %vm2762, %v2698, %v2826
    %v2891 = vsel %vm2763, %v2699, %v2827
    %v2892 = vsel %vm2764, %v2700, %v2828
    %v2893 = vsel %vm2765, %v2701, %v2829
    %v2894 = vsel %vm2766, %v2702, %v2830
    %v2895 = vsel %vm2767, %v2703, %v2831
    %v2896 = vsel %vm2768, %v2704, %v2832
    %v2897 = vsel %vm2769, %v2705, %v2833
    %v2898 = vsel %vm2770, %v2706, %v2834
    %v2899 = vsel %vm2771, %v2707, %v2835
    %v2900 = vsel %vm2772, %v2708, %v2836
    %v2901 = vsel %vm2773, %v2709, %v2837
    %v2902 = vsel %vm2774, %v2710, %v2838
    %v2903 = vsel %vm2775, %v2711, %v2839
    %v2904 = vsel %vm2776, %v2712, %v2840
    %vm2905 = vcmask 60416
    %2906 = vst.msk [vmem:[#allocation2] sm:$0xf] %vm2905, 0
    %2907 = vst.msk [vmem:[#allocation2 + $0x4] sm:$0xf] %vm2905, 0
    %vm2908 = vcmask 57344
    %2909 = vst.msk [vmem:[#allocation2 + $0x8] sm:$0x1] %vm2908, 0
    %2910 = vst.msk [vmem:[#allocation2 + $0xd8] sm:$0xf] %vm2905, 0
    %2911 = vst.msk [vmem:[#allocation2 + $0xdc] sm:$0xf] %vm2905, 0
    %2912 = vst.msk [vmem:[#allocation2 + $0xe0] sm:$0x1] %vm2908, 0
    %s2913 = scalar_lea.vmem [#allocation2], 204
    %2914 = vst.msk [vmem:[%s2913] sm:$0xf] %vm2905, 0
    %2915 = vst.msk [vmem:[%s2913 + $0x4] sm:$0xf] %vm2905, 0
    %2916 = vst.msk [vmem:[%s2913 + $0x8] sm:$0x1] %vm2908, 0
    %2917 = vst.msk [vmem:[%s2913 + $0xd8] sm:$0xf] %vm2905, 0
    %2918 = vst.msk [vmem:[%s2913 + $0xdc] sm:$0xf] %vm2905, 0
    %2919 = vst.msk [vmem:[%s2913 + $0xe0] sm:$0x1] %vm2908, 0
    %s2920 = scalar_lea.vmem [#allocation2], 12
    %vm2921 = vcmask 57344
    %vm2922 = vsmask.f32 256
    %vm2923 = vmand %vm2921, %vm2922
    %v2924 = vld [vmem:[%s2920] sm:$0x1]
    %v2925 = vsel %vm2923, 0, %v2924
    %2926 = vst [vmem:[%s2920] sm:$0x1] %v2925
    %v2927 = vld [vmem:[%s2920 + $0xc] sm:$0x1]
    %v2928 = vsel %vm2923, 0, %v2927
    %2929 = vst [vmem:[%s2920 + $0xc] sm:$0x1] %v2928
    %v2930 = vld [vmem:[%s2920 + $0x18] sm:$0x1]
    %v2931 = vsel %vm2923, 0, %v2930
    %2932 = vst [vmem:[%s2920 + $0x18] sm:$0x1] %v2931
    %v2933 = vld [vmem:[%s2920 + $0x24] sm:$0x1]
    %v2934 = vsel %vm2923, 0, %v2933
    %2935 = vst [vmem:[%s2920 + $0x24] sm:$0x1] %v2934
    %v2936 = vld [vmem:[%s2920 + $0x30] sm:$0x1]
    %v2937 = vsel %vm2923, 0, %v2936
    %2938 = vst [vmem:[%s2920 + $0x30] sm:$0x1] %v2937
    %v2939 = vld [vmem:[%s2920 + $0x3c] sm:$0x1]
    %v2940 = vsel %vm2923, 0, %v2939
    %2941 = vst [vmem:[%s2920 + $0x3c] sm:$0x1] %v2940
    %v2942 = vld [vmem:[%s2920 + $0x48] sm:$0x1]
    %v2943 = vsel %vm2923, 0, %v2942
    %2944 = vst [vmem:[%s2920 + $0x48] sm:$0x1] %v2943
    %v2945 = vld [vmem:[%s2920 + $0x54] sm:$0x1]
    %v2946 = vsel %vm2923, 0, %v2945
    %2947 = vst [vmem:[%s2920 + $0x54] sm:$0x1] %v2946
    %v2948 = vld [vmem:[%s2920 + $0x60] sm:$0x1]
    %v2949 = vsel %vm2923, 0, %v2948
    %2950 = vst [vmem:[%s2920 + $0x60] sm:$0x1] %v2949
    %v2951 = vld [vmem:[%s2920 + $0x6c] sm:$0x1]
    %v2952 = vsel %vm2923, 0, %v2951
    %2953 = vst [vmem:[%s2920 + $0x6c] sm:$0x1] %v2952
    %v2954 = vld [vmem:[%s2920 + $0x78] sm:$0x1]
    %v2955 = vsel %vm2923, 0, %v2954
    %2956 = vst [vmem:[%s2920 + $0x78] sm:$0x1] %v2955
    %v2957 = vld [vmem:[%s2920 + $0x84] sm:$0x1]
    %v2958 = vsel %vm2923, 0, %v2957
    %2959 = vst [vmem:[%s2920 + $0x84] sm:$0x1] %v2958
    %v2960 = vld [vmem:[%s2920 + $0x90] sm:$0x1]
    %v2961 = vsel %vm2923, 0, %v2960
    %2962 = vst [vmem:[%s2920 + $0x90] sm:$0x1] %v2961
    %v2963 = vld [vmem:[%s2920 + $0x9c] sm:$0x1]
    %v2964 = vsel %vm2923, 0, %v2963
    %2965 = vst [vmem:[%s2920 + $0x9c] sm:$0x1] %v2964
    %v2966 = vld [vmem:[%s2920 + $0xa8] sm:$0x1]
    %v2967 = vsel %vm2923, 0, %v2966
    %2968 = vst [vmem:[%s2920 + $0xa8] sm:$0x1] %v2967
    %v2969 = vld [vmem:[%s2920 + $0xb4] sm:$0x1]
    %v2970 = vsel %vm2923, 0, %v2969
    %2971 = vst [vmem:[%s2920 + $0xb4] sm:$0x1] %v2970
    %v2972 = vld [vmem:[%s2920 + $0xd8] sm:$0x1]
    %v2973 = vsel %vm2923, 0, %v2972
    %2974 = vst [vmem:[%s2920 + $0xd8] sm:$0x1] %v2973
    %v2975 = vld [vmem:[%s2920 + $0xe4] sm:$0x1]
    %v2976 = vsel %vm2923, 0, %v2975
    %2977 = vst [vmem:[%s2920 + $0xe4] sm:$0x1] %v2976
    %v2978 = vld [vmem:[%s2920 + $0xf0] sm:$0x1]
    %v2979 = vsel %vm2923, 0, %v2978
    %2980 = vst [vmem:[%s2920 + $0xf0] sm:$0x1] %v2979
    %v2981 = vld [vmem:[%s2920 + $0xfc] sm:$0x1]
    %v2982 = vsel %vm2923, 0, %v2981
    %2983 = vst [vmem:[%s2920 + $0xfc] sm:$0x1] %v2982
    %v2984 = vld [vmem:[%s2920 + $0x108] sm:$0x1]
    %v2985 = vsel %vm2923, 0, %v2984
    %2986 = vst [vmem:[%s2920 + $0x108] sm:$0x1] %v2985
    %v2987 = vld [vmem:[%s2920 + $0x114] sm:$0x1]
    %v2988 = vsel %vm2923, 0, %v2987
    %2989 = vst [vmem:[%s2920 + $0x114] sm:$0x1] %v2988
    %v2990 = vld [vmem:[%s2920 + $0x120] sm:$0x1]
    %v2991 = vsel %vm2923, 0, %v2990
    %2992 = vst [vmem:[%s2920 + $0x120] sm:$0x1] %v2991
    %v2993 = vld [vmem:[%s2920 + $0x12c] sm:$0x1]
    %v2994 = vsel %vm2923, 0, %v2993
    %2995 = vst [vmem:[%s2920 + $0x12c] sm:$0x1] %v2994
    %v2996 = vld [vmem:[%s2920 + $0x138] sm:$0x1]
    %v2997 = vsel %vm2923, 0, %v2996
    %2998 = vst [vmem:[%s2920 + $0x138] sm:$0x1] %v2997
    %v2999 = vld [vmem:[%s2920 + $0x144] sm:$0x1]
    %v3000 = vsel %vm2923, 0, %v2999
    %3001 = vst [vmem:[%s2920 + $0x144] sm:$0x1] %v3000
    %v3002 = vld [vmem:[%s2920 + $0x150] sm:$0x1]
    %v3003 = vsel %vm2923, 0, %v3002
    %3004 = vst [vmem:[%s2920 + $0x150] sm:$0x1] %v3003
    %v3005 = vld [vmem:[%s2920 + $0x15c] sm:$0x1]
    %v3006 = vsel %vm2923, 0, %v3005
    %3007 = vst [vmem:[%s2920 + $0x15c] sm:$0x1] %v3006
    %v3008 = vld [vmem:[%s2920 + $0x168] sm:$0x1]
    %v3009 = vsel %vm2923, 0, %v3008
    %3010 = vst [vmem:[%s2920 + $0x168] sm:$0x1] %v3009
    %v3011 = vld [vmem:[%s2920 + $0x174] sm:$0x1]
    %v3012 = vsel %vm2923, 0, %v3011
    %3013 = vst [vmem:[%s2920 + $0x174] sm:$0x1] %v3012
    %v3014 = vld [vmem:[%s2920 + $0x180] sm:$0x1]
    %v3015 = vsel %vm2923, 0, %v3014
    %3016 = vst [vmem:[%s2920 + $0x180] sm:$0x1] %v3015
    %v3017 = vld [vmem:[%s2920 + $0x18c] sm:$0x1]
    %v3018 = vsel %vm2923, 0, %v3017
    %3019 = vst [vmem:[%s2920 + $0x18c] sm:$0x1] %v3018
    %vm3020 = vsmask.f32 7938
    %vm3021 = vmand %vm2921, %vm3020
    %v3022 = vld [vmem:[%s2920 + $0x8] sm:$0x1]
    %v3023 = vsel %vm3021, 0, %v3022
    %3024 = vst [vmem:[%s2920 + $0x8] sm:$0x1] %v3023
    %v3025 = vld [vmem:[%s2920 + $0x14] sm:$0x1]
    %v3026 = vsel %vm3021, 0, %v3025
    %3027 = vst [vmem:[%s2920 + $0x14] sm:$0x1] %v3026
    %v3028 = vld [vmem:[%s2920 + $0x20] sm:$0x1]
    %v3029 = vsel %vm3021, 0, %v3028
    %3030 = vst [vmem:[%s2920 + $0x20] sm:$0x1] %v3029
    %v3031 = vld [vmem:[%s2920 + $0x2c] sm:$0x1]
    %v3032 = vsel %vm3021, 0, %v3031
    %3033 = vst [vmem:[%s2920 + $0x2c] sm:$0x1] %v3032
    %v3034 = vld [vmem:[%s2920 + $0x38] sm:$0x1]
    %v3035 = vsel %vm3021, 0, %v3034
    %3036 = vst [vmem:[%s2920 + $0x38] sm:$0x1] %v3035
    %v3037 = vld [vmem:[%s2920 + $0x44] sm:$0x1]
    %v3038 = vsel %vm3021, 0, %v3037
    %3039 = vst [vmem:[%s2920 + $0x44] sm:$0x1] %v3038
    %v3040 = vld [vmem:[%s2920 + $0x50] sm:$0x1]
    %v3041 = vsel %vm3021, 0, %v3040
    %3042 = vst [vmem:[%s2920 + $0x50] sm:$0x1] %v3041
    %v3043 = vld [vmem:[%s2920 + $0x5c] sm:$0x1]
    %v3044 = vsel %vm3021, 0, %v3043
    %3045 = vst [vmem:[%s2920 + $0x5c] sm:$0x1] %v3044
    %v3046 = vld [vmem:[%s2920 + $0x68] sm:$0x1]
    %v3047 = vsel %vm3021, 0, %v3046
    %3048 = vst [vmem:[%s2920 + $0x68] sm:$0x1] %v3047
    %v3049 = vld [vmem:[%s2920 + $0x74] sm:$0x1]
    %v3050 = vsel %vm3021, 0, %v3049
    %3051 = vst [vmem:[%s2920 + $0x74] sm:$0x1] %v3050
    %v3052 = vld [vmem:[%s2920 + $0x80] sm:$0x1]
    %v3053 = vsel %vm3021, 0, %v3052
    %3054 = vst [vmem:[%s2920 + $0x80] sm:$0x1] %v3053
    %v3055 = vld [vmem:[%s2920 + $0x8c] sm:$0x1]
    %v3056 = vsel %vm3021, 0, %v3055
    %3057 = vst [vmem:[%s2920 + $0x8c] sm:$0x1] %v3056
    %v3058 = vld [vmem:[%s2920 + $0x98] sm:$0x1]
    %v3059 = vsel %vm3021, 0, %v3058
    %3060 = vst [vmem:[%s2920 + $0x98] sm:$0x1] %v3059
    %v3061 = vld [vmem:[%s2920 + $0xa4] sm:$0x1]
    %v3062 = vsel %vm3021, 0, %v3061
    %3063 = vst [vmem:[%s2920 + $0xa4] sm:$0x1] %v3062
    %v3064 = vld [vmem:[%s2920 + $0xb0] sm:$0x1]
    %v3065 = vsel %vm3021, 0, %v3064
    %3066 = vst [vmem:[%s2920 + $0xb0] sm:$0x1] %v3065
    %v3067 = vld [vmem:[%s2920 + $0xbc] sm:$0x1]
    %v3068 = vsel %vm3021, 0, %v3067
    %3069 = vst [vmem:[%s2920 + $0xbc] sm:$0x1] %v3068
    %v3070 = vld [vmem:[%s2920 + $0xe0] sm:$0x1]
    %v3071 = vsel %vm3021, 0, %v3070
    %3072 = vst [vmem:[%s2920 + $0xe0] sm:$0x1] %v3071
    %v3073 = vld [vmem:[%s2920 + $0xec] sm:$0x1]
    %v3074 = vsel %vm3021, 0, %v3073
    %3075 = vst [vmem:[%s2920 + $0xec] sm:$0x1] %v3074
    %v3076 = vld [vmem:[%s2920 + $0xf8] sm:$0x1]
    %v3077 = vsel %vm3021, 0, %v3076
    %3078 = vst [vmem:[%s2920 + $0xf8] sm:$0x1] %v3077
    %v3079 = vld [vmem:[%s2920 + $0x104] sm:$0x1]
    %v3080 = vsel %vm3021, 0, %v3079
    %3081 = vst [vmem:[%s2920 + $0x104] sm:$0x1] %v3080
    %v3082 = vld [vmem:[%s2920 + $0x110] sm:$0x1]
    %v3083 = vsel %vm3021, 0, %v3082
    %3084 = vst [vmem:[%s2920 + $0x110] sm:$0x1] %v3083
    %v3085 = vld [vmem:[%s2920 + $0x11c] sm:$0x1]
    %v3086 = vsel %vm3021, 0, %v3085
    %3087 = vst [vmem:[%s2920 + $0x11c] sm:$0x1] %v3086
    %v3088 = vld [vmem:[%s2920 + $0x128] sm:$0x1]
    %v3089 = vsel %vm3021, 0, %v3088
    %3090 = vst [vmem:[%s2920 + $0x128] sm:$0x1] %v3089
    %v3091 = vld [vmem:[%s2920 + $0x134] sm:$0x1]
    %v3092 = vsel %vm3021, 0, %v3091
    %3093 = vst [vmem:[%s2920 + $0x134] sm:$0x1] %v3092
    %v3094 = vld [vmem:[%s2920 + $0x140] sm:$0x1]
    %v3095 = vsel %vm3021, 0, %v3094
    %3096 = vst [vmem:[%s2920 + $0x140] sm:$0x1] %v3095
    %v3097 = vld [vmem:[%s2920 + $0x14c] sm:$0x1]
    %v3098 = vsel %vm3021, 0, %v3097
    %3099 = vst [vmem:[%s2920 + $0x14c] sm:$0x1] %v3098
    %v3100 = vld [vmem:[%s2920 + $0x158] sm:$0x1]
    %v3101 = vsel %vm3021, 0, %v3100
    %3102 = vst [vmem:[%s2920 + $0x158] sm:$0x1] %v3101
    %v3103 = vld [vmem:[%s2920 + $0x164] sm:$0x1]
    %v3104 = vsel %vm3021, 0, %v3103
    %3105 = vst [vmem:[%s2920 + $0x164] sm:$0x1] %v3104
    %v3106 = vld [vmem:[%s2920 + $0x170] sm:$0x1]
    %v3107 = vsel %vm3021, 0, %v3106
    %3108 = vst [vmem:[%s2920 + $0x170] sm:$0x1] %v3107
    %v3109 = vld [vmem:[%s2920 + $0x17c] sm:$0x1]
    %v3110 = vsel %vm3021, 0, %v3109
    %3111 = vst [vmem:[%s2920 + $0x17c] sm:$0x1] %v3110
    %v3112 = vld [vmem:[%s2920 + $0x188] sm:$0x1]
    %v3113 = vsel %vm3021, 0, %v3112
    %3114 = vst [vmem:[%s2920 + $0x188] sm:$0x1] %v3113
    %v3115 = vld [vmem:[%s2920 + $0x194] sm:$0x1]
    %v3116 = vsel %vm3021, 0, %v3115
    %3117 = vst [vmem:[%s2920 + $0x194] sm:$0x1] %v3116
    %v3118 = vpack.c.bf16 %v2842, %v2841
    %v3119 = vpack.c.bf16 %v2844, %v2843
    %v3120 = vpack.c.bf16 %v2846, %v2845
    %v3121 = vpack.c.bf16 %v2848, %v2847
    %v3122 = vpack.c.bf16 %v2850, %v2849
    %v3123 = vpack.c.bf16 %v2852, %v2851
    %v3124 = vpack.c.bf16 %v2854, %v2853
    %v3125 = vpack.c.bf16 %v2856, %v2855
    %v3126 = vpack.c.bf16 %v2858, %v2857
    %v3127 = vpack.c.bf16 %v2860, %v2859
    %v3128 = vpack.c.bf16 %v2862, %v2861
    %v3129 = vpack.c.bf16 %v2864, %v2863
    %v3130 = vpack.c.bf16 %v2866, %v2865
    %v3131 = vpack.c.bf16 %v2868, %v2867
    %v3132 = vpack.c.bf16 %v2870, %v2869
    %v3133 = vpack.c.bf16 %v2872, %v2871
    %v3134 = vpack.c.bf16 %v2874, %v2873
    %v3135 = vpack.c.bf16 %v2876, %v2875
    %v3136 = vpack.c.bf16 %v2878, %v2877
    %v3137 = vpack.c.bf16 %v2880, %v2879
    %v3138 = vpack.c.bf16 %v2882, %v2881
    %v3139 = vpack.c.bf16 %v2884, %v2883
    %v3140 = vpack.c.bf16 %v2886, %v2885
    %v3141 = vpack.c.bf16 %v2888, %v2887
    %v3142 = vpack.c.bf16 %v2890, %v2889
    %v3143 = vpack.c.bf16 %v2892, %v2891
    %v3144 = vpack.c.bf16 %v2894, %v2893
    %v3145 = vpack.c.bf16 %v2896, %v2895
    %v3146 = vpack.c.bf16 %v2898, %v2897
    %v3147 = vpack.c.bf16 %v2900, %v2899
    %v3148 = vpack.c.bf16 %v2902, %v2901
    %v3149 = vpack.c.bf16 %v2904, %v2903
    %v3182 = vunpack.c.l.b16 %v3118
    %v3183 = vunpack.c.h.b16 %v3118
    %v3184 = vunpack.c.l.b16 %v3119
    %v3185 = vunpack.c.h.b16 %v3119
    %v3186 = vunpack.c.l.b16 %v3120
    %v3187 = vunpack.c.h.b16 %v3120
    %v3188 = vunpack.c.l.b16 %v3121
    %v3189 = vunpack.c.h.b16 %v3121
    %v3190 = vunpack.c.l.b16 %v3122
    %v3191 = vunpack.c.h.b16 %v3122
    %v3192 = vunpack.c.l.b16 %v3123
    %v3193 = vunpack.c.h.b16 %v3123
    %v3194 = vunpack.c.l.b16 %v3124
    %v3195 = vunpack.c.h.b16 %v3124
    %v3196 = vunpack.c.l.b16 %v3125
    %v3197 = vunpack.c.h.b16 %v3125
    %v3198 = vunpack.c.l.b16 %v3126
    %v3199 = vunpack.c.h.b16 %v3126
    %v3200 = vunpack.c.l.b16 %v3127
    %v3201 = vunpack.c.h.b16 %v3127
    %v3202 = vunpack.c.l.b16 %v3128
    %v3203 = vunpack.c.h.b16 %v3128
    %v3204 = vunpack.c.l.b16 %v3129
    %v3205 = vunpack.c.h.b16 %v3129
    %v3206 = vunpack.c.l.b16 %v3130
    %v3207 = vunpack.c.h.b16 %v3130
    %v3208 = vunpack.c.l.b16 %v3131
    %v3209 = vunpack.c.h.b16 %v3131
    %v3210 = vunpack.c.l.b16 %v3132
    %v3211 = vunpack.c.h.b16 %v3132
    %v3212 = vunpack.c.l.b16 %v3133
    %v3213 = vunpack.c.h.b16 %v3133
    %v3214 = vunpack.c.l.b16 %v3134
    %v3215 = vunpack.c.h.b16 %v3134
    %v3216 = vunpack.c.l.b16 %v3135
    %v3217 = vunpack.c.h.b16 %v3135
    %v3218 = vunpack.c.l.b16 %v3136
    %v3219 = vunpack.c.h.b16 %v3136
    %v3220 = vunpack.c.l.b16 %v3137
    %v3221 = vunpack.c.h.b16 %v3137
    %v3222 = vunpack.c.l.b16 %v3138
    %v3223 = vunpack.c.h.b16 %v3138
    %v3224 = vunpack.c.l.b16 %v3139
    %v3225 = vunpack.c.h.b16 %v3139
    %v3226 = vunpack.c.l.b16 %v3140
    %v3227 = vunpack.c.h.b16 %v3140
    %v3228 = vunpack.c.l.b16 %v3141
    %v3229 = vunpack.c.h.b16 %v3141
    %v3230 = vunpack.c.l.b16 %v3142
    %v3231 = vunpack.c.h.b16 %v3142
    %v3232 = vunpack.c.l.b16 %v3143
    %v3233 = vunpack.c.h.b16 %v3143
    %v3234 = vunpack.c.l.b16 %v3144
    %v3235 = vunpack.c.h.b16 %v3144
    %v3236 = vunpack.c.l.b16 %v3145
    %v3237 = vunpack.c.h.b16 %v3145
    %v3238 = vunpack.c.l.b16 %v3146
    %v3239 = vunpack.c.h.b16 %v3146
    %v3240 = vunpack.c.l.b16 %v3147
    %v3241 = vunpack.c.h.b16 %v3147
    %v3242 = vunpack.c.l.b16 %v3148
    %v3243 = vunpack.c.h.b16 %v3148
    %v3244 = vunpack.c.l.b16 %v3149
    %v3245 = vunpack.c.h.b16 %v3149
    %v3246 = vpack.c.b16 %v3182, %v3182
    %v3247 = vpack.c.b16 %v3183, %v3183
    %v3248 = vpack.c.b16 %v3184, %v3184
    %v3249 = vpack.c.b16 %v3185, %v3185
    %v3250 = vpack.c.b16 %v3186, %v3186
    %v3251 = vpack.c.b16 %v3187, %v3187
    %v3252 = vpack.c.b16 %v3188, %v3188
    %v3253 = vpack.c.b16 %v3189, %v3189
    %v3254 = vpack.c.b16 %v3190, %v3190
    %v3255 = vpack.c.b16 %v3191, %v3191
    %v3256 = vpack.c.b16 %v3192, %v3192
    %v3257 = vpack.c.b16 %v3193, %v3193
    %v3258 = vpack.c.b16 %v3194, %v3194
    %v3259 = vpack.c.b16 %v3195, %v3195
    %v3260 = vpack.c.b16 %v3196, %v3196
    %v3261 = vpack.c.b16 %v3197, %v3197
    %v3262 = vpack.c.b16 %v3198, %v3198
    %v3263 = vpack.c.b16 %v3199, %v3199
    %v3264 = vpack.c.b16 %v3200, %v3200
    %v3265 = vpack.c.b16 %v3201, %v3201
    %v3266 = vpack.c.b16 %v3202, %v3202
    %v3267 = vpack.c.b16 %v3203, %v3203
    %v3268 = vpack.c.b16 %v3204, %v3204
    %v3269 = vpack.c.b16 %v3205, %v3205
    %v3270 = vpack.c.b16 %v3206, %v3206
    %v3271 = vpack.c.b16 %v3207, %v3207
    %v3272 = vpack.c.b16 %v3208, %v3208
    %v3273 = vpack.c.b16 %v3209, %v3209
    %v3274 = vpack.c.b16 %v3210, %v3210
    %v3275 = vpack.c.b16 %v3211, %v3211
    %v3276 = vpack.c.b16 %v3212, %v3212
    %v3277 = vpack.c.b16 %v3213, %v3213
    %v3278 = vpack.c.b16 %v3214, %v3214
    %v3279 = vpack.c.b16 %v3215, %v3215
    %v3280 = vpack.c.b16 %v3216, %v3216
    %v3281 = vpack.c.b16 %v3217, %v3217
    %v3282 = vpack.c.b16 %v3218, %v3218
    %v3283 = vpack.c.b16 %v3219, %v3219
    %v3284 = vpack.c.b16 %v3220, %v3220
    %v3285 = vpack.c.b16 %v3221, %v3221
    %v3286 = vpack.c.b16 %v3222, %v3222
    %v3287 = vpack.c.b16 %v3223, %v3223
    %v3288 = vpack.c.b16 %v3224, %v3224
    %v3289 = vpack.c.b16 %v3225, %v3225
    %v3290 = vpack.c.b16 %v3226, %v3226
    %v3291 = vpack.c.b16 %v3227, %v3227
    %v3292 = vpack.c.b16 %v3228, %v3228
    %v3293 = vpack.c.b16 %v3229, %v3229
    %v3294 = vpack.c.b16 %v3230, %v3230
    %v3295 = vpack.c.b16 %v3231, %v3231
    %v3296 = vpack.c.b16 %v3232, %v3232
    %v3297 = vpack.c.b16 %v3233, %v3233
    %v3298 = vpack.c.b16 %v3234, %v3234
    %v3299 = vpack.c.b16 %v3235, %v3235
    %v3300 = vpack.c.b16 %v3236, %v3236
    %v3301 = vpack.c.b16 %v3237, %v3237
    %v3302 = vpack.c.b16 %v3238, %v3238
    %v3303 = vpack.c.b16 %v3239, %v3239
    %v3304 = vpack.c.b16 %v3240, %v3240
    %v3305 = vpack.c.b16 %v3241, %v3241
    %v3306 = vpack.c.b16 %v3242, %v3242
    %v3307 = vpack.c.b16 %v3243, %v3243
    %v3308 = vpack.c.b16 %v3244, %v3244
    %v3309 = vpack.c.b16 %v3245, %v3245
    %vm3310 = vsmask.f32 4368
    %vm3311 = vmor %vm2922, %vm3310
    %v3313 = vshrl.u32 %v3246, 16
    %v3315 = vrot.slane %v3313, 7
    %v3316 = vshll.u32 %v3246, 16
    %v3318 = vor.u32 %v3315, %v3316
    %v3319 = vrot.slane %v3315, 4
    %v3321 = vshrl.u32 %v3247, 16
    %v3323 = vrot.slane %v3321, 7
    %v3324 = vshll.u32 %v3247, 16
    %v3326 = vor.u32 %v3323, %v3324
    %v3327 = vsel %vm3311, %v3319, %v3326
    %v3328 = vrot.slane %v3323, 4
    %v3330 = vshrl.u32 %v3248, 16
    %v3332 = vrot.slane %v3330, 7
    %v3333 = vshll.u32 %v3248, 16
    %v3335 = vor.u32 %v3332, %v3333
    %v3336 = vrot.slane %v3332, 4
    %v3338 = vshrl.u32 %v3249, 16
    %v3340 = vrot.slane %v3338, 7
    %v3341 = vshll.u32 %v3249, 16
    %v3343 = vor.u32 %v3340, %v3341
    %v3344 = vsel %vm3311, %v3336, %v3343
    %v3345 = vrot.slane %v3340, 4
    %v3347 = vshrl.u32 %v3250, 16
    %v3349 = vrot.slane %v3347, 7
    %v3350 = vshll.u32 %v3250, 16
    %v3352 = vor.u32 %v3349, %v3350
    %v3353 = vrot.slane %v3349, 4
    %v3355 = vshrl.u32 %v3251, 16
    %v3357 = vrot.slane %v3355, 7
    %v3358 = vshll.u32 %v3251, 16
    %v3360 = vor.u32 %v3357, %v3358
    %v3361 = vsel %vm3311, %v3353, %v3360
    %v3362 = vrot.slane %v3357, 4
    %v3364 = vshrl.u32 %v3252, 16
    %v3366 = vrot.slane %v3364, 7
    %v3367 = vshll.u32 %v3252, 16
    %v3369 = vor.u32 %v3366, %v3367
    %v3370 = vrot.slane %v3366, 4
    %v3372 = vshrl.u32 %v3253, 16
    %v3374 = vrot.slane %v3372, 7
    %v3375 = vshll.u32 %v3253, 16
    %v3377 = vor.u32 %v3374, %v3375
    %v3378 = vsel %vm3311, %v3370, %v3377
    %v3379 = vrot.slane %v3374, 4
    %v3381 = vshrl.u32 %v3254, 16
    %v3383 = vrot.slane %v3381, 7
    %v3384 = vshll.u32 %v3254, 16
    %v3386 = vor.u32 %v3383, %v3384
    %v3387 = vrot.slane %v3383, 4
    %v3389 = vshrl.u32 %v3255, 16
    %v3391 = vrot.slane %v3389, 7
    %v3392 = vshll.u32 %v3255, 16
    %v3394 = vor.u32 %v3391, %v3392
    %v3395 = vsel %vm3311, %v3387, %v3394
    %v3396 = vrot.slane %v3391, 4
    %v3398 = vshrl.u32 %v3256, 16
    %v3400 = vrot.slane %v3398, 7
    %v3401 = vshll.u32 %v3256, 16
    %v3403 = vor.u32 %v3400, %v3401
    %v3404 = vrot.slane %v3400, 4
    %v3406 = vshrl.u32 %v3257, 16
    %v3408 = vrot.slane %v3406, 7
    %v3409 = vshll.u32 %v3257, 16
    %v3411 = vor.u32 %v3408, %v3409
    %v3412 = vsel %vm3311, %v3404, %v3411
    %v3413 = vrot.slane %v3408, 4
    %v3415 = vshrl.u32 %v3258, 16
    %v3417 = vrot.slane %v3415, 7
    %v3418 = vshll.u32 %v3258, 16
    %v3420 = vor.u32 %v3417, %v3418
    %v3421 = vrot.slane %v3417, 4
    %v3423 = vshrl.u32 %v3259, 16
    %v3425 = vrot.slane %v3423, 7
    %v3426 = vshll.u32 %v3259, 16
    %v3428 = vor.u32 %v3425, %v3426
    %v3429 = vsel %vm3311, %v3421, %v3428
    %v3430 = vrot.slane %v3425, 4
    %v3432 = vshrl.u32 %v3260, 16
    %v3434 = vrot.slane %v3432, 7
    %v3435 = vshll.u32 %v3260, 16
    %v3437 = vor.u32 %v3434, %v3435
    %v3438 = vrot.slane %v3434, 4
    %v3440 = vshrl.u32 %v3261, 16
    %v3442 = vrot.slane %v3440, 7
    %v3443 = vshll.u32 %v3261, 16
    %v3445 = vor.u32 %v3442, %v3443
    %v3446 = vsel %vm3311, %v3438, %v3445
    %v3447 = vrot.slane %v3442, 4
    %v3449 = vshrl.u32 %v3262, 16
    %v3451 = vrot.slane %v3449, 7
    %v3452 = vshll.u32 %v3262, 16
    %v3454 = vor.u32 %v3451, %v3452
    %v3455 = vrot.slane %v3451, 4
    %v3457 = vshrl.u32 %v3263, 16
    %v3459 = vrot.slane %v3457, 7
    %v3460 = vshll.u32 %v3263, 16
    %v3462 = vor.u32 %v3459, %v3460
    %v3463 = vsel %vm3311, %v3455, %v3462
    %v3464 = vrot.slane %v3459, 4
    %v3466 = vshrl.u32 %v3264, 16
    %v3468 = vrot.slane %v3466, 7
    %v3469 = vshll.u32 %v3264, 16
    %v3471 = vor.u32 %v3468, %v3469
    %v3472 = vrot.slane %v3468, 4
    %v3474 = vshrl.u32 %v3265, 16
    %v3476 = vrot.slane %v3474, 7
    %v3477 = vshll.u32 %v3265, 16
    %v3479 = vor.u32 %v3476, %v3477
    %v3480 = vsel %vm3311, %v3472, %v3479
    %v3481 = vrot.slane %v3476, 4
    %v3483 = vshrl.u32 %v3266, 16
    %v3485 = vrot.slane %v3483, 7
    %v3486 = vshll.u32 %v3266, 16
    %v3488 = vor.u32 %v3485, %v3486
    %v3489 = vrot.slane %v3485, 4
    %v3491 = vshrl.u32 %v3267, 16
    %v3493 = vrot.slane %v3491, 7
    %v3494 = vshll.u32 %v3267, 16
    %v3496 = vor.u32 %v3493, %v3494
    %v3497 = vsel %vm3311, %v3489, %v3496
    %v3498 = vrot.slane %v3493, 4
    %v3500 = vshrl.u32 %v3268, 16
    %v3502 = vrot.slane %v3500, 7
    %v3503 = vshll.u32 %v3268, 16
    %v3505 = vor.u32 %v3502, %v3503
    %v3506 = vrot.slane %v3502, 4
    %v3508 = vshrl.u32 %v3269, 16
    %v3510 = vrot.slane %v3508, 7
    %v3511 = vshll.u32 %v3269, 16
    %v3513 = vor.u32 %v3510, %v3511
    %v3514 = vsel %vm3311, %v3506, %v3513
    %v3515 = vrot.slane %v3510, 4
    %v3517 = vshrl.u32 %v3270, 16
    %v3519 = vrot.slane %v3517, 7
    %v3520 = vshll.u32 %v3270, 16
    %v3522 = vor.u32 %v3519, %v3520
    %v3523 = vrot.slane %v3519, 4
    %v3525 = vshrl.u32 %v3271, 16
    %v3527 = vrot.slane %v3525, 7
    %v3528 = vshll.u32 %v3271, 16
    %v3530 = vor.u32 %v3527, %v3528
    %v3531 = vsel %vm3311, %v3523, %v3530
    %v3532 = vrot.slane %v3527, 4
    %v3534 = vshrl.u32 %v3272, 16
    %v3536 = vrot.slane %v3534, 7
    %v3537 = vshll.u32 %v3272, 16
    %v3539 = vor.u32 %v3536, %v3537
    %v3540 = vrot.slane %v3536, 4
    %v3542 = vshrl.u32 %v3273, 16
    %v3544 = vrot.slane %v3542, 7
    %v3545 = vshll.u32 %v3273, 16
    %v3547 = vor.u32 %v3544, %v3545
    %v3548 = vsel %vm3311, %v3540, %v3547
    %v3549 = vrot.slane %v3544, 4
    %v3551 = vshrl.u32 %v3274, 16
    %v3553 = vrot.slane %v3551, 7
    %v3554 = vshll.u32 %v3274, 16
    %v3556 = vor.u32 %v3553, %v3554
    %v3557 = vrot.slane %v3553, 4
    %v3559 = vshrl.u32 %v3275, 16
    %v3561 = vrot.slane %v3559, 7
    %v3562 = vshll.u32 %v3275, 16
    %v3564 = vor.u32 %v3561, %v3562
    %v3565 = vsel %vm3311, %v3557, %v3564
    %v3566 = vrot.slane %v3561, 4
    %v3568 = vshrl.u32 %v3276, 16
    %v3570 = vrot.slane %v3568, 7
    %v3571 = vshll.u32 %v3276, 16
    %v3573 = vor.u32 %v3570, %v3571
    %v3574 = vrot.slane %v3570, 4
    %v3576 = vshrl.u32 %v3277, 16
    %v3578 = vrot.slane %v3576, 7
    %v3579 = vshll.u32 %v3277, 16
    %v3581 = vor.u32 %v3578, %v3579
    %v3582 = vsel %vm3311, %v3574, %v3581
    %v3583 = vrot.slane %v3578, 4
    %v3585 = vshrl.u32 %v3278, 16
    %v3587 = vrot.slane %v3585, 7
    %v3588 = vshll.u32 %v3278, 16
    %v3590 = vor.u32 %v3587, %v3588
    %v3591 = vrot.slane %v3587, 4
    %v3593 = vshrl.u32 %v3279, 16
    %v3595 = vrot.slane %v3593, 7
    %v3596 = vshll.u32 %v3279, 16
    %v3598 = vor.u32 %v3595, %v3596
    %v3599 = vsel %vm3311, %v3591, %v3598
    %v3600 = vrot.slane %v3595, 4
    %v3602 = vshrl.u32 %v3280, 16
    %v3604 = vrot.slane %v3602, 7
    %v3605 = vshll.u32 %v3280, 16
    %v3607 = vor.u32 %v3604, %v3605
    %v3608 = vrot.slane %v3604, 4
    %v3610 = vshrl.u32 %v3281, 16
    %v3612 = vrot.slane %v3610, 7
    %v3613 = vshll.u32 %v3281, 16
    %v3615 = vor.u32 %v3612, %v3613
    %v3616 = vsel %vm3311, %v3608, %v3615
    %v3617 = vrot.slane %v3612, 4
    %v3619 = vshrl.u32 %v3282, 16
    %v3621 = vrot.slane %v3619, 7
    %v3622 = vshll.u32 %v3282, 16
    %v3624 = vor.u32 %v3621, %v3622
    %v3625 = vrot.slane %v3621, 4
    %v3627 = vshrl.u32 %v3283, 16
    %v3629 = vrot.slane %v3627, 7
    %v3630 = vshll.u32 %v3283, 16
    %v3632 = vor.u32 %v3629, %v3630
    %v3633 = vsel %vm3311, %v3625, %v3632
    %v3634 = vrot.slane %v3629, 4
    %v3636 = vshrl.u32 %v3284, 16
    %v3638 = vrot.slane %v3636, 7
    %v3639 = vshll.u32 %v3284, 16
    %v3641 = vor.u32 %v3638, %v3639
    %v3642 = vrot.slane %v3638, 4
    %v3644 = vshrl.u32 %v3285, 16
    %v3646 = vrot.slane %v3644, 7
    %v3647 = vshll.u32 %v3285, 16
    %v3649 = vor.u32 %v3646, %v3647
    %v3650 = vsel %vm3311, %v3642, %v3649
    %v3651 = vrot.slane %v3646, 4
    %v3653 = vshrl.u32 %v3286, 16
    %v3655 = vrot.slane %v3653, 7
    %v3656 = vshll.u32 %v3286, 16
    %v3658 = vor.u32 %v3655, %v3656
    %v3659 = vrot.slane %v3655, 4
    %v3661 = vshrl.u32 %v3287, 16
    %v3663 = vrot.slane %v3661, 7
    %v3664 = vshll.u32 %v3287, 16
    %v3666 = vor.u32 %v3663, %v3664
    %v3667 = vsel %vm3311, %v3659, %v3666
    %v3668 = vrot.slane %v3663, 4
    %v3670 = vshrl.u32 %v3288, 16
    %v3672 = vrot.slane %v3670, 7
    %v3673 = vshll.u32 %v3288, 16
    %v3675 = vor.u32 %v3672, %v3673
    %v3676 = vrot.slane %v3672, 4
    %v3678 = vshrl.u32 %v3289, 16
    %v3680 = vrot.slane %v3678, 7
    %v3681 = vshll.u32 %v3289, 16
    %v3683 = vor.u32 %v3680, %v3681
    %v3684 = vsel %vm3311, %v3676, %v3683
    %v3685 = vrot.slane %v3680, 4
    %v3687 = vshrl.u32 %v3290, 16
    %v3689 = vrot.slane %v3687, 7
    %v3690 = vshll.u32 %v3290, 16
    %v3692 = vor.u32 %v3689, %v3690
    %v3693 = vrot.slane %v3689, 4
    %v3695 = vshrl.u32 %v3291, 16
    %v3697 = vrot.slane %v3695, 7
    %v3698 = vshll.u32 %v3291, 16
    %v3700 = vor.u32 %v3697, %v3698
    %v3701 = vsel %vm3311, %v3693, %v3700
    %v3702 = vrot.slane %v3697, 4
    %v3704 = vshrl.u32 %v3292, 16
    %v3706 = vrot.slane %v3704, 7
    %v3707 = vshll.u32 %v3292, 16
    %v3709 = vor.u32 %v3706, %v3707
    %v3710 = vrot.slane %v3706, 4
    %v3712 = vshrl.u32 %v3293, 16
    %v3714 = vrot.slane %v3712, 7
    %v3715 = vshll.u32 %v3293, 16
    %v3717 = vor.u32 %v3714, %v3715
    %v3718 = vsel %vm3311, %v3710, %v3717
    %v3719 = vrot.slane %v3714, 4
    %v3721 = vshrl.u32 %v3294, 16
    %v3723 = vrot.slane %v3721, 7
    %v3724 = vshll.u32 %v3294, 16
    %v3726 = vor.u32 %v3723, %v3724
    %v3727 = vrot.slane %v3723, 4
    %v3729 = vshrl.u32 %v3295, 16
    %v3731 = vrot.slane %v3729, 7
    %v3732 = vshll.u32 %v3295, 16
    %v3734 = vor.u32 %v3731, %v3732
    %v3735 = vsel %vm3311, %v3727, %v3734
    %v3736 = vrot.slane %v3731, 4
    %v3738 = vshrl.u32 %v3296, 16
    %v3740 = vrot.slane %v3738, 7
    %v3741 = vshll.u32 %v3296, 16
    %v3743 = vor.u32 %v3740, %v3741
    %v3744 = vrot.slane %v3740, 4
    %v3746 = vshrl.u32 %v3297, 16
    %v3748 = vrot.slane %v3746, 7
    %v3749 = vshll.u32 %v3297, 16
    %v3751 = vor.u32 %v3748, %v3749
    %v3752 = vsel %vm3311, %v3744, %v3751
    %v3753 = vrot.slane %v3748, 4
    %v3755 = vshrl.u32 %v3298, 16
    %v3757 = vrot.slane %v3755, 7
    %v3758 = vshll.u32 %v3298, 16
    %v3760 = vor.u32 %v3757, %v3758
    %v3761 = vrot.slane %v3757, 4
    %v3763 = vshrl.u32 %v3299, 16
    %v3765 = vrot.slane %v3763, 7
    %v3766 = vshll.u32 %v3299, 16
    %v3768 = vor.u32 %v3765, %v3766
    %v3769 = vsel %vm3311, %v3761, %v3768
    %v3770 = vrot.slane %v3765, 4
    %v3772 = vshrl.u32 %v3300, 16
    %v3774 = vrot.slane %v3772, 7
    %v3775 = vshll.u32 %v3300, 16
    %v3777 = vor.u32 %v3774, %v3775
    %v3778 = vrot.slane %v3774, 4
    %v3780 = vshrl.u32 %v3301, 16
    %v3782 = vrot.slane %v3780, 7
    %v3783 = vshll.u32 %v3301, 16
    %v3785 = vor.u32 %v3782, %v3783
    %v3786 = vsel %vm3311, %v3778, %v3785
    %v3787 = vrot.slane %v3782, 4
    %v3789 = vshrl.u32 %v3302, 16
    %v3791 = vrot.slane %v3789, 7
    %v3792 = vshll.u32 %v3302, 16
    %v3794 = vor.u32 %v3791, %v3792
    %v3795 = vrot.slane %v3791, 4
    %v3797 = vshrl.u32 %v3303, 16
    %v3799 = vrot.slane %v3797, 7
    %v3800 = vshll.u32 %v3303, 16
    %v3802 = vor.u32 %v3799, %v3800
    %v3803 = vsel %vm3311, %v3795, %v3802
    %v3804 = vrot.slane %v3799, 4
    %v3806 = vshrl.u32 %v3304, 16
    %v3808 = vrot.slane %v3806, 7
    %v3809 = vshll.u32 %v3304, 16
    %v3811 = vor.u32 %v3808, %v3809
    %v3812 = vrot.slane %v3808, 4
    %v3814 = vshrl.u32 %v3305, 16
    %v3816 = vrot.slane %v3814, 7
    %v3817 = vshll.u32 %v3305, 16
    %v3819 = vor.u32 %v3816, %v3817
    %v3820 = vsel %vm3311, %v3812, %v3819
    %v3821 = vrot.slane %v3816, 4
    %v3823 = vshrl.u32 %v3306, 16
    %v3825 = vrot.slane %v3823, 7
    %v3826 = vshll.u32 %v3306, 16
    %v3828 = vor.u32 %v3825, %v3826
    %v3829 = vrot.slane %v3825, 4
    %v3831 = vshrl.u32 %v3307, 16
    %v3833 = vrot.slane %v3831, 7
    %v3834 = vshll.u32 %v3307, 16
    %v3836 = vor.u32 %v3833, %v3834
    %v3837 = vsel %vm3311, %v3829, %v3836
    %v3838 = vrot.slane %v3833, 4
    %v3840 = vshrl.u32 %v3308, 16
    %v3842 = vrot.slane %v3840, 7
    %v3843 = vshll.u32 %v3308, 16
    %v3845 = vor.u32 %v3842, %v3843
    %v3846 = vrot.slane %v3842, 4
    %v3848 = vshrl.u32 %v3309, 16
    %v3850 = vrot.slane %v3848, 7
    %v3851 = vshll.u32 %v3309, 16
    %v3853 = vor.u32 %v3850, %v3851
    %v3854 = vsel %vm3311, %v3846, %v3853
    %v3855 = vrot.slane %v3850, 4
    %vm3952 = vcmask 60416
    %vm3953 = vmand %vm3952, %vm3020
    %v3954 = vld [vmem:[%s2920] sm:$0xf]
    %v3955 = vsel %vm3953, %v3318, %v3954
    %3956 = vst [vmem:[%s2920] sm:$0xf] %v3955
    %3957 = vst.msk [vmem:[%s2920 + $0x4] sm:$0xf] %vm2905, %v3327
    %v3958 = vld [vmem:[%s2920 + $0x8] sm:$0x1]
    %v3959 = vsel %vm2923, %v3328, %v3958
    %3960 = vst [vmem:[%s2920 + $0x8] sm:$0x1] %v3959
    %v3961 = vld [vmem:[%s2920 + $0xc] sm:$0xf]
    %v3962 = vsel %vm3953, %v3335, %v3961
    %3963 = vst [vmem:[%s2920 + $0xc] sm:$0xf] %v3962
    %3964 = vst.msk [vmem:[%s2920 + $0x10] sm:$0xf] %vm2905, %v3344
    %v3965 = vld [vmem:[%s2920 + $0x14] sm:$0x1]
    %v3966 = vsel %vm2923, %v3345, %v3965
    %3967 = vst [vmem:[%s2920 + $0x14] sm:$0x1] %v3966
    %v3968 = vld [vmem:[%s2920 + $0x18] sm:$0xf]
    %v3969 = vsel %vm3953, %v3352, %v3968
    %3970 = vst [vmem:[%s2920 + $0x18] sm:$0xf] %v3969
    %3971 = vst.msk [vmem:[%s2920 + $0x1c] sm:$0xf] %vm2905, %v3361
    %v3972 = vld [vmem:[%s2920 + $0x20] sm:$0x1]
    %v3973 = vsel %vm2923, %v3362, %v3972
    %3974 = vst [vmem:[%s2920 + $0x20] sm:$0x1] %v3973
    %v3975 = vld [vmem:[%s2920 + $0x24] sm:$0xf]
    %v3976 = vsel %vm3953, %v3369, %v3975
    %3977 = vst [vmem:[%s2920 + $0x24] sm:$0xf] %v3976
    %3978 = vst.msk [vmem:[%s2920 + $0x28] sm:$0xf] %vm2905, %v3378
    %v3979 = vld [vmem:[%s2920 + $0x2c] sm:$0x1]
    %v3980 = vsel %vm2923, %v3379, %v3979
    %3981 = vst [vmem:[%s2920 + $0x2c] sm:$0x1] %v3980
    %v3982 = vld [vmem:[%s2920 + $0x30] sm:$0xf]
    %v3983 = vsel %vm3953, %v3386, %v3982
    %3984 = vst [vmem:[%s2920 + $0x30] sm:$0xf] %v3983
    %3985 = vst.msk [vmem:[%s2920 + $0x34] sm:$0xf] %vm2905, %v3395
    %v3986 = vld [vmem:[%s2920 + $0x38] sm:$0x1]
    %v3987 = vsel %vm2923, %v3396, %v3986
    %3988 = vst [vmem:[%s2920 + $0x38] sm:$0x1] %v3987
    %v3989 = vld [vmem:[%s2920 + $0x3c] sm:$0xf]
    %v3990 = vsel %vm3953, %v3403, %v3989
    %3991 = vst [vmem:[%s2920 + $0x3c] sm:$0xf] %v3990
    %3992 = vst.msk [vmem:[%s2920 + $0x40] sm:$0xf] %vm2905, %v3412
    %v3993 = vld [vmem:[%s2920 + $0x44] sm:$0x1]
    %v3994 = vsel %vm2923, %v3413, %v3993
    %3995 = vst [vmem:[%s2920 + $0x44] sm:$0x1] %v3994
    %v3996 = vld [vmem:[%s2920 + $0x48] sm:$0xf]
    %v3997 = vsel %vm3953, %v3420, %v3996
    %3998 = vst [vmem:[%s2920 + $0x48] sm:$0xf] %v3997
    %3999 = vst.msk [vmem:[%s2920 + $0x4c] sm:$0xf] %vm2905, %v3429
    %v4000 = vld [vmem:[%s2920 + $0x50] sm:$0x1]
    %v4001 = vsel %vm2923, %v3430, %v4000
    %4002 = vst [vmem:[%s2920 + $0x50] sm:$0x1] %v4001
    %v4003 = vld [vmem:[%s2920 + $0x54] sm:$0xf]
    %v4004 = vsel %vm3953, %v3437, %v4003
    %4005 = vst [vmem:[%s2920 + $0x54] sm:$0xf] %v4004
    %4006 = vst.msk [vmem:[%s2920 + $0x58] sm:$0xf] %vm2905, %v3446
    %v4007 = vld [vmem:[%s2920 + $0x5c] sm:$0x1]
    %v4008 = vsel %vm2923, %v3447, %v4007
    %4009 = vst [vmem:[%s2920 + $0x5c] sm:$0x1] %v4008
    %v4010 = vld [vmem:[%s2920 + $0x60] sm:$0xf]
    %v4011 = vsel %vm3953, %v3454, %v4010
    %4012 = vst [vmem:[%s2920 + $0x60] sm:$0xf] %v4011
    %4013 = vst.msk [vmem:[%s2920 + $0x64] sm:$0xf] %vm2905, %v3463
    %v4014 = vld [vmem:[%s2920 + $0x68] sm:$0x1]
    %v4015 = vsel %vm2923, %v3464, %v4014
    %4016 = vst [vmem:[%s2920 + $0x68] sm:$0x1] %v4015
    %v4017 = vld [vmem:[%s2920 + $0x6c] sm:$0xf]
    %v4018 = vsel %vm3953, %v3471, %v4017
    %4019 = vst [vmem:[%s2920 + $0x6c] sm:$0xf] %v4018
    %4020 = vst.msk [vmem:[%s2920 + $0x70] sm:$0xf] %vm2905, %v3480
    %v4021 = vld [vmem:[%s2920 + $0x74] sm:$0x1]
    %v4022 = vsel %vm2923, %v3481, %v4021
    %4023 = vst [vmem:[%s2920 + $0x74] sm:$0x1] %v4022
    %v4024 = vld [vmem:[%s2920 + $0x78] sm:$0xf]
    %v4025 = vsel %vm3953, %v3488, %v4024
    %4026 = vst [vmem:[%s2920 + $0x78] sm:$0xf] %v4025
    %4027 = vst.msk [vmem:[%s2920 + $0x7c] sm:$0xf] %vm2905, %v3497
    %v4028 = vld [vmem:[%s2920 + $0x80] sm:$0x1]
    %v4029 = vsel %vm2923, %v3498, %v4028
    %4030 = vst [vmem:[%s2920 + $0x80] sm:$0x1] %v4029
    %v4031 = vld [vmem:[%s2920 + $0x84] sm:$0xf]
    %v4032 = vsel %vm3953, %v3505, %v4031
    %4033 = vst [vmem:[%s2920 + $0x84] sm:$0xf] %v4032
    %4034 = vst.msk [vmem:[%s2920 + $0x88] sm:$0xf] %vm2905, %v3514
    %v4035 = vld [vmem:[%s2920 + $0x8c] sm:$0x1]
    %v4036 = vsel %vm2923, %v3515, %v4035
    %4037 = vst [vmem:[%s2920 + $0x8c] sm:$0x1] %v4036
    %v4038 = vld [vmem:[%s2920 + $0x90] sm:$0xf]
    %v4039 = vsel %vm3953, %v3522, %v4038
    %4040 = vst [vmem:[%s2920 + $0x90] sm:$0xf] %v4039
    %4041 = vst.msk [vmem:[%s2920 + $0x94] sm:$0xf] %vm2905, %v3531
    %v4042 = vld [vmem:[%s2920 + $0x98] sm:$0x1]
    %v4043 = vsel %vm2923, %v3532, %v4042
    %4044 = vst [vmem:[%s2920 + $0x98] sm:$0x1] %v4043
    %v4045 = vld [vmem:[%s2920 + $0x9c] sm:$0xf]
    %v4046 = vsel %vm3953, %v3539, %v4045
    %4047 = vst [vmem:[%s2920 + $0x9c] sm:$0xf] %v4046
    %4048 = vst.msk [vmem:[%s2920 + $0xa0] sm:$0xf] %vm2905, %v3548
    %v4049 = vld [vmem:[%s2920 + $0xa4] sm:$0x1]
    %v4050 = vsel %vm2923, %v3549, %v4049
    %4051 = vst [vmem:[%s2920 + $0xa4] sm:$0x1] %v4050
    %v4052 = vld [vmem:[%s2920 + $0xa8] sm:$0xf]
    %v4053 = vsel %vm3953, %v3556, %v4052
    %4054 = vst [vmem:[%s2920 + $0xa8] sm:$0xf] %v4053
    %4055 = vst.msk [vmem:[%s2920 + $0xac] sm:$0xf] %vm2905, %v3565
    %v4056 = vld [vmem:[%s2920 + $0xb0] sm:$0x1]
    %v4057 = vsel %vm2923, %v3566, %v4056
    %4058 = vst [vmem:[%s2920 + $0xb0] sm:$0x1] %v4057
    %v4059 = vld [vmem:[%s2920 + $0xb4] sm:$0xf]
    %v4060 = vsel %vm3953, %v3573, %v4059
    %4061 = vst [vmem:[%s2920 + $0xb4] sm:$0xf] %v4060
    %4062 = vst.msk [vmem:[%s2920 + $0xb8] sm:$0xf] %vm2905, %v3582
    %v4063 = vld [vmem:[%s2920 + $0xbc] sm:$0x1]
    %v4064 = vsel %vm2923, %v3583, %v4063
    %4065 = vst [vmem:[%s2920 + $0xbc] sm:$0x1] %v4064
    %v4066 = vld [vmem:[%s2920 + $0xd8] sm:$0xf]
    %v4067 = vsel %vm3953, %v3590, %v4066
    %4068 = vst [vmem:[%s2920 + $0xd8] sm:$0xf] %v4067
    %4069 = vst.msk [vmem:[%s2920 + $0xdc] sm:$0xf] %vm2905, %v3599
    %v4070 = vld [vmem:[%s2920 + $0xe0] sm:$0x1]
    %v4071 = vsel %vm2923, %v3600, %v4070
    %4072 = vst [vmem:[%s2920 + $0xe0] sm:$0x1] %v4071
    %v4073 = vld [vmem:[%s2920 + $0xe4] sm:$0xf]
    %v4074 = vsel %vm3953, %v3607, %v4073
    %4075 = vst [vmem:[%s2920 + $0xe4] sm:$0xf] %v4074
    %4076 = vst.msk [vmem:[%s2920 + $0xe8] sm:$0xf] %vm2905, %v3616
    %v4077 = vld [vmem:[%s2920 + $0xec] sm:$0x1]
    %v4078 = vsel %vm2923, %v3617, %v4077
    %4079 = vst [vmem:[%s2920 + $0xec] sm:$0x1] %v4078
    %v4080 = vld [vmem:[%s2920 + $0xf0] sm:$0xf]
    %v4081 = vsel %vm3953, %v3624, %v4080
    %4082 = vst [vmem:[%s2920 + $0xf0] sm:$0xf] %v4081
    %4083 = vst.msk [vmem:[%s2920 + $0xf4] sm:$0xf] %vm2905, %v3633
    %v4084 = vld [vmem:[%s2920 + $0xf8] sm:$0x1]
    %v4085 = vsel %vm2923, %v3634, %v4084
    %4086 = vst [vmem:[%s2920 + $0xf8] sm:$0x1] %v4085
    %v4087 = vld [vmem:[%s2920 + $0xfc] sm:$0xf]
    %v4088 = vsel %vm3953, %v3641, %v4087
    %4089 = vst [vmem:[%s2920 + $0xfc] sm:$0xf] %v4088
    %4090 = vst.msk [vmem:[%s2920 + $0x100] sm:$0xf] %vm2905, %v3650
    %v4091 = vld [vmem:[%s2920 + $0x104] sm:$0x1]
    %v4092 = vsel %vm2923, %v3651, %v4091
    %4093 = vst [vmem:[%s2920 + $0x104] sm:$0x1] %v4092
    %v4094 = vld [vmem:[%s2920 + $0x108] sm:$0xf]
    %v4095 = vsel %vm3953, %v3658, %v4094
    %4096 = vst [vmem:[%s2920 + $0x108] sm:$0xf] %v4095
    %4097 = vst.msk [vmem:[%s2920 + $0x10c] sm:$0xf] %vm2905, %v3667
    %v4098 = vld [vmem:[%s2920 + $0x110] sm:$0x1]
    %v4099 = vsel %vm2923, %v3668, %v4098
    %4100 = vst [vmem:[%s2920 + $0x110] sm:$0x1] %v4099
    %v4101 = vld [vmem:[%s2920 + $0x114] sm:$0xf]
    %v4102 = vsel %vm3953, %v3675, %v4101
    %4103 = vst [vmem:[%s2920 + $0x114] sm:$0xf] %v4102
    %4104 = vst.msk [vmem:[%s2920 + $0x118] sm:$0xf] %vm2905, %v3684
    %v4105 = vld [vmem:[%s2920 + $0x11c] sm:$0x1]
    %v4106 = vsel %vm2923, %v3685, %v4105
    %4107 = vst [vmem:[%s2920 + $0x11c] sm:$0x1] %v4106
    %v4108 = vld [vmem:[%s2920 + $0x120] sm:$0xf]
    %v4109 = vsel %vm3953, %v3692, %v4108
    %4110 = vst [vmem:[%s2920 + $0x120] sm:$0xf] %v4109
    %4111 = vst.msk [vmem:[%s2920 + $0x124] sm:$0xf] %vm2905, %v3701
    %v4112 = vld [vmem:[%s2920 + $0x128] sm:$0x1]
    %v4113 = vsel %vm2923, %v3702, %v4112
    %4114 = vst [vmem:[%s2920 + $0x128] sm:$0x1] %v4113
    %v4115 = vld [vmem:[%s2920 + $0x12c] sm:$0xf]
    %v4116 = vsel %vm3953, %v3709, %v4115
    %4117 = vst [vmem:[%s2920 + $0x12c] sm:$0xf] %v4116
    %4118 = vst.msk [vmem:[%s2920 + $0x130] sm:$0xf] %vm2905, %v3718
    %v4119 = vld [vmem:[%s2920 + $0x134] sm:$0x1]
    %v4120 = vsel %vm2923, %v3719, %v4119
    %4121 = vst [vmem:[%s2920 + $0x134] sm:$0x1] %v4120
    %v4122 = vld [vmem:[%s2920 + $0x138] sm:$0xf]
    %v4123 = vsel %vm3953, %v3726, %v4122
    %4124 = vst [vmem:[%s2920 + $0x138] sm:$0xf] %v4123
    %4125 = vst.msk [vmem:[%s2920 + $0x13c] sm:$0xf] %vm2905, %v3735
    %v4126 = vld [vmem:[%s2920 + $0x140] sm:$0x1]
    %v4127 = vsel %vm2923, %v3736, %v4126
    %4128 = vst [vmem:[%s2920 + $0x140] sm:$0x1] %v4127
    %v4129 = vld [vmem:[%s2920 + $0x144] sm:$0xf]
    %v4130 = vsel %vm3953, %v3743, %v4129
    %4131 = vst [vmem:[%s2920 + $0x144] sm:$0xf] %v4130
    %4132 = vst.msk [vmem:[%s2920 + $0x148] sm:$0xf] %vm2905, %v3752
    %v4133 = vld [vmem:[%s2920 + $0x14c] sm:$0x1]
    %v4134 = vsel %vm2923, %v3753, %v4133
    %4135 = vst [vmem:[%s2920 + $0x14c] sm:$0x1] %v4134
    %v4136 = vld [vmem:[%s2920 + $0x150] sm:$0xf]
    %v4137 = vsel %vm3953, %v3760, %v4136
    %4138 = vst [vmem:[%s2920 + $0x150] sm:$0xf] %v4137
    %4139 = vst.msk [vmem:[%s2920 + $0x154] sm:$0xf] %vm2905, %v3769
    %v4140 = vld [vmem:[%s2920 + $0x158] sm:$0x1]
    %v4141 = vsel %vm2923, %v3770, %v4140
    %4142 = vst [vmem:[%s2920 + $0x158] sm:$0x1] %v4141
    %v4143 = vld [vmem:[%s2920 + $0x15c] sm:$0xf]
    %v4144 = vsel %vm3953, %v3777, %v4143
    %4145 = vst [vmem:[%s2920 + $0x15c] sm:$0xf] %v4144
    %4146 = vst.msk [vmem:[%s2920 + $0x160] sm:$0xf] %vm2905, %v3786
    %v4147 = vld [vmem:[%s2920 + $0x164] sm:$0x1]
    %v4148 = vsel %vm2923, %v3787, %v4147
    %4149 = vst [vmem:[%s2920 + $0x164] sm:$0x1] %v4148
    %v4150 = vld [vmem:[%s2920 + $0x168] sm:$0xf]
    %v4151 = vsel %vm3953, %v3794, %v4150
    %4152 = vst [vmem:[%s2920 + $0x168] sm:$0xf] %v4151
    %4153 = vst.msk [vmem:[%s2920 + $0x16c] sm:$0xf] %vm2905, %v3803
    %v4154 = vld [vmem:[%s2920 + $0x170] sm:$0x1]
    %v4155 = vsel %vm2923, %v3804, %v4154
    %4156 = vst [vmem:[%s2920 + $0x170] sm:$0x1] %v4155
    %v4157 = vld [vmem:[%s2920 + $0x174] sm:$0xf]
    %v4158 = vsel %vm3953, %v3811, %v4157
    %4159 = vst [vmem:[%s2920 + $0x174] sm:$0xf] %v4158
    %4160 = vst.msk [vmem:[%s2920 + $0x178] sm:$0xf] %vm2905, %v3820
    %v4161 = vld [vmem:[%s2920 + $0x17c] sm:$0x1]
    %v4162 = vsel %vm2923, %v3821, %v4161
    %4163 = vst [vmem:[%s2920 + $0x17c] sm:$0x1] %v4162
    %v4164 = vld [vmem:[%s2920 + $0x180] sm:$0xf]
    %v4165 = vsel %vm3953, %v3828, %v4164
    %4166 = vst [vmem:[%s2920 + $0x180] sm:$0xf] %v4165
    %4167 = vst.msk [vmem:[%s2920 + $0x184] sm:$0xf] %vm2905, %v3837
    %v4168 = vld [vmem:[%s2920 + $0x188] sm:$0x1]
    %v4169 = vsel %vm2923, %v3838, %v4168
    %4170 = vst [vmem:[%s2920 + $0x188] sm:$0x1] %v4169
    %v4171 = vld [vmem:[%s2920 + $0x18c] sm:$0xf]
    %v4172 = vsel %vm3953, %v3845, %v4171
    %4173 = vst [vmem:[%s2920 + $0x18c] sm:$0xf] %v4172
    %4174 = vst.msk [vmem:[%s2920 + $0x190] sm:$0xf] %vm2905, %v3854
    %v4175 = vld [vmem:[%s2920 + $0x194] sm:$0x1]
    %v4176 = vsel %vm2923, %v3855, %v4175
    %4177 = vst [vmem:[%s2920 + $0x194] sm:$0x1] %v4176
    %v4178 = vld [vmem:[#allocation2] sm:$0xf]
    %v4179 = vld [vmem:[#allocation2 + $0x4] sm:$0xf]
    %v4180 = vld [vmem:[#allocation2 + $0xc] sm:$0xf]
    %v4181 = vld [vmem:[#allocation2 + $0x10] sm:$0xf]
    %v4182 = vld [vmem:[#allocation2 + $0x18] sm:$0xf]
    %v4183 = vld [vmem:[#allocation2 + $0x1c] sm:$0xf]
    %v4184 = vld [vmem:[#allocation2 + $0x24] sm:$0xf]
    %v4185 = vld [vmem:[#allocation2 + $0x28] sm:$0xf]
    %v4186 = vld [vmem:[#allocation2 + $0x30] sm:$0xf]
    %v4187 = vld [vmem:[#allocation2 + $0x34] sm:$0xf]
    %v4188 = vld [vmem:[#allocation2 + $0x3c] sm:$0xf]
    %v4189 = vld [vmem:[#allocation2 + $0x40] sm:$0xf]
    %v4190 = vld [vmem:[#allocation2 + $0x48] sm:$0xf]
    %v4191 = vld [vmem:[#allocation2 + $0x4c] sm:$0xf]
    %v4192 = vld [vmem:[#allocation2 + $0x54] sm:$0xf]
    %v4193 = vld [vmem:[#allocation2 + $0x58] sm:$0xf]
    %v4194 = vld [vmem:[#allocation2 + $0x60] sm:$0xf]
    %v4195 = vld [vmem:[#allocation2 + $0x64] sm:$0xf]
    %v4196 = vld [vmem:[#allocation2 + $0x6c] sm:$0xf]
    %v4197 = vld [vmem:[#allocation2 + $0x70] sm:$0xf]
    %v4198 = vld [vmem:[#allocation2 + $0x78] sm:$0xf]
    %v4199 = vld [vmem:[#allocation2 + $0x7c] sm:$0xf]
    %v4200 = vld [vmem:[#allocation2 + $0x84] sm:$0xf]
    %v4201 = vld [vmem:[#allocation2 + $0x88] sm:$0xf]
    %v4202 = vld [vmem:[#allocation2 + $0x90] sm:$0xf]
    %v4203 = vld [vmem:[#allocation2 + $0x94] sm:$0xf]
    %v4204 = vld [vmem:[#allocation2 + $0x9c] sm:$0xf]
    %v4205 = vld [vmem:[#allocation2 + $0xa0] sm:$0xf]
    %v4206 = vld [vmem:[#allocation2 + $0xa8] sm:$0xf]
    %v4207 = vld [vmem:[#allocation2 + $0xac] sm:$0xf]
    %v4208 = vld [vmem:[#allocation2 + $0xb4] sm:$0xf]
    %v4209 = vld [vmem:[#allocation2 + $0xb8] sm:$0xf]
    %v4210 = vld [vmem:[#allocation2 + $0xd8] sm:$0xf]
    %v4211 = vld [vmem:[#allocation2 + $0xdc] sm:$0xf]
    %v4212 = vld [vmem:[#allocation2 + $0xe4] sm:$0xf]
    %v4213 = vld [vmem:[#allocation2 + $0xe8] sm:$0xf]
    %v4214 = vld [vmem:[#allocation2 + $0xf0] sm:$0xf]
    %v4215 = vld [vmem:[#allocation2 + $0xf4] sm:$0xf]
    %v4216 = vld [vmem:[#allocation2 + $0xfc] sm:$0xf]
    %v4217 = vld [vmem:[#allocation2 + $0x100] sm:$0xf]
    %v4218 = vld [vmem:[#allocation2 + $0x108] sm:$0xf]
    %v4219 = vld [vmem:[#allocation2 + $0x10c] sm:$0xf]
    %v4220 = vld [vmem:[#allocation2 + $0x114] sm:$0xf]
    %v4221 = vld [vmem:[#allocation2 + $0x118] sm:$0xf]
    %v4222 = vld [vmem:[#allocation2 + $0x120] sm:$0xf]
    %v4223 = vld [vmem:[#allocation2 + $0x124] sm:$0xf]
    %v4224 = vld [vmem:[#allocation2 + $0x12c] sm:$0xf]
    %v4225 = vld [vmem:[#allocation2 + $0x130] sm:$0xf]
    %v4226 = vld [vmem:[#allocation2 + $0x138] sm:$0xf]
    %v4227 = vld [vmem:[#allocation2 + $0x13c] sm:$0xf]
    %v4228 = vld [vmem:[#allocation2 + $0x144] sm:$0xf]
    %v4229 = vld [vmem:[#allocation2 + $0x148] sm:$0xf]
    %v4230 = vld [vmem:[#allocation2 + $0x150] sm:$0xf]
    %v4231 = vld [vmem:[#allocation2 + $0x154] sm:$0xf]
    %v4232 = vld [vmem:[#allocation2 + $0x15c] sm:$0xf]
    %v4233 = vld [vmem:[#allocation2 + $0x160] sm:$0xf]
    %v4234 = vld [vmem:[#allocation2 + $0x168] sm:$0xf]
    %v4235 = vld [vmem:[#allocation2 + $0x16c] sm:$0xf]
    %v4236 = vld [vmem:[#allocation2 + $0x174] sm:$0xf]
    %v4237 = vld [vmem:[#allocation2 + $0x178] sm:$0xf]
    %v4238 = vld [vmem:[#allocation2 + $0x180] sm:$0xf]
    %v4239 = vld [vmem:[#allocation2 + $0x184] sm:$0xf]
    %v4240 = vld [vmem:[#allocation2 + $0x18c] sm:$0xf]
    %v4241 = vld [vmem:[#allocation2 + $0x190] sm:$0xf]
    %v4242 = vld [vmem:[#allocation2 + $0x8] sm:$0x1]
    %v4243 = vld [vmem:[#allocation2 + $0x14] sm:$0x1]
    %v4244 = vld [vmem:[#allocation2 + $0x20] sm:$0x1]
    %v4245 = vld [vmem:[#allocation2 + $0x2c] sm:$0x1]
    %v4246 = vld [vmem:[#allocation2 + $0x38] sm:$0x1]
    %v4247 = vld [vmem:[#allocation2 + $0x44] sm:$0x1]
    %v4248 = vld [vmem:[#allocation2 + $0x50] sm:$0x1]
    %v4249 = vld [vmem:[#allocation2 + $0x5c] sm:$0x1]
    %v4250 = vld [vmem:[#allocation2 + $0x68] sm:$0x1]
    %v4251 = vld [vmem:[#allocation2 + $0x74] sm:$0x1]
    %v4252 = vld [vmem:[#allocation2 + $0x80] sm:$0x1]
    %v4253 = vld [vmem:[#allocation2 + $0x8c] sm:$0x1]
    %v4254 = vld [vmem:[#allocation2 + $0x98] sm:$0x1]
    %v4255 = vld [vmem:[#allocation2 + $0xa4] sm:$0x1]
    %v4256 = vld [vmem:[#allocation2 + $0xb0] sm:$0x1]
    %v4257 = vld [vmem:[#allocation2 + $0xbc] sm:$0x1]
    %v4258 = vld [vmem:[#allocation2 + $0xe0] sm:$0x1]
    %v4259 = vld [vmem:[#allocation2 + $0xec] sm:$0x1]
    %v4260 = vld [vmem:[#allocation2 + $0xf8] sm:$0x1]
    %v4261 = vld [vmem:[#allocation2 + $0x104] sm:$0x1]
    %v4262 = vld [vmem:[#allocation2 + $0x110] sm:$0x1]
    %v4263 = vld [vmem:[#allocation2 + $0x11c] sm:$0x1]
    %v4264 = vld [vmem:[#allocation2 + $0x128] sm:$0x1]
    %v4265 = vld [vmem:[#allocation2 + $0x134] sm:$0x1]
    %v4266 = vld [vmem:[#allocation2 + $0x140] sm:$0x1]
    %v4267 = vld [vmem:[#allocation2 + $0x14c] sm:$0x1]
    %v4268 = vld [vmem:[#allocation2 + $0x158] sm:$0x1]
    %v4269 = vld [vmem:[#allocation2 + $0x164] sm:$0x1]
    %v4270 = vld [vmem:[#allocation2 + $0x170] sm:$0x1]
    %v4271 = vld [vmem:[#allocation2 + $0x17c] sm:$0x1]
    %v4272 = vld [vmem:[#allocation2 + $0x188] sm:$0x1]
    %v4273 = vld [vmem:[#allocation2 + $0x194] sm:$0x1]
    %v4274 = vld [vmem:[#allocation2] sm:$0xe]
    %v4275 = vld [vmem:[#allocation2 + $0xc] sm:$0xe]
    %v4276 = vld [vmem:[#allocation2 + $0x18] sm:$0xe]
    %v4277 = vld [vmem:[#allocation2 + $0x24] sm:$0xe]
    %v4278 = vld [vmem:[#allocation2 + $0x30] sm:$0xe]
    %v4279 = vld [vmem:[#allocation2 + $0x3c] sm:$0xe]
    %v4280 = vld [vmem:[#allocation2 + $0x48] sm:$0xe]
    %v4281 = vld [vmem:[#allocation2 + $0x54] sm:$0xe]
    %v4282 = vld [vmem:[#allocation2 + $0x60] sm:$0xe]
    %v4283 = vld [vmem:[#allocation2 + $0x6c] sm:$0xe]
    %v4284 = vld [vmem:[#allocation2 + $0x78] sm:$0xe]
    %v4285 = vld [vmem:[#allocation2 + $0x84] sm:$0xe]
    %v4286 = vld [vmem:[#allocation2 + $0x90] sm:$0xe]
    %v4287 = vld [vmem:[#allocation2 + $0x9c] sm:$0xe]
    %v4288 = vld [vmem:[#allocation2 + $0xa8] sm:$0xe]
    %v4289 = vld [vmem:[#allocation2 + $0xb4] sm:$0xe]
    %v4290 = vld [vmem:[#allocation2 + $0xd8] sm:$0xe]
    %v4291 = vld [vmem:[#allocation2 + $0xe4] sm:$0xe]
    %v4292 = vld [vmem:[#allocation2 + $0xf0] sm:$0xe]
    %v4293 = vld [vmem:[#allocation2 + $0xfc] sm:$0xe]
    %v4294 = vld [vmem:[#allocation2 + $0x108] sm:$0xe]
    %v4295 = vld [vmem:[#allocation2 + $0x114] sm:$0xe]
    %v4296 = vld [vmem:[#allocation2 + $0x120] sm:$0xe]
    %v4297 = vld [vmem:[#allocation2 + $0x12c] sm:$0xe]
    %v4298 = vld [vmem:[#allocation2 + $0x138] sm:$0xe]
    %v4299 = vld [vmem:[#allocation2 + $0x144] sm:$0xe]
    %v4300 = vld [vmem:[#allocation2 + $0x150] sm:$0xe]
    %v4301 = vld [vmem:[#allocation2 + $0x15c] sm:$0xe]
    %v4302 = vld [vmem:[#allocation2 + $0x168] sm:$0xe]
    %v4303 = vld [vmem:[#allocation2 + $0x174] sm:$0xe]
    %v4304 = vld [vmem:[#allocation2 + $0x180] sm:$0xe]
    %v4305 = vld [vmem:[#allocation2 + $0x18c] sm:$0xe]
    %v4306 = vld [vmem:[%s2920] sm:$0xf]
    %v4307 = vld [vmem:[%s2920 + $0x4] sm:$0xf]
    %v4308 = vld [vmem:[%s2920 + $0xc] sm:$0xf]
    %v4309 = vld [vmem:[%s2920 + $0x10] sm:$0xf]
    %v4310 = vld [vmem:[%s2920 + $0x18] sm:$0xf]
    %v4311 = vld [vmem:[%s2920 + $0x1c] sm:$0xf]
    %v4312 = vld [vmem:[%s2920 + $0x24] sm:$0xf]
    %v4313 = vld [vmem:[%s2920 + $0x28] sm:$0xf]
    %v4314 = vld [vmem:[%s2920 + $0x30] sm:$0xf]
    %v4315 = vld [vmem:[%s2920 + $0x34] sm:$0xf]
    %v4316 = vld [vmem:[%s2920 + $0x3c] sm:$0xf]
    %v4317 = vld [vmem:[%s2920 + $0x40] sm:$0xf]
    %v4318 = vld [vmem:[%s2920 + $0x48] sm:$0xf]
    %v4319 = vld [vmem:[%s2920 + $0x4c] sm:$0xf]
    %v4320 = vld [vmem:[%s2920 + $0x54] sm:$0xf]
    %v4321 = vld [vmem:[%s2920 + $0x58] sm:$0xf]
    %v4322 = vld [vmem:[%s2920 + $0x60] sm:$0xf]
    %v4323 = vld [vmem:[%s2920 + $0x64] sm:$0xf]
    %v4324 = vld [vmem:[%s2920 + $0x6c] sm:$0xf]
    %v4325 = vld [vmem:[%s2920 + $0x70] sm:$0xf]
    %v4326 = vld [vmem:[%s2920 + $0x78] sm:$0xf]
    %v4327 = vld [vmem:[%s2920 + $0x7c] sm:$0xf]
    %v4328 = vld [vmem:[%s2920 + $0x84] sm:$0xf]
    %v4329 = vld [vmem:[%s2920 + $0x88] sm:$0xf]
    %v4330 = vld [vmem:[%s2920 + $0x90] sm:$0xf]
    %v4331 = vld [vmem:[%s2920 + $0x94] sm:$0xf]
    %v4332 = vld [vmem:[%s2920 + $0x9c] sm:$0xf]
    %v4333 = vld [vmem:[%s2920 + $0xa0] sm:$0xf]
    %v4334 = vld [vmem:[%s2920 + $0xa8] sm:$0xf]
    %v4335 = vld [vmem:[%s2920 + $0xac] sm:$0xf]
    %v4336 = vld [vmem:[%s2920 + $0xb4] sm:$0xf]
    %v4337 = vld [vmem:[%s2920 + $0xb8] sm:$0xf]
    %v4338 = vld [vmem:[%s2920 + $0xd8] sm:$0xf]
    %v4339 = vld [vmem:[%s2920 + $0xdc] sm:$0xf]
    %v4340 = vld [vmem:[%s2920 + $0xe4] sm:$0xf]
    %v4341 = vld [vmem:[%s2920 + $0xe8] sm:$0xf]
    %v4342 = vld [vmem:[%s2920 + $0xf0] sm:$0xf]
    %v4343 = vld [vmem:[%s2920 + $0xf4] sm:$0xf]
    %v4344 = vld [vmem:[%s2920 + $0xfc] sm:$0xf]
    %v4345 = vld [vmem:[%s2920 + $0x100] sm:$0xf]
    %v4346 = vld [vmem:[%s2920 + $0x108] sm:$0xf]
    %v4347 = vld [vmem:[%s2920 + $0x10c] sm:$0xf]
    %v4348 = vld [vmem:[%s2920 + $0x114] sm:$0xf]
    %v4349 = vld [vmem:[%s2920 + $0x118] sm:$0xf]
    %v4350 = vld [vmem:[%s2920 + $0x120] sm:$0xf]
    %v4351 = vld [vmem:[%s2920 + $0x124] sm:$0xf]
    %v4352 = vld [vmem:[%s2920 + $0x12c] sm:$0xf]
    %v4353 = vld [vmem:[%s2920 + $0x130] sm:$0xf]
    %v4354 = vld [vmem:[%s2920 + $0x138] sm:$0xf]
    %v4355 = vld [vmem:[%s2920 + $0x13c] sm:$0xf]
    %v4356 = vld [vmem:[%s2920 + $0x144] sm:$0xf]
    %v4357 = vld [vmem:[%s2920 + $0x148] sm:$0xf]
    %v4358 = vld [vmem:[%s2920 + $0x150] sm:$0xf]
    %v4359 = vld [vmem:[%s2920 + $0x154] sm:$0xf]
    %v4360 = vld [vmem:[%s2920 + $0x15c] sm:$0xf]
    %v4361 = vld [vmem:[%s2920 + $0x160] sm:$0xf]
    %v4362 = vld [vmem:[%s2920 + $0x168] sm:$0xf]
    %v4363 = vld [vmem:[%s2920 + $0x16c] sm:$0xf]
    %v4364 = vld [vmem:[%s2920 + $0x174] sm:$0xf]
    %v4365 = vld [vmem:[%s2920 + $0x178] sm:$0xf]
    %v4366 = vld [vmem:[%s2920 + $0x180] sm:$0xf]
    %v4367 = vld [vmem:[%s2920 + $0x184] sm:$0xf]
    %v4368 = vld [vmem:[%s2920 + $0x18c] sm:$0xf]
    %v4369 = vld [vmem:[%s2920 + $0x190] sm:$0xf]
    %v4370 = vld [vmem:[%s2920 + $0x8] sm:$0x1]
    %v4371 = vld [vmem:[%s2920 + $0x14] sm:$0x1]
    %v4372 = vld [vmem:[%s2920 + $0x20] sm:$0x1]
    %v4373 = vld [vmem:[%s2920 + $0x2c] sm:$0x1]
    %v4374 = vld [vmem:[%s2920 + $0x38] sm:$0x1]
    %v4375 = vld [vmem:[%s2920 + $0x44] sm:$0x1]
    %v4376 = vld [vmem:[%s2920 + $0x50] sm:$0x1]
    %v4377 = vld [vmem:[%s2920 + $0x5c] sm:$0x1]
    %v4378 = vld [vmem:[%s2920 + $0x68] sm:$0x1]
    %v4379 = vld [vmem:[%s2920 + $0x74] sm:$0x1]
    %v4380 = vld [vmem:[%s2920 + $0x80] sm:$0x1]
    %v4381 = vld [vmem:[%s2920 + $0x8c] sm:$0x1]
    %v4382 = vld [vmem:[%s2920 + $0x98] sm:$0x1]
    %v4383 = vld [vmem:[%s2920 + $0xa4] sm:$0x1]
    %v4384 = vld [vmem:[%s2920 + $0xb0] sm:$0x1]
    %v4385 = vld [vmem:[%s2920 + $0xbc] sm:$0x1]
    %v4386 = vld [vmem:[%s2920 + $0xe0] sm:$0x1]
    %v4387 = vld [vmem:[%s2920 + $0xec] sm:$0x1]
    %v4388 = vld [vmem:[%s2920 + $0xf8] sm:$0x1]
    %v4389 = vld [vmem:[%s2920 + $0x104] sm:$0x1]
    %v4390 = vld [vmem:[%s2920 + $0x110] sm:$0x1]
    %v4391 = vld [vmem:[%s2920 + $0x11c] sm:$0x1]
    %v4392 = vld [vmem:[%s2920 + $0x128] sm:$0x1]
    %v4393 = vld [vmem:[%s2920 + $0x134] sm:$0x1]
    %v4394 = vld [vmem:[%s2920 + $0x140] sm:$0x1]
    %v4395 = vld [vmem:[%s2920 + $0x14c] sm:$0x1]
    %v4396 = vld [vmem:[%s2920 + $0x158] sm:$0x1]
    %v4397 = vld [vmem:[%s2920 + $0x164] sm:$0x1]
    %v4398 = vld [vmem:[%s2920 + $0x170] sm:$0x1]
    %v4399 = vld [vmem:[%s2920 + $0x17c] sm:$0x1]
    %v4400 = vld [vmem:[%s2920 + $0x188] sm:$0x1]
    %v4401 = vld [vmem:[%s2920 + $0x194] sm:$0x1]
    %v4402 = vld [vmem:[%s2920] sm:$0xe]
    %v4403 = vld [vmem:[%s2920 + $0xc] sm:$0xe]
    %v4404 = vld [vmem:[%s2920 + $0x18] sm:$0xe]
    %v4405 = vld [vmem:[%s2920 + $0x24] sm:$0xe]
    %v4406 = vld [vmem:[%s2920 + $0x30] sm:$0xe]
    %v4407 = vld [vmem:[%s2920 + $0x3c] sm:$0xe]
    %v4408 = vld [vmem:[%s2920 + $0x48] sm:$0xe]
    %v4409 = vld [vmem:[%s2920 + $0x54] sm:$0xe]
    %v4410 = vld [vmem:[%s2920 + $0x60] sm:$0xe]
    %v4411 = vld [vmem:[%s2920 + $0x6c] sm:$0xe]
    %v4412 = vld [vmem:[%s2920 + $0x78] sm:$0xe]
    %v4413 = vld [vmem:[%s2920 + $0x84] sm:$0xe]
    %v4414 = vld [vmem:[%s2920 + $0x90] sm:$0xe]
    %v4415 = vld [vmem:[%s2920 + $0x9c] sm:$0xe]
    %v4416 = vld [vmem:[%s2920 + $0xa8] sm:$0xe]
    %v4417 = vld [vmem:[%s2920 + $0xb4] sm:$0xe]
    %v4418 = vld [vmem:[%s2920 + $0xd8] sm:$0xe]
    %v4419 = vld [vmem:[%s2920 + $0xe4] sm:$0xe]
    %v4420 = vld [vmem:[%s2920 + $0xf0] sm:$0xe]
    %v4421 = vld [vmem:[%s2920 + $0xfc] sm:$0xe]
    %v4422 = vld [vmem:[%s2920 + $0x108] sm:$0xe]
    %v4423 = vld [vmem:[%s2920 + $0x114] sm:$0xe]
    %v4424 = vld [vmem:[%s2920 + $0x120] sm:$0xe]
    %v4425 = vld [vmem:[%s2920 + $0x12c] sm:$0xe]
    %v4426 = vld [vmem:[%s2920 + $0x138] sm:$0xe]
    %v4427 = vld [vmem:[%s2920 + $0x144] sm:$0xe]
    %v4428 = vld [vmem:[%s2920 + $0x150] sm:$0xe]
    %v4429 = vld [vmem:[%s2920 + $0x15c] sm:$0xe]
    %v4430 = vld [vmem:[%s2920 + $0x168] sm:$0xe]
    %v4431 = vld [vmem:[%s2920 + $0x174] sm:$0xe]
    %v4432 = vld [vmem:[%s2920 + $0x180] sm:$0xe]
    %v4433 = vld [vmem:[%s2920 + $0x18c] sm:$0xe]
    %s4434 = scalar_lea.vmem [#allocation2], 24
    %v4435 = vld [vmem:[%s4434] sm:$0xf]
    %v4436 = vld [vmem:[%s4434 + $0x4] sm:$0xf]
    %v4437 = vld [vmem:[%s4434 + $0xc] sm:$0xf]
    %v4438 = vld [vmem:[%s4434 + $0x10] sm:$0xf]
    %v4439 = vld [vmem:[%s4434 + $0x18] sm:$0xf]
    %v4440 = vld [vmem:[%s4434 + $0x1c] sm:$0xf]
    %v4441 = vld [vmem:[%s4434 + $0x24] sm:$0xf]
    %v4442 = vld [vmem:[%s4434 + $0x28] sm:$0xf]
    %v4443 = vld [vmem:[%s4434 + $0x30] sm:$0xf]
    %v4444 = vld [vmem:[%s4434 + $0x34] sm:$0xf]
    %v4445 = vld [vmem:[%s4434 + $0x3c] sm:$0xf]
    %v4446 = vld [vmem:[%s4434 + $0x40] sm:$0xf]
    %v4447 = vld [vmem:[%s4434 + $0x48] sm:$0xf]
    %v4448 = vld [vmem:[%s4434 + $0x4c] sm:$0xf]
    %v4449 = vld [vmem:[%s4434 + $0x54] sm:$0xf]
    %v4450 = vld [vmem:[%s4434 + $0x58] sm:$0xf]
    %v4451 = vld [vmem:[%s4434 + $0x60] sm:$0xf]
    %v4452 = vld [vmem:[%s4434 + $0x64] sm:$0xf]
    %v4453 = vld [vmem:[%s4434 + $0x6c] sm:$0xf]
    %v4454 = vld [vmem:[%s4434 + $0x70] sm:$0xf]
    %v4455 = vld [vmem:[%s4434 + $0x78] sm:$0xf]
    %v4456 = vld [vmem:[%s4434 + $0x7c] sm:$0xf]
    %v4457 = vld [vmem:[%s4434 + $0x84] sm:$0xf]
    %v4458 = vld [vmem:[%s4434 + $0x88] sm:$0xf]
    %v4459 = vld [vmem:[%s4434 + $0x90] sm:$0xf]
    %v4460 = vld [vmem:[%s4434 + $0x94] sm:$0xf]
    %v4461 = vld [vmem:[%s4434 + $0x9c] sm:$0xf]
    %v4462 = vld [vmem:[%s4434 + $0xa0] sm:$0xf]
    %v4463 = vld [vmem:[%s4434 + $0xa8] sm:$0xf]
    %v4464 = vld [vmem:[%s4434 + $0xac] sm:$0xf]
    %v4465 = vld [vmem:[%s4434 + $0xb4] sm:$0xf]
    %v4466 = vld [vmem:[%s4434 + $0xb8] sm:$0xf]
    %v4467 = vld [vmem:[%s4434 + $0xd8] sm:$0xf]
    %v4468 = vld [vmem:[%s4434 + $0xdc] sm:$0xf]
    %v4469 = vld [vmem:[%s4434 + $0xe4] sm:$0xf]
    %v4470 = vld [vmem:[%s4434 + $0xe8] sm:$0xf]
    %v4471 = vld [vmem:[%s4434 + $0xf0] sm:$0xf]
    %v4472 = vld [vmem:[%s4434 + $0xf4] sm:$0xf]
    %v4473 = vld [vmem:[%s4434 + $0xfc] sm:$0xf]
    %v4474 = vld [vmem:[%s4434 + $0x100] sm:$0xf]
    %v4475 = vld [vmem:[%s4434 + $0x108] sm:$0xf]
    %v4476 = vld [vmem:[%s4434 + $0x10c] sm:$0xf]
    %v4477 = vld [vmem:[%s4434 + $0x114] sm:$0xf]
    %v4478 = vld [vmem:[%s4434 + $0x118] sm:$0xf]
    %v4479 = vld [vmem:[%s4434 + $0x120] sm:$0xf]
    %v4480 = vld [vmem:[%s4434 + $0x124] sm:$0xf]
    %v4481 = vld [vmem:[%s4434 + $0x12c] sm:$0xf]
    %v4482 = vld [vmem:[%s4434 + $0x130] sm:$0xf]
    %v4483 = vld [vmem:[%s4434 + $0x138] sm:$0xf]
    %v4484 = vld [vmem:[%s4434 + $0x13c] sm:$0xf]
    %v4485 = vld [vmem:[%s4434 + $0x144] sm:$0xf]
    %v4486 = vld [vmem:[%s4434 + $0x148] sm:$0xf]
    %v4487 = vld [vmem:[%s4434 + $0x150] sm:$0xf]
    %v4488 = vld [vmem:[%s4434 + $0x154] sm:$0xf]
    %v4489 = vld [vmem:[%s4434 + $0x15c] sm:$0xf]
    %v4490 = vld [vmem:[%s4434 + $0x160] sm:$0xf]
    %v4491 = vld [vmem:[%s4434 + $0x168] sm:$0xf]
    %v4492 = vld [vmem:[%s4434 + $0x16c] sm:$0xf]
    %v4493 = vld [vmem:[%s4434 + $0x174] sm:$0xf]
    %v4494 = vld [vmem:[%s4434 + $0x178] sm:$0xf]
    %v4495 = vld [vmem:[%s4434 + $0x180] sm:$0xf]
    %v4496 = vld [vmem:[%s4434 + $0x184] sm:$0xf]
    %v4497 = vld [vmem:[%s4434 + $0x18c] sm:$0xf]
    %v4498 = vld [vmem:[%s4434 + $0x190] sm:$0xf]
    %v4499 = vld [vmem:[%s4434 + $0x8] sm:$0x1]
    %v4500 = vld [vmem:[%s4434 + $0x14] sm:$0x1]
    %v4501 = vld [vmem:[%s4434 + $0x20] sm:$0x1]
    %v4502 = vld [vmem:[%s4434 + $0x2c] sm:$0x1]
    %v4503 = vld [vmem:[%s4434 + $0x38] sm:$0x1]
    %v4504 = vld [vmem:[%s4434 + $0x44] sm:$0x1]
    %v4505 = vld [vmem:[%s4434 + $0x50] sm:$0x1]
    %v4506 = vld [vmem:[%s4434 + $0x5c] sm:$0x1]
    %v4507 = vld [vmem:[%s4434 + $0x68] sm:$0x1]
    %v4508 = vld [vmem:[%s4434 + $0x74] sm:$0x1]
    %v4509 = vld [vmem:[%s4434 + $0x80] sm:$0x1]
    %v4510 = vld [vmem:[%s4434 + $0x8c] sm:$0x1]
    %v4511 = vld [vmem:[%s4434 + $0x98] sm:$0x1]
    %v4512 = vld [vmem:[%s4434 + $0xa4] sm:$0x1]
    %v4513 = vld [vmem:[%s4434 + $0xb0] sm:$0x1]
    %v4514 = vld [vmem:[%s4434 + $0xbc] sm:$0x1]
    %v4515 = vld [vmem:[%s4434 + $0xe0] sm:$0x1]
    %v4516 = vld [vmem:[%s4434 + $0xec] sm:$0x1]
    %v4517 = vld [vmem:[%s4434 + $0xf8] sm:$0x1]
    %v4518 = vld [vmem:[%s4434 + $0x104] sm:$0x1]
    %v4519 = vld [vmem:[%s4434 + $0x110] sm:$0x1]
    %v4520 = vld [vmem:[%s4434 + $0x11c] sm:$0x1]
    %v4521 = vld [vmem:[%s4434 + $0x128] sm:$0x1]
    %v4522 = vld [vmem:[%s4434 + $0x134] sm:$0x1]
    %v4523 = vld [vmem:[%s4434 + $0x140] sm:$0x1]
    %v4524 = vld [vmem:[%s4434 + $0x14c] sm:$0x1]
    %v4525 = vld [vmem:[%s4434 + $0x158] sm:$0x1]
    %v4526 = vld [vmem:[%s4434 + $0x164] sm:$0x1]
    %v4527 = vld [vmem:[%s4434 + $0x170] sm:$0x1]
    %v4528 = vld [vmem:[%s4434 + $0x17c] sm:$0x1]
    %v4529 = vld [vmem:[%s4434 + $0x188] sm:$0x1]
    %v4530 = vld [vmem:[%s4434 + $0x194] sm:$0x1]
    %v4531 = vld [vmem:[%s4434] sm:$0xe]
    %v4532 = vld [vmem:[%s4434 + $0xc] sm:$0xe]
    %v4533 = vld [vmem:[%s4434 + $0x18] sm:$0xe]
    %v4534 = vld [vmem:[%s4434 + $0x24] sm:$0xe]
    %v4535 = vld [vmem:[%s4434 + $0x30] sm:$0xe]
    %v4536 = vld [vmem:[%s4434 + $0x3c] sm:$0xe]
    %v4537 = vld [vmem:[%s4434 + $0x48] sm:$0xe]
    %v4538 = vld [vmem:[%s4434 + $0x54] sm:$0xe]
    %v4539 = vld [vmem:[%s4434 + $0x60] sm:$0xe]
    %v4540 = vld [vmem:[%s4434 + $0x6c] sm:$0xe]
    %v4541 = vld [vmem:[%s4434 + $0x78] sm:$0xe]
    %v4542 = vld [vmem:[%s4434 + $0x84] sm:$0xe]
    %v4543 = vld [vmem:[%s4434 + $0x90] sm:$0xe]
    %v4544 = vld [vmem:[%s4434 + $0x9c] sm:$0xe]
    %v4545 = vld [vmem:[%s4434 + $0xa8] sm:$0xe]
    %v4546 = vld [vmem:[%s4434 + $0xb4] sm:$0xe]
    %v4547 = vld [vmem:[%s4434 + $0xd8] sm:$0xe]
    %v4548 = vld [vmem:[%s4434 + $0xe4] sm:$0xe]
    %v4549 = vld [vmem:[%s4434 + $0xf0] sm:$0xe]
    %v4550 = vld [vmem:[%s4434 + $0xfc] sm:$0xe]
    %v4551 = vld [vmem:[%s4434 + $0x108] sm:$0xe]
    %v4552 = vld [vmem:[%s4434 + $0x114] sm:$0xe]
    %v4553 = vld [vmem:[%s4434 + $0x120] sm:$0xe]
    %v4554 = vld [vmem:[%s4434 + $0x12c] sm:$0xe]
    %v4555 = vld [vmem:[%s4434 + $0x138] sm:$0xe]
    %v4556 = vld [vmem:[%s4434 + $0x144] sm:$0xe]
    %v4557 = vld [vmem:[%s4434 + $0x150] sm:$0xe]
    %v4558 = vld [vmem:[%s4434 + $0x15c] sm:$0xe]
    %v4559 = vld [vmem:[%s4434 + $0x168] sm:$0xe]
    %v4560 = vld [vmem:[%s4434 + $0x174] sm:$0xe]
    %v4561 = vld [vmem:[%s4434 + $0x180] sm:$0xe]
    %v4562 = vld [vmem:[%s4434 + $0x18c] sm:$0xe]
    %v4627 = vunpack.c.l.b16 %v4178
    %v4628 = vunpack.c.l.b16 %v4179
    %v4629 = vunpack.c.l.b16 %v4180
    %v4630 = vunpack.c.l.b16 %v4181
    %v4631 = vunpack.c.l.b16 %v4182
    %v4632 = vunpack.c.l.b16 %v4183
    %v4633 = vunpack.c.l.b16 %v4184
    %v4634 = vunpack.c.l.b16 %v4185
    %v4635 = vunpack.c.l.b16 %v4186
    %v4636 = vunpack.c.l.b16 %v4187
    %v4637 = vunpack.c.l.b16 %v4188
    %v4638 = vunpack.c.l.b16 %v4189
    %v4639 = vunpack.c.l.b16 %v4190
    %v4640 = vunpack.c.l.b16 %v4191
    %v4641 = vunpack.c.l.b16 %v4192
    %v4642 = vunpack.c.l.b16 %v4193
    %v4643 = vunpack.c.l.b16 %v4194
    %v4644 = vunpack.c.l.b16 %v4195
    %v4645 = vunpack.c.l.b16 %v4196
    %v4646 = vunpack.c.l.b16 %v4197
    %v4647 = vunpack.c.l.b16 %v4198
    %v4648 = vunpack.c.l.b16 %v4199
    %v4649 = vunpack.c.l.b16 %v4200
    %v4650 = vunpack.c.l.b16 %v4201
    %v4651 = vunpack.c.l.b16 %v4202
    %v4652 = vunpack.c.l.b16 %v4203
    %v4653 = vunpack.c.l.b16 %v4204
    %v4654 = vunpack.c.l.b16 %v4205
    %v4655 = vunpack.c.l.b16 %v4206
    %v4656 = vunpack.c.l.b16 %v4207
    %v4657 = vunpack.c.l.b16 %v4208
    %v4658 = vunpack.c.l.b16 %v4209
    %v4659 = vunpack.c.l.b16 %v4210
    %v4660 = vunpack.c.l.b16 %v4211
    %v4661 = vunpack.c.l.b16 %v4212
    %v4662 = vunpack.c.l.b16 %v4213
    %v4663 = vunpack.c.l.b16 %v4214
    %v4664 = vunpack.c.l.b16 %v4215
    %v4665 = vunpack.c.l.b16 %v4216
    %v4666 = vunpack.c.l.b16 %v4217
    %v4667 = vunpack.c.l.b16 %v4218
    %v4668 = vunpack.c.l.b16 %v4219
    %v4669 = vunpack.c.l.b16 %v4220
    %v4670 = vunpack.c.l.b16 %v4221
    %v4671 = vunpack.c.l.b16 %v4222
    %v4672 = vunpack.c.l.b16 %v4223
    %v4673 = vunpack.c.l.b16 %v4224
    %v4674 = vunpack.c.l.b16 %v4225
    %v4675 = vunpack.c.l.b16 %v4226
    %v4676 = vunpack.c.l.b16 %v4227
    %v4677 = vunpack.c.l.b16 %v4228
    %v4678 = vunpack.c.l.b16 %v4229
    %v4679 = vunpack.c.l.b16 %v4230
    %v4680 = vunpack.c.l.b16 %v4231
    %v4681 = vunpack.c.l.b16 %v4232
    %v4682 = vunpack.c.l.b16 %v4233
    %v4683 = vunpack.c.l.b16 %v4234
    %v4684 = vunpack.c.l.b16 %v4235
    %v4685 = vunpack.c.l.b16 %v4236
    %v4686 = vunpack.c.l.b16 %v4237
    %v4687 = vunpack.c.l.b16 %v4238
    %v4688 = vunpack.c.l.b16 %v4239
    %v4689 = vunpack.c.l.b16 %v4240
    %v4690 = vunpack.c.l.b16 %v4241
    %v4691 = vpack.c.b16 %v4628, %v4627
    %v4692 = vpack.c.b16 %v4630, %v4629
    %v4693 = vpack.c.b16 %v4632, %v4631
    %v4694 = vpack.c.b16 %v4634, %v4633
    %v4695 = vpack.c.b16 %v4636, %v4635
    %v4696 = vpack.c.b16 %v4638, %v4637
    %v4697 = vpack.c.b16 %v4640, %v4639
    %v4698 = vpack.c.b16 %v4642, %v4641
    %v4699 = vpack.c.b16 %v4644, %v4643
    %v4700 = vpack.c.b16 %v4646, %v4645
    %v4701 = vpack.c.b16 %v4648, %v4647
    %v4702 = vpack.c.b16 %v4650, %v4649
    %v4703 = vpack.c.b16 %v4652, %v4651
    %v4704 = vpack.c.b16 %v4654, %v4653
    %v4705 = vpack.c.b16 %v4656, %v4655
    %v4706 = vpack.c.b16 %v4658, %v4657
    %v4707 = vpack.c.b16 %v4660, %v4659
    %v4708 = vpack.c.b16 %v4662, %v4661
    %v4709 = vpack.c.b16 %v4664, %v4663
    %v4710 = vpack.c.b16 %v4666, %v4665
    %v4711 = vpack.c.b16 %v4668, %v4667
    %v4712 = vpack.c.b16 %v4670, %v4669
    %v4713 = vpack.c.b16 %v4672, %v4671
    %v4714 = vpack.c.b16 %v4674, %v4673
    %v4715 = vpack.c.b16 %v4676, %v4675
    %v4716 = vpack.c.b16 %v4678, %v4677
    %v4717 = vpack.c.b16 %v4680, %v4679
    %v4718 = vpack.c.b16 %v4682, %v4681
    %v4719 = vpack.c.b16 %v4684, %v4683
    %v4720 = vpack.c.b16 %v4686, %v4685
    %v4721 = vpack.c.b16 %v4688, %v4687
    %v4722 = vpack.c.b16 %v4690, %v4689
    %v4755 = vunpack.c.l.b16 %v4242
    %v4756 = vunpack.c.l.b16 %v4243
    %v4757 = vunpack.c.l.b16 %v4244
    %v4758 = vunpack.c.l.b16 %v4245
    %v4759 = vunpack.c.l.b16 %v4246
    %v4760 = vunpack.c.l.b16 %v4247
    %v4761 = vunpack.c.l.b16 %v4248
    %v4762 = vunpack.c.l.b16 %v4249
    %v4763 = vunpack.c.l.b16 %v4250
    %v4764 = vunpack.c.l.b16 %v4251
    %v4765 = vunpack.c.l.b16 %v4252
    %v4766 = vunpack.c.l.b16 %v4253
    %v4767 = vunpack.c.l.b16 %v4254
    %v4768 = vunpack.c.l.b16 %v4255
    %v4769 = vunpack.c.l.b16 %v4256
    %v4770 = vunpack.c.l.b16 %v4257
    %v4771 = vunpack.c.l.b16 %v4258
    %v4772 = vunpack.c.l.b16 %v4259
    %v4773 = vunpack.c.l.b16 %v4260
    %v4774 = vunpack.c.l.b16 %v4261
    %v4775 = vunpack.c.l.b16 %v4262
    %v4776 = vunpack.c.l.b16 %v4263
    %v4777 = vunpack.c.l.b16 %v4264
    %v4778 = vunpack.c.l.b16 %v4265
    %v4779 = vunpack.c.l.b16 %v4266
    %v4780 = vunpack.c.l.b16 %v4267
    %v4781 = vunpack.c.l.b16 %v4268
    %v4782 = vunpack.c.l.b16 %v4269
    %v4783 = vunpack.c.l.b16 %v4270
    %v4784 = vunpack.c.l.b16 %v4271
    %v4785 = vunpack.c.l.b16 %v4272
    %v4786 = vunpack.c.l.b16 %v4273
    %v4787 = vpack.c.b16 %v4755, %v4755
    %v4788 = vpack.c.b16 %v4756, %v4756
    %v4789 = vpack.c.b16 %v4757, %v4757
    %v4790 = vpack.c.b16 %v4758, %v4758
    %v4791 = vpack.c.b16 %v4759, %v4759
    %v4792 = vpack.c.b16 %v4760, %v4760
    %v4793 = vpack.c.b16 %v4761, %v4761
    %v4794 = vpack.c.b16 %v4762, %v4762
    %v4795 = vpack.c.b16 %v4763, %v4763
    %v4796 = vpack.c.b16 %v4764, %v4764
    %v4797 = vpack.c.b16 %v4765, %v4765
    %v4798 = vpack.c.b16 %v4766, %v4766
    %v4799 = vpack.c.b16 %v4767, %v4767
    %v4800 = vpack.c.b16 %v4768, %v4768
    %v4801 = vpack.c.b16 %v4769, %v4769
    %v4802 = vpack.c.b16 %v4770, %v4770
    %v4803 = vpack.c.b16 %v4771, %v4771
    %v4804 = vpack.c.b16 %v4772, %v4772
    %v4805 = vpack.c.b16 %v4773, %v4773
    %v4806 = vpack.c.b16 %v4774, %v4774
    %v4807 = vpack.c.b16 %v4775, %v4775
    %v4808 = vpack.c.b16 %v4776, %v4776
    %v4809 = vpack.c.b16 %v4777, %v4777
    %v4810 = vpack.c.b16 %v4778, %v4778
    %v4811 = vpack.c.b16 %v4779, %v4779
    %v4812 = vpack.c.b16 %v4780, %v4780
    %v4813 = vpack.c.b16 %v4781, %v4781
    %v4814 = vpack.c.b16 %v4782, %v4782
    %v4815 = vpack.c.b16 %v4783, %v4783
    %v4816 = vpack.c.b16 %v4784, %v4784
    %v4817 = vpack.c.b16 %v4785, %v4785
    %v4818 = vpack.c.b16 %v4786, %v4786
    %v4820 = vshrl.u32 %v4691, 16
    %v4822 = vshll.u32 %v4691, 16
    %v4824 = vrot.slane %v4822, 1
    %v4825 = vor.u32 %v4820, %v4824
    %v4827 = vshll.u32 %v4787, 16
    %v4829 = vrot.slane %v4827, 1
    %v4830 = vsel %vm380, %v4825, %v4829
    %v4832 = vshrl.u32 %v4692, 16
    %v4834 = vshll.u32 %v4692, 16
    %v4836 = vrot.slane %v4834, 1
    %v4837 = vor.u32 %v4832, %v4836
    %v4839 = vshll.u32 %v4788, 16
    %v4841 = vrot.slane %v4839, 1
    %v4842 = vsel %vm380, %v4837, %v4841
    %v4844 = vshrl.u32 %v4693, 16
    %v4846 = vshll.u32 %v4693, 16
    %v4848 = vrot.slane %v4846, 1
    %v4849 = vor.u32 %v4844, %v4848
    %v4851 = vshll.u32 %v4789, 16
    %v4853 = vrot.slane %v4851, 1
    %v4854 = vsel %vm380, %v4849, %v4853
    %v4856 = vshrl.u32 %v4694, 16
    %v4858 = vshll.u32 %v4694, 16
    %v4860 = vrot.slane %v4858, 1
    %v4861 = vor.u32 %v4856, %v4860
    %v4863 = vshll.u32 %v4790, 16
    %v4865 = vrot.slane %v4863, 1
    %v4866 = vsel %vm380, %v4861, %v4865
    %v4868 = vshrl.u32 %v4695, 16
    %v4870 = vshll.u32 %v4695, 16
    %v4872 = vrot.slane %v4870, 1
    %v4873 = vor.u32 %v4868, %v4872
    %v4875 = vshll.u32 %v4791, 16
    %v4877 = vrot.slane %v4875, 1
    %v4878 = vsel %vm380, %v4873, %v4877
    %v4880 = vshrl.u32 %v4696, 16
    %v4882 = vshll.u32 %v4696, 16
    %v4884 = vrot.slane %v4882, 1
    %v4885 = vor.u32 %v4880, %v4884
    %v4887 = vshll.u32 %v4792, 16
    %v4889 = vrot.slane %v4887, 1
    %v4890 = vsel %vm380, %v4885, %v4889
    %v4892 = vshrl.u32 %v4697, 16
    %v4894 = vshll.u32 %v4697, 16
    %v4896 = vrot.slane %v4894, 1
    %v4897 = vor.u32 %v4892, %v4896
    %v4899 = vshll.u32 %v4793, 16
    %v4901 = vrot.slane %v4899, 1
    %v4902 = vsel %vm380, %v4897, %v4901
    %v4904 = vshrl.u32 %v4698, 16
    %v4906 = vshll.u32 %v4698, 16
    %v4908 = vrot.slane %v4906, 1
    %v4909 = vor.u32 %v4904, %v4908
    %v4911 = vshll.u32 %v4794, 16
    %v4913 = vrot.slane %v4911, 1
    %v4914 = vsel %vm380, %v4909, %v4913
    %v4916 = vshrl.u32 %v4699, 16
    %v4918 = vshll.u32 %v4699, 16
    %v4920 = vrot.slane %v4918, 1
    %v4921 = vor.u32 %v4916, %v4920
    %v4923 = vshll.u32 %v4795, 16
    %v4925 = vrot.slane %v4923, 1
    %v4926 = vsel %vm380, %v4921, %v4925
    %v4928 = vshrl.u32 %v4700, 16
    %v4930 = vshll.u32 %v4700, 16
    %v4932 = vrot.slane %v4930, 1
    %v4933 = vor.u32 %v4928, %v4932
    %v4935 = vshll.u32 %v4796, 16
    %v4937 = vrot.slane %v4935, 1
    %v4938 = vsel %vm380, %v4933, %v4937
    %v4940 = vshrl.u32 %v4701, 16
    %v4942 = vshll.u32 %v4701, 16
    %v4944 = vrot.slane %v4942, 1
    %v4945 = vor.u32 %v4940, %v4944
    %v4947 = vshll.u32 %v4797, 16
    %v4949 = vrot.slane %v4947, 1
    %v4950 = vsel %vm380, %v4945, %v4949
    %v4952 = vshrl.u32 %v4702, 16
    %v4954 = vshll.u32 %v4702, 16
    %v4956 = vrot.slane %v4954, 1
    %v4957 = vor.u32 %v4952, %v4956
    %v4959 = vshll.u32 %v4798, 16
    %v4961 = vrot.slane %v4959, 1
    %v4962 = vsel %vm380, %v4957, %v4961
    %v4964 = vshrl.u32 %v4703, 16
    %v4966 = vshll.u32 %v4703, 16
    %v4968 = vrot.slane %v4966, 1
    %v4969 = vor.u32 %v4964, %v4968
    %v4971 = vshll.u32 %v4799, 16
    %v4973 = vrot.slane %v4971, 1
    %v4974 = vsel %vm380, %v4969, %v4973
    %v4976 = vshrl.u32 %v4704, 16
    %v4978 = vshll.u32 %v4704, 16
    %v4980 = vrot.slane %v4978, 1
    %v4981 = vor.u32 %v4976, %v4980
    %v4983 = vshll.u32 %v4800, 16
    %v4985 = vrot.slane %v4983, 1
    %v4986 = vsel %vm380, %v4981, %v4985
    %v4988 = vshrl.u32 %v4705, 16
    %v4990 = vshll.u32 %v4705, 16
    %v4992 = vrot.slane %v4990, 1
    %v4993 = vor.u32 %v4988, %v4992
    %v4995 = vshll.u32 %v4801, 16
    %v4997 = vrot.slane %v4995, 1
    %v4998 = vsel %vm380, %v4993, %v4997
    %v5000 = vshrl.u32 %v4706, 16
    %v5002 = vshll.u32 %v4706, 16
    %v5004 = vrot.slane %v5002, 1
    %v5005 = vor.u32 %v5000, %v5004
    %v5007 = vshll.u32 %v4802, 16
    %v5009 = vrot.slane %v5007, 1
    %v5010 = vsel %vm380, %v5005, %v5009
    %v5012 = vshrl.u32 %v4707, 16
    %v5014 = vshll.u32 %v4707, 16
    %v5016 = vrot.slane %v5014, 1
    %v5017 = vor.u32 %v5012, %v5016
    %v5019 = vshll.u32 %v4803, 16
    %v5021 = vrot.slane %v5019, 1
    %v5022 = vsel %vm380, %v5017, %v5021
    %v5024 = vshrl.u32 %v4708, 16
    %v5026 = vshll.u32 %v4708, 16
    %v5028 = vrot.slane %v5026, 1
    %v5029 = vor.u32 %v5024, %v5028
    %v5031 = vshll.u32 %v4804, 16
    %v5033 = vrot.slane %v5031, 1
    %v5034 = vsel %vm380, %v5029, %v5033
    %v5036 = vshrl.u32 %v4709, 16
    %v5038 = vshll.u32 %v4709, 16
    %v5040 = vrot.slane %v5038, 1
    %v5041 = vor.u32 %v5036, %v5040
    %v5043 = vshll.u32 %v4805, 16
    %v5045 = vrot.slane %v5043, 1
    %v5046 = vsel %vm380, %v5041, %v5045
    %v5048 = vshrl.u32 %v4710, 16
    %v5050 = vshll.u32 %v4710, 16
    %v5052 = vrot.slane %v5050, 1
    %v5053 = vor.u32 %v5048, %v5052
    %v5055 = vshll.u32 %v4806, 16
    %v5057 = vrot.slane %v5055, 1
    %v5058 = vsel %vm380, %v5053, %v5057
    %v5060 = vshrl.u32 %v4711, 16
    %v5062 = vshll.u32 %v4711, 16
    %v5064 = vrot.slane %v5062, 1
    %v5065 = vor.u32 %v5060, %v5064
    %v5067 = vshll.u32 %v4807, 16
    %v5069 = vrot.slane %v5067, 1
    %v5070 = vsel %vm380, %v5065, %v5069
    %v5072 = vshrl.u32 %v4712, 16
    %v5074 = vshll.u32 %v4712, 16
    %v5076 = vrot.slane %v5074, 1
    %v5077 = vor.u32 %v5072, %v5076
    %v5079 = vshll.u32 %v4808, 16
    %v5081 = vrot.slane %v5079, 1
    %v5082 = vsel %vm380, %v5077, %v5081
    %v5084 = vshrl.u32 %v4713, 16
    %v5086 = vshll.u32 %v4713, 16
    %v5088 = vrot.slane %v5086, 1
    %v5089 = vor.u32 %v5084, %v5088
    %v5091 = vshll.u32 %v4809, 16
    %v5093 = vrot.slane %v5091, 1
    %v5094 = vsel %vm380, %v5089, %v5093
    %v5096 = vshrl.u32 %v4714, 16
    %v5098 = vshll.u32 %v4714, 16
    %v5100 = vrot.slane %v5098, 1
    %v5101 = vor.u32 %v5096, %v5100
    %v5103 = vshll.u32 %v4810, 16
    %v5105 = vrot.slane %v5103, 1
    %v5106 = vsel %vm380, %v5101, %v5105
    %v5108 = vshrl.u32 %v4715, 16
    %v5110 = vshll.u32 %v4715, 16
    %v5112 = vrot.slane %v5110, 1
    %v5113 = vor.u32 %v5108, %v5112
    %v5115 = vshll.u32 %v4811, 16
    %v5117 = vrot.slane %v5115, 1
    %v5118 = vsel %vm380, %v5113, %v5117
    %v5120 = vshrl.u32 %v4716, 16
    %v5122 = vshll.u32 %v4716, 16
    %v5124 = vrot.slane %v5122, 1
    %v5125 = vor.u32 %v5120, %v5124
    %v5127 = vshll.u32 %v4812, 16
    %v5129 = vrot.slane %v5127, 1
    %v5130 = vsel %vm380, %v5125, %v5129
    %v5132 = vshrl.u32 %v4717, 16
    %v5134 = vshll.u32 %v4717, 16
    %v5136 = vrot.slane %v5134, 1
    %v5137 = vor.u32 %v5132, %v5136
    %v5139 = vshll.u32 %v4813, 16
    %v5141 = vrot.slane %v5139, 1
    %v5142 = vsel %vm380, %v5137, %v5141
    %v5144 = vshrl.u32 %v4718, 16
    %v5146 = vshll.u32 %v4718, 16
    %v5148 = vrot.slane %v5146, 1
    %v5149 = vor.u32 %v5144, %v5148
    %v5151 = vshll.u32 %v4814, 16
    %v5153 = vrot.slane %v5151, 1
    %v5154 = vsel %vm380, %v5149, %v5153
    %v5156 = vshrl.u32 %v4719, 16
    %v5158 = vshll.u32 %v4719, 16
    %v5160 = vrot.slane %v5158, 1
    %v5161 = vor.u32 %v5156, %v5160
    %v5163 = vshll.u32 %v4815, 16
    %v5165 = vrot.slane %v5163, 1
    %v5166 = vsel %vm380, %v5161, %v5165
    %v5168 = vshrl.u32 %v4720, 16
    %v5170 = vshll.u32 %v4720, 16
    %v5172 = vrot.slane %v5170, 1
    %v5173 = vor.u32 %v5168, %v5172
    %v5175 = vshll.u32 %v4816, 16
    %v5177 = vrot.slane %v5175, 1
    %v5178 = vsel %vm380, %v5173, %v5177
    %v5180 = vshrl.u32 %v4721, 16
    %v5182 = vshll.u32 %v4721, 16
    %v5184 = vrot.slane %v5182, 1
    %v5185 = vor.u32 %v5180, %v5184
    %v5187 = vshll.u32 %v4817, 16
    %v5189 = vrot.slane %v5187, 1
    %v5190 = vsel %vm380, %v5185, %v5189
    %v5192 = vshrl.u32 %v4722, 16
    %v5194 = vshll.u32 %v4722, 16
    %v5196 = vrot.slane %v5194, 1
    %v5197 = vor.u32 %v5192, %v5196
    %v5199 = vshll.u32 %v4818, 16
    %v5201 = vrot.slane %v5199, 1
    %v5202 = vsel %vm380, %v5197, %v5201
    %5203 = vrot.lane.b32.xlu0 %v4830, 8
    %v5204 = vpop.permute.xlu0 %5203
    %5205 = vrot.lane.b32.xlu0 %v4842, 8
    %v5206 = vpop.permute.xlu0 %5205
    %5207 = vrot.lane.b32.xlu0 %v4854, 8
    %v5208 = vpop.permute.xlu0 %5207
    %5209 = vrot.lane.b32.xlu0 %v4866, 8
    %v5210 = vpop.permute.xlu0 %5209
    %5211 = vrot.lane.b32.xlu0 %v4878, 8
    %v5212 = vpop.permute.xlu0 %5211
    %5213 = vrot.lane.b32.xlu0 %v4890, 8
    %v5214 = vpop.permute.xlu0 %5213
    %5215 = vrot.lane.b32.xlu0 %v4902, 8
    %v5216 = vpop.permute.xlu0 %5215
    %5217 = vrot.lane.b32.xlu0 %v4914, 8
    %v5218 = vpop.permute.xlu0 %5217
    %5219 = vrot.lane.b32.xlu0 %v4926, 8
    %v5220 = vpop.permute.xlu0 %5219
    %5221 = vrot.lane.b32.xlu0 %v4938, 8
    %v5222 = vpop.permute.xlu0 %5221
    %5223 = vrot.lane.b32.xlu0 %v4950, 8
    %v5224 = vpop.permute.xlu0 %5223
    %5225 = vrot.lane.b32.xlu0 %v4962, 8
    %v5226 = vpop.permute.xlu0 %5225
    %5227 = vrot.lane.b32.xlu0 %v4974, 8
    %v5228 = vpop.permute.xlu0 %5227
    %5229 = vrot.lane.b32.xlu0 %v4986, 8
    %v5230 = vpop.permute.xlu0 %5229
    %5231 = vrot.lane.b32.xlu0 %v4998, 8
    %v5232 = vpop.permute.xlu0 %5231
    %5233 = vrot.lane.b32.xlu0 %v5010, 8
    %v5234 = vpop.permute.xlu0 %5233
    %5235 = vrot.lane.b32.xlu0 %v5022, 8
    %v5236 = vpop.permute.xlu0 %5235
    %5237 = vrot.lane.b32.xlu0 %v5034, 8
    %v5238 = vpop.permute.xlu0 %5237
    %5239 = vrot.lane.b32.xlu0 %v5046, 8
    %v5240 = vpop.permute.xlu0 %5239
    %5241 = vrot.lane.b32.xlu0 %v5058, 8
    %v5242 = vpop.permute.xlu0 %5241
    %5243 = vrot.lane.b32.xlu0 %v5070, 8
    %v5244 = vpop.permute.xlu0 %5243
    %5245 = vrot.lane.b32.xlu0 %v5082, 8
    %v5246 = vpop.permute.xlu0 %5245
    %5247 = vrot.lane.b32.xlu0 %v5094, 8
    %v5248 = vpop.permute.xlu0 %5247
    %5249 = vrot.lane.b32.xlu0 %v5106, 8
    %v5250 = vpop.permute.xlu0 %5249
    %5251 = vrot.lane.b32.xlu0 %v5118, 8
    %v5252 = vpop.permute.xlu0 %5251
    %5253 = vrot.lane.b32.xlu0 %v5130, 8
    %v5254 = vpop.permute.xlu0 %5253
    %5255 = vrot.lane.b32.xlu0 %v5142, 8
    %v5256 = vpop.permute.xlu0 %5255
    %5257 = vrot.lane.b32.xlu0 %v5154, 8
    %v5258 = vpop.permute.xlu0 %5257
    %5259 = vrot.lane.b32.xlu0 %v5166, 8
    %v5260 = vpop.permute.xlu0 %5259
    %5261 = vrot.lane.b32.xlu0 %v5178, 8
    %v5262 = vpop.permute.xlu0 %5261
    %5263 = vrot.lane.b32.xlu0 %v5190, 8
    %v5264 = vpop.permute.xlu0 %5263
    %5265 = vrot.lane.b32.xlu0 %v5202, 8
    %v5266 = vpop.permute.xlu0 %5265
    %v5299 = vunpack.c.l.b16 %v4274
    %v5300 = vunpack.c.l.b16 %v4275
    %v5301 = vunpack.c.l.b16 %v4276
    %v5302 = vunpack.c.l.b16 %v4277
    %v5303 = vunpack.c.l.b16 %v4278
    %v5304 = vunpack.c.l.b16 %v4279
    %v5305 = vunpack.c.l.b16 %v4280
    %v5306 = vunpack.c.l.b16 %v4281
    %v5307 = vunpack.c.l.b16 %v4282
    %v5308 = vunpack.c.l.b16 %v4283
    %v5309 = vunpack.c.l.b16 %v4284
    %v5310 = vunpack.c.l.b16 %v4285
    %v5311 = vunpack.c.l.b16 %v4286
    %v5312 = vunpack.c.l.b16 %v4287
    %v5313 = vunpack.c.l.b16 %v4288
    %v5314 = vunpack.c.l.b16 %v4289
    %v5315 = vunpack.c.l.b16 %v4290
    %v5316 = vunpack.c.l.b16 %v4291
    %v5317 = vunpack.c.l.b16 %v4292
    %v5318 = vunpack.c.l.b16 %v4293
    %v5319 = vunpack.c.l.b16 %v4294
    %v5320 = vunpack.c.l.b16 %v4295
    %v5321 = vunpack.c.l.b16 %v4296
    %v5322 = vunpack.c.l.b16 %v4297
    %v5323 = vunpack.c.l.b16 %v4298
    %v5324 = vunpack.c.l.b16 %v4299
    %v5325 = vunpack.c.l.b16 %v4300
    %v5326 = vunpack.c.l.b16 %v4301
    %v5327 = vunpack.c.l.b16 %v4302
    %v5328 = vunpack.c.l.b16 %v4303
    %v5329 = vunpack.c.l.b16 %v4304
    %v5330 = vunpack.c.l.b16 %v4305
    %v5331 = vpack.c.b16 %v4628, %v5299
    %v5332 = vpack.c.b16 %v4630, %v5300
    %v5333 = vpack.c.b16 %v4632, %v5301
    %v5334 = vpack.c.b16 %v4634, %v5302
    %v5335 = vpack.c.b16 %v4636, %v5303
    %v5336 = vpack.c.b16 %v4638, %v5304
    %v5337 = vpack.c.b16 %v4640, %v5305
    %v5338 = vpack.c.b16 %v4642, %v5306
    %v5339 = vpack.c.b16 %v4644, %v5307
    %v5340 = vpack.c.b16 %v4646, %v5308
    %v5341 = vpack.c.b16 %v4648, %v5309
    %v5342 = vpack.c.b16 %v4650, %v5310
    %v5343 = vpack.c.b16 %v4652, %v5311
    %v5344 = vpack.c.b16 %v4654, %v5312
    %v5345 = vpack.c.b16 %v4656, %v5313
    %v5346 = vpack.c.b16 %v4658, %v5314
    %v5347 = vpack.c.b16 %v4660, %v5315
    %v5348 = vpack.c.b16 %v4662, %v5316
    %v5349 = vpack.c.b16 %v4664, %v5317
    %v5350 = vpack.c.b16 %v4666, %v5318
    %v5351 = vpack.c.b16 %v4668, %v5319
    %v5352 = vpack.c.b16 %v4670, %v5320
    %v5353 = vpack.c.b16 %v4672, %v5321
    %v5354 = vpack.c.b16 %v4674, %v5322
    %v5355 = vpack.c.b16 %v4676, %v5323
    %v5356 = vpack.c.b16 %v4678, %v5324
    %v5357 = vpack.c.b16 %v4680, %v5325
    %v5358 = vpack.c.b16 %v4682, %v5326
    %v5359 = vpack.c.b16 %v4684, %v5327
    %v5360 = vpack.c.b16 %v4686, %v5328
    %v5361 = vpack.c.b16 %v4688, %v5329
    %v5362 = vpack.c.b16 %v4690, %v5330
    %v5363 = vrot.slane %v5331, 1
    %v5364 = vrot.slane %v4787, 1
    %v5365 = vsel %vm829, %v5363, %v5364
    %v5366 = vrot.slane %v5332, 1
    %v5367 = vrot.slane %v4788, 1
    %v5368 = vsel %vm829, %v5366, %v5367
    %v5369 = vrot.slane %v5333, 1
    %v5370 = vrot.slane %v4789, 1
    %v5371 = vsel %vm829, %v5369, %v5370
    %v5372 = vrot.slane %v5334, 1
    %v5373 = vrot.slane %v4790, 1
    %v5374 = vsel %vm829, %v5372, %v5373
    %v5375 = vrot.slane %v5335, 1
    %v5376 = vrot.slane %v4791, 1
    %v5377 = vsel %vm829, %v5375, %v5376
    %v5378 = vrot.slane %v5336, 1
    %v5379 = vrot.slane %v4792, 1
    %v5380 = vsel %vm829, %v5378, %v5379
    %v5381 = vrot.slane %v5337, 1
    %v5382 = vrot.slane %v4793, 1
    %v5383 = vsel %vm829, %v5381, %v5382
    %v5384 = vrot.slane %v5338, 1
    %v5385 = vrot.slane %v4794, 1
    %v5386 = vsel %vm829, %v5384, %v5385
    %v5387 = vrot.slane %v5339, 1
    %v5388 = vrot.slane %v4795, 1
    %v5389 = vsel %vm829, %v5387, %v5388
    %v5390 = vrot.slane %v5340, 1
    %v5391 = vrot.slane %v4796, 1
    %v5392 = vsel %vm829, %v5390, %v5391
    %v5393 = vrot.slane %v5341, 1
    %v5394 = vrot.slane %v4797, 1
    %v5395 = vsel %vm829, %v5393, %v5394
    %v5396 = vrot.slane %v5342, 1
    %v5397 = vrot.slane %v4798, 1
    %v5398 = vsel %vm829, %v5396, %v5397
    %v5399 = vrot.slane %v5343, 1
    %v5400 = vrot.slane %v4799, 1
    %v5401 = vsel %vm829, %v5399, %v5400
    %v5402 = vrot.slane %v5344, 1
    %v5403 = vrot.slane %v4800, 1
    %v5404 = vsel %vm829, %v5402, %v5403
    %v5405 = vrot.slane %v5345, 1
    %v5406 = vrot.slane %v4801, 1
    %v5407 = vsel %vm829, %v5405, %v5406
    %v5408 = vrot.slane %v5346, 1
    %v5409 = vrot.slane %v4802, 1
    %v5410 = vsel %vm829, %v5408, %v5409
    %v5411 = vrot.slane %v5347, 1
    %v5412 = vrot.slane %v4803, 1
    %v5413 = vsel %vm829, %v5411, %v5412
    %v5414 = vrot.slane %v5348, 1
    %v5415 = vrot.slane %v4804, 1
    %v5416 = vsel %vm829, %v5414, %v5415
    %v5417 = vrot.slane %v5349, 1
    %v5418 = vrot.slane %v4805, 1
    %v5419 = vsel %vm829, %v5417, %v5418
    %v5420 = vrot.slane %v5350, 1
    %v5421 = vrot.slane %v4806, 1
    %v5422 = vsel %vm829, %v5420, %v5421
    %v5423 = vrot.slane %v5351, 1
    %v5424 = vrot.slane %v4807, 1
    %v5425 = vsel %vm829, %v5423, %v5424
    %v5426 = vrot.slane %v5352, 1
    %v5427 = vrot.slane %v4808, 1
    %v5428 = vsel %vm829, %v5426, %v5427
    %v5429 = vrot.slane %v5353, 1
    %v5430 = vrot.slane %v4809, 1
    %v5431 = vsel %vm829, %v5429, %v5430
    %v5432 = vrot.slane %v5354, 1
    %v5433 = vrot.slane %v4810, 1
    %v5434 = vsel %vm829, %v5432, %v5433
    %v5435 = vrot.slane %v5355, 1
    %v5436 = vrot.slane %v4811, 1
    %v5437 = vsel %vm829, %v5435, %v5436
    %v5438 = vrot.slane %v5356, 1
    %v5439 = vrot.slane %v4812, 1
    %v5440 = vsel %vm829, %v5438, %v5439
    %v5441 = vrot.slane %v5357, 1
    %v5442 = vrot.slane %v4813, 1
    %v5443 = vsel %vm829, %v5441, %v5442
    %v5444 = vrot.slane %v5358, 1
    %v5445 = vrot.slane %v4814, 1
    %v5446 = vsel %vm829, %v5444, %v5445
    %v5447 = vrot.slane %v5359, 1
    %v5448 = vrot.slane %v4815, 1
    %v5449 = vsel %vm829, %v5447, %v5448
    %v5450 = vrot.slane %v5360, 1
    %v5451 = vrot.slane %v4816, 1
    %v5452 = vsel %vm829, %v5450, %v5451
    %v5453 = vrot.slane %v5361, 1
    %v5454 = vrot.slane %v4817, 1
    %v5455 = vsel %vm829, %v5453, %v5454
    %v5456 = vrot.slane %v5362, 1
    %v5457 = vrot.slane %v4818, 1
    %v5458 = vsel %vm829, %v5456, %v5457
    %5459 = vrot.lane.b32.xlu0 %v5365, 16
    %v5460 = vpop.permute.xlu0 %5459
    %5461 = vrot.lane.b32.xlu0 %v5368, 16
    %v5462 = vpop.permute.xlu0 %5461
    %5463 = vrot.lane.b32.xlu0 %v5371, 16
    %v5464 = vpop.permute.xlu0 %5463
    %5465 = vrot.lane.b32.xlu0 %v5374, 16
    %v5466 = vpop.permute.xlu0 %5465
    %5467 = vrot.lane.b32.xlu0 %v5377, 16
    %v5468 = vpop.permute.xlu0 %5467
    %5469 = vrot.lane.b32.xlu0 %v5380, 16
    %v5470 = vpop.permute.xlu0 %5469
    %5471 = vrot.lane.b32.xlu0 %v5383, 16
    %v5472 = vpop.permute.xlu0 %5471
    %5473 = vrot.lane.b32.xlu0 %v5386, 16
    %v5474 = vpop.permute.xlu0 %5473
    %5475 = vrot.lane.b32.xlu0 %v5389, 16
    %v5476 = vpop.permute.xlu0 %5475
    %5477 = vrot.lane.b32.xlu0 %v5392, 16
    %v5478 = vpop.permute.xlu0 %5477
    %5479 = vrot.lane.b32.xlu0 %v5395, 16
    %v5480 = vpop.permute.xlu0 %5479
    %5481 = vrot.lane.b32.xlu0 %v5398, 16
    %v5482 = vpop.permute.xlu0 %5481
    %5483 = vrot.lane.b32.xlu0 %v5401, 16
    %v5484 = vpop.permute.xlu0 %5483
    %5485 = vrot.lane.b32.xlu0 %v5404, 16
    %v5486 = vpop.permute.xlu0 %5485
    %5487 = vrot.lane.b32.xlu0 %v5407, 16
    %v5488 = vpop.permute.xlu0 %5487
    %5489 = vrot.lane.b32.xlu0 %v5410, 16
    %v5490 = vpop.permute.xlu0 %5489
    %5491 = vrot.lane.b32.xlu0 %v5413, 16
    %v5492 = vpop.permute.xlu0 %5491
    %5493 = vrot.lane.b32.xlu0 %v5416, 16
    %v5494 = vpop.permute.xlu0 %5493
    %5495 = vrot.lane.b32.xlu0 %v5419, 16
    %v5496 = vpop.permute.xlu0 %5495
    %5497 = vrot.lane.b32.xlu0 %v5422, 16
    %v5498 = vpop.permute.xlu0 %5497
    %5499 = vrot.lane.b32.xlu0 %v5425, 16
    %v5500 = vpop.permute.xlu0 %5499
    %5501 = vrot.lane.b32.xlu0 %v5428, 16
    %v5502 = vpop.permute.xlu0 %5501
    %5503 = vrot.lane.b32.xlu0 %v5431, 16
    %v5504 = vpop.permute.xlu0 %5503
    %5505 = vrot.lane.b32.xlu0 %v5434, 16
    %v5506 = vpop.permute.xlu0 %5505
    %5507 = vrot.lane.b32.xlu0 %v5437, 16
    %v5508 = vpop.permute.xlu0 %5507
    %5509 = vrot.lane.b32.xlu0 %v5440, 16
    %v5510 = vpop.permute.xlu0 %5509
    %5511 = vrot.lane.b32.xlu0 %v5443, 16
    %v5512 = vpop.permute.xlu0 %5511
    %5513 = vrot.lane.b32.xlu0 %v5446, 16
    %v5514 = vpop.permute.xlu0 %5513
    %5515 = vrot.lane.b32.xlu0 %v5449, 16
    %v5516 = vpop.permute.xlu0 %5515
    %5517 = vrot.lane.b32.xlu0 %v5452, 16
    %v5518 = vpop.permute.xlu0 %5517
    %5519 = vrot.lane.b32.xlu0 %v5455, 16
    %v5520 = vpop.permute.xlu0 %5519
    %5521 = vrot.lane.b32.xlu0 %v5458, 16
    %v5522 = vpop.permute.xlu0 %5521
    %v5587 = vunpack.c.l.b16 %v4306
    %v5588 = vunpack.c.l.b16 %v4307
    %v5589 = vunpack.c.l.b16 %v4308
    %v5590 = vunpack.c.l.b16 %v4309
    %v5591 = vunpack.c.l.b16 %v4310
    %v5592 = vunpack.c.l.b16 %v4311
    %v5593 = vunpack.c.l.b16 %v4312
    %v5594 = vunpack.c.l.b16 %v4313
    %v5595 = vunpack.c.l.b16 %v4314
    %v5596 = vunpack.c.l.b16 %v4315
    %v5597 = vunpack.c.l.b16 %v4316
    %v5598 = vunpack.c.l.b16 %v4317
    %v5599 = vunpack.c.l.b16 %v4318
    %v5600 = vunpack.c.l.b16 %v4319
    %v5601 = vunpack.c.l.b16 %v4320
    %v5602 = vunpack.c.l.b16 %v4321
    %v5603 = vunpack.c.l.b16 %v4322
    %v5604 = vunpack.c.l.b16 %v4323
    %v5605 = vunpack.c.l.b16 %v4324
    %v5606 = vunpack.c.l.b16 %v4325
    %v5607 = vunpack.c.l.b16 %v4326
    %v5608 = vunpack.c.l.b16 %v4327
    %v5609 = vunpack.c.l.b16 %v4328
    %v5610 = vunpack.c.l.b16 %v4329
    %v5611 = vunpack.c.l.b16 %v4330
    %v5612 = vunpack.c.l.b16 %v4331
    %v5613 = vunpack.c.l.b16 %v4332
    %v5614 = vunpack.c.l.b16 %v4333
    %v5615 = vunpack.c.l.b16 %v4334
    %v5616 = vunpack.c.l.b16 %v4335
    %v5617 = vunpack.c.l.b16 %v4336
    %v5618 = vunpack.c.l.b16 %v4337
    %v5619 = vunpack.c.l.b16 %v4338
    %v5620 = vunpack.c.l.b16 %v4339
    %v5621 = vunpack.c.l.b16 %v4340
    %v5622 = vunpack.c.l.b16 %v4341
    %v5623 = vunpack.c.l.b16 %v4342
    %v5624 = vunpack.c.l.b16 %v4343
    %v5625 = vunpack.c.l.b16 %v4344
    %v5626 = vunpack.c.l.b16 %v4345
    %v5627 = vunpack.c.l.b16 %v4346
    %v5628 = vunpack.c.l.b16 %v4347
    %v5629 = vunpack.c.l.b16 %v4348
    %v5630 = vunpack.c.l.b16 %v4349
    %v5631 = vunpack.c.l.b16 %v4350
    %v5632 = vunpack.c.l.b16 %v4351
    %v5633 = vunpack.c.l.b16 %v4352
    %v5634 = vunpack.c.l.b16 %v4353
    %v5635 = vunpack.c.l.b16 %v4354
    %v5636 = vunpack.c.l.b16 %v4355
    %v5637 = vunpack.c.l.b16 %v4356
    %v5638 = vunpack.c.l.b16 %v4357
    %v5639 = vunpack.c.l.b16 %v4358
    %v5640 = vunpack.c.l.b16 %v4359
    %v5641 = vunpack.c.l.b16 %v4360
    %v5642 = vunpack.c.l.b16 %v4361
    %v5643 = vunpack.c.l.b16 %v4362
    %v5644 = vunpack.c.l.b16 %v4363
    %v5645 = vunpack.c.l.b16 %v4364
    %v5646 = vunpack.c.l.b16 %v4365
    %v5647 = vunpack.c.l.b16 %v4366
    %v5648 = vunpack.c.l.b16 %v4367
    %v5649 = vunpack.c.l.b16 %v4368
    %v5650 = vunpack.c.l.b16 %v4369
    %v5651 = vpack.c.b16 %v5588, %v5587
    %v5652 = vpack.c.b16 %v5590, %v5589
    %v5653 = vpack.c.b16 %v5592, %v5591
    %v5654 = vpack.c.b16 %v5594, %v5593
    %v5655 = vpack.c.b16 %v5596, %v5595
    %v5656 = vpack.c.b16 %v5598, %v5597
    %v5657 = vpack.c.b16 %v5600, %v5599
    %v5658 = vpack.c.b16 %v5602, %v5601
    %v5659 = vpack.c.b16 %v5604, %v5603
    %v5660 = vpack.c.b16 %v5606, %v5605
    %v5661 = vpack.c.b16 %v5608, %v5607
    %v5662 = vpack.c.b16 %v5610, %v5609
    %v5663 = vpack.c.b16 %v5612, %v5611
    %v5664 = vpack.c.b16 %v5614, %v5613
    %v5665 = vpack.c.b16 %v5616, %v5615
    %v5666 = vpack.c.b16 %v5618, %v5617
    %v5667 = vpack.c.b16 %v5620, %v5619
    %v5668 = vpack.c.b16 %v5622, %v5621
    %v5669 = vpack.c.b16 %v5624, %v5623
    %v5670 = vpack.c.b16 %v5626, %v5625
    %v5671 = vpack.c.b16 %v5628, %v5627
    %v5672 = vpack.c.b16 %v5630, %v5629
    %v5673 = vpack.c.b16 %v5632, %v5631
    %v5674 = vpack.c.b16 %v5634, %v5633
    %v5675 = vpack.c.b16 %v5636, %v5635
    %v5676 = vpack.c.b16 %v5638, %v5637
    %v5677 = vpack.c.b16 %v5640, %v5639
    %v5678 = vpack.c.b16 %v5642, %v5641
    %v5679 = vpack.c.b16 %v5644, %v5643
    %v5680 = vpack.c.b16 %v5646, %v5645
    %v5681 = vpack.c.b16 %v5648, %v5647
    %v5682 = vpack.c.b16 %v5650, %v5649
    %5683 = vrot.lane.b32.xlu0 %v5651, 24
    %v5684 = vpop.permute.xlu0 %5683
    %5685 = vrot.lane.b32.xlu0 %v5652, 24
    %v5686 = vpop.permute.xlu0 %5685
    %5687 = vrot.lane.b32.xlu0 %v5653, 24
    %v5688 = vpop.permute.xlu0 %5687
    %5689 = vrot.lane.b32.xlu0 %v5654, 24
    %v5690 = vpop.permute.xlu0 %5689
    %5691 = vrot.lane.b32.xlu0 %v5655, 24
    %v5692 = vpop.permute.xlu0 %5691
    %5693 = vrot.lane.b32.xlu0 %v5656, 24
    %v5694 = vpop.permute.xlu0 %5693
    %5695 = vrot.lane.b32.xlu0 %v5657, 24
    %v5696 = vpop.permute.xlu0 %5695
    %5697 = vrot.lane.b32.xlu0 %v5658, 24
    %v5698 = vpop.permute.xlu0 %5697
    %5699 = vrot.lane.b32.xlu0 %v5659, 24
    %v5700 = vpop.permute.xlu0 %5699
    %5701 = vrot.lane.b32.xlu0 %v5660, 24
    %v5702 = vpop.permute.xlu0 %5701
    %5703 = vrot.lane.b32.xlu0 %v5661, 24
    %v5704 = vpop.permute.xlu0 %5703
    %5705 = vrot.lane.b32.xlu0 %v5662, 24
    %v5706 = vpop.permute.xlu0 %5705
    %5707 = vrot.lane.b32.xlu0 %v5663, 24
    %v5708 = vpop.permute.xlu0 %5707
    %5709 = vrot.lane.b32.xlu0 %v5664, 24
    %v5710 = vpop.permute.xlu0 %5709
    %5711 = vrot.lane.b32.xlu0 %v5665, 24
    %v5712 = vpop.permute.xlu0 %5711
    %5713 = vrot.lane.b32.xlu0 %v5666, 24
    %v5714 = vpop.permute.xlu0 %5713
    %5715 = vrot.lane.b32.xlu0 %v5667, 24
    %v5716 = vpop.permute.xlu0 %5715
    %5717 = vrot.lane.b32.xlu0 %v5668, 24
    %v5718 = vpop.permute.xlu0 %5717
    %5719 = vrot.lane.b32.xlu0 %v5669, 24
    %v5720 = vpop.permute.xlu0 %5719
    %5721 = vrot.lane.b32.xlu0 %v5670, 24
    %v5722 = vpop.permute.xlu0 %5721
    %5723 = vrot.lane.b32.xlu0 %v5671, 24
    %v5724 = vpop.permute.xlu0 %5723
    %5725 = vrot.lane.b32.xlu0 %v5672, 24
    %v5726 = vpop.permute.xlu0 %5725
    %5727 = vrot.lane.b32.xlu0 %v5673, 24
    %v5728 = vpop.permute.xlu0 %5727
    %5729 = vrot.lane.b32.xlu0 %v5674, 24
    %v5730 = vpop.permute.xlu0 %5729
    %5731 = vrot.lane.b32.xlu0 %v5675, 24
    %v5732 = vpop.permute.xlu0 %5731
    %5733 = vrot.lane.b32.xlu0 %v5676, 24
    %v5734 = vpop.permute.xlu0 %5733
    %5735 = vrot.lane.b32.xlu0 %v5677, 24
    %v5736 = vpop.permute.xlu0 %5735
    %5737 = vrot.lane.b32.xlu0 %v5678, 24
    %v5738 = vpop.permute.xlu0 %5737
    %5739 = vrot.lane.b32.xlu0 %v5679, 24
    %v5740 = vpop.permute.xlu0 %5739
    %5741 = vrot.lane.b32.xlu0 %v5680, 24
    %v5742 = vpop.permute.xlu0 %5741
    %5743 = vrot.lane.b32.xlu0 %v5681, 24
    %v5744 = vpop.permute.xlu0 %5743
    %5745 = vrot.lane.b32.xlu0 %v5682, 24
    %v5746 = vpop.permute.xlu0 %5745
    %v5779 = vunpack.c.l.b16 %v4370
    %v5780 = vunpack.c.l.b16 %v4371
    %v5781 = vunpack.c.l.b16 %v4372
    %v5782 = vunpack.c.l.b16 %v4373
    %v5783 = vunpack.c.l.b16 %v4374
    %v5784 = vunpack.c.l.b16 %v4375
    %v5785 = vunpack.c.l.b16 %v4376
    %v5786 = vunpack.c.l.b16 %v4377
    %v5787 = vunpack.c.l.b16 %v4378
    %v5788 = vunpack.c.l.b16 %v4379
    %v5789 = vunpack.c.l.b16 %v4380
    %v5790 = vunpack.c.l.b16 %v4381
    %v5791 = vunpack.c.l.b16 %v4382
    %v5792 = vunpack.c.l.b16 %v4383
    %v5793 = vunpack.c.l.b16 %v4384
    %v5794 = vunpack.c.l.b16 %v4385
    %v5795 = vunpack.c.l.b16 %v4386
    %v5796 = vunpack.c.l.b16 %v4387
    %v5797 = vunpack.c.l.b16 %v4388
    %v5798 = vunpack.c.l.b16 %v4389
    %v5799 = vunpack.c.l.b16 %v4390
    %v5800 = vunpack.c.l.b16 %v4391
    %v5801 = vunpack.c.l.b16 %v4392
    %v5802 = vunpack.c.l.b16 %v4393
    %v5803 = vunpack.c.l.b16 %v4394
    %v5804 = vunpack.c.l.b16 %v4395
    %v5805 = vunpack.c.l.b16 %v4396
    %v5806 = vunpack.c.l.b16 %v4397
    %v5807 = vunpack.c.l.b16 %v4398
    %v5808 = vunpack.c.l.b16 %v4399
    %v5809 = vunpack.c.l.b16 %v4400
    %v5810 = vunpack.c.l.b16 %v4401
    %v5811 = vpack.c.b16 %v5779, %v5779
    %v5812 = vpack.c.b16 %v5780, %v5780
    %v5813 = vpack.c.b16 %v5781, %v5781
    %v5814 = vpack.c.b16 %v5782, %v5782
    %v5815 = vpack.c.b16 %v5783, %v5783
    %v5816 = vpack.c.b16 %v5784, %v5784
    %v5817 = vpack.c.b16 %v5785, %v5785
    %v5818 = vpack.c.b16 %v5786, %v5786
    %v5819 = vpack.c.b16 %v5787, %v5787
    %v5820 = vpack.c.b16 %v5788, %v5788
    %v5821 = vpack.c.b16 %v5789, %v5789
    %v5822 = vpack.c.b16 %v5790, %v5790
    %v5823 = vpack.c.b16 %v5791, %v5791
    %v5824 = vpack.c.b16 %v5792, %v5792
    %v5825 = vpack.c.b16 %v5793, %v5793
    %v5826 = vpack.c.b16 %v5794, %v5794
    %v5827 = vpack.c.b16 %v5795, %v5795
    %v5828 = vpack.c.b16 %v5796, %v5796
    %v5829 = vpack.c.b16 %v5797, %v5797
    %v5830 = vpack.c.b16 %v5798, %v5798
    %v5831 = vpack.c.b16 %v5799, %v5799
    %v5832 = vpack.c.b16 %v5800, %v5800
    %v5833 = vpack.c.b16 %v5801, %v5801
    %v5834 = vpack.c.b16 %v5802, %v5802
    %v5835 = vpack.c.b16 %v5803, %v5803
    %v5836 = vpack.c.b16 %v5804, %v5804
    %v5837 = vpack.c.b16 %v5805, %v5805
    %v5838 = vpack.c.b16 %v5806, %v5806
    %v5839 = vpack.c.b16 %v5807, %v5807
    %v5840 = vpack.c.b16 %v5808, %v5808
    %v5841 = vpack.c.b16 %v5809, %v5809
    %v5842 = vpack.c.b16 %v5810, %v5810
    %v5844 = vshrl.u32 %v5651, 16
    %v5846 = vshll.u32 %v5651, 16
    %v5848 = vrot.slane %v5846, 1
    %v5849 = vor.u32 %v5844, %v5848
    %v5851 = vshll.u32 %v5811, 16
    %v5853 = vrot.slane %v5851, 1
    %v5854 = vsel %vm380, %v5849, %v5853
    %v5856 = vshrl.u32 %v5652, 16
    %v5858 = vshll.u32 %v5652, 16
    %v5860 = vrot.slane %v5858, 1
    %v5861 = vor.u32 %v5856, %v5860
    %v5863 = vshll.u32 %v5812, 16
    %v5865 = vrot.slane %v5863, 1
    %v5866 = vsel %vm380, %v5861, %v5865
    %v5868 = vshrl.u32 %v5653, 16
    %v5870 = vshll.u32 %v5653, 16
    %v5872 = vrot.slane %v5870, 1
    %v5873 = vor.u32 %v5868, %v5872
    %v5875 = vshll.u32 %v5813, 16
    %v5877 = vrot.slane %v5875, 1
    %v5878 = vsel %vm380, %v5873, %v5877
    %v5880 = vshrl.u32 %v5654, 16
    %v5882 = vshll.u32 %v5654, 16
    %v5884 = vrot.slane %v5882, 1
    %v5885 = vor.u32 %v5880, %v5884
    %v5887 = vshll.u32 %v5814, 16
    %v5889 = vrot.slane %v5887, 1
    %v5890 = vsel %vm380, %v5885, %v5889
    %v5892 = vshrl.u32 %v5655, 16
    %v5894 = vshll.u32 %v5655, 16
    %v5896 = vrot.slane %v5894, 1
    %v5897 = vor.u32 %v5892, %v5896
    %v5899 = vshll.u32 %v5815, 16
    %v5901 = vrot.slane %v5899, 1
    %v5902 = vsel %vm380, %v5897, %v5901
    %v5904 = vshrl.u32 %v5656, 16
    %v5906 = vshll.u32 %v5656, 16
    %v5908 = vrot.slane %v5906, 1
    %v5909 = vor.u32 %v5904, %v5908
    %v5911 = vshll.u32 %v5816, 16
    %v5913 = vrot.slane %v5911, 1
    %v5914 = vsel %vm380, %v5909, %v5913
    %v5916 = vshrl.u32 %v5657, 16
    %v5918 = vshll.u32 %v5657, 16
    %v5920 = vrot.slane %v5918, 1
    %v5921 = vor.u32 %v5916, %v5920
    %v5923 = vshll.u32 %v5817, 16
    %v5925 = vrot.slane %v5923, 1
    %v5926 = vsel %vm380, %v5921, %v5925
    %v5928 = vshrl.u32 %v5658, 16
    %v5930 = vshll.u32 %v5658, 16
    %v5932 = vrot.slane %v5930, 1
    %v5933 = vor.u32 %v5928, %v5932
    %v5935 = vshll.u32 %v5818, 16
    %v5937 = vrot.slane %v5935, 1
    %v5938 = vsel %vm380, %v5933, %v5937
    %v5940 = vshrl.u32 %v5659, 16
    %v5942 = vshll.u32 %v5659, 16
    %v5944 = vrot.slane %v5942, 1
    %v5945 = vor.u32 %v5940, %v5944
    %v5947 = vshll.u32 %v5819, 16
    %v5949 = vrot.slane %v5947, 1
    %v5950 = vsel %vm380, %v5945, %v5949
    %v5952 = vshrl.u32 %v5660, 16
    %v5954 = vshll.u32 %v5660, 16
    %v5956 = vrot.slane %v5954, 1
    %v5957 = vor.u32 %v5952, %v5956
    %v5959 = vshll.u32 %v5820, 16
    %v5961 = vrot.slane %v5959, 1
    %v5962 = vsel %vm380, %v5957, %v5961
    %v5964 = vshrl.u32 %v5661, 16
    %v5966 = vshll.u32 %v5661, 16
    %v5968 = vrot.slane %v5966, 1
    %v5969 = vor.u32 %v5964, %v5968
    %v5971 = vshll.u32 %v5821, 16
    %v5973 = vrot.slane %v5971, 1
    %v5974 = vsel %vm380, %v5969, %v5973
    %v5976 = vshrl.u32 %v5662, 16
    %v5978 = vshll.u32 %v5662, 16
    %v5980 = vrot.slane %v5978, 1
    %v5981 = vor.u32 %v5976, %v5980
    %v5983 = vshll.u32 %v5822, 16
    %v5985 = vrot.slane %v5983, 1
    %v5986 = vsel %vm380, %v5981, %v5985
    %v5988 = vshrl.u32 %v5663, 16
    %v5990 = vshll.u32 %v5663, 16
    %v5992 = vrot.slane %v5990, 1
    %v5993 = vor.u32 %v5988, %v5992
    %v5995 = vshll.u32 %v5823, 16
    %v5997 = vrot.slane %v5995, 1
    %v5998 = vsel %vm380, %v5993, %v5997
    %v6000 = vshrl.u32 %v5664, 16
    %v6002 = vshll.u32 %v5664, 16
    %v6004 = vrot.slane %v6002, 1
    %v6005 = vor.u32 %v6000, %v6004
    %v6007 = vshll.u32 %v5824, 16
    %v6009 = vrot.slane %v6007, 1
    %v6010 = vsel %vm380, %v6005, %v6009
    %v6012 = vshrl.u32 %v5665, 16
    %v6014 = vshll.u32 %v5665, 16
    %v6016 = vrot.slane %v6014, 1
    %v6017 = vor.u32 %v6012, %v6016
    %v6019 = vshll.u32 %v5825, 16
    %v6021 = vrot.slane %v6019, 1
    %v6022 = vsel %vm380, %v6017, %v6021
    %v6024 = vshrl.u32 %v5666, 16
    %v6026 = vshll.u32 %v5666, 16
    %v6028 = vrot.slane %v6026, 1
    %v6029 = vor.u32 %v6024, %v6028
    %v6031 = vshll.u32 %v5826, 16
    %v6033 = vrot.slane %v6031, 1
    %v6034 = vsel %vm380, %v6029, %v6033
    %v6036 = vshrl.u32 %v5667, 16
    %v6038 = vshll.u32 %v5667, 16
    %v6040 = vrot.slane %v6038, 1
    %v6041 = vor.u32 %v6036, %v6040
    %v6043 = vshll.u32 %v5827, 16
    %v6045 = vrot.slane %v6043, 1
    %v6046 = vsel %vm380, %v6041, %v6045
    %v6048 = vshrl.u32 %v5668, 16
    %v6050 = vshll.u32 %v5668, 16
    %v6052 = vrot.slane %v6050, 1
    %v6053 = vor.u32 %v6048, %v6052
    %v6055 = vshll.u32 %v5828, 16
    %v6057 = vrot.slane %v6055, 1
    %v6058 = vsel %vm380, %v6053, %v6057
    %v6060 = vshrl.u32 %v5669, 16
    %v6062 = vshll.u32 %v5669, 16
    %v6064 = vrot.slane %v6062, 1
    %v6065 = vor.u32 %v6060, %v6064
    %v6067 = vshll.u32 %v5829, 16
    %v6069 = vrot.slane %v6067, 1
    %v6070 = vsel %vm380, %v6065, %v6069
    %v6072 = vshrl.u32 %v5670, 16
    %v6074 = vshll.u32 %v5670, 16
    %v6076 = vrot.slane %v6074, 1
    %v6077 = vor.u32 %v6072, %v6076
    %v6079 = vshll.u32 %v5830, 16
    %v6081 = vrot.slane %v6079, 1
    %v6082 = vsel %vm380, %v6077, %v6081
    %v6084 = vshrl.u32 %v5671, 16
    %v6086 = vshll.u32 %v5671, 16
    %v6088 = vrot.slane %v6086, 1
    %v6089 = vor.u32 %v6084, %v6088
    %v6091 = vshll.u32 %v5831, 16
    %v6093 = vrot.slane %v6091, 1
    %v6094 = vsel %vm380, %v6089, %v6093
    %v6096 = vshrl.u32 %v5672, 16
    %v6098 = vshll.u32 %v5672, 16
    %v6100 = vrot.slane %v6098, 1
    %v6101 = vor.u32 %v6096, %v6100
    %v6103 = vshll.u32 %v5832, 16
    %v6105 = vrot.slane %v6103, 1
    %v6106 = vsel %vm380, %v6101, %v6105
    %v6108 = vshrl.u32 %v5673, 16
    %v6110 = vshll.u32 %v5673, 16
    %v6112 = vrot.slane %v6110, 1
    %v6113 = vor.u32 %v6108, %v6112
    %v6115 = vshll.u32 %v5833, 16
    %v6117 = vrot.slane %v6115, 1
    %v6118 = vsel %vm380, %v6113, %v6117
    %v6120 = vshrl.u32 %v5674, 16
    %v6122 = vshll.u32 %v5674, 16
    %v6124 = vrot.slane %v6122, 1
    %v6125 = vor.u32 %v6120, %v6124
    %v6127 = vshll.u32 %v5834, 16
    %v6129 = vrot.slane %v6127, 1
    %v6130 = vsel %vm380, %v6125, %v6129
    %v6132 = vshrl.u32 %v5675, 16
    %v6134 = vshll.u32 %v5675, 16
    %v6136 = vrot.slane %v6134, 1
    %v6137 = vor.u32 %v6132, %v6136
    %v6139 = vshll.u32 %v5835, 16
    %v6141 = vrot.slane %v6139, 1
    %v6142 = vsel %vm380, %v6137, %v6141
    %v6144 = vshrl.u32 %v5676, 16
    %v6146 = vshll.u32 %v5676, 16
    %v6148 = vrot.slane %v6146, 1
    %v6149 = vor.u32 %v6144, %v6148
    %v6151 = vshll.u32 %v5836, 16
    %v6153 = vrot.slane %v6151, 1
    %v6154 = vsel %vm380, %v6149, %v6153
    %v6156 = vshrl.u32 %v5677, 16
    %v6158 = vshll.u32 %v5677, 16
    %v6160 = vrot.slane %v6158, 1
    %v6161 = vor.u32 %v6156, %v6160
    %v6163 = vshll.u32 %v5837, 16
    %v6165 = vrot.slane %v6163, 1
    %v6166 = vsel %vm380, %v6161, %v6165
    %v6168 = vshrl.u32 %v5678, 16
    %v6170 = vshll.u32 %v5678, 16
    %v6172 = vrot.slane %v6170, 1
    %v6173 = vor.u32 %v6168, %v6172
    %v6175 = vshll.u32 %v5838, 16
    %v6177 = vrot.slane %v6175, 1
    %v6178 = vsel %vm380, %v6173, %v6177
    %v6180 = vshrl.u32 %v5679, 16
    %v6182 = vshll.u32 %v5679, 16
    %v6184 = vrot.slane %v6182, 1
    %v6185 = vor.u32 %v6180, %v6184
    %v6187 = vshll.u32 %v5839, 16
    %v6189 = vrot.slane %v6187, 1
    %v6190 = vsel %vm380, %v6185, %v6189
    %v6192 = vshrl.u32 %v5680, 16
    %v6194 = vshll.u32 %v5680, 16
    %v6196 = vrot.slane %v6194, 1
    %v6197 = vor.u32 %v6192, %v6196
    %v6199 = vshll.u32 %v5840, 16
    %v6201 = vrot.slane %v6199, 1
    %v6202 = vsel %vm380, %v6197, %v6201
    %v6204 = vshrl.u32 %v5681, 16
    %v6206 = vshll.u32 %v5681, 16
    %v6208 = vrot.slane %v6206, 1
    %v6209 = vor.u32 %v6204, %v6208
    %v6211 = vshll.u32 %v5841, 16
    %v6213 = vrot.slane %v6211, 1
    %v6214 = vsel %vm380, %v6209, %v6213
    %v6216 = vshrl.u32 %v5682, 16
    %v6218 = vshll.u32 %v5682, 16
    %v6220 = vrot.slane %v6218, 1
    %v6221 = vor.u32 %v6216, %v6220
    %v6223 = vshll.u32 %v5842, 16
    %v6225 = vrot.slane %v6223, 1
    %v6226 = vsel %vm380, %v6221, %v6225
    %6227 = vrot.lane.b32.xlu0 %v5854, 32
    %v6228 = vpop.permute.xlu0 %6227
    %6229 = vrot.lane.b32.xlu0 %v5866, 32
    %v6230 = vpop.permute.xlu0 %6229
    %6231 = vrot.lane.b32.xlu0 %v5878, 32
    %v6232 = vpop.permute.xlu0 %6231
    %6233 = vrot.lane.b32.xlu0 %v5890, 32
    %v6234 = vpop.permute.xlu0 %6233
    %6235 = vrot.lane.b32.xlu0 %v5902, 32
    %v6236 = vpop.permute.xlu0 %6235
    %6237 = vrot.lane.b32.xlu0 %v5914, 32
    %v6238 = vpop.permute.xlu0 %6237
    %6239 = vrot.lane.b32.xlu0 %v5926, 32
    %v6240 = vpop.permute.xlu0 %6239
    %6241 = vrot.lane.b32.xlu0 %v5938, 32
    %v6242 = vpop.permute.xlu0 %6241
    %6243 = vrot.lane.b32.xlu0 %v5950, 32
    %v6244 = vpop.permute.xlu0 %6243
    %6245 = vrot.lane.b32.xlu0 %v5962, 32
    %v6246 = vpop.permute.xlu0 %6245
    %6247 = vrot.lane.b32.xlu0 %v5974, 32
    %v6248 = vpop.permute.xlu0 %6247
    %6249 = vrot.lane.b32.xlu0 %v5986, 32
    %v6250 = vpop.permute.xlu0 %6249
    %6251 = vrot.lane.b32.xlu0 %v5998, 32
    %v6252 = vpop.permute.xlu0 %6251
    %6253 = vrot.lane.b32.xlu0 %v6010, 32
    %v6254 = vpop.permute.xlu0 %6253
    %6255 = vrot.lane.b32.xlu0 %v6022, 32
    %v6256 = vpop.permute.xlu0 %6255
    %6257 = vrot.lane.b32.xlu0 %v6034, 32
    %v6258 = vpop.permute.xlu0 %6257
    %6259 = vrot.lane.b32.xlu0 %v6046, 32
    %v6260 = vpop.permute.xlu0 %6259
    %6261 = vrot.lane.b32.xlu0 %v6058, 32
    %v6262 = vpop.permute.xlu0 %6261
    %6263 = vrot.lane.b32.xlu0 %v6070, 32
    %v6264 = vpop.permute.xlu0 %6263
    %6265 = vrot.lane.b32.xlu0 %v6082, 32
    %v6266 = vpop.permute.xlu0 %6265
    %6267 = vrot.lane.b32.xlu0 %v6094, 32
    %v6268 = vpop.permute.xlu0 %6267
    %6269 = vrot.lane.b32.xlu0 %v6106, 32
    %v6270 = vpop.permute.xlu0 %6269
    %6271 = vrot.lane.b32.xlu0 %v6118, 32
    %v6272 = vpop.permute.xlu0 %6271
    %6273 = vrot.lane.b32.xlu0 %v6130, 32
    %v6274 = vpop.permute.xlu0 %6273
    %6275 = vrot.lane.b32.xlu0 %v6142, 32
    %v6276 = vpop.permute.xlu0 %6275
    %6277 = vrot.lane.b32.xlu0 %v6154, 32
    %v6278 = vpop.permute.xlu0 %6277
    %6279 = vrot.lane.b32.xlu0 %v6166, 32
    %v6280 = vpop.permute.xlu0 %6279
    %6281 = vrot.lane.b32.xlu0 %v6178, 32
    %v6282 = vpop.permute.xlu0 %6281
    %6283 = vrot.lane.b32.xlu0 %v6190, 32
    %v6284 = vpop.permute.xlu0 %6283
    %6285 = vrot.lane.b32.xlu0 %v6202, 32
    %v6286 = vpop.permute.xlu0 %6285
    %6287 = vrot.lane.b32.xlu0 %v6214, 32
    %v6288 = vpop.permute.xlu0 %6287
    %6289 = vrot.lane.b32.xlu0 %v6226, 32
    %v6290 = vpop.permute.xlu0 %6289
    %v6323 = vunpack.c.l.b16 %v4402
    %v6324 = vunpack.c.l.b16 %v4403
    %v6325 = vunpack.c.l.b16 %v4404
    %v6326 = vunpack.c.l.b16 %v4405
    %v6327 = vunpack.c.l.b16 %v4406
    %v6328 = vunpack.c.l.b16 %v4407
    %v6329 = vunpack.c.l.b16 %v4408
    %v6330 = vunpack.c.l.b16 %v4409
    %v6331 = vunpack.c.l.b16 %v4410
    %v6332 = vunpack.c.l.b16 %v4411
    %v6333 = vunpack.c.l.b16 %v4412
    %v6334 = vunpack.c.l.b16 %v4413
    %v6335 = vunpack.c.l.b16 %v4414
    %v6336 = vunpack.c.l.b16 %v4415
    %v6337 = vunpack.c.l.b16 %v4416
    %v6338 = vunpack.c.l.b16 %v4417
    %v6339 = vunpack.c.l.b16 %v4418
    %v6340 = vunpack.c.l.b16 %v4419
    %v6341 = vunpack.c.l.b16 %v4420
    %v6342 = vunpack.c.l.b16 %v4421
    %v6343 = vunpack.c.l.b16 %v4422
    %v6344 = vunpack.c.l.b16 %v4423
    %v6345 = vunpack.c.l.b16 %v4424
    %v6346 = vunpack.c.l.b16 %v4425
    %v6347 = vunpack.c.l.b16 %v4426
    %v6348 = vunpack.c.l.b16 %v4427
    %v6349 = vunpack.c.l.b16 %v4428
    %v6350 = vunpack.c.l.b16 %v4429
    %v6351 = vunpack.c.l.b16 %v4430
    %v6352 = vunpack.c.l.b16 %v4431
    %v6353 = vunpack.c.l.b16 %v4432
    %v6354 = vunpack.c.l.b16 %v4433
    %v6355 = vpack.c.b16 %v5588, %v6323
    %v6356 = vpack.c.b16 %v5590, %v6324
    %v6357 = vpack.c.b16 %v5592, %v6325
    %v6358 = vpack.c.b16 %v5594, %v6326
    %v6359 = vpack.c.b16 %v5596, %v6327
    %v6360 = vpack.c.b16 %v5598, %v6328
    %v6361 = vpack.c.b16 %v5600, %v6329
    %v6362 = vpack.c.b16 %v5602, %v6330
    %v6363 = vpack.c.b16 %v5604, %v6331
    %v6364 = vpack.c.b16 %v5606, %v6332
    %v6365 = vpack.c.b16 %v5608, %v6333
    %v6366 = vpack.c.b16 %v5610, %v6334
    %v6367 = vpack.c.b16 %v5612, %v6335
    %v6368 = vpack.c.b16 %v5614, %v6336
    %v6369 = vpack.c.b16 %v5616, %v6337
    %v6370 = vpack.c.b16 %v5618, %v6338
    %v6371 = vpack.c.b16 %v5620, %v6339
    %v6372 = vpack.c.b16 %v5622, %v6340
    %v6373 = vpack.c.b16 %v5624, %v6341
    %v6374 = vpack.c.b16 %v5626, %v6342
    %v6375 = vpack.c.b16 %v5628, %v6343
    %v6376 = vpack.c.b16 %v5630, %v6344
    %v6377 = vpack.c.b16 %v5632, %v6345
    %v6378 = vpack.c.b16 %v5634, %v6346
    %v6379 = vpack.c.b16 %v5636, %v6347
    %v6380 = vpack.c.b16 %v5638, %v6348
    %v6381 = vpack.c.b16 %v5640, %v6349
    %v6382 = vpack.c.b16 %v5642, %v6350
    %v6383 = vpack.c.b16 %v5644, %v6351
    %v6384 = vpack.c.b16 %v5646, %v6352
    %v6385 = vpack.c.b16 %v5648, %v6353
    %v6386 = vpack.c.b16 %v5650, %v6354
    %v6387 = vrot.slane %v6355, 1
    %v6388 = vrot.slane %v5811, 1
    %v6389 = vsel %vm829, %v6387, %v6388
    %v6390 = vrot.slane %v6356, 1
    %v6391 = vrot.slane %v5812, 1
    %v6392 = vsel %vm829, %v6390, %v6391
    %v6393 = vrot.slane %v6357, 1
    %v6394 = vrot.slane %v5813, 1
    %v6395 = vsel %vm829, %v6393, %v6394
    %v6396 = vrot.slane %v6358, 1
    %v6397 = vrot.slane %v5814, 1
    %v6398 = vsel %vm829, %v6396, %v6397
    %v6399 = vrot.slane %v6359, 1
    %v6400 = vrot.slane %v5815, 1
    %v6401 = vsel %vm829, %v6399, %v6400
    %v6402 = vrot.slane %v6360, 1
    %v6403 = vrot.slane %v5816, 1
    %v6404 = vsel %vm829, %v6402, %v6403
    %v6405 = vrot.slane %v6361, 1
    %v6406 = vrot.slane %v5817, 1
    %v6407 = vsel %vm829, %v6405, %v6406
    %v6408 = vrot.slane %v6362, 1
    %v6409 = vrot.slane %v5818, 1
    %v6410 = vsel %vm829, %v6408, %v6409
    %v6411 = vrot.slane %v6363, 1
    %v6412 = vrot.slane %v5819, 1
    %v6413 = vsel %vm829, %v6411, %v6412
    %v6414 = vrot.slane %v6364, 1
    %v6415 = vrot.slane %v5820, 1
    %v6416 = vsel %vm829, %v6414, %v6415
    %v6417 = vrot.slane %v6365, 1
    %v6418 = vrot.slane %v5821, 1
    %v6419 = vsel %vm829, %v6417, %v6418
    %v6420 = vrot.slane %v6366, 1
    %v6421 = vrot.slane %v5822, 1
    %v6422 = vsel %vm829, %v6420, %v6421
    %v6423 = vrot.slane %v6367, 1
    %v6424 = vrot.slane %v5823, 1
    %v6425 = vsel %vm829, %v6423, %v6424
    %v6426 = vrot.slane %v6368, 1
    %v6427 = vrot.slane %v5824, 1
    %v6428 = vsel %vm829, %v6426, %v6427
    %v6429 = vrot.slane %v6369, 1
    %v6430 = vrot.slane %v5825, 1
    %v6431 = vsel %vm829, %v6429, %v6430
    %v6432 = vrot.slane %v6370, 1
    %v6433 = vrot.slane %v5826, 1
    %v6434 = vsel %vm829, %v6432, %v6433
    %v6435 = vrot.slane %v6371, 1
    %v6436 = vrot.slane %v5827, 1
    %v6437 = vsel %vm829, %v6435, %v6436
    %v6438 = vrot.slane %v6372, 1
    %v6439 = vrot.slane %v5828, 1
    %v6440 = vsel %vm829, %v6438, %v6439
    %v6441 = vrot.slane %v6373, 1
    %v6442 = vrot.slane %v5829, 1
    %v6443 = vsel %vm829, %v6441, %v6442
    %v6444 = vrot.slane %v6374, 1
    %v6445 = vrot.slane %v5830, 1
    %v6446 = vsel %vm829, %v6444, %v6445
    %v6447 = vrot.slane %v6375, 1
    %v6448 = vrot.slane %v5831, 1
    %v6449 = vsel %vm829, %v6447, %v6448
    %v6450 = vrot.slane %v6376, 1
    %v6451 = vrot.slane %v5832, 1
    %v6452 = vsel %vm829, %v6450, %v6451
    %v6453 = vrot.slane %v6377, 1
    %v6454 = vrot.slane %v5833, 1
    %v6455 = vsel %vm829, %v6453, %v6454
    %v6456 = vrot.slane %v6378, 1
    %v6457 = vrot.slane %v5834, 1
    %v6458 = vsel %vm829, %v6456, %v6457
    %v6459 = vrot.slane %v6379, 1
    %v6460 = vrot.slane %v5835, 1
    %v6461 = vsel %vm829, %v6459, %v6460
    %v6462 = vrot.slane %v6380, 1
    %v6463 = vrot.slane %v5836, 1
    %v6464 = vsel %vm829, %v6462, %v6463
    %v6465 = vrot.slane %v6381, 1
    %v6466 = vrot.slane %v5837, 1
    %v6467 = vsel %vm829, %v6465, %v6466
    %v6468 = vrot.slane %v6382, 1
    %v6469 = vrot.slane %v5838, 1
    %v6470 = vsel %vm829, %v6468, %v6469
    %v6471 = vrot.slane %v6383, 1
    %v6472 = vrot.slane %v5839, 1
    %v6473 = vsel %vm829, %v6471, %v6472
    %v6474 = vrot.slane %v6384, 1
    %v6475 = vrot.slane %v5840, 1
    %v6476 = vsel %vm829, %v6474, %v6475
    %v6477 = vrot.slane %v6385, 1
    %v6478 = vrot.slane %v5841, 1
    %v6479 = vsel %vm829, %v6477, %v6478
    %v6480 = vrot.slane %v6386, 1
    %v6481 = vrot.slane %v5842, 1
    %v6482 = vsel %vm829, %v6480, %v6481
    %6483 = vrot.lane.b32.xlu0 %v6389, 40
    %v6484 = vpop.permute.xlu0 %6483
    %6485 = vrot.lane.b32.xlu0 %v6392, 40
    %v6486 = vpop.permute.xlu0 %6485
    %6487 = vrot.lane.b32.xlu0 %v6395, 40
    %v6488 = vpop.permute.xlu0 %6487
    %6489 = vrot.lane.b32.xlu0 %v6398, 40
    %v6490 = vpop.permute.xlu0 %6489
    %6491 = vrot.lane.b32.xlu0 %v6401, 40
    %v6492 = vpop.permute.xlu0 %6491
    %6493 = vrot.lane.b32.xlu0 %v6404, 40
    %v6494 = vpop.permute.xlu0 %6493
    %6495 = vrot.lane.b32.xlu0 %v6407, 40
    %v6496 = vpop.permute.xlu0 %6495
    %6497 = vrot.lane.b32.xlu0 %v6410, 40
    %v6498 = vpop.permute.xlu0 %6497
    %6499 = vrot.lane.b32.xlu0 %v6413, 40
    %v6500 = vpop.permute.xlu0 %6499
    %6501 = vrot.lane.b32.xlu0 %v6416, 40
    %v6502 = vpop.permute.xlu0 %6501
    %6503 = vrot.lane.b32.xlu0 %v6419, 40
    %v6504 = vpop.permute.xlu0 %6503
    %6505 = vrot.lane.b32.xlu0 %v6422, 40
    %v6506 = vpop.permute.xlu0 %6505
    %6507 = vrot.lane.b32.xlu0 %v6425, 40
    %v6508 = vpop.permute.xlu0 %6507
    %6509 = vrot.lane.b32.xlu0 %v6428, 40
    %v6510 = vpop.permute.xlu0 %6509
    %6511 = vrot.lane.b32.xlu0 %v6431, 40
    %v6512 = vpop.permute.xlu0 %6511
    %6513 = vrot.lane.b32.xlu0 %v6434, 40
    %v6514 = vpop.permute.xlu0 %6513
    %6515 = vrot.lane.b32.xlu0 %v6437, 40
    %v6516 = vpop.permute.xlu0 %6515
    %6517 = vrot.lane.b32.xlu0 %v6440, 40
    %v6518 = vpop.permute.xlu0 %6517
    %6519 = vrot.lane.b32.xlu0 %v6443, 40
    %v6520 = vpop.permute.xlu0 %6519
    %6521 = vrot.lane.b32.xlu0 %v6446, 40
    %v6522 = vpop.permute.xlu0 %6521
    %6523 = vrot.lane.b32.xlu0 %v6449, 40
    %v6524 = vpop.permute.xlu0 %6523
    %6525 = vrot.lane.b32.xlu0 %v6452, 40
    %v6526 = vpop.permute.xlu0 %6525
    %6527 = vrot.lane.b32.xlu0 %v6455, 40
    %v6528 = vpop.permute.xlu0 %6527
    %6529 = vrot.lane.b32.xlu0 %v6458, 40
    %v6530 = vpop.permute.xlu0 %6529
    %6531 = vrot.lane.b32.xlu0 %v6461, 40
    %v6532 = vpop.permute.xlu0 %6531
    %6533 = vrot.lane.b32.xlu0 %v6464, 40
    %v6534 = vpop.permute.xlu0 %6533
    %6535 = vrot.lane.b32.xlu0 %v6467, 40
    %v6536 = vpop.permute.xlu0 %6535
    %6537 = vrot.lane.b32.xlu0 %v6470, 40
    %v6538 = vpop.permute.xlu0 %6537
    %6539 = vrot.lane.b32.xlu0 %v6473, 40
    %v6540 = vpop.permute.xlu0 %6539
    %6541 = vrot.lane.b32.xlu0 %v6476, 40
    %v6542 = vpop.permute.xlu0 %6541
    %6543 = vrot.lane.b32.xlu0 %v6479, 40
    %v6544 = vpop.permute.xlu0 %6543
    %6545 = vrot.lane.b32.xlu0 %v6482, 40
    %v6546 = vpop.permute.xlu0 %6545
    %v6611 = vunpack.c.l.b16 %v4435
    %v6612 = vunpack.c.l.b16 %v4436
    %v6613 = vunpack.c.l.b16 %v4437
    %v6614 = vunpack.c.l.b16 %v4438
    %v6615 = vunpack.c.l.b16 %v4439
    %v6616 = vunpack.c.l.b16 %v4440
    %v6617 = vunpack.c.l.b16 %v4441
    %v6618 = vunpack.c.l.b16 %v4442
    %v6619 = vunpack.c.l.b16 %v4443
    %v6620 = vunpack.c.l.b16 %v4444
    %v6621 = vunpack.c.l.b16 %v4445
    %v6622 = vunpack.c.l.b16 %v4446
    %v6623 = vunpack.c.l.b16 %v4447
    %v6624 = vunpack.c.l.b16 %v4448
    %v6625 = vunpack.c.l.b16 %v4449
    %v6626 = vunpack.c.l.b16 %v4450
    %v6627 = vunpack.c.l.b16 %v4451
    %v6628 = vunpack.c.l.b16 %v4452
    %v6629 = vunpack.c.l.b16 %v4453
    %v6630 = vunpack.c.l.b16 %v4454
    %v6631 = vunpack.c.l.b16 %v4455
    %v6632 = vunpack.c.l.b16 %v4456
    %v6633 = vunpack.c.l.b16 %v4457
    %v6634 = vunpack.c.l.b16 %v4458
    %v6635 = vunpack.c.l.b16 %v4459
    %v6636 = vunpack.c.l.b16 %v4460
    %v6637 = vunpack.c.l.b16 %v4461
    %v6638 = vunpack.c.l.b16 %v4462
    %v6639 = vunpack.c.l.b16 %v4463
    %v6640 = vunpack.c.l.b16 %v4464
    %v6641 = vunpack.c.l.b16 %v4465
    %v6642 = vunpack.c.l.b16 %v4466
    %v6643 = vunpack.c.l.b16 %v4467
    %v6644 = vunpack.c.l.b16 %v4468
    %v6645 = vunpack.c.l.b16 %v4469
    %v6646 = vunpack.c.l.b16 %v4470
    %v6647 = vunpack.c.l.b16 %v4471
    %v6648 = vunpack.c.l.b16 %v4472
    %v6649 = vunpack.c.l.b16 %v4473
    %v6650 = vunpack.c.l.b16 %v4474
    %v6651 = vunpack.c.l.b16 %v4475
    %v6652 = vunpack.c.l.b16 %v4476
    %v6653 = vunpack.c.l.b16 %v4477
    %v6654 = vunpack.c.l.b16 %v4478
    %v6655 = vunpack.c.l.b16 %v4479
    %v6656 = vunpack.c.l.b16 %v4480
    %v6657 = vunpack.c.l.b16 %v4481
    %v6658 = vunpack.c.l.b16 %v4482
    %v6659 = vunpack.c.l.b16 %v4483
    %v6660 = vunpack.c.l.b16 %v4484
    %v6661 = vunpack.c.l.b16 %v4485
    %v6662 = vunpack.c.l.b16 %v4486
    %v6663 = vunpack.c.l.b16 %v4487
    %v6664 = vunpack.c.l.b16 %v4488
    %v6665 = vunpack.c.l.b16 %v4489
    %v6666 = vunpack.c.l.b16 %v4490
    %v6667 = vunpack.c.l.b16 %v4491
    %v6668 = vunpack.c.l.b16 %v4492
    %v6669 = vunpack.c.l.b16 %v4493
    %v6670 = vunpack.c.l.b16 %v4494
    %v6671 = vunpack.c.l.b16 %v4495
    %v6672 = vunpack.c.l.b16 %v4496
    %v6673 = vunpack.c.l.b16 %v4497
    %v6674 = vunpack.c.l.b16 %v4498
    %v6675 = vpack.c.b16 %v6612, %v6611
    %v6676 = vpack.c.b16 %v6614, %v6613
    %v6677 = vpack.c.b16 %v6616, %v6615
    %v6678 = vpack.c.b16 %v6618, %v6617
    %v6679 = vpack.c.b16 %v6620, %v6619
    %v6680 = vpack.c.b16 %v6622, %v6621
    %v6681 = vpack.c.b16 %v6624, %v6623
    %v6682 = vpack.c.b16 %v6626, %v6625
    %v6683 = vpack.c.b16 %v6628, %v6627
    %v6684 = vpack.c.b16 %v6630, %v6629
    %v6685 = vpack.c.b16 %v6632, %v6631
    %v6686 = vpack.c.b16 %v6634, %v6633
    %v6687 = vpack.c.b16 %v6636, %v6635
    %v6688 = vpack.c.b16 %v6638, %v6637
    %v6689 = vpack.c.b16 %v6640, %v6639
    %v6690 = vpack.c.b16 %v6642, %v6641
    %v6691 = vpack.c.b16 %v6644, %v6643
    %v6692 = vpack.c.b16 %v6646, %v6645
    %v6693 = vpack.c.b16 %v6648, %v6647
    %v6694 = vpack.c.b16 %v6650, %v6649
    %v6695 = vpack.c.b16 %v6652, %v6651
    %v6696 = vpack.c.b16 %v6654, %v6653
    %v6697 = vpack.c.b16 %v6656, %v6655
    %v6698 = vpack.c.b16 %v6658, %v6657
    %v6699 = vpack.c.b16 %v6660, %v6659
    %v6700 = vpack.c.b16 %v6662, %v6661
    %v6701 = vpack.c.b16 %v6664, %v6663
    %v6702 = vpack.c.b16 %v6666, %v6665
    %v6703 = vpack.c.b16 %v6668, %v6667
    %v6704 = vpack.c.b16 %v6670, %v6669
    %v6705 = vpack.c.b16 %v6672, %v6671
    %v6706 = vpack.c.b16 %v6674, %v6673
    %6707 = vrot.lane.b32.xlu0 %v6675, 48
    %v6708 = vpop.permute.xlu0 %6707
    %6709 = vrot.lane.b32.xlu0 %v6676, 48
    %v6710 = vpop.permute.xlu0 %6709
    %6711 = vrot.lane.b32.xlu0 %v6677, 48
    %v6712 = vpop.permute.xlu0 %6711
    %6713 = vrot.lane.b32.xlu0 %v6678, 48
    %v6714 = vpop.permute.xlu0 %6713
    %6715 = vrot.lane.b32.xlu0 %v6679, 48
    %v6716 = vpop.permute.xlu0 %6715
    %6717 = vrot.lane.b32.xlu0 %v6680, 48
    %v6718 = vpop.permute.xlu0 %6717
    %6719 = vrot.lane.b32.xlu0 %v6681, 48
    %v6720 = vpop.permute.xlu0 %6719
    %6721 = vrot.lane.b32.xlu0 %v6682, 48
    %v6722 = vpop.permute.xlu0 %6721
    %6723 = vrot.lane.b32.xlu0 %v6683, 48
    %v6724 = vpop.permute.xlu0 %6723
    %6725 = vrot.lane.b32.xlu0 %v6684, 48
    %v6726 = vpop.permute.xlu0 %6725
    %6727 = vrot.lane.b32.xlu0 %v6685, 48
    %v6728 = vpop.permute.xlu0 %6727
    %6729 = vrot.lane.b32.xlu0 %v6686, 48
    %v6730 = vpop.permute.xlu0 %6729
    %6731 = vrot.lane.b32.xlu0 %v6687, 48
    %v6732 = vpop.permute.xlu0 %6731
    %6733 = vrot.lane.b32.xlu0 %v6688, 48
    %v6734 = vpop.permute.xlu0 %6733
    %6735 = vrot.lane.b32.xlu0 %v6689, 48
    %v6736 = vpop.permute.xlu0 %6735
    %6737 = vrot.lane.b32.xlu0 %v6690, 48
    %v6738 = vpop.permute.xlu0 %6737
    %6739 = vrot.lane.b32.xlu0 %v6691, 48
    %v6740 = vpop.permute.xlu0 %6739
    %6741 = vrot.lane.b32.xlu0 %v6692, 48
    %v6742 = vpop.permute.xlu0 %6741
    %6743 = vrot.lane.b32.xlu0 %v6693, 48
    %v6744 = vpop.permute.xlu0 %6743
    %6745 = vrot.lane.b32.xlu0 %v6694, 48
    %v6746 = vpop.permute.xlu0 %6745
    %6747 = vrot.lane.b32.xlu0 %v6695, 48
    %v6748 = vpop.permute.xlu0 %6747
    %6749 = vrot.lane.b32.xlu0 %v6696, 48
    %v6750 = vpop.permute.xlu0 %6749
    %6751 = vrot.lane.b32.xlu0 %v6697, 48
    %v6752 = vpop.permute.xlu0 %6751
    %6753 = vrot.lane.b32.xlu0 %v6698, 48
    %v6754 = vpop.permute.xlu0 %6753
    %6755 = vrot.lane.b32.xlu0 %v6699, 48
    %v6756 = vpop.permute.xlu0 %6755
    %6757 = vrot.lane.b32.xlu0 %v6700, 48
    %v6758 = vpop.permute.xlu0 %6757
    %6759 = vrot.lane.b32.xlu0 %v6701, 48
    %v6760 = vpop.permute.xlu0 %6759
    %6761 = vrot.lane.b32.xlu0 %v6702, 48
    %v6762 = vpop.permute.xlu0 %6761
    %6763 = vrot.lane.b32.xlu0 %v6703, 48
    %v6764 = vpop.permute.xlu0 %6763
    %6765 = vrot.lane.b32.xlu0 %v6704, 48
    %v6766 = vpop.permute.xlu0 %6765
    %6767 = vrot.lane.b32.xlu0 %v6705, 48
    %v6768 = vpop.permute.xlu0 %6767
    %6769 = vrot.lane.b32.xlu0 %v6706, 48
    %v6770 = vpop.permute.xlu0 %6769
    %v6803 = vunpack.c.l.b16 %v4499
    %v6804 = vunpack.c.l.b16 %v4500
    %v6805 = vunpack.c.l.b16 %v4501
    %v6806 = vunpack.c.l.b16 %v4502
    %v6807 = vunpack.c.l.b16 %v4503
    %v6808 = vunpack.c.l.b16 %v4504
    %v6809 = vunpack.c.l.b16 %v4505
    %v6810 = vunpack.c.l.b16 %v4506
    %v6811 = vunpack.c.l.b16 %v4507
    %v6812 = vunpack.c.l.b16 %v4508
    %v6813 = vunpack.c.l.b16 %v4509
    %v6814 = vunpack.c.l.b16 %v4510
    %v6815 = vunpack.c.l.b16 %v4511
    %v6816 = vunpack.c.l.b16 %v4512
    %v6817 = vunpack.c.l.b16 %v4513
    %v6818 = vunpack.c.l.b16 %v4514
    %v6819 = vunpack.c.l.b16 %v4515
    %v6820 = vunpack.c.l.b16 %v4516
    %v6821 = vunpack.c.l.b16 %v4517
    %v6822 = vunpack.c.l.b16 %v4518
    %v6823 = vunpack.c.l.b16 %v4519
    %v6824 = vunpack.c.l.b16 %v4520
    %v6825 = vunpack.c.l.b16 %v4521
    %v6826 = vunpack.c.l.b16 %v4522
    %v6827 = vunpack.c.l.b16 %v4523
    %v6828 = vunpack.c.l.b16 %v4524
    %v6829 = vunpack.c.l.b16 %v4525
    %v6830 = vunpack.c.l.b16 %v4526
    %v6831 = vunpack.c.l.b16 %v4527
    %v6832 = vunpack.c.l.b16 %v4528
    %v6833 = vunpack.c.l.b16 %v4529
    %v6834 = vunpack.c.l.b16 %v4530
    %v6835 = vpack.c.b16 %v6803, %v6803
    %v6836 = vpack.c.b16 %v6804, %v6804
    %v6837 = vpack.c.b16 %v6805, %v6805
    %v6838 = vpack.c.b16 %v6806, %v6806
    %v6839 = vpack.c.b16 %v6807, %v6807
    %v6840 = vpack.c.b16 %v6808, %v6808
    %v6841 = vpack.c.b16 %v6809, %v6809
    %v6842 = vpack.c.b16 %v6810, %v6810
    %v6843 = vpack.c.b16 %v6811, %v6811
    %v6844 = vpack.c.b16 %v6812, %v6812
    %v6845 = vpack.c.b16 %v6813, %v6813
    %v6846 = vpack.c.b16 %v6814, %v6814
    %v6847 = vpack.c.b16 %v6815, %v6815
    %v6848 = vpack.c.b16 %v6816, %v6816
    %v6849 = vpack.c.b16 %v6817, %v6817
    %v6850 = vpack.c.b16 %v6818, %v6818
    %v6851 = vpack.c.b16 %v6819, %v6819
    %v6852 = vpack.c.b16 %v6820, %v6820
    %v6853 = vpack.c.b16 %v6821, %v6821
    %v6854 = vpack.c.b16 %v6822, %v6822
    %v6855 = vpack.c.b16 %v6823, %v6823
    %v6856 = vpack.c.b16 %v6824, %v6824
    %v6857 = vpack.c.b16 %v6825, %v6825
    %v6858 = vpack.c.b16 %v6826, %v6826
    %v6859 = vpack.c.b16 %v6827, %v6827
    %v6860 = vpack.c.b16 %v6828, %v6828
    %v6861 = vpack.c.b16 %v6829, %v6829
    %v6862 = vpack.c.b16 %v6830, %v6830
    %v6863 = vpack.c.b16 %v6831, %v6831
    %v6864 = vpack.c.b16 %v6832, %v6832
    %v6865 = vpack.c.b16 %v6833, %v6833
    %v6866 = vpack.c.b16 %v6834, %v6834
    %v6868 = vshrl.u32 %v6675, 16
    %v6870 = vshll.u32 %v6675, 16
    %v6872 = vrot.slane %v6870, 1
    %v6873 = vor.u32 %v6868, %v6872
    %v6875 = vshll.u32 %v6835, 16
    %v6877 = vrot.slane %v6875, 1
    %v6878 = vsel %vm380, %v6873, %v6877
    %v6880 = vshrl.u32 %v6676, 16
    %v6882 = vshll.u32 %v6676, 16
    %v6884 = vrot.slane %v6882, 1
    %v6885 = vor.u32 %v6880, %v6884
    %v6887 = vshll.u32 %v6836, 16
    %v6889 = vrot.slane %v6887, 1
    %v6890 = vsel %vm380, %v6885, %v6889
    %v6892 = vshrl.u32 %v6677, 16
    %v6894 = vshll.u32 %v6677, 16
    %v6896 = vrot.slane %v6894, 1
    %v6897 = vor.u32 %v6892, %v6896
    %v6899 = vshll.u32 %v6837, 16
    %v6901 = vrot.slane %v6899, 1
    %v6902 = vsel %vm380, %v6897, %v6901
    %v6904 = vshrl.u32 %v6678, 16
    %v6906 = vshll.u32 %v6678, 16
    %v6908 = vrot.slane %v6906, 1
    %v6909 = vor.u32 %v6904, %v6908
    %v6911 = vshll.u32 %v6838, 16
    %v6913 = vrot.slane %v6911, 1
    %v6914 = vsel %vm380, %v6909, %v6913
    %v6916 = vshrl.u32 %v6679, 16
    %v6918 = vshll.u32 %v6679, 16
    %v6920 = vrot.slane %v6918, 1
    %v6921 = vor.u32 %v6916, %v6920
    %v6923 = vshll.u32 %v6839, 16
    %v6925 = vrot.slane %v6923, 1
    %v6926 = vsel %vm380, %v6921, %v6925
    %v6928 = vshrl.u32 %v6680, 16
    %v6930 = vshll.u32 %v6680, 16
    %v6932 = vrot.slane %v6930, 1
    %v6933 = vor.u32 %v6928, %v6932
    %v6935 = vshll.u32 %v6840, 16
    %v6937 = vrot.slane %v6935, 1
    %v6938 = vsel %vm380, %v6933, %v6937
    %v6940 = vshrl.u32 %v6681, 16
    %v6942 = vshll.u32 %v6681, 16
    %v6944 = vrot.slane %v6942, 1
    %v6945 = vor.u32 %v6940, %v6944
    %v6947 = vshll.u32 %v6841, 16
    %v6949 = vrot.slane %v6947, 1
    %v6950 = vsel %vm380, %v6945, %v6949
    %v6952 = vshrl.u32 %v6682, 16
    %v6954 = vshll.u32 %v6682, 16
    %v6956 = vrot.slane %v6954, 1
    %v6957 = vor.u32 %v6952, %v6956
    %v6959 = vshll.u32 %v6842, 16
    %v6961 = vrot.slane %v6959, 1
    %v6962 = vsel %vm380, %v6957, %v6961
    %v6964 = vshrl.u32 %v6683, 16
    %v6966 = vshll.u32 %v6683, 16
    %v6968 = vrot.slane %v6966, 1
    %v6969 = vor.u32 %v6964, %v6968
    %v6971 = vshll.u32 %v6843, 16
    %v6973 = vrot.slane %v6971, 1
    %v6974 = vsel %vm380, %v6969, %v6973
    %v6976 = vshrl.u32 %v6684, 16
    %v6978 = vshll.u32 %v6684, 16
    %v6980 = vrot.slane %v6978, 1
    %v6981 = vor.u32 %v6976, %v6980
    %v6983 = vshll.u32 %v6844, 16
    %v6985 = vrot.slane %v6983, 1
    %v6986 = vsel %vm380, %v6981, %v6985
    %v6988 = vshrl.u32 %v6685, 16
    %v6990 = vshll.u32 %v6685, 16
    %v6992 = vrot.slane %v6990, 1
    %v6993 = vor.u32 %v6988, %v6992
    %v6995 = vshll.u32 %v6845, 16
    %v6997 = vrot.slane %v6995, 1
    %v6998 = vsel %vm380, %v6993, %v6997
    %v7000 = vshrl.u32 %v6686, 16
    %v7002 = vshll.u32 %v6686, 16
    %v7004 = vrot.slane %v7002, 1
    %v7005 = vor.u32 %v7000, %v7004
    %v7007 = vshll.u32 %v6846, 16
    %v7009 = vrot.slane %v7007, 1
    %v7010 = vsel %vm380, %v7005, %v7009
    %v7012 = vshrl.u32 %v6687, 16
    %v7014 = vshll.u32 %v6687, 16
    %v7016 = vrot.slane %v7014, 1
    %v7017 = vor.u32 %v7012, %v7016
    %v7019 = vshll.u32 %v6847, 16
    %v7021 = vrot.slane %v7019, 1
    %v7022 = vsel %vm380, %v7017, %v7021
    %v7024 = vshrl.u32 %v6688, 16
    %v7026 = vshll.u32 %v6688, 16
    %v7028 = vrot.slane %v7026, 1
    %v7029 = vor.u32 %v7024, %v7028
    %v7031 = vshll.u32 %v6848, 16
    %v7033 = vrot.slane %v7031, 1
    %v7034 = vsel %vm380, %v7029, %v7033
    %v7036 = vshrl.u32 %v6689, 16
    %v7038 = vshll.u32 %v6689, 16
    %v7040 = vrot.slane %v7038, 1
    %v7041 = vor.u32 %v7036, %v7040
    %v7043 = vshll.u32 %v6849, 16
    %v7045 = vrot.slane %v7043, 1
    %v7046 = vsel %vm380, %v7041, %v7045
    %v7048 = vshrl.u32 %v6690, 16
    %v7050 = vshll.u32 %v6690, 16
    %v7052 = vrot.slane %v7050, 1
    %v7053 = vor.u32 %v7048, %v7052
    %v7055 = vshll.u32 %v6850, 16
    %v7057 = vrot.slane %v7055, 1
    %v7058 = vsel %vm380, %v7053, %v7057
    %v7060 = vshrl.u32 %v6691, 16
    %v7062 = vshll.u32 %v6691, 16
    %v7064 = vrot.slane %v7062, 1
    %v7065 = vor.u32 %v7060, %v7064
    %v7067 = vshll.u32 %v6851, 16
    %v7069 = vrot.slane %v7067, 1
    %v7070 = vsel %vm380, %v7065, %v7069
    %v7072 = vshrl.u32 %v6692, 16
    %v7074 = vshll.u32 %v6692, 16
    %v7076 = vrot.slane %v7074, 1
    %v7077 = vor.u32 %v7072, %v7076
    %v7079 = vshll.u32 %v6852, 16
    %v7081 = vrot.slane %v7079, 1
    %v7082 = vsel %vm380, %v7077, %v7081
    %v7084 = vshrl.u32 %v6693, 16
    %v7086 = vshll.u32 %v6693, 16
    %v7088 = vrot.slane %v7086, 1
    %v7089 = vor.u32 %v7084, %v7088
    %v7091 = vshll.u32 %v6853, 16
    %v7093 = vrot.slane %v7091, 1
    %v7094 = vsel %vm380, %v7089, %v7093
    %v7096 = vshrl.u32 %v6694, 16
    %v7098 = vshll.u32 %v6694, 16
    %v7100 = vrot.slane %v7098, 1
    %v7101 = vor.u32 %v7096, %v7100
    %v7103 = vshll.u32 %v6854, 16
    %v7105 = vrot.slane %v7103, 1
    %v7106 = vsel %vm380, %v7101, %v7105
    %v7108 = vshrl.u32 %v6695, 16
    %v7110 = vshll.u32 %v6695, 16
    %v7112 = vrot.slane %v7110, 1
    %v7113 = vor.u32 %v7108, %v7112
    %v7115 = vshll.u32 %v6855, 16
    %v7117 = vrot.slane %v7115, 1
    %v7118 = vsel %vm380, %v7113, %v7117
    %v7120 = vshrl.u32 %v6696, 16
    %v7122 = vshll.u32 %v6696, 16
    %v7124 = vrot.slane %v7122, 1
    %v7125 = vor.u32 %v7120, %v7124
    %v7127 = vshll.u32 %v6856, 16
    %v7129 = vrot.slane %v7127, 1
    %v7130 = vsel %vm380, %v7125, %v7129
    %v7132 = vshrl.u32 %v6697, 16
    %v7134 = vshll.u32 %v6697, 16
    %v7136 = vrot.slane %v7134, 1
    %v7137 = vor.u32 %v7132, %v7136
    %v7139 = vshll.u32 %v6857, 16
    %v7141 = vrot.slane %v7139, 1
    %v7142 = vsel %vm380, %v7137, %v7141
    %v7144 = vshrl.u32 %v6698, 16
    %v7146 = vshll.u32 %v6698, 16
    %v7148 = vrot.slane %v7146, 1
    %v7149 = vor.u32 %v7144, %v7148
    %v7151 = vshll.u32 %v6858, 16
    %v7153 = vrot.slane %v7151, 1
    %v7154 = vsel %vm380, %v7149, %v7153
    %v7156 = vshrl.u32 %v6699, 16
    %v7158 = vshll.u32 %v6699, 16
    %v7160 = vrot.slane %v7158, 1
    %v7161 = vor.u32 %v7156, %v7160
    %v7163 = vshll.u32 %v6859, 16
    %v7165 = vrot.slane %v7163, 1
    %v7166 = vsel %vm380, %v7161, %v7165
    %v7168 = vshrl.u32 %v6700, 16
    %v7170 = vshll.u32 %v6700, 16
    %v7172 = vrot.slane %v7170, 1
    %v7173 = vor.u32 %v7168, %v7172
    %v7175 = vshll.u32 %v6860, 16
    %v7177 = vrot.slane %v7175, 1
    %v7178 = vsel %vm380, %v7173, %v7177
    %v7180 = vshrl.u32 %v6701, 16
    %v7182 = vshll.u32 %v6701, 16
    %v7184 = vrot.slane %v7182, 1
    %v7185 = vor.u32 %v7180, %v7184
    %v7187 = vshll.u32 %v6861, 16
    %v7189 = vrot.slane %v7187, 1
    %v7190 = vsel %vm380, %v7185, %v7189
    %v7192 = vshrl.u32 %v6702, 16
    %v7194 = vshll.u32 %v6702, 16
    %v7196 = vrot.slane %v7194, 1
    %v7197 = vor.u32 %v7192, %v7196
    %v7199 = vshll.u32 %v6862, 16
    %v7201 = vrot.slane %v7199, 1
    %v7202 = vsel %vm380, %v7197, %v7201
    %v7204 = vshrl.u32 %v6703, 16
    %v7206 = vshll.u32 %v6703, 16
    %v7208 = vrot.slane %v7206, 1
    %v7209 = vor.u32 %v7204, %v7208
    %v7211 = vshll.u32 %v6863, 16
    %v7213 = vrot.slane %v7211, 1
    %v7214 = vsel %vm380, %v7209, %v7213
    %v7216 = vshrl.u32 %v6704, 16
    %v7218 = vshll.u32 %v6704, 16
    %v7220 = vrot.slane %v7218, 1
    %v7221 = vor.u32 %v7216, %v7220
    %v7223 = vshll.u32 %v6864, 16
    %v7225 = vrot.slane %v7223, 1
    %v7226 = vsel %vm380, %v7221, %v7225
    %v7228 = vshrl.u32 %v6705, 16
    %v7230 = vshll.u32 %v6705, 16
    %v7232 = vrot.slane %v7230, 1
    %v7233 = vor.u32 %v7228, %v7232
    %v7235 = vshll.u32 %v6865, 16
    %v7237 = vrot.slane %v7235, 1
    %v7238 = vsel %vm380, %v7233, %v7237
    %v7240 = vshrl.u32 %v6706, 16
    %v7242 = vshll.u32 %v6706, 16
    %v7244 = vrot.slane %v7242, 1
    %v7245 = vor.u32 %v7240, %v7244
    %v7247 = vshll.u32 %v6866, 16
    %v7249 = vrot.slane %v7247, 1
    %v7250 = vsel %vm380, %v7245, %v7249
    %7251 = vrot.lane.b32.xlu0 %v6878, 56
    %v7252 = vpop.permute.xlu0 %7251
    %7253 = vrot.lane.b32.xlu0 %v6890, 56
    %v7254 = vpop.permute.xlu0 %7253
    %7255 = vrot.lane.b32.xlu0 %v6902, 56
    %v7256 = vpop.permute.xlu0 %7255
    %7257 = vrot.lane.b32.xlu0 %v6914, 56
    %v7258 = vpop.permute.xlu0 %7257
    %7259 = vrot.lane.b32.xlu0 %v6926, 56
    %v7260 = vpop.permute.xlu0 %7259
    %7261 = vrot.lane.b32.xlu0 %v6938, 56
    %v7262 = vpop.permute.xlu0 %7261
    %7263 = vrot.lane.b32.xlu0 %v6950, 56
    %v7264 = vpop.permute.xlu0 %7263
    %7265 = vrot.lane.b32.xlu0 %v6962, 56
    %v7266 = vpop.permute.xlu0 %7265
    %7267 = vrot.lane.b32.xlu0 %v6974, 56
    %v7268 = vpop.permute.xlu0 %7267
    %7269 = vrot.lane.b32.xlu0 %v6986, 56
    %v7270 = vpop.permute.xlu0 %7269
    %7271 = vrot.lane.b32.xlu0 %v6998, 56
    %v7272 = vpop.permute.xlu0 %7271
    %7273 = vrot.lane.b32.xlu0 %v7010, 56
    %v7274 = vpop.permute.xlu0 %7273
    %7275 = vrot.lane.b32.xlu0 %v7022, 56
    %v7276 = vpop.permute.xlu0 %7275
    %7277 = vrot.lane.b32.xlu0 %v7034, 56
    %v7278 = vpop.permute.xlu0 %7277
    %7279 = vrot.lane.b32.xlu0 %v7046, 56
    %v7280 = vpop.permute.xlu0 %7279
    %7281 = vrot.lane.b32.xlu0 %v7058, 56
    %v7282 = vpop.permute.xlu0 %7281
    %7283 = vrot.lane.b32.xlu0 %v7070, 56
    %v7284 = vpop.permute.xlu0 %7283
    %7285 = vrot.lane.b32.xlu0 %v7082, 56
    %v7286 = vpop.permute.xlu0 %7285
    %7287 = vrot.lane.b32.xlu0 %v7094, 56
    %v7288 = vpop.permute.xlu0 %7287
    %7289 = vrot.lane.b32.xlu0 %v7106, 56
    %v7290 = vpop.permute.xlu0 %7289
    %7291 = vrot.lane.b32.xlu0 %v7118, 56
    %v7292 = vpop.permute.xlu0 %7291
    %7293 = vrot.lane.b32.xlu0 %v7130, 56
    %v7294 = vpop.permute.xlu0 %7293
    %7295 = vrot.lane.b32.xlu0 %v7142, 56
    %v7296 = vpop.permute.xlu0 %7295
    %7297 = vrot.lane.b32.xlu0 %v7154, 56
    %v7298 = vpop.permute.xlu0 %7297
    %7299 = vrot.lane.b32.xlu0 %v7166, 56
    %v7300 = vpop.permute.xlu0 %7299
    %7301 = vrot.lane.b32.xlu0 %v7178, 56
    %v7302 = vpop.permute.xlu0 %7301
    %7303 = vrot.lane.b32.xlu0 %v7190, 56
    %v7304 = vpop.permute.xlu0 %7303
    %7305 = vrot.lane.b32.xlu0 %v7202, 56
    %v7306 = vpop.permute.xlu0 %7305
    %7307 = vrot.lane.b32.xlu0 %v7214, 56
    %v7308 = vpop.permute.xlu0 %7307
    %7309 = vrot.lane.b32.xlu0 %v7226, 56
    %v7310 = vpop.permute.xlu0 %7309
    %7311 = vrot.lane.b32.xlu0 %v7238, 56
    %v7312 = vpop.permute.xlu0 %7311
    %7313 = vrot.lane.b32.xlu0 %v7250, 56
    %v7314 = vpop.permute.xlu0 %7313
    %v7347 = vunpack.c.l.b16 %v4531
    %v7348 = vunpack.c.l.b16 %v4532
    %v7349 = vunpack.c.l.b16 %v4533
    %v7350 = vunpack.c.l.b16 %v4534
    %v7351 = vunpack.c.l.b16 %v4535
    %v7352 = vunpack.c.l.b16 %v4536
    %v7353 = vunpack.c.l.b16 %v4537
    %v7354 = vunpack.c.l.b16 %v4538
    %v7355 = vunpack.c.l.b16 %v4539
    %v7356 = vunpack.c.l.b16 %v4540
    %v7357 = vunpack.c.l.b16 %v4541
    %v7358 = vunpack.c.l.b16 %v4542
    %v7359 = vunpack.c.l.b16 %v4543
    %v7360 = vunpack.c.l.b16 %v4544
    %v7361 = vunpack.c.l.b16 %v4545
    %v7362 = vunpack.c.l.b16 %v4546
    %v7363 = vunpack.c.l.b16 %v4547
    %v7364 = vunpack.c.l.b16 %v4548
    %v7365 = vunpack.c.l.b16 %v4549
    %v7366 = vunpack.c.l.b16 %v4550
    %v7367 = vunpack.c.l.b16 %v4551
    %v7368 = vunpack.c.l.b16 %v4552
    %v7369 = vunpack.c.l.b16 %v4553
    %v7370 = vunpack.c.l.b16 %v4554
    %v7371 = vunpack.c.l.b16 %v4555
    %v7372 = vunpack.c.l.b16 %v4556
    %v7373 = vunpack.c.l.b16 %v4557
    %v7374 = vunpack.c.l.b16 %v4558
    %v7375 = vunpack.c.l.b16 %v4559
    %v7376 = vunpack.c.l.b16 %v4560
    %v7377 = vunpack.c.l.b16 %v4561
    %v7378 = vunpack.c.l.b16 %v4562
    %v7379 = vpack.c.b16 %v6612, %v7347
    %v7380 = vpack.c.b16 %v6614, %v7348
    %v7381 = vpack.c.b16 %v6616, %v7349
    %v7382 = vpack.c.b16 %v6618, %v7350
    %v7383 = vpack.c.b16 %v6620, %v7351
    %v7384 = vpack.c.b16 %v6622, %v7352
    %v7385 = vpack.c.b16 %v6624, %v7353
    %v7386 = vpack.c.b16 %v6626, %v7354
    %v7387 = vpack.c.b16 %v6628, %v7355
    %v7388 = vpack.c.b16 %v6630, %v7356
    %v7389 = vpack.c.b16 %v6632, %v7357
    %v7390 = vpack.c.b16 %v6634, %v7358
    %v7391 = vpack.c.b16 %v6636, %v7359
    %v7392 = vpack.c.b16 %v6638, %v7360
    %v7393 = vpack.c.b16 %v6640, %v7361
    %v7394 = vpack.c.b16 %v6642, %v7362
    %v7395 = vpack.c.b16 %v6644, %v7363
    %v7396 = vpack.c.b16 %v6646, %v7364
    %v7397 = vpack.c.b16 %v6648, %v7365
    %v7398 = vpack.c.b16 %v6650, %v7366
    %v7399 = vpack.c.b16 %v6652, %v7367
    %v7400 = vpack.c.b16 %v6654, %v7368
    %v7401 = vpack.c.b16 %v6656, %v7369
    %v7402 = vpack.c.b16 %v6658, %v7370
    %v7403 = vpack.c.b16 %v6660, %v7371
    %v7404 = vpack.c.b16 %v6662, %v7372
    %v7405 = vpack.c.b16 %v6664, %v7373
    %v7406 = vpack.c.b16 %v6666, %v7374
    %v7407 = vpack.c.b16 %v6668, %v7375
    %v7408 = vpack.c.b16 %v6670, %v7376
    %v7409 = vpack.c.b16 %v6672, %v7377
    %v7410 = vpack.c.b16 %v6674, %v7378
    %v7411 = vrot.slane %v7379, 1
    %v7412 = vrot.slane %v6835, 1
    %v7413 = vsel %vm829, %v7411, %v7412
    %v7414 = vrot.slane %v7380, 1
    %v7415 = vrot.slane %v6836, 1
    %v7416 = vsel %vm829, %v7414, %v7415
    %v7417 = vrot.slane %v7381, 1
    %v7418 = vrot.slane %v6837, 1
    %v7419 = vsel %vm829, %v7417, %v7418
    %v7420 = vrot.slane %v7382, 1
    %v7421 = vrot.slane %v6838, 1
    %v7422 = vsel %vm829, %v7420, %v7421
    %v7423 = vrot.slane %v7383, 1
    %v7424 = vrot.slane %v6839, 1
    %v7425 = vsel %vm829, %v7423, %v7424
    %v7426 = vrot.slane %v7384, 1
    %v7427 = vrot.slane %v6840, 1
    %v7428 = vsel %vm829, %v7426, %v7427
    %v7429 = vrot.slane %v7385, 1
    %v7430 = vrot.slane %v6841, 1
    %v7431 = vsel %vm829, %v7429, %v7430
    %v7432 = vrot.slane %v7386, 1
    %v7433 = vrot.slane %v6842, 1
    %v7434 = vsel %vm829, %v7432, %v7433
    %v7435 = vrot.slane %v7387, 1
    %v7436 = vrot.slane %v6843, 1
    %v7437 = vsel %vm829, %v7435, %v7436
    %v7438 = vrot.slane %v7388, 1
    %v7439 = vrot.slane %v6844, 1
    %v7440 = vsel %vm829, %v7438, %v7439
    %v7441 = vrot.slane %v7389, 1
    %v7442 = vrot.slane %v6845, 1
    %v7443 = vsel %vm829, %v7441, %v7442
    %v7444 = vrot.slane %v7390, 1
    %v7445 = vrot.slane %v6846, 1
    %v7446 = vsel %vm829, %v7444, %v7445
    %v7447 = vrot.slane %v7391, 1
    %v7448 = vrot.slane %v6847, 1
    %v7449 = vsel %vm829, %v7447, %v7448
    %v7450 = vrot.slane %v7392, 1
    %v7451 = vrot.slane %v6848, 1
    %v7452 = vsel %vm829, %v7450, %v7451
    %v7453 = vrot.slane %v7393, 1
    %v7454 = vrot.slane %v6849, 1
    %v7455 = vsel %vm829, %v7453, %v7454
    %v7456 = vrot.slane %v7394, 1
    %v7457 = vrot.slane %v6850, 1
    %v7458 = vsel %vm829, %v7456, %v7457
    %v7459 = vrot.slane %v7395, 1
    %v7460 = vrot.slane %v6851, 1
    %v7461 = vsel %vm829, %v7459, %v7460
    %v7462 = vrot.slane %v7396, 1
    %v7463 = vrot.slane %v6852, 1
    %v7464 = vsel %vm829, %v7462, %v7463
    %v7465 = vrot.slane %v7397, 1
    %v7466 = vrot.slane %v6853, 1
    %v7467 = vsel %vm829, %v7465, %v7466
    %v7468 = vrot.slane %v7398, 1
    %v7469 = vrot.slane %v6854, 1
    %v7470 = vsel %vm829, %v7468, %v7469
    %v7471 = vrot.slane %v7399, 1
    %v7472 = vrot.slane %v6855, 1
    %v7473 = vsel %vm829, %v7471, %v7472
    %v7474 = vrot.slane %v7400, 1
    %v7475 = vrot.slane %v6856, 1
    %v7476 = vsel %vm829, %v7474, %v7475
    %v7477 = vrot.slane %v7401, 1
    %v7478 = vrot.slane %v6857, 1
    %v7479 = vsel %vm829, %v7477, %v7478
    %v7480 = vrot.slane %v7402, 1
    %v7481 = vrot.slane %v6858, 1
    %v7482 = vsel %vm829, %v7480, %v7481
    %v7483 = vrot.slane %v7403, 1
    %v7484 = vrot.slane %v6859, 1
    %v7485 = vsel %vm829, %v7483, %v7484
    %v7486 = vrot.slane %v7404, 1
    %v7487 = vrot.slane %v6860, 1
    %v7488 = vsel %vm829, %v7486, %v7487
    %v7489 = vrot.slane %v7405, 1
    %v7490 = vrot.slane %v6861, 1
    %v7491 = vsel %vm829, %v7489, %v7490
    %v7492 = vrot.slane %v7406, 1
    %v7493 = vrot.slane %v6862, 1
    %v7494 = vsel %vm829, %v7492, %v7493
    %v7495 = vrot.slane %v7407, 1
    %v7496 = vrot.slane %v6863, 1
    %v7497 = vsel %vm829, %v7495, %v7496
    %v7498 = vrot.slane %v7408, 1
    %v7499 = vrot.slane %v6864, 1
    %v7500 = vsel %vm829, %v7498, %v7499
    %v7501 = vrot.slane %v7409, 1
    %v7502 = vrot.slane %v6865, 1
    %v7503 = vsel %vm829, %v7501, %v7502
    %v7504 = vrot.slane %v7410, 1
    %v7505 = vrot.slane %v6866, 1
    %v7506 = vsel %vm829, %v7504, %v7505
    %7507 = vrot.lane.b32.xlu0 %v7413, 64
    %v7508 = vpop.permute.xlu0 %7507
    %7509 = vrot.lane.b32.xlu0 %v7416, 64
    %v7510 = vpop.permute.xlu0 %7509
    %7511 = vrot.lane.b32.xlu0 %v7419, 64
    %v7512 = vpop.permute.xlu0 %7511
    %7513 = vrot.lane.b32.xlu0 %v7422, 64
    %v7514 = vpop.permute.xlu0 %7513
    %7515 = vrot.lane.b32.xlu0 %v7425, 64
    %v7516 = vpop.permute.xlu0 %7515
    %7517 = vrot.lane.b32.xlu0 %v7428, 64
    %v7518 = vpop.permute.xlu0 %7517
    %7519 = vrot.lane.b32.xlu0 %v7431, 64
    %v7520 = vpop.permute.xlu0 %7519
    %7521 = vrot.lane.b32.xlu0 %v7434, 64
    %v7522 = vpop.permute.xlu0 %7521
    %7523 = vrot.lane.b32.xlu0 %v7437, 64
    %v7524 = vpop.permute.xlu0 %7523
    %7525 = vrot.lane.b32.xlu0 %v7440, 64
    %v7526 = vpop.permute.xlu0 %7525
    %7527 = vrot.lane.b32.xlu0 %v7443, 64
    %v7528 = vpop.permute.xlu0 %7527
    %7529 = vrot.lane.b32.xlu0 %v7446, 64
    %v7530 = vpop.permute.xlu0 %7529
    %7531 = vrot.lane.b32.xlu0 %v7449, 64
    %v7532 = vpop.permute.xlu0 %7531
    %7533 = vrot.lane.b32.xlu0 %v7452, 64
    %v7534 = vpop.permute.xlu0 %7533
    %7535 = vrot.lane.b32.xlu0 %v7455, 64
    %v7536 = vpop.permute.xlu0 %7535
    %7537 = vrot.lane.b32.xlu0 %v7458, 64
    %v7538 = vpop.permute.xlu0 %7537
    %7539 = vrot.lane.b32.xlu0 %v7461, 64
    %v7540 = vpop.permute.xlu0 %7539
    %7541 = vrot.lane.b32.xlu0 %v7464, 64
    %v7542 = vpop.permute.xlu0 %7541
    %7543 = vrot.lane.b32.xlu0 %v7467, 64
    %v7544 = vpop.permute.xlu0 %7543
    %7545 = vrot.lane.b32.xlu0 %v7470, 64
    %v7546 = vpop.permute.xlu0 %7545
    %7547 = vrot.lane.b32.xlu0 %v7473, 64
    %v7548 = vpop.permute.xlu0 %7547
    %7549 = vrot.lane.b32.xlu0 %v7476, 64
    %v7550 = vpop.permute.xlu0 %7549
    %7551 = vrot.lane.b32.xlu0 %v7479, 64
    %v7552 = vpop.permute.xlu0 %7551
    %7553 = vrot.lane.b32.xlu0 %v7482, 64
    %v7554 = vpop.permute.xlu0 %7553
    %7555 = vrot.lane.b32.xlu0 %v7485, 64
    %v7556 = vpop.permute.xlu0 %7555
    %7557 = vrot.lane.b32.xlu0 %v7488, 64
    %v7558 = vpop.permute.xlu0 %7557
    %7559 = vrot.lane.b32.xlu0 %v7491, 64
    %v7560 = vpop.permute.xlu0 %7559
    %7561 = vrot.lane.b32.xlu0 %v7494, 64
    %v7562 = vpop.permute.xlu0 %7561
    %7563 = vrot.lane.b32.xlu0 %v7497, 64
    %v7564 = vpop.permute.xlu0 %7563
    %7565 = vrot.lane.b32.xlu0 %v7500, 64
    %v7566 = vpop.permute.xlu0 %7565
    %7567 = vrot.lane.b32.xlu0 %v7503, 64
    %v7568 = vpop.permute.xlu0 %7567
    %7569 = vrot.lane.b32.xlu0 %v7506, 64
    %v7570 = vpop.permute.xlu0 %7569
    %v7572 = vsel %vm1531, %v4691, %v5204
    %v7574 = vsel %vm1531, %v4692, %v5206
    %v7576 = vsel %vm1531, %v4693, %v5208
    %v7578 = vsel %vm1531, %v4694, %v5210
    %v7580 = vsel %vm1531, %v4695, %v5212
    %v7582 = vsel %vm1531, %v4696, %v5214
    %v7584 = vsel %vm1531, %v4697, %v5216
    %v7586 = vsel %vm1531, %v4698, %v5218
    %v7588 = vsel %vm1531, %v4699, %v5220
    %v7590 = vsel %vm1531, %v4700, %v5222
    %v7592 = vsel %vm1531, %v4701, %v5224
    %v7594 = vsel %vm1531, %v4702, %v5226
    %v7596 = vsel %vm1531, %v4703, %v5228
    %v7598 = vsel %vm1531, %v4704, %v5230
    %v7600 = vsel %vm1531, %v4705, %v5232
    %v7602 = vsel %vm1531, %v4706, %v5234
    %v7604 = vsel %vm1531, %v4707, %v5236
    %v7606 = vsel %vm1531, %v4708, %v5238
    %v7608 = vsel %vm1531, %v4709, %v5240
    %v7610 = vsel %vm1531, %v4710, %v5242
    %v7612 = vsel %vm1531, %v4711, %v5244
    %v7614 = vsel %vm1531, %v4712, %v5246
    %v7616 = vsel %vm1531, %v4713, %v5248
    %v7618 = vsel %vm1531, %v4714, %v5250
    %v7620 = vsel %vm1531, %v4715, %v5252
    %v7622 = vsel %vm1531, %v4716, %v5254
    %v7624 = vsel %vm1531, %v4717, %v5256
    %v7626 = vsel %vm1531, %v4718, %v5258
    %v7628 = vsel %vm1531, %v4719, %v5260
    %v7630 = vsel %vm1531, %v4720, %v5262
    %v7632 = vsel %vm1531, %v4721, %v5264
    %v7634 = vsel %vm1531, %v4722, %v5266
    %v7636 = vsel %vm1661, %v7572, %v5460
    %v7638 = vsel %vm1661, %v7574, %v5462
    %v7640 = vsel %vm1661, %v7576, %v5464
    %v7642 = vsel %vm1661, %v7578, %v5466
    %v7644 = vsel %vm1661, %v7580, %v5468
    %v7646 = vsel %vm1661, %v7582, %v5470
    %v7648 = vsel %vm1661, %v7584, %v5472
    %v7650 = vsel %vm1661, %v7586, %v5474
    %v7652 = vsel %vm1661, %v7588, %v5476
    %v7654 = vsel %vm1661, %v7590, %v5478
    %v7656 = vsel %vm1661, %v7592, %v5480
    %v7658 = vsel %vm1661, %v7594, %v5482
    %v7660 = vsel %vm1661, %v7596, %v5484
    %v7662 = vsel %vm1661, %v7598, %v5486
    %v7664 = vsel %vm1661, %v7600, %v5488
    %v7666 = vsel %vm1661, %v7602, %v5490
    %v7668 = vsel %vm1661, %v7604, %v5492
    %v7670 = vsel %vm1661, %v7606, %v5494
    %v7672 = vsel %vm1661, %v7608, %v5496
    %v7674 = vsel %vm1661, %v7610, %v5498
    %v7676 = vsel %vm1661, %v7612, %v5500
    %v7678 = vsel %vm1661, %v7614, %v5502
    %v7680 = vsel %vm1661, %v7616, %v5504
    %v7682 = vsel %vm1661, %v7618, %v5506
    %v7684 = vsel %vm1661, %v7620, %v5508
    %v7686 = vsel %vm1661, %v7622, %v5510
    %v7688 = vsel %vm1661, %v7624, %v5512
    %v7690 = vsel %vm1661, %v7626, %v5514
    %v7692 = vsel %vm1661, %v7628, %v5516
    %v7694 = vsel %vm1661, %v7630, %v5518
    %v7696 = vsel %vm1661, %v7632, %v5520
    %v7698 = vsel %vm1661, %v7634, %v5522
    %v7700 = vsel %vm1791, %v7636, %v5684
    %v7702 = vsel %vm1791, %v7638, %v5686
    %v7704 = vsel %vm1791, %v7640, %v5688
    %v7706 = vsel %vm1791, %v7642, %v5690
    %v7708 = vsel %vm1791, %v7644, %v5692
    %v7710 = vsel %vm1791, %v7646, %v5694
    %v7712 = vsel %vm1791, %v7648, %v5696
    %v7714 = vsel %vm1791, %v7650, %v5698
    %v7716 = vsel %vm1791, %v7652, %v5700
    %v7718 = vsel %vm1791, %v7654, %v5702
    %v7720 = vsel %vm1791, %v7656, %v5704
    %v7722 = vsel %vm1791, %v7658, %v5706
    %v7724 = vsel %vm1791, %v7660, %v5708
    %v7726 = vsel %vm1791, %v7662, %v5710
    %v7728 = vsel %vm1791, %v7664, %v5712
    %v7730 = vsel %vm1791, %v7666, %v5714
    %v7732 = vsel %vm1791, %v7668, %v5716
    %v7734 = vsel %vm1791, %v7670, %v5718
    %v7736 = vsel %vm1791, %v7672, %v5720
    %v7738 = vsel %vm1791, %v7674, %v5722
    %v7740 = vsel %vm1791, %v7676, %v5724
    %v7742 = vsel %vm1791, %v7678, %v5726
    %v7744 = vsel %vm1791, %v7680, %v5728
    %v7746 = vsel %vm1791, %v7682, %v5730
    %v7748 = vsel %vm1791, %v7684, %v5732
    %v7750 = vsel %vm1791, %v7686, %v5734
    %v7752 = vsel %vm1791, %v7688, %v5736
    %v7754 = vsel %vm1791, %v7690, %v5738
    %v7756 = vsel %vm1791, %v7692, %v5740
    %v7758 = vsel %vm1791, %v7694, %v5742
    %v7760 = vsel %vm1791, %v7696, %v5744
    %v7762 = vsel %vm1791, %v7698, %v5746
    %v7764 = vsel %vm1921, %v7700, %v6228
    %v7766 = vsel %vm1921, %v7702, %v6230
    %v7768 = vsel %vm1921, %v7704, %v6232
    %v7770 = vsel %vm1921, %v7706, %v6234
    %v7772 = vsel %vm1921, %v7708, %v6236
    %v7774 = vsel %vm1921, %v7710, %v6238
    %v7776 = vsel %vm1921, %v7712, %v6240
    %v7778 = vsel %vm1921, %v7714, %v6242
    %v7780 = vsel %vm1921, %v7716, %v6244
    %v7782 = vsel %vm1921, %v7718, %v6246
    %v7784 = vsel %vm1921, %v7720, %v6248
    %v7786 = vsel %vm1921, %v7722, %v6250
    %v7788 = vsel %vm1921, %v7724, %v6252
    %v7790 = vsel %vm1921, %v7726, %v6254
    %v7792 = vsel %vm1921, %v7728, %v6256
    %v7794 = vsel %vm1921, %v7730, %v6258
    %v7796 = vsel %vm1921, %v7732, %v6260
    %v7798 = vsel %vm1921, %v7734, %v6262
    %v7800 = vsel %vm1921, %v7736, %v6264
    %v7802 = vsel %vm1921, %v7738, %v6266
    %v7804 = vsel %vm1921, %v7740, %v6268
    %v7806 = vsel %vm1921, %v7742, %v6270
    %v7808 = vsel %vm1921, %v7744, %v6272
    %v7810 = vsel %vm1921, %v7746, %v6274
    %v7812 = vsel %vm1921, %v7748, %v6276
    %v7814 = vsel %vm1921, %v7750, %v6278
    %v7816 = vsel %vm1921, %v7752, %v6280
    %v7818 = vsel %vm1921, %v7754, %v6282
    %v7820 = vsel %vm1921, %v7756, %v6284
    %v7822 = vsel %vm1921, %v7758, %v6286
    %v7824 = vsel %vm1921, %v7760, %v6288
    %v7826 = vsel %vm1921, %v7762, %v6290
    %vm7827 = vcmask 326656
    %v7829 = vsel %vm7827, %v7764, %v6484
    %v7831 = vsel %vm7827, %v7766, %v6486
    %v7833 = vsel %vm7827, %v7768, %v6488
    %v7835 = vsel %vm7827, %v7770, %v6490
    %v7837 = vsel %vm7827, %v7772, %v6492
    %v7839 = vsel %vm7827, %v7774, %v6494
    %v7841 = vsel %vm7827, %v7776, %v6496
    %v7843 = vsel %vm7827, %v7778, %v6498
    %v7845 = vsel %vm7827, %v7780, %v6500
    %v7847 = vsel %vm7827, %v7782, %v6502
    %v7849 = vsel %vm7827, %v7784, %v6504
    %v7851 = vsel %vm7827, %v7786, %v6506
    %v7853 = vsel %vm7827, %v7788, %v6508
    %v7855 = vsel %vm7827, %v7790, %v6510
    %v7857 = vsel %vm7827, %v7792, %v6512
    %v7859 = vsel %vm7827, %v7794, %v6514
    %v7861 = vsel %vm7827, %v7796, %v6516
    %v7863 = vsel %vm7827, %v7798, %v6518
    %v7865 = vsel %vm7827, %v7800, %v6520
    %v7867 = vsel %vm7827, %v7802, %v6522
    %v7869 = vsel %vm7827, %v7804, %v6524
    %v7871 = vsel %vm7827, %v7806, %v6526
    %v7873 = vsel %vm7827, %v7808, %v6528
    %v7875 = vsel %vm7827, %v7810, %v6530
    %v7877 = vsel %vm7827, %v7812, %v6532
    %v7879 = vsel %vm7827, %v7814, %v6534
    %v7881 = vsel %vm7827, %v7816, %v6536
    %v7883 = vsel %vm7827, %v7818, %v6538
    %v7885 = vsel %vm7827, %v7820, %v6540
    %v7887 = vsel %vm7827, %v7822, %v6542
    %v7889 = vsel %vm7827, %v7824, %v6544
    %v7891 = vsel %vm7827, %v7826, %v6546
    %vm7892 = vcmask 392192
    %v7894 = vsel %vm7892, %v7829, %v6708
    %v7896 = vsel %vm7892, %v7831, %v6710
    %v7898 = vsel %vm7892, %v7833, %v6712
    %v7900 = vsel %vm7892, %v7835, %v6714
    %v7902 = vsel %vm7892, %v7837, %v6716
    %v7904 = vsel %vm7892, %v7839, %v6718
    %v7906 = vsel %vm7892, %v7841, %v6720
    %v7908 = vsel %vm7892, %v7843, %v6722
    %v7910 = vsel %vm7892, %v7845, %v6724
    %v7912 = vsel %vm7892, %v7847, %v6726
    %v7914 = vsel %vm7892, %v7849, %v6728
    %v7916 = vsel %vm7892, %v7851, %v6730
    %v7918 = vsel %vm7892, %v7853, %v6732
    %v7920 = vsel %vm7892, %v7855, %v6734
    %v7922 = vsel %vm7892, %v7857, %v6736
    %v7924 = vsel %vm7892, %v7859, %v6738
    %v7926 = vsel %vm7892, %v7861, %v6740
    %v7928 = vsel %vm7892, %v7863, %v6742
    %v7930 = vsel %vm7892, %v7865, %v6744
    %v7932 = vsel %vm7892, %v7867, %v6746
    %v7934 = vsel %vm7892, %v7869, %v6748
    %v7936 = vsel %vm7892, %v7871, %v6750
    %v7938 = vsel %vm7892, %v7873, %v6752
    %v7940 = vsel %vm7892, %v7875, %v6754
    %v7942 = vsel %vm7892, %v7877, %v6756
    %v7944 = vsel %vm7892, %v7879, %v6758
    %v7946 = vsel %vm7892, %v7881, %v6760
    %v7948 = vsel %vm7892, %v7883, %v6762
    %v7950 = vsel %vm7892, %v7885, %v6764
    %v7952 = vsel %vm7892, %v7887, %v6766
    %v7954 = vsel %vm7892, %v7889, %v6768
    %v7956 = vsel %vm7892, %v7891, %v6770
    %vm7957 = vcmask 457728
    %v7959 = vsel %vm7957, %v7894, %v7252
    %v7961 = vsel %vm7957, %v7896, %v7254
    %v7963 = vsel %vm7957, %v7898, %v7256
    %v7965 = vsel %vm7957, %v7900, %v7258
    %v7967 = vsel %vm7957, %v7902, %v7260
    %v7969 = vsel %vm7957, %v7904, %v7262
    %v7971 = vsel %vm7957, %v7906, %v7264
    %v7973 = vsel %vm7957, %v7908, %v7266
    %v7975 = vsel %vm7957, %v7910, %v7268
    %v7977 = vsel %vm7957, %v7912, %v7270
    %v7979 = vsel %vm7957, %v7914, %v7272
    %v7981 = vsel %vm7957, %v7916, %v7274
    %v7983 = vsel %vm7957, %v7918, %v7276
    %v7985 = vsel %vm7957, %v7920, %v7278
    %v7987 = vsel %vm7957, %v7922, %v7280
    %v7989 = vsel %vm7957, %v7924, %v7282
    %v7991 = vsel %vm7957, %v7926, %v7284
    %v7993 = vsel %vm7957, %v7928, %v7286
    %v7995 = vsel %vm7957, %v7930, %v7288
    %v7997 = vsel %vm7957, %v7932, %v7290
    %v7999 = vsel %vm7957, %v7934, %v7292
    %v8001 = vsel %vm7957, %v7936, %v7294
    %v8003 = vsel %vm7957, %v7938, %v7296
    %v8005 = vsel %vm7957, %v7940, %v7298
    %v8007 = vsel %vm7957, %v7942, %v7300
    %v8009 = vsel %vm7957, %v7944, %v7302
    %v8011 = vsel %vm7957, %v7946, %v7304
    %v8013 = vsel %vm7957, %v7948, %v7306
    %v8015 = vsel %vm7957, %v7950, %v7308
    %v8017 = vsel %vm7957, %v7952, %v7310
    %v8019 = vsel %vm7957, %v7954, %v7312
    %v8021 = vsel %vm7957, %v7956, %v7314
    %vm8022 = vcmask 523264
    %v8024 = vsel %vm8022, %v7959, %v7508
    %v8026 = vsel %vm8022, %v7961, %v7510
    %v8028 = vsel %vm8022, %v7963, %v7512
    %v8030 = vsel %vm8022, %v7965, %v7514
    %v8032 = vsel %vm8022, %v7967, %v7516
    %v8034 = vsel %vm8022, %v7969, %v7518
    %v8036 = vsel %vm8022, %v7971, %v7520
    %v8038 = vsel %vm8022, %v7973, %v7522
    %v8040 = vsel %vm8022, %v7975, %v7524
    %v8042 = vsel %vm8022, %v7977, %v7526
    %v8044 = vsel %vm8022, %v7979, %v7528
    %v8046 = vsel %vm8022, %v7981, %v7530
    %v8048 = vsel %vm8022, %v7983, %v7532
    %v8050 = vsel %vm8022, %v7985, %v7534
    %v8052 = vsel %vm8022, %v7987, %v7536
    %v8054 = vsel %vm8022, %v7989, %v7538
    %v8056 = vsel %vm8022, %v7991, %v7540
    %v8058 = vsel %vm8022, %v7993, %v7542
    %v8060 = vsel %vm8022, %v7995, %v7544
    %v8062 = vsel %vm8022, %v7997, %v7546
    %v8064 = vsel %vm8022, %v7999, %v7548
    %v8066 = vsel %vm8022, %v8001, %v7550
    %v8068 = vsel %vm8022, %v8003, %v7552
    %v8070 = vsel %vm8022, %v8005, %v7554
    %v8072 = vsel %vm8022, %v8007, %v7556
    %v8074 = vsel %vm8022, %v8009, %v7558
    %v8076 = vsel %vm8022, %v8011, %v7560
    %v8078 = vsel %vm8022, %v8013, %v7562
    %v8080 = vsel %vm8022, %v8015, %v7564
    %v8082 = vsel %vm8022, %v8017, %v7566
    %v8084 = vsel %vm8022, %v8019, %v7568
    %v8086 = vsel %vm8022, %v8021, %v7570
    %v8087 = vld [vmem:[%s2] sm:$0xf]
    %v8088 = vld [vmem:[%s2 + $0x4] sm:$0xf]
    %v8089 = vld [vmem:[%s2 + $0x8] sm:$0xf]
    %v8090 = vld [vmem:[%s2 + $0xc] sm:$0xf]
    %v8091 = vld [vmem:[%s2 + $0x10] sm:$0xf]
    %v8092 = vld [vmem:[%s2 + $0x14] sm:$0xf]
    %v8093 = vld [vmem:[%s2 + $0x18] sm:$0xf]
    %v8094 = vld [vmem:[%s2 + $0x1c] sm:$0xf]
    %v8095 = vld [vmem:[%s2 + $0x20] sm:$0xf]
    %v8105 = vunpack.c.l.b16 %v8087
    %v8106 = vunpack.c.l.b16 %v8088
    %v8107 = vunpack.c.l.b16 %v8089
    %v8108 = vunpack.c.l.b16 %v8090
    %v8109 = vunpack.c.l.b16 %v8091
    %v8110 = vunpack.c.l.b16 %v8092
    %v8111 = vunpack.c.l.b16 %v8093
    %v8112 = vunpack.c.l.b16 %v8094
    %v8113 = vunpack.c.l.b16 %v8095
    %v8114 = vpack.c.b16 %v8106, %v8105
    %v8115 = vpack.c.b16 %v8108, %v8107
    %v8116 = vpack.c.b16 %v8110, %v8109
    %v8117 = vpack.c.b16 %v8112, %v8111
    %v8118 = vpack.c.b16 %v8113, %v8113
    %vm8123 = vcmask 588800
    %v8124 = vsel %vm8123, %v8024, 0
    %v8126 = vsel %vm8123, %v8026, 0
    %v8128 = vsel %vm8123, %v8028, 0
    %v8130 = vsel %vm8123, %v8030, 0
    %v8132 = vsel %vm8123, %v8032, 0
    %v8134 = vsel %vm8123, %v8034, 0
    %v8136 = vsel %vm8123, %v8036, 0
    %v8138 = vsel %vm8123, %v8038, 0
    %v8140 = vsel %vm8123, %v8040, 0
    %v8142 = vsel %vm8123, %v8042, 0
    %v8144 = vsel %vm8123, %v8044, 0
    %v8146 = vsel %vm8123, %v8046, 0
    %v8148 = vsel %vm8123, %v8048, 0
    %v8150 = vsel %vm8123, %v8050, 0
    %v8152 = vsel %vm8123, %v8052, 0
    %v8154 = vsel %vm8123, %v8054, 0
    %v8156 = vsel %vm8123, %v8056, 0
    %v8158 = vsel %vm8123, %v8058, 0
    %v8160 = vsel %vm8123, %v8060, 0
    %v8162 = vsel %vm8123, %v8062, 0
    %v8164 = vsel %vm8123, %v8064, 0
    %v8166 = vsel %vm8123, %v8066, 0
    %v8168 = vsel %vm8123, %v8068, 0
    %v8170 = vsel %vm8123, %v8070, 0
    %v8172 = vsel %vm8123, %v8072, 0
    %v8174 = vsel %vm8123, %v8074, 0
    %v8176 = vsel %vm8123, %v8076, 0
    %v8178 = vsel %vm8123, %v8078, 0
    %v8180 = vsel %vm8123, %v8080, 0
    %v8182 = vsel %vm8123, %v8082, 0
    %v8184 = vsel %vm8123, %v8084, 0
    %v8186 = vsel %vm8123, %v8086, 0
    %vm8188 = vcmask 1043456
    %v8190 = vsel %vm8188, %v8118, 0
    %8192 = vmatprep.subr.bf16.mxu0 0
    %8193 = vmatpush1.bf16.msra.mxu0 0
    %8194 = vmatprep.subr.bf16.mxu0 0
    %8195 = vmatpush1.bf16.msra.mxu0 0
    %8196 = vmatprep.subr.bf16.mxu0 0
    %8197 = vmatpush1.bf16.msra.mxu0 0
    %8198 = vmatprep.subr.bf16.mxu0 0
    %8199 = vmatpush1.bf16.msra.mxu0 %v8190
    %8200 = vmatprep.subr.bf16.mxu0 0
    %8201 = vmatpush1.bf16.msra.mxu0 %v8117
    %8202 = vmatprep.subr.bf16.mxu0 0
    %8203 = vmatpush1.bf16.msra.mxu0 %v8116
    %8204 = vmatprep.subr.bf16.mxu0 0
    %8205 = vmatpush1.bf16.msra.mxu0 %v8115
    %8206 = vmatprep.subr.bf16.mxu0 0
    %8207 = vmatpush1.bf16.msra.mxu0 %v8114
    %8208 = vmatprep.subr.bf16.mxu0 0
    %8209 = vmatpush2.bf16.msra.mxu0 0
    %8210 = vmatprep.subr.bf16.mxu0 0
    %8211 = vmatpush2.bf16.msra.mxu0 0
    %8212 = vmatprep.subr.bf16.mxu0 0
    %8213 = vmatpush2.bf16.msra.mxu0 0
    %8214 = vmatprep.subr.bf16.mxu0 0
    %8215 = vmatpush2.bf16.msra.mxu0 0
    %8216 = vmatprep.subr.bf16.mxu0 0
    %8217 = vmatpush2.bf16.msra.mxu0 0
    %8218 = vmatprep.subr.bf16.mxu0 0
    %8219 = vmatpush2.bf16.msra.mxu0 0
    %8220 = vmatprep.subr.bf16.mxu0 0
    %8221 = vmatpush2.bf16.msra.mxu0 0
    %8222 = vmatprep.subr.bf16.mxu0 0
    %8223 = vmatpush2.bf16.msra.mxu0 0
    %8224 = vmatprep.mubr.bf16.mxu0 0
    %8225 = vmatmul.mubr.bf16.gmra.mxu0 %v8124
    %v8226 = vpop.f32.mrf.mxu0
    %v8227 = vadd.f32 0.0, %v8226
    %v8228 = vpop.f32.mrf.mxu0
    %v8229 = vpop.f32.mrf.mxu0
    %v8230 = vadd.f32 0.0, %v8229
    %v8231 = vpop.f32.mrf.mxu0
    %8232 = vmatprep.mubr.bf16.mxu0 0
    %8233 = vmatmul.mubr.bf16.gmra.mxu0 %v8126
    %v8234 = vpop.f32.mrf.mxu0
    %v8235 = vadd.f32 0.0, %v8234
    %v8236 = vpop.f32.mrf.mxu0
    %v8237 = vpop.f32.mrf.mxu0
    %v8238 = vadd.f32 0.0, %v8237
    %v8239 = vpop.f32.mrf.mxu0
    %8240 = vmatprep.mubr.bf16.mxu0 0
    %8241 = vmatmul.mubr.bf16.gmra.mxu0 %v8128
    %v8242 = vpop.f32.mrf.mxu0
    %v8243 = vadd.f32 0.0, %v8242
    %v8244 = vpop.f32.mrf.mxu0
    %v8245 = vpop.f32.mrf.mxu0
    %v8246 = vadd.f32 0.0, %v8245
    %v8247 = vpop.f32.mrf.mxu0
    %8248 = vmatprep.mubr.bf16.mxu0 0
    %8249 = vmatmul.mubr.bf16.gmra.mxu0 %v8130
    %v8250 = vpop.f32.mrf.mxu0
    %v8251 = vadd.f32 0.0, %v8250
    %v8252 = vpop.f32.mrf.mxu0
    %v8253 = vpop.f32.mrf.mxu0
    %v8254 = vadd.f32 0.0, %v8253
    %v8255 = vpop.f32.mrf.mxu0
    %8256 = vmatprep.mubr.bf16.mxu0 0
    %8257 = vmatmul.mubr.bf16.gmra.mxu0 %v8132
    %v8258 = vpop.f32.mrf.mxu0
    %v8259 = vadd.f32 0.0, %v8258
    %v8260 = vpop.f32.mrf.mxu0
    %v8261 = vpop.f32.mrf.mxu0
    %v8262 = vadd.f32 0.0, %v8261
    %v8263 = vpop.f32.mrf.mxu0
    %8264 = vmatprep.mubr.bf16.mxu0 0
    %8265 = vmatmul.mubr.bf16.gmra.mxu0 %v8134
    %v8266 = vpop.f32.mrf.mxu0
    %v8267 = vadd.f32 0.0, %v8266
    %v8268 = vpop.f32.mrf.mxu0
    %v8269 = vpop.f32.mrf.mxu0
    %v8270 = vadd.f32 0.0, %v8269
    %v8271 = vpop.f32.mrf.mxu0
    %8272 = vmatprep.mubr.bf16.mxu0 0
    %8273 = vmatmul.mubr.bf16.gmra.mxu0 %v8136
    %v8274 = vpop.f32.mrf.mxu0
    %v8275 = vadd.f32 0.0, %v8274
    %v8276 = vpop.f32.mrf.mxu0
    %v8277 = vpop.f32.mrf.mxu0
    %v8278 = vadd.f32 0.0, %v8277
    %v8279 = vpop.f32.mrf.mxu0
    %8280 = vmatprep.mubr.bf16.mxu0 0
    %8281 = vmatmul.mubr.bf16.gmra.mxu0 %v8138
    %v8282 = vpop.f32.mrf.mxu0
    %v8283 = vadd.f32 0.0, %v8282
    %v8284 = vpop.f32.mrf.mxu0
    %v8285 = vpop.f32.mrf.mxu0
    %v8286 = vadd.f32 0.0, %v8285
    %v8287 = vpop.f32.mrf.mxu0
    %8288 = vmatprep.mubr.bf16.mxu0 0
    %8289 = vmatmul.mubr.bf16.gmra.mxu0 %v8140
    %v8290 = vpop.f32.mrf.mxu0
    %v8291 = vadd.f32 0.0, %v8290
    %v8292 = vpop.f32.mrf.mxu0
    %v8293 = vpop.f32.mrf.mxu0
    %v8294 = vadd.f32 0.0, %v8293
    %v8295 = vpop.f32.mrf.mxu0
    %8296 = vmatprep.mubr.bf16.mxu0 0
    %8297 = vmatmul.mubr.bf16.gmra.mxu0 %v8142
    %v8298 = vpop.f32.mrf.mxu0
    %v8299 = vadd.f32 0.0, %v8298
    %v8300 = vpop.f32.mrf.mxu0
    %v8301 = vpop.f32.mrf.mxu0
    %v8302 = vadd.f32 0.0, %v8301
    %v8303 = vpop.f32.mrf.mxu0
    %8304 = vmatprep.mubr.bf16.mxu0 0
    %8305 = vmatmul.mubr.bf16.gmra.mxu0 %v8144
    %v8306 = vpop.f32.mrf.mxu0
    %v8307 = vadd.f32 0.0, %v8306
    %v8308 = vpop.f32.mrf.mxu0
    %v8309 = vpop.f32.mrf.mxu0
    %v8310 = vadd.f32 0.0, %v8309
    %v8311 = vpop.f32.mrf.mxu0
    %8312 = vmatprep.mubr.bf16.mxu0 0
    %8313 = vmatmul.mubr.bf16.gmra.mxu0 %v8146
    %v8314 = vpop.f32.mrf.mxu0
    %v8315 = vadd.f32 0.0, %v8314
    %v8316 = vpop.f32.mrf.mxu0
    %v8317 = vpop.f32.mrf.mxu0
    %v8318 = vadd.f32 0.0, %v8317
    %v8319 = vpop.f32.mrf.mxu0
    %8320 = vmatprep.mubr.bf16.mxu0 0
    %8321 = vmatmul.mubr.bf16.gmra.mxu0 %v8148
    %v8322 = vpop.f32.mrf.mxu0
    %v8323 = vadd.f32 0.0, %v8322
    %v8324 = vpop.f32.mrf.mxu0
    %v8325 = vpop.f32.mrf.mxu0
    %v8326 = vadd.f32 0.0, %v8325
    %v8327 = vpop.f32.mrf.mxu0
    %8328 = vmatprep.mubr.bf16.mxu0 0
    %8329 = vmatmul.mubr.bf16.gmra.mxu0 %v8150
    %v8330 = vpop.f32.mrf.mxu0
    %v8331 = vadd.f32 0.0, %v8330
    %v8332 = vpop.f32.mrf.mxu0
    %v8333 = vpop.f32.mrf.mxu0
    %v8334 = vadd.f32 0.0, %v8333
    %v8335 = vpop.f32.mrf.mxu0
    %8336 = vmatprep.mubr.bf16.mxu0 0
    %8337 = vmatmul.mubr.bf16.gmra.mxu0 %v8152
    %v8338 = vpop.f32.mrf.mxu0
    %v8339 = vadd.f32 0.0, %v8338
    %v8340 = vpop.f32.mrf.mxu0
    %v8341 = vpop.f32.mrf.mxu0
    %v8342 = vadd.f32 0.0, %v8341
    %v8343 = vpop.f32.mrf.mxu0
    %8344 = vmatprep.mubr.bf16.mxu0 0
    %8345 = vmatmul.mubr.bf16.gmra.mxu0 %v8154
    %v8346 = vpop.f32.mrf.mxu0
    %v8347 = vadd.f32 0.0, %v8346
    %v8348 = vpop.f32.mrf.mxu0
    %v8349 = vpop.f32.mrf.mxu0
    %v8350 = vadd.f32 0.0, %v8349
    %v8351 = vpop.f32.mrf.mxu0
    %8352 = vmatprep.mubr.bf16.mxu0 0
    %8353 = vmatmul.mubr.bf16.gmra.mxu0 %v8156
    %v8354 = vpop.f32.mrf.mxu0
    %v8355 = vadd.f32 0.0, %v8354
    %v8356 = vpop.f32.mrf.mxu0
    %v8357 = vpop.f32.mrf.mxu0
    %v8358 = vadd.f32 0.0, %v8357
    %v8359 = vpop.f32.mrf.mxu0
    %8360 = vmatprep.mubr.bf16.mxu0 0
    %8361 = vmatmul.mubr.bf16.gmra.mxu0 %v8158
    %v8362 = vpop.f32.mrf.mxu0
    %v8363 = vadd.f32 0.0, %v8362
    %v8364 = vpop.f32.mrf.mxu0
    %v8365 = vpop.f32.mrf.mxu0
    %v8366 = vadd.f32 0.0, %v8365
    %v8367 = vpop.f32.mrf.mxu0
    %8368 = vmatprep.mubr.bf16.mxu0 0
    %8369 = vmatmul.mubr.bf16.gmra.mxu0 %v8160
    %v8370 = vpop.f32.mrf.mxu0
    %v8371 = vadd.f32 0.0, %v8370
    %v8372 = vpop.f32.mrf.mxu0
    %v8373 = vpop.f32.mrf.mxu0
    %v8374 = vadd.f32 0.0, %v8373
    %v8375 = vpop.f32.mrf.mxu0
    %8376 = vmatprep.mubr.bf16.mxu0 0
    %8377 = vmatmul.mubr.bf16.gmra.mxu0 %v8162
    %v8378 = vpop.f32.mrf.mxu0
    %v8379 = vadd.f32 0.0, %v8378
    %v8380 = vpop.f32.mrf.mxu0
    %v8381 = vpop.f32.mrf.mxu0
    %v8382 = vadd.f32 0.0, %v8381
    %v8383 = vpop.f32.mrf.mxu0
    %8384 = vmatprep.mubr.bf16.mxu0 0
    %8385 = vmatmul.mubr.bf16.gmra.mxu0 %v8164
    %v8386 = vpop.f32.mrf.mxu0
    %v8387 = vadd.f32 0.0, %v8386
    %v8388 = vpop.f32.mrf.mxu0
    %v8389 = vpop.f32.mrf.mxu0
    %v8390 = vadd.f32 0.0, %v8389
    %v8391 = vpop.f32.mrf.mxu0
    %8392 = vmatprep.mubr.bf16.mxu0 0
    %8393 = vmatmul.mubr.bf16.gmra.mxu0 %v8166
    %v8394 = vpop.f32.mrf.mxu0
    %v8395 = vadd.f32 0.0, %v8394
    %v8396 = vpop.f32.mrf.mxu0
    %v8397 = vpop.f32.mrf.mxu0
    %v8398 = vadd.f32 0.0, %v8397
    %v8399 = vpop.f32.mrf.mxu0
    %8400 = vmatprep.mubr.bf16.mxu0 0
    %8401 = vmatmul.mubr.bf16.gmra.mxu0 %v8168
    %v8402 = vpop.f32.mrf.mxu0
    %v8403 = vadd.f32 0.0, %v8402
    %v8404 = vpop.f32.mrf.mxu0
    %v8405 = vpop.f32.mrf.mxu0
    %v8406 = vadd.f32 0.0, %v8405
    %v8407 = vpop.f32.mrf.mxu0
    %8408 = vmatprep.mubr.bf16.mxu0 0
    %8409 = vmatmul.mubr.bf16.gmra.mxu0 %v8170
    %v8410 = vpop.f32.mrf.mxu0
    %v8411 = vadd.f32 0.0, %v8410
    %v8412 = vpop.f32.mrf.mxu0
    %v8413 = vpop.f32.mrf.mxu0
    %v8414 = vadd.f32 0.0, %v8413
    %v8415 = vpop.f32.mrf.mxu0
    %8416 = vmatprep.mubr.bf16.mxu0 0
    %8417 = vmatmul.mubr.bf16.gmra.mxu0 %v8172
    %v8418 = vpop.f32.mrf.mxu0
    %v8419 = vadd.f32 0.0, %v8418
    %v8420 = vpop.f32.mrf.mxu0
    %v8421 = vpop.f32.mrf.mxu0
    %v8422 = vadd.f32 0.0, %v8421
    %v8423 = vpop.f32.mrf.mxu0
    %8424 = vmatprep.mubr.bf16.mxu0 0
    %8425 = vmatmul.mubr.bf16.gmra.mxu0 %v8174
    %v8426 = vpop.f32.mrf.mxu0
    %v8427 = vadd.f32 0.0, %v8426
    %v8428 = vpop.f32.mrf.mxu0
    %v8429 = vpop.f32.mrf.mxu0
    %v8430 = vadd.f32 0.0, %v8429
    %v8431 = vpop.f32.mrf.mxu0
    %8432 = vmatprep.mubr.bf16.mxu0 0
    %8433 = vmatmul.mubr.bf16.gmra.mxu0 %v8176
    %v8434 = vpop.f32.mrf.mxu0
    %v8435 = vadd.f32 0.0, %v8434
    %v8436 = vpop.f32.mrf.mxu0
    %v8437 = vpop.f32.mrf.mxu0
    %v8438 = vadd.f32 0.0, %v8437
    %v8439 = vpop.f32.mrf.mxu0
    %8440 = vmatprep.mubr.bf16.mxu0 0
    %8441 = vmatmul.mubr.bf16.gmra.mxu0 %v8178
    %v8442 = vpop.f32.mrf.mxu0
    %v8443 = vadd.f32 0.0, %v8442
    %v8444 = vpop.f32.mrf.mxu0
    %v8445 = vpop.f32.mrf.mxu0
    %v8446 = vadd.f32 0.0, %v8445
    %v8447 = vpop.f32.mrf.mxu0
    %8448 = vmatprep.mubr.bf16.mxu0 0
    %8449 = vmatmul.mubr.bf16.gmra.mxu0 %v8180
    %v8450 = vpop.f32.mrf.mxu0
    %v8451 = vadd.f32 0.0, %v8450
    %v8452 = vpop.f32.mrf.mxu0
    %v8453 = vpop.f32.mrf.mxu0
    %v8454 = vadd.f32 0.0, %v8453
    %v8455 = vpop.f32.mrf.mxu0
    %8456 = vmatprep.mubr.bf16.mxu0 0
    %8457 = vmatmul.mubr.bf16.gmra.mxu0 %v8182
    %v8458 = vpop.f32.mrf.mxu0
    %v8459 = vadd.f32 0.0, %v8458
    %v8460 = vpop.f32.mrf.mxu0
    %v8461 = vpop.f32.mrf.mxu0
    %v8462 = vadd.f32 0.0, %v8461
    %v8463 = vpop.f32.mrf.mxu0
    %8464 = vmatprep.mubr.bf16.mxu0 0
    %8465 = vmatmul.mubr.bf16.gmra.mxu0 %v8184
    %v8466 = vpop.f32.mrf.mxu0
    %v8467 = vadd.f32 0.0, %v8466
    %v8468 = vpop.f32.mrf.mxu0
    %v8469 = vpop.f32.mrf.mxu0
    %v8470 = vadd.f32 0.0, %v8469
    %v8471 = vpop.f32.mrf.mxu0
    %8472 = vmatprep.mubr.bf16.mxu0 0
    %8473 = vmatmul.mubr.bf16.gmra.mxu0 %v8186
    %v8474 = vpop.f32.mrf.mxu0
    %v8475 = vadd.f32 0.0, %v8474
    %v8476 = vpop.f32.mrf.mxu0
    %v8477 = vpop.f32.mrf.mxu0
    %v8478 = vadd.f32 0.0, %v8477
    %v8479 = vpop.f32.mrf.mxu0
    %8480 = vdwg.mxu0
    %8485 = vrot.lane.b32.xlu0 %v8243, 8
    %v8486 = vpop.permute.xlu0 %8485
    %8487 = vrot.lane.b32.xlu0 %v8246, 8
    %v8488 = vpop.permute.xlu0 %8487
    %8489 = vrot.lane.b32.xlu0 %v8251, 8
    %v8490 = vpop.permute.xlu0 %8489
    %8491 = vrot.lane.b32.xlu0 %v8254, 8
    %v8492 = vpop.permute.xlu0 %8491
    %8501 = vrot.lane.b32.xlu0 %v8259, 16
    %v8502 = vpop.permute.xlu0 %8501
    %8503 = vrot.lane.b32.xlu0 %v8262, 16
    %v8504 = vpop.permute.xlu0 %8503
    %8505 = vrot.lane.b32.xlu0 %v8267, 16
    %v8506 = vpop.permute.xlu0 %8505
    %8507 = vrot.lane.b32.xlu0 %v8270, 16
    %v8508 = vpop.permute.xlu0 %8507
    %8517 = vrot.lane.b32.xlu0 %v8275, 24
    %v8518 = vpop.permute.xlu0 %8517
    %8519 = vrot.lane.b32.xlu0 %v8278, 24
    %v8520 = vpop.permute.xlu0 %8519
    %8521 = vrot.lane.b32.xlu0 %v8283, 24
    %v8522 = vpop.permute.xlu0 %8521
    %8523 = vrot.lane.b32.xlu0 %v8286, 24
    %v8524 = vpop.permute.xlu0 %8523
    %8533 = vrot.lane.b32.xlu0 %v8291, 32
    %v8534 = vpop.permute.xlu0 %8533
    %8535 = vrot.lane.b32.xlu0 %v8294, 32
    %v8536 = vpop.permute.xlu0 %8535
    %8537 = vrot.lane.b32.xlu0 %v8299, 32
    %v8538 = vpop.permute.xlu0 %8537
    %8539 = vrot.lane.b32.xlu0 %v8302, 32
    %v8540 = vpop.permute.xlu0 %8539
    %8549 = vrot.lane.b32.xlu0 %v8307, 40
    %v8550 = vpop.permute.xlu0 %8549
    %8551 = vrot.lane.b32.xlu0 %v8310, 40
    %v8552 = vpop.permute.xlu0 %8551
    %8553 = vrot.lane.b32.xlu0 %v8315, 40
    %v8554 = vpop.permute.xlu0 %8553
    %8555 = vrot.lane.b32.xlu0 %v8318, 40
    %v8556 = vpop.permute.xlu0 %8555
    %8565 = vrot.lane.b32.xlu0 %v8323, 48
    %v8566 = vpop.permute.xlu0 %8565
    %8567 = vrot.lane.b32.xlu0 %v8326, 48
    %v8568 = vpop.permute.xlu0 %8567
    %8569 = vrot.lane.b32.xlu0 %v8331, 48
    %v8570 = vpop.permute.xlu0 %8569
    %8571 = vrot.lane.b32.xlu0 %v8334, 48
    %v8572 = vpop.permute.xlu0 %8571
    %8581 = vrot.lane.b32.xlu0 %v8339, 56
    %v8582 = vpop.permute.xlu0 %8581
    %8583 = vrot.lane.b32.xlu0 %v8342, 56
    %v8584 = vpop.permute.xlu0 %8583
    %8585 = vrot.lane.b32.xlu0 %v8347, 56
    %v8586 = vpop.permute.xlu0 %8585
    %8587 = vrot.lane.b32.xlu0 %v8350, 56
    %v8588 = vpop.permute.xlu0 %8587
    %8597 = vrot.lane.b32.xlu0 %v8355, 64
    %v8598 = vpop.permute.xlu0 %8597
    %8599 = vrot.lane.b32.xlu0 %v8358, 64
    %v8600 = vpop.permute.xlu0 %8599
    %8601 = vrot.lane.b32.xlu0 %v8363, 64
    %v8602 = vpop.permute.xlu0 %8601
    %8603 = vrot.lane.b32.xlu0 %v8366, 64
    %v8604 = vpop.permute.xlu0 %8603
    %8613 = vrot.lane.b32.xlu0 %v8371, 72
    %v8614 = vpop.permute.xlu0 %8613
    %8615 = vrot.lane.b32.xlu0 %v8374, 72
    %v8616 = vpop.permute.xlu0 %8615
    %8617 = vrot.lane.b32.xlu0 %v8379, 72
    %v8618 = vpop.permute.xlu0 %8617
    %8619 = vrot.lane.b32.xlu0 %v8382, 72
    %v8620 = vpop.permute.xlu0 %8619
    %8629 = vrot.lane.b32.xlu0 %v8387, 80
    %v8630 = vpop.permute.xlu0 %8629
    %8631 = vrot.lane.b32.xlu0 %v8390, 80
    %v8632 = vpop.permute.xlu0 %8631
    %8633 = vrot.lane.b32.xlu0 %v8395, 80
    %v8634 = vpop.permute.xlu0 %8633
    %8635 = vrot.lane.b32.xlu0 %v8398, 80
    %v8636 = vpop.permute.xlu0 %8635
    %8645 = vrot.lane.b32.xlu0 %v8403, 88
    %v8646 = vpop.permute.xlu0 %8645
    %8647 = vrot.lane.b32.xlu0 %v8406, 88
    %v8648 = vpop.permute.xlu0 %8647
    %8649 = vrot.lane.b32.xlu0 %v8411, 88
    %v8650 = vpop.permute.xlu0 %8649
    %8651 = vrot.lane.b32.xlu0 %v8414, 88
    %v8652 = vpop.permute.xlu0 %8651
    %8661 = vrot.lane.b32.xlu0 %v8419, 96
    %v8662 = vpop.permute.xlu0 %8661
    %8663 = vrot.lane.b32.xlu0 %v8422, 96
    %v8664 = vpop.permute.xlu0 %8663
    %8665 = vrot.lane.b32.xlu0 %v8427, 96
    %v8666 = vpop.permute.xlu0 %8665
    %8667 = vrot.lane.b32.xlu0 %v8430, 96
    %v8668 = vpop.permute.xlu0 %8667
    %8677 = vrot.lane.b32.xlu0 %v8435, 104
    %v8678 = vpop.permute.xlu0 %8677
    %8679 = vrot.lane.b32.xlu0 %v8438, 104
    %v8680 = vpop.permute.xlu0 %8679
    %8681 = vrot.lane.b32.xlu0 %v8443, 104
    %v8682 = vpop.permute.xlu0 %8681
    %8683 = vrot.lane.b32.xlu0 %v8446, 104
    %v8684 = vpop.permute.xlu0 %8683
    %8693 = vrot.lane.b32.xlu0 %v8451, 112
    %v8694 = vpop.permute.xlu0 %8693
    %8695 = vrot.lane.b32.xlu0 %v8454, 112
    %v8696 = vpop.permute.xlu0 %8695
    %8697 = vrot.lane.b32.xlu0 %v8459, 112
    %v8698 = vpop.permute.xlu0 %8697
    %8699 = vrot.lane.b32.xlu0 %v8462, 112
    %v8700 = vpop.permute.xlu0 %8699
    %8709 = vrot.lane.b32.xlu0 %v8467, 120
    %v8710 = vpop.permute.xlu0 %8709
    %8711 = vrot.lane.b32.xlu0 %v8470, 120
    %v8712 = vpop.permute.xlu0 %8711
    %8713 = vrot.lane.b32.xlu0 %v8475, 120
    %v8714 = vpop.permute.xlu0 %8713
    %8715 = vrot.lane.b32.xlu0 %v8478, 120
    %v8716 = vpop.permute.xlu0 %8715
    %v8721 = vsel %vm1531, %v8227, %v8486
    %v8722 = vsel %vm1531, %v8230, %v8488
    %v8723 = vsel %vm1531, %v8235, %v8490
    %v8724 = vsel %vm1531, %v8238, %v8492
    %v8725 = vsel %vm1661, %v8721, %v8502
    %v8726 = vsel %vm1661, %v8722, %v8504
    %v8727 = vsel %vm1661, %v8723, %v8506
    %v8728 = vsel %vm1661, %v8724, %v8508
    %v8729 = vsel %vm1791, %v8725, %v8518
    %v8730 = vsel %vm1791, %v8726, %v8520
    %v8731 = vsel %vm1791, %v8727, %v8522
    %v8732 = vsel %vm1791, %v8728, %v8524
    %v8733 = vsel %vm1921, %v8729, %v8534
    %v8734 = vsel %vm1921, %v8730, %v8536
    %v8735 = vsel %vm1921, %v8731, %v8538
    %v8736 = vsel %vm1921, %v8732, %v8540
    %v8737 = vsel %vm7827, %v8733, %v8550
    %v8738 = vsel %vm7827, %v8734, %v8552
    %v8739 = vsel %vm7827, %v8735, %v8554
    %v8740 = vsel %vm7827, %v8736, %v8556
    %v8741 = vsel %vm7892, %v8737, %v8566
    %v8742 = vsel %vm7892, %v8738, %v8568
    %v8743 = vsel %vm7892, %v8739, %v8570
    %v8744 = vsel %vm7892, %v8740, %v8572
    %v8745 = vsel %vm7957, %v8741, %v8582
    %v8746 = vsel %vm7957, %v8742, %v8584
    %v8747 = vsel %vm7957, %v8743, %v8586
    %v8748 = vsel %vm7957, %v8744, %v8588
    %v8749 = vsel %vm8022, %v8745, %v8598
    %v8750 = vsel %vm8022, %v8746, %v8600
    %v8751 = vsel %vm8022, %v8747, %v8602
    %v8752 = vsel %vm8022, %v8748, %v8604
    %v8753 = vsel %vm8123, %v8749, %v8614
    %v8754 = vsel %vm8123, %v8750, %v8616
    %v8755 = vsel %vm8123, %v8751, %v8618
    %v8756 = vsel %vm8123, %v8752, %v8620
    %vm8757 = vcmask 654336
    %v8758 = vsel %vm8757, %v8753, %v8630
    %v8759 = vsel %vm8757, %v8754, %v8632
    %v8760 = vsel %vm8757, %v8755, %v8634
    %v8761 = vsel %vm8757, %v8756, %v8636
    %vm8762 = vcmask 719872
    %v8763 = vsel %vm8762, %v8758, %v8646
    %v8764 = vsel %vm8762, %v8759, %v8648
    %v8765 = vsel %vm8762, %v8760, %v8650
    %v8766 = vsel %vm8762, %v8761, %v8652
    %vm8767 = vcmask 785408
    %v8768 = vsel %vm8767, %v8763, %v8662
    %v8769 = vsel %vm8767, %v8764, %v8664
    %v8770 = vsel %vm8767, %v8765, %v8666
    %v8771 = vsel %vm8767, %v8766, %v8668
    %vm8772 = vcmask 850944
    %v8773 = vsel %vm8772, %v8768, %v8678
    %v8774 = vsel %vm8772, %v8769, %v8680
    %v8775 = vsel %vm8772, %v8770, %v8682
    %v8776 = vsel %vm8772, %v8771, %v8684
    %vm8777 = vcmask 916480
    %v8778 = vsel %vm8777, %v8773, %v8694
    %v8779 = vsel %vm8777, %v8774, %v8696
    %v8780 = vsel %vm8777, %v8775, %v8698
    %v8781 = vsel %vm8777, %v8776, %v8700
    %vm8782 = vcmask 982016
    %v8783 = vsel %vm8782, %v8778, %v8710
    %v8784 = vsel %vm8782, %v8779, %v8712
    %v8785 = vsel %vm8782, %v8780, %v8714
    %v8786 = vsel %vm8782, %v8781, %v8716
    %8787 = vst [vmem:[#allocation3] sm:$0xff] %v8783
    %8788 = vst [vmem:[#allocation3 + $0x8] sm:$0xff] %v8784
    %8789 = vst [vmem:[#allocation3 + $0x10] sm:$0xff] %v8785
    %8790 = vst [vmem:[#allocation3 + $0x18] sm:$0xff] %v8786
    // Predicated region
    $region14: #{tpu_custom_call.1} parent=1 // pred_check
      _
    $region15: #{tpu_custom_call.1} parent=1 // pred_check_branch
      %8792 = sbr.rel (0) target = $region17
    $region16: #{tpu_custom_call.1} parent=1 // pred_region
      %s8794 = ssub.s32 512, 512
      %8795 = vsyncadd [#allocation4], %s8794
      %s8796 = sshll.u32 [#allocation3], 4
      %s8797 = int_to_ptr.vmem [resolvable:$true] %s8796
      %8802 = dma.vmem_to_hbm [thread:$0]  %s8797, 512, %s3, [#allocation4], 128, 128, 8
    $region17: #{tpu_custom_call.1} parent=1 // pred_fallthru
      _
    // Predicated region
    $region18: #{tpu_custom_call.1} parent=1 // pred_check
      _
    $region19: #{tpu_custom_call.1} parent=1 // pred_check_branch
      %8804 = sbr.rel (0) target = $region21
    $region20: #{tpu_custom_call.1} parent=1 // pred_region
      %8805 = dma.done [#allocation4], 512
    $region21: #{tpu_custom_call.1} parent=1 // pred_fallthru
      _
    %8806 = vsyncpa [#allocation4], 1

</llo_original>
